<compile_context>
chip_gen: v7x
topology: tpu7x:2x2x1
jax: 0.10.0
libtpu: 0.0.40
codegen_flags: <defaults>
</compile_context>

<pallas_src>
import functools

import jax
import jax.numpy as jnp
from jax.experimental import pallas as pl
from jax.experimental.pallas import tpu as pltpu


# ---------------------------------------------------------------------------
# Small helpers
# ---------------------------------------------------------------------------

def _round_up(x, m):
    return ((x + m - 1) // m) * m


def _vmem_capacity_bytes():
    """Physical VMEM of the current generation, with a v7x-safe fallback."""
    try:
        cap = int(pltpu.get_tpu_info().vmem_capacity_bytes)
        if cap > 0:
            return cap
    except Exception:
        pass
    return 64 << 20


def _block_bytes(rows, cols):
    """Conservative (8,128)-tiled VMEM footprint of one block (32-bit words assumed)."""
    return _round_up(max(int(rows), 1), 8) * _round_up(max(int(cols), 1), 128) * 4


def _conv_block_bytes(hb, wp, cin, cout, k):
    p = k // 2
    s_out = _round_up(hb * wp, 8)
    s_in = _round_up(s_out + 2 * p * wp + 2 * p, 8)
    streamed = _block_bytes(s_in, cin) + _block_bytes(s_out, cout)
    resident = (_block_bytes(k * k * cin, cout) + _block_bytes(s_out, 1)
                + _block_bytes(1, cout) + _block_bytes(2, cout))
    return 2 * streamed + 2 * resident          # double-buffered by default


def _pool_block_bytes(tr, wh, c):
    streamed = 2 * _block_bytes(tr * 2 * wh, c) + _block_bytes(tr * wh, c)
    return 2 * streamed + 4 * _block_bytes(1, c)


def _pick_hb(h, wp, cin, cout, k, budget):
    """Largest divisor of H whose conv blocks fit the per-generation VMEM budget."""
    best = 1
    for hb in range(1, h + 1):
        if h % hb == 0 and _conv_block_bytes(hb, wp, cin, cout, k) <= budget:
            best = hb
    return best


def _compiler_params(block_bytes):
    cap = _vmem_capacity_bytes()
    hi = min((cap * 5) // 8, 100 << 20)          # ~40 MiB on v7x, ~80 MiB on v5e/v6e
    limit = max(24 << 20, min(int(block_bytes) + (8 << 20), hi))
    return pltpu.CompilerParams(dimension_semantics=("parallel",),
                                vmem_limit_bytes=int(limit))


# ---------------------------------------------------------------------------
# Kernels
# ---------------------------------------------------------------------------

def _conv_bn_stats_kernel(w_ref, b_ref, m_ref, x_ref, y_ref, s_ref, *, k, wp):
    """'same' KxK conv + bias for one haloed row-group, plus BN partial sums.

    Channels-minor layout: flattened (padded) spatial positions on the sublane axis,
    channels on the lane axis.  Each tap is a static sublane-offset view of the haloed
    slab, contracted over Cin on the MXU and accumulated in f32.

      w_ref: (K*K, Cin, Cout)  per-tap weight matrices                 (resident)
      b_ref: (1, Cout)         conv bias (f32)                         (resident)
      m_ref: (S_OUT, 1)        1.0 on valid (non-pad) output positions (resident)
      x_ref: (S_IN, Cin)       zero-extended haloed input slab
      y_ref: (S_OUT, Cout)     raw conv output (pre-BN); W-pad columns hold garbage
      s_ref: (1, 2, Cout)      [sum, sum of squares] over valid positions (f32)
    """
    s_out, _ = y_ref.shape
    op_dtype = w_ref.dtype
    cout = y_ref.shape[1]

    # Single full-block load; keep the shifted views in un-packed f32 (exact for bf16 data).
    x = x_ref[...].astype(jnp.float32)

    acc = jnp.zeros((s_out, cout), jnp.float32)
    tap = 0
    for kh in range(k):
        for kw in range(k):
            off = kh * wp + kw                               # static sublane offset
            xt = x[off:off + s_out, :].astype(op_dtype)      # (S_OUT, Cin) shifted view
            acc = acc + jnp.dot(xt, w_ref[tap],
                                preferred_element_type=jnp.float32)
            tap += 1

    acc = acc + b_ref[...]                                   # (1, Cout) broadcast
    y_ref[...] = acc.astype(y_ref.dtype)

    m = m_ref[...]                                           # (S_OUT, 1) f32
    s_ref[0, 0:1, :] = jnp.sum(acc * m, axis=0, keepdims=True)
    s_ref[0, 1:2, :] = jnp.sum(acc * acc * m, axis=0, keepdims=True)


def _bn_relu_pool_kernel(scale_ref, shift_ref, xe_ref, xo_ref, o_ref):
    """Fused BatchNorm affine + ReLU + MaxPool2d(2) for the final layer.

      scale_ref/shift_ref: (1, C)  folded BN scale / shift              (resident)
      xe_ref/xo_ref: (TR, 2, Wh, C) even / odd W columns; axis 1 is the H parity
      o_ref: (TR, Wh, C)
    """
    scale = scale_ref[...]
    shift = shift_ref[...]

    ae = jnp.maximum(xe_ref[...].astype(jnp.float32) * scale + shift, 0.0)
    ao = jnp.maximum(xo_ref[...].astype(jnp.float32) * scale + shift, 0.0)
    m = jnp.maximum(jnp.maximum(ae[:, 0], ae[:, 1]),
                    jnp.maximum(ao[:, 0], ao[:, 1]))
    o_ref[...] = m.astype(o_ref.dtype)


# ---------------------------------------------------------------------------
# Wrappers
# ---------------------------------------------------------------------------

def _conv_layer(ap, w_oihw, bias, k, hb, conv_dtype, y_dtype):
    """One DownConv conv+bias on a zero-padded NHWC activation, plus BN batch partials.

    ap: (N, Hp, Wp, Cin) zero padded by p=k//2, already in conv_dtype.
    Returns y: (N, H, Wp, Cout) raw conv output (W-pad columns are garbage) and
            stats: (2, Cout) f32 [sum, sum_sq] over the N*H*W valid output positions.
    """
    n, hp, wp, cin = ap.shape
    p = k // 2
    h = hp - 2 * p
    cout = w_oihw.shape[0]
    assert h % hb == 0
    g = h // hb
    ng = n * g

    s_out = _round_up(hb * wp, 8)
    s_in = _round_up(s_out + 2 * p * wp + 2 * p, 8)

    # Haloed row-group slabs (2p rows duplicated per group - tiny), zero-extended by p at
    # both ends so every static tap offset stays in bounds.  Pure XLA glue; it fuses with
    # the previous layer's BN/ReLU and the pad above.
    slabs = jnp.stack([ap[:, i * hb:i * hb + hb + 2 * p, :, :] for i in range(g)], axis=1)
    slabs = slabs.reshape(ng, (hb + 2 * p) * wp, cin)
    slabs = jnp.pad(slabs, ((0, 0), (p, s_in - p - (hb + 2 * p) * wp), (0, 0)))
    x2d = slabs.reshape(ng * s_in, cin)

    # Per-tap (Cin, Cout) weight matrices and bias.
    w_taps = jnp.transpose(w_oihw, (2, 3, 1, 0)).reshape(k * k, cin, cout).astype(conv_dtype)
    b2 = bias.reshape(1, cout).astype(jnp.float32)

    # Valid-position mask for the BN statistics (excludes W-pad columns and the 8-row
    # alignment pad); identical for every grid step -> resident input.
    idx = jnp.arange(s_out)
    wpos = idx % wp
    valid = (idx < hb * wp) & (wpos >= p) & (wpos < wp - p)
    mvec = valid.astype(jnp.float32).reshape(s_out, 1)

    cparams = _compiler_params(_conv_block_bytes(hb, wp, cin, cout, k))

    y2d, stats = pl.pallas_call(
        functools.partial(_conv_bn_stats_kernel, k=k, wp=wp),
        out_shape=(jax.ShapeDtypeStruct((ng * s_out, cout), y_dtype),
                   jax.ShapeDtypeStruct((ng, 2, cout), jnp.float32)),
        grid=(ng,),
        in_specs=[
            pl.BlockSpec((k * k, cin, cout), lambda i: (0, 0, 0)),   # weights (resident)
            pl.BlockSpec((1, cout), lambda i: (0, 0)),               # bias    (resident)
            pl.BlockSpec((s_out, 1), lambda i: (0, 0)),              # mask    (resident)
            pl.BlockSpec((s_in, cin), lambda i: (i, 0)),             # haloed input slab
        ],
        out_specs=(
            pl.BlockSpec((s_out, cout), lambda i: (i, 0)),           # raw conv output
            pl.BlockSpec((1, 2, cout), lambda i: (i, 0, 0)),         # BN partial sums
        ),
        compiler_params=cparams,
    )(w_taps, b2, mvec, x2d)

    y = y2d.reshape(n, g, s_out, cout)[:, :, :hb * wp, :]
    y = y.reshape(n, g, hb, wp, cout).reshape(n, h, wp, cout)
    return y, jnp.sum(stats, axis=0)


def _bn_relu_maxpool(y, scale, shift, budget):
    """Fused BN affine + ReLU + MaxPool2d(2) over an NHWC activation."""
    n, h, w, c = y.shape
    hc, wc = (h // 2) * 2, (w // 2) * 2          # nn.MaxPool2d(2) floors odd sizes
    hh, wh = hc // 2, wc // 2
    yv = y[:, :hc, :wc, :]
    # Even / odd W columns; H pairs become an explicit length-2 axis (pure reshapes/slices).
    xe = yv[:, :, 0::2, :].reshape(n, hh, 2, wh, c).reshape(n * hh, 2, wh, c)
    xo = yv[:, :, 1::2, :].reshape(n, hh, 2, wh, c).reshape(n * hh, 2, wh, c)

    r = n * hh
    tr = 1
    for d in range(1, r + 1):
        if r % d == 0 and _pool_block_bytes(d, wh, c) <= budget:
            tr = d

    out = pl.pallas_call(
        _bn_relu_pool_kernel,
        out_shape=jax.ShapeDtypeStruct((r, wh, c), jnp.float32),
        grid=(r // tr,),
        in_specs=[
            pl.BlockSpec((1, c), lambda i: (0, 0)),                  # BN scale (resident)
            pl.BlockSpec((1, c), lambda i: (0, 0)),                  # BN shift (resident)
            pl.BlockSpec((tr, 2, wh, c), lambda i: (i, 0, 0, 0)),    # even W columns
            pl.BlockSpec((tr, 2, wh, c), lambda i: (i, 0, 0, 0)),    # odd W columns
        ],
        out_specs=pl.BlockSpec((tr, wh, c), lambda i: (i, 0, 0)),
        compiler_params=_compiler_params(_pool_block_bytes(tr, wh, c)),
    )(scale.reshape(1, c), shift.reshape(1, c), xe, xo)
    return out.reshape(n, hh, wh, c)


def downblock_forward(x_nchw, params, kernel_size=3, down_sample=True,
                      conv_dtype=jnp.bfloat16):
    """DownBlock forward.

    x_nchw: (N, Cin, H, W) float32
    params: list of (conv weight OIHW, conv bias, bn_gamma, bn_beta) per DownConv layer
    conv_dtype: dtype of the MXU operands / inter-layer activations (bf16 default for
                performance; pass jnp.float32 for tight validation).
    Returns NCHW: (N, Cout, H//2, W//2) if down_sample else (N, Cout, H, W).
    """
    k = kernel_size
    p = k // 2
    eps = 1e-5
    y_dtype = jnp.float32 if conv_dtype == jnp.float32 else jnp.bfloat16

    a = jnp.transpose(x_nchw, (0, 2, 3, 1)).astype(conv_dtype)      # NHWC, channels minor
    n, h, w, _ = a.shape
    m_count = n * h * w
    budget = _vmem_capacity_bytes() // 4

    n_layers = len(params)
    out = None
    for li, (wgt, bias, gamma, beta) in enumerate(params):
        cin = a.shape[-1]
        cout = wgt.shape[0]
        wp = w + 2 * p
        hb = _pick_hb(h, wp, cin, cout, k, budget)

        # 'same' zero padding (and, for layers >0, the previous layer's BN+ReLU) are pure
        # XLA elementwise/pad glue that fuses with the slab build inside _conv_layer.
        ap = jnp.pad(a, ((0, 0), (p, p), (p, p), (0, 0)))
        y, stats = _conv_layer(ap, wgt, bias, k, hb, conv_dtype, y_dtype)

        # Global training-mode batch statistics from the kernel's f32 partial sums.
        mean = stats[0] / m_count
        var = jnp.maximum(stats[1] / m_count - mean * mean, 0.0)    # biased var
        scale = (gamma * jax.lax.rsqrt(var + eps)).astype(jnp.float32)
        shift = (beta - mean * scale).astype(jnp.float32)

        y_valid = y[:, :, p:p + w, :]                               # drop W-pad columns
        if li < n_layers - 1:
            # Fold BN+ReLU into the next layer's input construction (XLA fuses it with the
            # pad + slab build of the next iteration); no dedicated Pallas pass.
            a = jnp.maximum(y_valid.astype(jnp.float32) * scale + shift,
                            0.0).astype(conv_dtype)
        elif down_sample:
            out = _bn_relu_maxpool(y_valid, scale, shift, budget)
        else:
            out = jnp.maximum(y_valid.astype(jnp.float32) * scale + shift, 0.0)

    return jnp.transpose(out, (0, 3, 1, 2))                         # back to NCHW


# ---------------------------------------------------------------------------
# Reference (pure JAX) and self-check
# ---------------------------------------------------------------------------

def _reference_downblock(x, params, down_sample=True):
    h = x
    for (w, b, gamma, beta) in params:
        y = jax.lax.conv_general_dilated(
            h, w, window_strides=(1, 1), padding="SAME",
            dimension_numbers=("NCHW", "OIHW", "NCHW"))
        y = y + b[None, :, None, None]
        mean = jnp.mean(y, axis=(0, 2, 3), keepdims=True)
        var = jnp.mean((y - mean) ** 2, axis=(0, 2, 3), keepdims=True)
        y = (y - mean) * jax.lax.rsqrt(var + 1e-5)
        y = y * gamma[None, :, None, None] + beta[None, :, None, None]
        h = jnp.maximum(y, 0.0)
    if down_sample:
        h = jax.lax.reduce_window(h, -jnp.inf, jax.lax.max,
                                  (1, 1, 2, 2), (1, 1, 2, 2), "VALID")
    return h


if __name__ == "__main__":
    # DownBlock(n_layers=2, in_channels=4, out_channels=8, kernel_size=3, down_sample=True)
    N, CIN, COUT, H, W, K, N_LAYERS = 2, 4, 8, 16, 16, 3, 2

    key = jax.random.PRNGKey(0)
    key, kx = jax.random.split(key)
    x = jax.random.normal(kx, (N, CIN, H, W), dtype=jnp.float32)

    # Deterministic init matching the module: xavier_uniform_ conv weights, zero bias,
    # BN gamma=1 / beta=0 (training mode => batch statistics).
    params = []
    for i in range(N_LAYERS):
        cin_i = CIN if i == 0 else COUT
        key, kw = jax.random.split(key)
        fan_in = cin_i * K * K
        fan_out = COUT * K * K
        limit = (6.0 / (fan_in + fan_out)) ** 0.5
        wgt = jax.random.uniform(kw, (COUT, cin_i, K, K), jnp.float32, -limit, limit)
        b = jnp.zeros((COUT,), jnp.float32)
        gamma = jnp.ones((COUT,), jnp.float32)
        beta = jnp.zeros((COUT,), jnp.float32)
        params.append((wgt, b, gamma, beta))

    ref = _reference_downblock(x, params, down_sample=True)

    # f32-operand validation path (matches the f32 PyTorch semantics tightly).
    fwd_f32 = jax.jit(functools.partial(downblock_forward, kernel_size=K,
                                        down_sample=True, conv_dtype=jnp.float32))
    out_f32 = jax.block_until_ready(fwd_f32(x, params))
    assert out_f32.shape == (N, COUT, H // 2, W // 2), out_f32.shape
    assert jnp.allclose(out_f32, ref, atol=1e-4, rtol=1e-4), \
        float(jnp.max(jnp.abs(out_f32 - ref)))

    # Default (performance) path: bf16 MXU operands, f32 accumulation / BN statistics.
    fwd_bf16 = jax.jit(functools.partial(downblock_forward, kernel_size=K,
                                         down_sample=True))
    out_bf16 = jax.block_until_ready(fwd_bf16(x, params))
    assert out_bf16.shape == (N, COUT, H // 2, W // 2), out_bf16.shape
    assert jnp.allclose(out_bf16, ref, atol=0.25, rtol=0.25), \
        float(jnp.max(jnp.abs(out_bf16 - ref)))

    print("KERNEL_OK")
</pallas_src>

<mosaic_0001>
module attributes {stable_mosaic.version = 11 : i64} {
  func.func @_conv_bn_stats_kernel(%arg0: i32, %arg1: memref<9x4x8xf32, #tpu.memory_space<vmem>>, %arg2: memref<1x8xf32, #tpu.memory_space<vmem>>, %arg3: memref<288x1xf32, #tpu.memory_space<vmem>>, %arg4: memref<328x4xf32, #tpu.memory_space<vmem>>, %arg5: memref<288x8xf32, #tpu.memory_space<vmem>>, %arg6: memref<1x2x8xf32, #tpu.memory_space<vmem>>) attributes {dimension_semantics = [#tpu.dimension_semantics<parallel>], iteration_bounds = array<i64: 2>, scalar_prefetch = 0 : i64, scratch_operands = 0 : i64, tpu.core_type = #tpu.core_type<tc>, window_params = [{pipeline_mode = #tpu.pipeline_mode<synchronous>, transform_indices = @transform_0, window_bounds = array<i64: 9, 4, 8>}, {pipeline_mode = #tpu.pipeline_mode<synchronous>, transform_indices = @transform_1, window_bounds = array<i64: 1, 8>}, {pipeline_mode = #tpu.pipeline_mode<synchronous>, transform_indices = @transform_2, window_bounds = array<i64: 288, 1>}, {transform_indices = @transform_3, window_bounds = array<i64: 328, 4>}, {transform_indices = @transform_4, window_bounds = array<i64: 288, 8>}, {transform_indices = @transform_5, window_bounds = array<i64: 1, 2, 8>}]} {
    %c0 = arith.constant 0 : index
    %c0_0 = arith.constant 0 : index
    %0 = vector.load %arg4[%c0, %c0_0] : memref<328x4xf32, #tpu.memory_space<vmem>>, vector<328x4xf32>
    %cst = arith.constant 0.000000e+00 : f32
    %1 = vector.broadcast %cst : f32 to vector<288x8xf32>
    %2 = vector.extract_strided_slice %0 {offsets = [0, 0], sizes = [288, 4], strides = [1, 1]} : vector<328x4xf32> to vector<288x4xf32>
    %c0_1 = arith.constant 0 : index
    %c0_2 = arith.constant 0 : index
    %c0_3 = arith.constant 0 : index
    %3 = vector.load %arg1[%c0_1, %c0_2, %c0_3] : memref<9x4x8xf32, #tpu.memory_space<vmem>>, vector<1x4x8xf32>
    %4 = vector.shape_cast %3 : vector<1x4x8xf32> to vector<4x8xf32>
    %cst_4 = arith.constant dense<0.000000e+00> : vector<288x8xf32>
    %5 = tpu.matmul %2, %4, %cst_4 {dimension_numbers = #tpu.dot_dimension_numbers<[1], [0], [0], [1], [0, 0, 1, 1], [], []>} : vector<288x4xf32>, vector<4x8xf32>, vector<288x8xf32> -> vector<288x8xf32>
    %6 = arith.addf %1, %5 : vector<288x8xf32>
    %7 = vector.extract_strided_slice %0 {offsets = [1, 0], sizes = [288, 4], strides = [1, 1]} : vector<328x4xf32> to vector<288x4xf32>
    %c1 = arith.constant 1 : index
    %c0_5 = arith.constant 0 : index
    %c0_6 = arith.constant 0 : index
    %8 = vector.load %arg1[%c1, %c0_5, %c0_6] : memref<9x4x8xf32, #tpu.memory_space<vmem>>, vector<1x4x8xf32>
    %9 = vector.shape_cast %8 : vector<1x4x8xf32> to vector<4x8xf32>
    %cst_7 = arith.constant dense<0.000000e+00> : vector<288x8xf32>
    %10 = tpu.matmul %7, %9, %cst_7 {dimension_numbers = #tpu.dot_dimension_numbers<[1], [0], [0], [1], [0, 0, 1, 1], [], []>} : vector<288x4xf32>, vector<4x8xf32>, vector<288x8xf32> -> vector<288x8xf32>
    %11 = arith.addf %6, %10 : vector<288x8xf32>
    %12 = vector.extract_strided_slice %0 {offsets = [2, 0], sizes = [288, 4], strides = [1, 1]} : vector<328x4xf32> to vector<288x4xf32>
    %c2 = arith.constant 2 : index
    %c0_8 = arith.constant 0 : index
    %c0_9 = arith.constant 0 : index
    %13 = vector.load %arg1[%c2, %c0_8, %c0_9] : memref<9x4x8xf32, #tpu.memory_space<vmem>>, vector<1x4x8xf32>
    %14 = vector.shape_cast %13 : vector<1x4x8xf32> to vector<4x8xf32>
    %cst_10 = arith.constant dense<0.000000e+00> : vector<288x8xf32>
    %15 = tpu.matmul %12, %14, %cst_10 {dimension_numbers = #tpu.dot_dimension_numbers<[1], [0], [0], [1], [0, 0, 1, 1], [], []>} : vector<288x4xf32>, vector<4x8xf32>, vector<288x8xf32> -> vector<288x8xf32>
    %16 = arith.addf %11, %15 : vector<288x8xf32>
    %17 = vector.extract_strided_slice %0 {offsets = [18, 0], sizes = [288, 4], strides = [1, 1]} : vector<328x4xf32> to vector<288x4xf32>
    %c3 = arith.constant 3 : index
    %c0_11 = arith.constant 0 : index
    %c0_12 = arith.constant 0 : index
    %18 = vector.load %arg1[%c3, %c0_11, %c0_12] : memref<9x4x8xf32, #tpu.memory_space<vmem>>, vector<1x4x8xf32>
    %19 = vector.shape_cast %18 : vector<1x4x8xf32> to vector<4x8xf32>
    %cst_13 = arith.constant dense<0.000000e+00> : vector<288x8xf32>
    %20 = tpu.matmul %17, %19, %cst_13 {dimension_numbers = #tpu.dot_dimension_numbers<[1], [0], [0], [1], [0, 0, 1, 1], [], []>} : vector<288x4xf32>, vector<4x8xf32>, vector<288x8xf32> -> vector<288x8xf32>
    %21 = arith.addf %16, %20 : vector<288x8xf32>
    %22 = vector.extract_strided_slice %0 {offsets = [19, 0], sizes = [288, 4], strides = [1, 1]} : vector<328x4xf32> to vector<288x4xf32>
    %c4 = arith.constant 4 : index
    %c0_14 = arith.constant 0 : index
    %c0_15 = arith.constant 0 : index
    %23 = vector.load %arg1[%c4, %c0_14, %c0_15] : memref<9x4x8xf32, #tpu.memory_space<vmem>>, vector<1x4x8xf32>
    %24 = vector.shape_cast %23 : vector<1x4x8xf32> to vector<4x8xf32>
    %cst_16 = arith.constant dense<0.000000e+00> : vector<288x8xf32>
    %25 = tpu.matmul %22, %24, %cst_16 {dimension_numbers = #tpu.dot_dimension_numbers<[1], [0], [0], [1], [0, 0, 1, 1], [], []>} : vector<288x4xf32>, vector<4x8xf32>, vector<288x8xf32> -> vector<288x8xf32>
    %26 = arith.addf %21, %25 : vector<288x8xf32>
    %27 = vector.extract_strided_slice %0 {offsets = [20, 0], sizes = [288, 4], strides = [1, 1]} : vector<328x4xf32> to vector<288x4xf32>
    %c5 = arith.constant 5 : index
    %c0_17 = arith.constant 0 : index
    %c0_18 = arith.constant 0 : index
    %28 = vector.load %arg1[%c5, %c0_17, %c0_18] : memref<9x4x8xf32, #tpu.memory_space<vmem>>, vector<1x4x8xf32>
    %29 = vector.shape_cast %28 : vector<1x4x8xf32> to vector<4x8xf32>
    %cst_19 = arith.constant dense<0.000000e+00> : vector<288x8xf32>
    %30 = tpu.matmul %27, %29, %cst_19 {dimension_numbers = #tpu.dot_dimension_numbers<[1], [0], [0], [1], [0, 0, 1, 1], [], []>} : vector<288x4xf32>, vector<4x8xf32>, vector<288x8xf32> -> vector<288x8xf32>
    %31 = arith.addf %26, %30 : vector<288x8xf32>
    %32 = vector.extract_strided_slice %0 {offsets = [36, 0], sizes = [288, 4], strides = [1, 1]} : vector<328x4xf32> to vector<288x4xf32>
    %c6 = arith.constant 6 : index
    %c0_20 = arith.constant 0 : index
    %c0_21 = arith.constant 0 : index
    %33 = vector.load %arg1[%c6, %c0_20, %c0_21] : memref<9x4x8xf32, #tpu.memory_space<vmem>>, vector<1x4x8xf32>
    %34 = vector.shape_cast %33 : vector<1x4x8xf32> to vector<4x8xf32>
    %cst_22 = arith.constant dense<0.000000e+00> : vector<288x8xf32>
    %35 = tpu.matmul %32, %34, %cst_22 {dimension_numbers = #tpu.dot_dimension_numbers<[1], [0], [0], [1], [0, 0, 1, 1], [], []>} : vector<288x4xf32>, vector<4x8xf32>, vector<288x8xf32> -> vector<288x8xf32>
    %36 = arith.addf %31, %35 : vector<288x8xf32>
    %37 = vector.extract_strided_slice %0 {offsets = [37, 0], sizes = [288, 4], strides = [1, 1]} : vector<328x4xf32> to vector<288x4xf32>
    %c7 = arith.constant 7 : index
    %c0_23 = arith.constant 0 : index
    %c0_24 = arith.constant 0 : index
    %38 = vector.load %arg1[%c7, %c0_23, %c0_24] : memref<9x4x8xf32, #tpu.memory_space<vmem>>, vector<1x4x8xf32>
    %39 = vector.shape_cast %38 : vector<1x4x8xf32> to vector<4x8xf32>
    %cst_25 = arith.constant dense<0.000000e+00> : vector<288x8xf32>
    %40 = tpu.matmul %37, %39, %cst_25 {dimension_numbers = #tpu.dot_dimension_numbers<[1], [0], [0], [1], [0, 0, 1, 1], [], []>} : vector<288x4xf32>, vector<4x8xf32>, vector<288x8xf32> -> vector<288x8xf32>
    %41 = arith.addf %36, %40 : vector<288x8xf32>
    %42 = vector.extract_strided_slice %0 {offsets = [38, 0], sizes = [288, 4], strides = [1, 1]} : vector<328x4xf32> to vector<288x4xf32>
    %c8 = arith.constant 8 : index
    %c0_26 = arith.constant 0 : index
    %c0_27 = arith.constant 0 : index
    %43 = vector.load %arg1[%c8, %c0_26, %c0_27] : memref<9x4x8xf32, #tpu.memory_space<vmem>>, vector<1x4x8xf32>
    %44 = vector.shape_cast %43 : vector<1x4x8xf32> to vector<4x8xf32>
    %cst_28 = arith.constant dense<0.000000e+00> : vector<288x8xf32>
    %45 = tpu.matmul %42, %44, %cst_28 {dimension_numbers = #tpu.dot_dimension_numbers<[1], [0], [0], [1], [0, 0, 1, 1], [], []>} : vector<288x4xf32>, vector<4x8xf32>, vector<288x8xf32> -> vector<288x8xf32>
    %46 = arith.addf %41, %45 : vector<288x8xf32>
    %c0_29 = arith.constant 0 : index
    %c0_30 = arith.constant 0 : index
    %47 = vector.load %arg2[%c0_29, %c0_30] : memref<1x8xf32, #tpu.memory_space<vmem>>, vector<1x8xf32>
    %48 = vector.broadcast %47 : vector<1x8xf32> to vector<288x8xf32>
    %49 = arith.addf %46, %48 : vector<288x8xf32>
    %c0_31 = arith.constant 0 : index
    %c0_32 = arith.constant 0 : index
    %50 = vector.load %arg5[%c0_31, %c0_32] : memref<288x8xf32, #tpu.memory_space<vmem>>, vector<288x8xf32>
    tpu.vector_store %arg5[%c0_31, %c0_32], %49 {strides = array<i32>} : memref<288x8xf32, #tpu.memory_space<vmem>>, vector<288x8xf32>,
    %c0_33 = arith.constant 0 : index
    %c0_34 = arith.constant 0 : index
    %51 = vector.load %arg3[%c0_33, %c0_34] : memref<288x1xf32, #tpu.memory_space<vmem>>, vector<288x1xf32>
    %52 = vector.broadcast %51 : vector<288x1xf32> to vector<288x8xf32>
    %53 = arith.mulf %49, %52 : vector<288x8xf32>
    %cst_35 = arith.constant dense<0.000000e+00> : vector<8xf32>
    %54 = vector.multi_reduction <add>, %53, %cst_35 [0] : vector<288x8xf32> to vector<8xf32>
    %55 = vector.shape_cast %54 : vector<8xf32> to vector<1x8xf32>
    %c0_36 = arith.constant 0 : index
    %c0_37 = arith.constant 0 : index
    %c0_38 = arith.constant 0 : index
    %56 = vector.load %arg6[%c0_36, %c0_37, %c0_38] : memref<1x2x8xf32, #tpu.memory_space<vmem>>, vector<1x1x8xf32>
    %57 = vector.shape_cast %56 : vector<1x1x8xf32> to vector<1x8xf32>
    %58 = vector.shape_cast %55 : vector<1x8xf32> to vector<1x1x8xf32>
    tpu.vector_store %arg6[%c0_36, %c0_37, %c0_38], %58 {strides = array<i32>} : memref<1x2x8xf32, #tpu.memory_space<vmem>>, vector<1x1x8xf32>,
    %59 = arith.mulf %49, %49 : vector<288x8xf32>
    %60 = vector.broadcast %51 : vector<288x1xf32> to vector<288x8xf32>
    %61 = arith.mulf %59, %60 : vector<288x8xf32>
    %cst_39 = arith.constant dense<0.000000e+00> : vector<8xf32>
    %62 = vector.multi_reduction <add>, %61, %cst_39 [0] : vector<288x8xf32> to vector<8xf32>
    %63 = vector.shape_cast %62 : vector<8xf32> to vector<1x8xf32>
    %c0_40 = arith.constant 0 : index
    %c1_41 = arith.constant 1 : index
    %c0_42 = arith.constant 0 : index
    %64 = vector.load %arg6[%c0_40, %c1_41, %c0_42] : memref<1x2x8xf32, #tpu.memory_space<vmem>>, vector<1x1x8xf32>
    %65 = vector.shape_cast %64 : vector<1x1x8xf32> to vector<1x8xf32>
    %66 = vector.shape_cast %63 : vector<1x8xf32> to vector<1x1x8xf32>
    tpu.vector_store %arg6[%c0_40, %c1_41, %c0_42], %66 {strides = array<i32>} : memref<1x2x8xf32, #tpu.memory_space<vmem>>, vector<1x1x8xf32>,
    return
  }
  func.func @transform_0(%arg0: i32) -> (i32, i32, i32) {
    %c0_i32 = arith.constant 0 : i32
    %c0_i32_0 = arith.constant 0 : i32
    %c0_i32_1 = arith.constant 0 : i32
    %c0_i32_2 = arith.constant 0 : i32
    return %c0_i32, %c0_i32_0, %c0_i32_1 : i32, i32, i32
  }
  func.func @transform_1(%arg0: i32) -> (i32, i32) {
    %c0_i32 = arith.constant 0 : i32
    %c0_i32_0 = arith.constant 0 : i32
    %c0_i32_1 = arith.constant 0 : i32
    return %c0_i32, %c0_i32_0 : i32, i32
  }
  func.func @transform_2(%arg0: i32) -> (i32, i32) {
    %c0_i32 = arith.constant 0 : i32
    %c0_i32_0 = arith.constant 0 : i32
    %c0_i32_1 = arith.constant 0 : i32
    return %c0_i32, %c0_i32_0 : i32, i32
  }
  func.func @transform_3(%arg0: i32) -> (i32, i32) {
    %c0_i32 = arith.constant 0 : i32
    %c0_i32_0 = arith.constant 0 : i32
    return %arg0, %c0_i32 : i32, i32
  }
  func.func @transform_4(%arg0: i32) -> (i32, i32) {
    %c0_i32 = arith.constant 0 : i32
    %c0_i32_0 = arith.constant 0 : i32
    return %arg0, %c0_i32 : i32, i32
  }
  func.func @transform_5(%arg0: i32) -> (i32, i32, i32) {
    %c0_i32 = arith.constant 0 : i32
    %c0_i32_0 = arith.constant 0 : i32
    %c0_i32_1 = arith.constant 0 : i32
    return %arg0, %c0_i32, %c0_i32_0 : i32, i32, i32
  }
}

module attributes {stable_mosaic.version = 11 : i64} {
  func.func @_conv_bn_stats_kernel(%arg0: i32, %arg1: memref<9x8x8xf32, #tpu.memory_space<vmem>>, %arg2: memref<1x8xf32, #tpu.memory_space<vmem>>, %arg3: memref<288x1xf32, #tpu.memory_space<vmem>>, %arg4: memref<328x8xf32, #tpu.memory_space<vmem>>, %arg5: memref<288x8xf32, #tpu.memory_space<vmem>>, %arg6: memref<1x2x8xf32, #tpu.memory_space<vmem>>) attributes {dimension_semantics = [#tpu.dimension_semantics<parallel>], iteration_bounds = array<i64: 2>, scalar_prefetch = 0 : i64, scratch_operands = 0 : i64, tpu.core_type = #tpu.core_type<tc>, window_params = [{pipeline_mode = #tpu.pipeline_mode<synchronous>, transform_indices = @transform_0, window_bounds = array<i64: 9, 8, 8>}, {pipeline_mode = #tpu.pipeline_mode<synchronous>, transform_indices = @transform_1, window_bounds = array<i64: 1, 8>}, {pipeline_mode = #tpu.pipeline_mode<synchronous>, transform_indices = @transform_2, window_bounds = array<i64: 288, 1>}, {transform_indices = @transform_3, window_bounds = array<i64: 328, 8>}, {transform_indices = @transform_4, window_bounds = array<i64: 288, 8>}, {transform_indices = @transform_5, window_bounds = array<i64: 1, 2, 8>}]} {
    %c0 = arith.constant 0 : index
    %c0_0 = arith.constant 0 : index
    %0 = vector.load %arg4[%c0, %c0_0] : memref<328x8xf32, #tpu.memory_space<vmem>>, vector<328x8xf32>
    %cst = arith.constant 0.000000e+00 : f32
    %1 = vector.broadcast %cst : f32 to vector<288x8xf32>
    %2 = vector.extract_strided_slice %0 {offsets = [0, 0], sizes = [288, 8], strides = [1, 1]} : vector<328x8xf32> to vector<288x8xf32>
    %c0_1 = arith.constant 0 : index
    %c0_2 = arith.constant 0 : index
    %c0_3 = arith.constant 0 : index
    %3 = vector.load %arg1[%c0_1, %c0_2, %c0_3] : memref<9x8x8xf32, #tpu.memory_space<vmem>>, vector<1x8x8xf32>
    %4 = vector.shape_cast %3 : vector<1x8x8xf32> to vector<8x8xf32>
    %cst_4 = arith.constant dense<0.000000e+00> : vector<288x8xf32>
    %5 = tpu.matmul %2, %4, %cst_4 {dimension_numbers = #tpu.dot_dimension_numbers<[1], [0], [0], [1], [0, 0, 1, 1], [], []>} : vector<288x8xf32>, vector<8x8xf32>, vector<288x8xf32> -> vector<288x8xf32>
    %6 = arith.addf %1, %5 : vector<288x8xf32>
    %7 = vector.extract_strided_slice %0 {offsets = [1, 0], sizes = [288, 8], strides = [1, 1]} : vector<328x8xf32> to vector<288x8xf32>
    %c1 = arith.constant 1 : index
    %c0_5 = arith.constant 0 : index
    %c0_6 = arith.constant 0 : index
    %8 = vector.load %arg1[%c1, %c0_5, %c0_6] : memref<9x8x8xf32, #tpu.memory_space<vmem>>, vector<1x8x8xf32>
    %9 = vector.shape_cast %8 : vector<1x8x8xf32> to vector<8x8xf32>
    %cst_7 = arith.constant dense<0.000000e+00> : vector<288x8xf32>
    %10 = tpu.matmul %7, %9, %cst_7 {dimension_numbers = #tpu.dot_dimension_numbers<[1], [0], [0], [1], [0, 0, 1, 1], [], []>} : vector<288x8xf32>, vector<8x8xf32>, vector<288x8xf32> -> vector<288x8xf32>
    %11 = arith.addf %6, %10 : vector<288x8xf32>
    %12 = vector.extract_strided_slice %0 {offsets = [2, 0], sizes = [288, 8], strides = [1, 1]} : vector<328x8xf32> to vector<288x8xf32>
    %c2 = arith.constant 2 : index
    %c0_8 = arith.constant 0 : index
    %c0_9 = arith.constant 0 : index
    %13 = vector.load %arg1[%c2, %c0_8, %c0_9] : memref<9x8x8xf32, #tpu.memory_space<vmem>>, vector<1x8x8xf32>
    %14 = vector.shape_cast %13 : vector<1x8x8xf32> to vector<8x8xf32>
    %cst_10 = arith.constant dense<0.000000e+00> : vector<288x8xf32>
    %15 = tpu.matmul %12, %14, %cst_10 {dimension_numbers = #tpu.dot_dimension_numbers<[1], [0], [0], [1], [0, 0, 1, 1], [], []>} : vector<288x8xf32>, vector<8x8xf32>, vector<288x8xf32> -> vector<288x8xf32>
    %16 = arith.addf %11, %15 : vector<288x8xf32>
    %17 = vector.extract_strided_slice %0 {offsets = [18, 0], sizes = [288, 8], strides = [1, 1]} : vector<328x8xf32> to vector<288x8xf32>
    %c3 = arith.constant 3 : index
    %c0_11 = arith.constant 0 : index
    %c0_12 = arith.constant 0 : index
    %18 = vector.load %arg1[%c3, %c0_11, %c0_12] : memref<9x8x8xf32, #tpu.memory_space<vmem>>, vector<1x8x8xf32>
    %19 = vector.shape_cast %18 : vector<1x8x8xf32> to vector<8x8xf32>
    %cst_13 = arith.constant dense<0.000000e+00> : vector<288x8xf32>
    %20 = tpu.matmul %17, %19, %cst_13 {dimension_numbers = #tpu.dot_dimension_numbers<[1], [0], [0], [1], [0, 0, 1, 1], [], []>} : vector<288x8xf32>, vector<8x8xf32>, vector<288x8xf32> -> vector<288x8xf32>
    %21 = arith.addf %16, %20 : vector<288x8xf32>
    %22 = vector.extract_strided_slice %0 {offsets = [19, 0], sizes = [288, 8], strides = [1, 1]} : vector<328x8xf32> to vector<288x8xf32>
    %c4 = arith.constant 4 : index
    %c0_14 = arith.constant 0 : index
    %c0_15 = arith.constant 0 : index
    %23 = vector.load %arg1[%c4, %c0_14, %c0_15] : memref<9x8x8xf32, #tpu.memory_space<vmem>>, vector<1x8x8xf32>
    %24 = vector.shape_cast %23 : vector<1x8x8xf32> to vector<8x8xf32>
    %cst_16 = arith.constant dense<0.000000e+00> : vector<288x8xf32>
    %25 = tpu.matmul %22, %24, %cst_16 {dimension_numbers = #tpu.dot_dimension_numbers<[1], [0], [0], [1], [0, 0, 1, 1], [], []>} : vector<288x8xf32>, vector<8x8xf32>, vector<288x8xf32> -> vector<288x8xf32>
    %26 = arith.addf %21, %25 : vector<288x8xf32>
    %27 = vector.extract_strided_slice %0 {offsets = [20, 0], sizes = [288, 8], strides = [1, 1]} : vector<328x8xf32> to vector<288x8xf32>
    %c5 = arith.constant 5 : index
    %c0_17 = arith.constant 0 : index
    %c0_18 = arith.constant 0 : index
    %28 = vector.load %arg1[%c5, %c0_17, %c0_18] : memref<9x8x8xf32, #tpu.memory_space<vmem>>, vector<1x8x8xf32>
    %29 = vector.shape_cast %28 : vector<1x8x8xf32> to vector<8x8xf32>
    %cst_19 = arith.constant dense<0.000000e+00> : vector<288x8xf32>
    %30 = tpu.matmul %27, %29, %cst_19 {dimension_numbers = #tpu.dot_dimension_numbers<[1], [0], [0], [1], [0, 0, 1, 1], [], []>} : vector<288x8xf32>, vector<8x8xf32>, vector<288x8xf32> -> vector<288x8xf32>
    %31 = arith.addf %26, %30 : vector<288x8xf32>
    %32 = vector.extract_strided_slice %0 {offsets = [36, 0], sizes = [288, 8], strides = [1, 1]} : vector<328x8xf32> to vector<288x8xf32>
    %c6 = arith.constant 6 : index
    %c0_20 = arith.constant 0 : index
    %c0_21 = arith.constant 0 : index
    %33 = vector.load %arg1[%c6, %c0_20, %c0_21] : memref<9x8x8xf32, #tpu.memory_space<vmem>>, vector<1x8x8xf32>
    %34 = vector.shape_cast %33 : vector<1x8x8xf32> to vector<8x8xf32>
    %cst_22 = arith.constant dense<0.000000e+00> : vector<288x8xf32>
    %35 = tpu.matmul %32, %34, %cst_22 {dimension_numbers = #tpu.dot_dimension_numbers<[1], [0], [0], [1], [0, 0, 1, 1], [], []>} : vector<288x8xf32>, vector<8x8xf32>, vector<288x8xf32> -> vector<288x8xf32>
    %36 = arith.addf %31, %35 : vector<288x8xf32>
    %37 = vector.extract_strided_slice %0 {offsets = [37, 0], sizes = [288, 8], strides = [1, 1]} : vector<328x8xf32> to vector<288x8xf32>
    %c7 = arith.constant 7 : index
    %c0_23 = arith.constant 0 : index
    %c0_24 = arith.constant 0 : index
    %38 = vector.load %arg1[%c7, %c0_23, %c0_24] : memref<9x8x8xf32, #tpu.memory_space<vmem>>, vector<1x8x8xf32>
    %39 = vector.shape_cast %38 : vector<1x8x8xf32> to vector<8x8xf32>
    %cst_25 = arith.constant dense<0.000000e+00> : vector<288x8xf32>
    %40 = tpu.matmul %37, %39, %cst_25 {dimension_numbers = #tpu.dot_dimension_numbers<[1], [0], [0], [1], [0, 0, 1, 1], [], []>} : vector<288x8xf32>, vector<8x8xf32>, vector<288x8xf32> -> vector<288x8xf32>
    %41 = arith.addf %36, %40 : vector<288x8xf32>
    %42 = vector.extract_strided_slice %0 {offsets = [38, 0], sizes = [288, 8], strides = [1, 1]} : vector<328x8xf32> to vector<288x8xf32>
    %c8 = arith.constant 8 : index
    %c0_26 = arith.constant 0 : index
    %c0_27 = arith.constant 0 : index
    %43 = vector.load %arg1[%c8, %c0_26, %c0_27] : memref<9x8x8xf32, #tpu.memory_space<vmem>>, vector<1x8x8xf32>
    %44 = vector.shape_cast %43 : vector<1x8x8xf32> to vector<8x8xf32>
    %cst_28 = arith.constant dense<0.000000e+00> : vector<288x8xf32>
    %45 = tpu.matmul %42, %44, %cst_28 {dimension_numbers = #tpu.dot_dimension_numbers<[1], [0], [0], [1], [0, 0, 1, 1], [], []>} : vector<288x8xf32>, vector<8x8xf32>, vector<288x8xf32> -> vector<288x8xf32>
    %46 = arith.addf %41, %45 : vector<288x8xf32>
    %c0_29 = arith.constant 0 : index
    %c0_30 = arith.constant 0 : index
    %47 = vector.load %arg2[%c0_29, %c0_30] : memref<1x8xf32, #tpu.memory_space<vmem>>, vector<1x8xf32>
    %48 = vector.broadcast %47 : vector<1x8xf32> to vector<288x8xf32>
    %49 = arith.addf %46, %48 : vector<288x8xf32>
    %c0_31 = arith.constant 0 : index
    %c0_32 = arith.constant 0 : index
    %50 = vector.load %arg5[%c0_31, %c0_32] : memref<288x8xf32, #tpu.memory_space<vmem>>, vector<288x8xf32>
    tpu.vector_store %arg5[%c0_31, %c0_32], %49 {strides = array<i32>} : memref<288x8xf32, #tpu.memory_space<vmem>>, vector<288x8xf32>,
    %c0_33 = arith.constant 0 : index
    %c0_34 = arith.constant 0 : index
    %51 = vector.load %arg3[%c0_33, %c0_34] : memref<288x1xf32, #tpu.memory_space<vmem>>, vector<288x1xf32>
    %52 = vector.broadcast %51 : vector<288x1xf32> to vector<288x8xf32>
    %53 = arith.mulf %49, %52 : vector<288x8xf32>
    %cst_35 = arith.constant dense<0.000000e+00> : vector<8xf32>
    %54 = vector.multi_reduction <add>, %53, %cst_35 [0] : vector<288x8xf32> to vector<8xf32>
    %55 = vector.shape_cast %54 : vector<8xf32> to vector<1x8xf32>
    %c0_36 = arith.constant 0 : index
    %c0_37 = arith.constant 0 : index
    %c0_38 = arith.constant 0 : index
    %56 = vector.load %arg6[%c0_36, %c0_37, %c0_38] : memref<1x2x8xf32, #tpu.memory_space<vmem>>, vector<1x1x8xf32>
    %57 = vector.shape_cast %56 : vector<1x1x8xf32> to vector<1x8xf32>
    %58 = vector.shape_cast %55 : vector<1x8xf32> to vector<1x1x8xf32>
    tpu.vector_store %arg6[%c0_36, %c0_37, %c0_38], %58 {strides = array<i32>} : memref<1x2x8xf32, #tpu.memory_space<vmem>>, vector<1x1x8xf32>,
    %59 = arith.mulf %49, %49 : vector<288x8xf32>
    %60 = vector.broadcast %51 : vector<288x1xf32> to vector<288x8xf32>
    %61 = arith.mulf %59, %60 : vector<288x8xf32>
    %cst_39 = arith.constant dense<0.000000e+00> : vector<8xf32>
    %62 = vector.multi_reduction <add>, %61, %cst_39 [0] : vector<288x8xf32> to vector<8xf32>
    %63 = vector.shape_cast %62 : vector<8xf32> to vector<1x8xf32>
    %c0_40 = arith.constant 0 : index
    %c1_41 = arith.constant 1 : index
    %c0_42 = arith.constant 0 : index
    %64 = vector.load %arg6[%c0_40, %c1_41, %c0_42] : memref<1x2x8xf32, #tpu.memory_space<vmem>>, vector<1x1x8xf32>
    %65 = vector.shape_cast %64 : vector<1x1x8xf32> to vector<1x8xf32>
    %66 = vector.shape_cast %63 : vector<1x8xf32> to vector<1x1x8xf32>
    tpu.vector_store %arg6[%c0_40, %c1_41, %c0_42], %66 {strides = array<i32>} : memref<1x2x8xf32, #tpu.memory_space<vmem>>, vector<1x1x8xf32>,
    return
  }
  func.func @transform_0(%arg0: i32) -> (i32, i32, i32) {
    %c0_i32 = arith.constant 0 : i32
    %c0_i32_0 = arith.constant 0 : i32
    %c0_i32_1 = arith.constant 0 : i32
    %c0_i32_2 = arith.constant 0 : i32
    return %c0_i32, %c0_i32_0, %c0_i32_1 : i32, i32, i32
  }
  func.func @transform_1(%arg0: i32) -> (i32, i32) {
    %c0_i32 = arith.constant 0 : i32
    %c0_i32_0 = arith.constant 0 : i32
    %c0_i32_1 = arith.constant 0 : i32
    return %c0_i32, %c0_i32_0 : i32, i32
  }
  func.func @transform_2(%arg0: i32) -> (i32, i32) {
    %c0_i32 = arith.constant 0 : i32
    %c0_i32_0 = arith.constant 0 : i32
    %c0_i32_1 = arith.constant 0 : i32
    return %c0_i32, %c0_i32_0 : i32, i32
  }
  func.func @transform_3(%arg0: i32) -> (i32, i32) {
    %c0_i32 = arith.constant 0 : i32
    %c0_i32_0 = arith.constant 0 : i32
    return %arg0, %c0_i32 : i32, i32
  }
  func.func @transform_4(%arg0: i32) -> (i32, i32) {
    %c0_i32 = arith.constant 0 : i32
    %c0_i32_0 = arith.constant 0 : i32
    return %arg0, %c0_i32 : i32, i32
  }
  func.func @transform_5(%arg0: i32) -> (i32, i32, i32) {
    %c0_i32 = arith.constant 0 : i32
    %c0_i32_0 = arith.constant 0 : i32
    %c0_i32_1 = arith.constant 0 : i32
    return %arg0, %c0_i32, %c0_i32_0 : i32, i32, i32
  }
}

module attributes {stable_mosaic.version = 11 : i64} {
  func.func @_bn_relu_pool_kernel(%arg0: i32, %arg1: memref<1x8xf32, #tpu.memory_space<vmem>>, %arg2: memref<1x8xf32, #tpu.memory_space<vmem>>, %arg3: memref<16x2x8x8xf32, #tpu.memory_space<vmem>>, %arg4: memref<16x2x8x8xf32, #tpu.memory_space<vmem>>, %arg5: memref<16x8x8xf32, #tpu.memory_space<vmem>>) attributes {dimension_semantics = [#tpu.dimension_semantics<parallel>], iteration_bounds = array<i64: 1>, scalar_prefetch = 0 : i64, scratch_operands = 0 : i64, tpu.core_type = #tpu.core_type<tc>, window_params = [{pipeline_mode = #tpu.pipeline_mode<synchronous>, transform_indices = @transform_0, window_bounds = array<i64: 1, 8>}, {pipeline_mode = #tpu.pipeline_mode<synchronous>, transform_indices = @transform_1, window_bounds = array<i64: 1, 8>}, {transform_indices = @transform_2, window_bounds = array<i64: 16, 2, 8, 8>}, {transform_indices = @transform_3, window_bounds = array<i64: 16, 2, 8, 8>}, {transform_indices = @transform_4, window_bounds = array<i64: 16, 8, 8>}]} {
    %c0 = arith.constant 0 : index
    %c0_0 = arith.constant 0 : index
    %0 = vector.load %arg1[%c0, %c0_0] : memref<1x8xf32, #tpu.memory_space<vmem>>, vector<1x8xf32>
    %c0_1 = arith.constant 0 : index
    %c0_2 = arith.constant 0 : index
    %1 = vector.load %arg2[%c0_1, %c0_2] : memref<1x8xf32, #tpu.memory_space<vmem>>, vector<1x8xf32>
    %c0_3 = arith.constant 0 : index
    %c0_4 = arith.constant 0 : index
    %c0_5 = arith.constant 0 : index
    %c0_6 = arith.constant 0 : index
    %2 = vector.load %arg3[%c0_3, %c0_4, %c0_5, %c0_6] : memref<16x2x8x8xf32, #tpu.memory_space<vmem>>, vector<16x2x8x8xf32>
    %3 = vector.shape_cast %0 : vector<1x8xf32> to vector<1x1x1x8xf32>
    %4 = vector.broadcast %3 : vector<1x1x1x8xf32> to vector<16x2x8x8xf32>
    %5 = arith.mulf %2, %4 : vector<16x2x8x8xf32>
    %6 = vector.shape_cast %1 : vector<1x8xf32> to vector<1x1x1x8xf32>
    %7 = vector.broadcast %6 : vector<1x1x1x8xf32> to vector<16x2x8x8xf32>
    %8 = arith.addf %5, %7 : vector<16x2x8x8xf32>
    %cst = arith.constant 0.000000e+00 : f32
    %9 = vector.broadcast %cst : f32 to vector<16x2x8x8xf32>
    %10 = arith.maximumf %8, %9 : vector<16x2x8x8xf32>
    %c0_7 = arith.constant 0 : index
    %c0_8 = arith.constant 0 : index
    %c0_9 = arith.constant 0 : index
    %c0_10 = arith.constant 0 : index
    %11 = vector.load %arg4[%c0_7, %c0_8, %c0_9, %c0_10] : memref<16x2x8x8xf32, #tpu.memory_space<vmem>>, vector<16x2x8x8xf32>
    %12 = vector.shape_cast %0 : vector<1x8xf32> to vector<1x1x1x8xf32>
    %13 = vector.broadcast %12 : vector<1x1x1x8xf32> to vector<16x2x8x8xf32>
    %14 = arith.mulf %11, %13 : vector<16x2x8x8xf32>
    %15 = vector.shape_cast %1 : vector<1x8xf32> to vector<1x1x1x8xf32>
    %16 = vector.broadcast %15 : vector<1x1x1x8xf32> to vector<16x2x8x8xf32>
    %17 = arith.addf %14, %16 : vector<16x2x8x8xf32>
    %cst_11 = arith.constant 0.000000e+00 : f32
    %18 = vector.broadcast %cst_11 : f32 to vector<16x2x8x8xf32>
    %19 = arith.maximumf %17, %18 : vector<16x2x8x8xf32>
    %20 = vector.extract_strided_slice %10 {offsets = [0, 0, 0, 0], sizes = [16, 1, 8, 8], strides = [1, 1, 1, 1]} : vector<16x2x8x8xf32> to vector<16x1x8x8xf32>
    %21 = vector.shape_cast %20 : vector<16x1x8x8xf32> to vector<16x8x8xf32>
    %22 = vector.extract_strided_slice %10 {offsets = [0, 1, 0, 0], sizes = [16, 1, 8, 8], strides = [1, 1, 1, 1]} : vector<16x2x8x8xf32> to vector<16x1x8x8xf32>
    %23 = vector.shape_cast %22 : vector<16x1x8x8xf32> to vector<16x8x8xf32>
    %24 = arith.maximumf %21, %23 : vector<16x8x8xf32>
    %25 = vector.extract_strided_slice %19 {offsets = [0, 0, 0, 0], sizes = [16, 1, 8, 8], strides = [1, 1, 1, 1]} : vector<16x2x8x8xf32> to vector<16x1x8x8xf32>
    %26 = vector.shape_cast %25 : vector<16x1x8x8xf32> to vector<16x8x8xf32>
    %27 = vector.extract_strided_slice %19 {offsets = [0, 1, 0, 0], sizes = [16, 1, 8, 8], strides = [1, 1, 1, 1]} : vector<16x2x8x8xf32> to vector<16x1x8x8xf32>
    %28 = vector.shape_cast %27 : vector<16x1x8x8xf32> to vector<16x8x8xf32>
    %29 = arith.maximumf %26, %28 : vector<16x8x8xf32>
    %30 = arith.maximumf %24, %29 : vector<16x8x8xf32>
    %c0_12 = arith.constant 0 : index
    %c0_13 = arith.constant 0 : index
    %c0_14 = arith.constant 0 : index
    %31 = vector.load %arg5[%c0_12, %c0_13, %c0_14] : memref<16x8x8xf32, #tpu.memory_space<vmem>>, vector<16x8x8xf32>
    tpu.vector_store %arg5[%c0_12, %c0_13, %c0_14], %30 {strides = array<i32>} : memref<16x8x8xf32, #tpu.memory_space<vmem>>, vector<16x8x8xf32>,
    return
  }
  func.func @transform_0(%arg0: i32) -> (i32, i32) {
    %c0_i32 = arith.constant 0 : i32
    %c0_i32_0 = arith.constant 0 : i32
    %c0_i32_1 = arith.constant 0 : i32
    return %c0_i32, %c0_i32_0 : i32, i32
  }
  func.func @transform_1(%arg0: i32) -> (i32, i32) {
    %c0_i32 = arith.constant 0 : i32
    %c0_i32_0 = arith.constant 0 : i32
    %c0_i32_1 = arith.constant 0 : i32
    return %c0_i32, %c0_i32_0 : i32, i32
  }
  func.func @transform_2(%arg0: i32) -> (i32, i32, i32, i32) {
    %c0_i32 = arith.constant 0 : i32
    %c0_i32_0 = arith.constant 0 : i32
    %c0_i32_1 = arith.constant 0 : i32
    %c0_i32_2 = arith.constant 0 : i32
    return %arg0, %c0_i32, %c0_i32_0, %c0_i32_1 : i32, i32, i32, i32
  }
  func.func @transform_3(%arg0: i32) -> (i32, i32, i32, i32) {
    %c0_i32 = arith.constant 0 : i32
    %c0_i32_0 = arith.constant 0 : i32
    %c0_i32_1 = arith.constant 0 : i32
    %c0_i32_2 = arith.constant 0 : i32
    return %arg0, %c0_i32, %c0_i32_0, %c0_i32_1 : i32, i32, i32, i32
  }
  func.func @transform_4(%arg0: i32) -> (i32, i32, i32) {
    %c0_i32 = arith.constant 0 : i32
    %c0_i32_0 = arith.constant 0 : i32
    %c0_i32_1 = arith.constant 0 : i32
    return %arg0, %c0_i32, %c0_i32_0 : i32, i32, i32
  }
}

</mosaic_0001>

<llo_original>
// kernel: downblock_forward.5
$region0: #{downblock_forward.5}
  #allocation0 [shape = 'u32[]', space=smem, size = 0x4, offset = 0x4, fixed_abs, tag = 'smem constant byte address 0x4 - core index']
  #allocation1 [shape = 'u32[144,128]{1,0:T(1,128)}', space=vmem, size = 0x12000, scoped, tag = 'internal scratch']
  %s0 = inlined_call_operand.vmem [shape: f32[1,8], index: 0, kind: input, shape index: {}]
  %s1 = inlined_call_operand.vmem [shape: f32[1,8], index: 1, kind: input, shape index: {}]
  %s2 = inlined_call_operand.vmem [shape: f32[16,2,8,8], index: 2, kind: input, shape index: {}]
  %s3 = inlined_call_operand.vmem [shape: f32[16,2,8,8], index: 3, kind: input, shape index: {}]
  %s4 = inlined_call_operand.vmem [shape: f32[16,8,8], index: 4, kind: output, shape index: {}]
  %s5 = sld [smem:[#allocation0]]
  $region26: #{downblock_forward.5} parent=0
    _
  %s7 = ssub.s32 1, %s5
  %s8 = scalar_select 0, %s7, %s5
  // Predicated region
  $region2: #{downblock_forward.5} parent=0 // pred_check
    _
  $region3: #{downblock_forward.5} parent=0 // pred_check_branch
    %10 = sbr.rel (0) target = $region5
  $region4: #{downblock_forward.5} parent=0 // pred_region
    _
  $region5: #{downblock_forward.5} parent=0 // pred_fallthru
    _
  // Predicated region
  $region6: #{downblock_forward.5} parent=0 // pred_check
    _
  $region7: #{downblock_forward.5} parent=0 // pred_check_branch
    %12 = sbr.rel (0) target = $region9
  $region8: #{downblock_forward.5} parent=0 // pred_region
    _
  $region9: #{downblock_forward.5} parent=0 // pred_fallthru
    _
  // Predicated region
  $region10: #{downblock_forward.5} parent=0 // pred_check
    _
  $region11: #{downblock_forward.5} parent=0 // pred_check_branch
    %14 = sbr.rel (0) target = $region13
  $region12: #{downblock_forward.5} parent=0 // pred_region
    _
  $region13: #{downblock_forward.5} parent=0 // pred_fallthru
    _
  // Predicated region
  $region14: #{downblock_forward.5} parent=0 // pred_check
    _
  $region15: #{downblock_forward.5} parent=0 // pred_check_branch
    %16 = sbr.rel (0) target = $region17
  $region16: #{downblock_forward.5} parent=0 // pred_region
    _
  $region17: #{downblock_forward.5} parent=0 // pred_fallthru
    _
  %v17 = vld [vmem:[%s0] sm:$0x1]
  %v18 = vld [vmem:[%s1] sm:$0x1]
  %v19 = vld [vmem:[%s2] sm:$0xff]
  %v20 = vld [vmem:[%s2 + $0x8] sm:$0xff]
  %v21 = vld [vmem:[%s2 + $0x10] sm:$0xff]
  %v22 = vld [vmem:[%s2 + $0x18] sm:$0xff]
  %v23 = vld [vmem:[%s2 + $0x20] sm:$0xff]
  %v24 = vld [vmem:[%s2 + $0x28] sm:$0xff]
  %v25 = vld [vmem:[%s2 + $0x30] sm:$0xff]
  %v26 = vld [vmem:[%s2 + $0x38] sm:$0xff]
  %v27 = vld [vmem:[%s2 + $0x40] sm:$0xff]
  %v28 = vld [vmem:[%s2 + $0x48] sm:$0xff]
  %v29 = vld [vmem:[%s2 + $0x50] sm:$0xff]
  %v30 = vld [vmem:[%s2 + $0x58] sm:$0xff]
  %v31 = vld [vmem:[%s2 + $0x60] sm:$0xff]
  %v32 = vld [vmem:[%s2 + $0x68] sm:$0xff]
  %v33 = vld [vmem:[%s2 + $0x70] sm:$0xff]
  %v34 = vld [vmem:[%s2 + $0x78] sm:$0xff]
  %v35 = vld [vmem:[%s2 + $0x80] sm:$0xff]
  %v36 = vld [vmem:[%s2 + $0x88] sm:$0xff]
  %v37 = vld [vmem:[%s2 + $0x90] sm:$0xff]
  %v38 = vld [vmem:[%s2 + $0x98] sm:$0xff]
  %v39 = vld [vmem:[%s2 + $0xa0] sm:$0xff]
  %v40 = vld [vmem:[%s2 + $0xa8] sm:$0xff]
  %v41 = vld [vmem:[%s2 + $0xb0] sm:$0xff]
  %v42 = vld [vmem:[%s2 + $0xb8] sm:$0xff]
  %v43 = vld [vmem:[%s2 + $0xc0] sm:$0xff]
  %v44 = vld [vmem:[%s2 + $0xc8] sm:$0xff]
  %v45 = vld [vmem:[%s2 + $0xd0] sm:$0xff]
  %v46 = vld [vmem:[%s2 + $0xd8] sm:$0xff]
  %v47 = vld [vmem:[%s2 + $0xe0] sm:$0xff]
  %v48 = vld [vmem:[%s2 + $0xe8] sm:$0xff]
  %v49 = vld [vmem:[%s2 + $0xf0] sm:$0xff]
  %v50 = vld [vmem:[%s2 + $0xf8] sm:$0xff]
  %v52 = vlaneseq
  %v53 = vshrl.u32 %v52, 7
  %v54 = vsub.s32 0, %v53
  %v55 = vrot.slane %v17, %v54
  %v57 = vmul.f32 %v19, %v55
  %v58 = vmul.f32 %v20, %v55
  %v59 = vmul.f32 %v21, %v55
  %v60 = vmul.f32 %v22, %v55
  %v61 = vmul.f32 %v23, %v55
  %v62 = vmul.f32 %v24, %v55
  %v63 = vmul.f32 %v25, %v55
  %v64 = vmul.f32 %v26, %v55
  %v65 = vmul.f32 %v27, %v55
  %v66 = vmul.f32 %v28, %v55
  %v67 = vmul.f32 %v29, %v55
  %v68 = vmul.f32 %v30, %v55
  %v69 = vmul.f32 %v31, %v55
  %v70 = vmul.f32 %v32, %v55
  %v71 = vmul.f32 %v33, %v55
  %v72 = vmul.f32 %v34, %v55
  %v73 = vmul.f32 %v35, %v55
  %v74 = vmul.f32 %v36, %v55
  %v75 = vmul.f32 %v37, %v55
  %v76 = vmul.f32 %v38, %v55
  %v77 = vmul.f32 %v39, %v55
  %v78 = vmul.f32 %v40, %v55
  %v79 = vmul.f32 %v41, %v55
  %v80 = vmul.f32 %v42, %v55
  %v81 = vmul.f32 %v43, %v55
  %v82 = vmul.f32 %v44, %v55
  %v83 = vmul.f32 %v45, %v55
  %v84 = vmul.f32 %v46, %v55
  %v85 = vmul.f32 %v47, %v55
  %v86 = vmul.f32 %v48, %v55
  %v87 = vmul.f32 %v49, %v55
  %v88 = vmul.f32 %v50, %v55
  %v90 = vlaneseq
  %v91 = vshrl.u32 %v90, 7
  %v92 = vsub.s32 0, %v91
  %v93 = vrot.slane %v18, %v92
  %v95 = vadd.f32 %v57, %v93
  %v96 = vadd.f32 %v58, %v93
  %v97 = vadd.f32 %v59, %v93
  %v98 = vadd.f32 %v60, %v93
  %v99 = vadd.f32 %v61, %v93
  %v100 = vadd.f32 %v62, %v93
  %v101 = vadd.f32 %v63, %v93
  %v102 = vadd.f32 %v64, %v93
  %v103 = vadd.f32 %v65, %v93
  %v104 = vadd.f32 %v66, %v93
  %v105 = vadd.f32 %v67, %v93
  %v106 = vadd.f32 %v68, %v93
  %v107 = vadd.f32 %v69, %v93
  %v108 = vadd.f32 %v70, %v93
  %v109 = vadd.f32 %v71, %v93
  %v110 = vadd.f32 %v72, %v93
  %v111 = vadd.f32 %v73, %v93
  %v112 = vadd.f32 %v74, %v93
  %v113 = vadd.f32 %v75, %v93
  %v114 = vadd.f32 %v76, %v93
  %v115 = vadd.f32 %v77, %v93
  %v116 = vadd.f32 %v78, %v93
  %v117 = vadd.f32 %v79, %v93
  %v118 = vadd.f32 %v80, %v93
  %v119 = vadd.f32 %v81, %v93
  %v120 = vadd.f32 %v82, %v93
  %v121 = vadd.f32 %v83, %v93
  %v122 = vadd.f32 %v84, %v93
  %v123 = vadd.f32 %v85, %v93
  %v124 = vadd.f32 %v86, %v93
  %v125 = vadd.f32 %v87, %v93
  %v126 = vadd.f32 %v88, %v93
  %v127 = vmax.f32 %v95, 0.0
  %v128 = vmax.f32 %v96, 0.0
  %v129 = vmax.f32 %v97, 0.0
  %v130 = vmax.f32 %v98, 0.0
  %v131 = vmax.f32 %v99, 0.0
  %v132 = vmax.f32 %v100, 0.0
  %v133 = vmax.f32 %v101, 0.0
  %v134 = vmax.f32 %v102, 0.0
  %v135 = vmax.f32 %v103, 0.0
  %v136 = vmax.f32 %v104, 0.0
  %v137 = vmax.f32 %v105, 0.0
  %v138 = vmax.f32 %v106, 0.0
  %v139 = vmax.f32 %v107, 0.0
  %v140 = vmax.f32 %v108, 0.0
  %v141 = vmax.f32 %v109, 0.0
  %v142 = vmax.f32 %v110, 0.0
  %v143 = vmax.f32 %v111, 0.0
  %v144 = vmax.f32 %v112, 0.0
  %v145 = vmax.f32 %v113, 0.0
  %v146 = vmax.f32 %v114, 0.0
  %v147 = vmax.f32 %v115, 0.0
  %v148 = vmax.f32 %v116, 0.0
  %v149 = vmax.f32 %v117, 0.0
  %v150 = vmax.f32 %v118, 0.0
  %v151 = vmax.f32 %v119, 0.0
  %v152 = vmax.f32 %v120, 0.0
  %v153 = vmax.f32 %v121, 0.0
  %v154 = vmax.f32 %v122, 0.0
  %v155 = vmax.f32 %v123, 0.0
  %v156 = vmax.f32 %v124, 0.0
  %v157 = vmax.f32 %v125, 0.0
  %v158 = vmax.f32 %v126, 0.0
  %v159 = vld [vmem:[%s3] sm:$0xff]
  %v160 = vld [vmem:[%s3 + $0x8] sm:$0xff]
  %v161 = vld [vmem:[%s3 + $0x10] sm:$0xff]
  %v162 = vld [vmem:[%s3 + $0x18] sm:$0xff]
  %v163 = vld [vmem:[%s3 + $0x20] sm:$0xff]
  %v164 = vld [vmem:[%s3 + $0x28] sm:$0xff]
  %v165 = vld [vmem:[%s3 + $0x30] sm:$0xff]
  %v166 = vld [vmem:[%s3 + $0x38] sm:$0xff]
  %v167 = vld [vmem:[%s3 + $0x40] sm:$0xff]
  %v168 = vld [vmem:[%s3 + $0x48] sm:$0xff]
  %v169 = vld [vmem:[%s3 + $0x50] sm:$0xff]
  %v170 = vld [vmem:[%s3 + $0x58] sm:$0xff]
  %v171 = vld [vmem:[%s3 + $0x60] sm:$0xff]
  %v172 = vld [vmem:[%s3 + $0x68] sm:$0xff]
  %v173 = vld [vmem:[%s3 + $0x70] sm:$0xff]
  %v174 = vld [vmem:[%s3 + $0x78] sm:$0xff]
  %v175 = vld [vmem:[%s3 + $0x80] sm:$0xff]
  %v176 = vld [vmem:[%s3 + $0x88] sm:$0xff]
  %v177 = vld [vmem:[%s3 + $0x90] sm:$0xff]
  %v178 = vld [vmem:[%s3 + $0x98] sm:$0xff]
  %v179 = vld [vmem:[%s3 + $0xa0] sm:$0xff]
  %v180 = vld [vmem:[%s3 + $0xa8] sm:$0xff]
  %v181 = vld [vmem:[%s3 + $0xb0] sm:$0xff]
  %v182 = vld [vmem:[%s3 + $0xb8] sm:$0xff]
  %v183 = vld [vmem:[%s3 + $0xc0] sm:$0xff]
  %v184 = vld [vmem:[%s3 + $0xc8] sm:$0xff]
  %v185 = vld [vmem:[%s3 + $0xd0] sm:$0xff]
  %v186 = vld [vmem:[%s3 + $0xd8] sm:$0xff]
  %v187 = vld [vmem:[%s3 + $0xe0] sm:$0xff]
  %v188 = vld [vmem:[%s3 + $0xe8] sm:$0xff]
  %v189 = vld [vmem:[%s3 + $0xf0] sm:$0xff]
  %v190 = vld [vmem:[%s3 + $0xf8] sm:$0xff]
  %v191 = vmul.f32 %v159, %v55
  %v192 = vmul.f32 %v160, %v55
  %v193 = vmul.f32 %v161, %v55
  %v194 = vmul.f32 %v162, %v55
  %v195 = vmul.f32 %v163, %v55
  %v196 = vmul.f32 %v164, %v55
  %v197 = vmul.f32 %v165, %v55
  %v198 = vmul.f32 %v166, %v55
  %v199 = vmul.f32 %v167, %v55
  %v200 = vmul.f32 %v168, %v55
  %v201 = vmul.f32 %v169, %v55
  %v202 = vmul.f32 %v170, %v55
  %v203 = vmul.f32 %v171, %v55
  %v204 = vmul.f32 %v172, %v55
  %v205 = vmul.f32 %v173, %v55
  %v206 = vmul.f32 %v174, %v55
  %v207 = vmul.f32 %v175, %v55
  %v208 = vmul.f32 %v176, %v55
  %v209 = vmul.f32 %v177, %v55
  %v210 = vmul.f32 %v178, %v55
  %v211 = vmul.f32 %v179, %v55
  %v212 = vmul.f32 %v180, %v55
  %v213 = vmul.f32 %v181, %v55
  %v214 = vmul.f32 %v182, %v55
  %v215 = vmul.f32 %v183, %v55
  %v216 = vmul.f32 %v184, %v55
  %v217 = vmul.f32 %v185, %v55
  %v218 = vmul.f32 %v186, %v55
  %v219 = vmul.f32 %v187, %v55
  %v220 = vmul.f32 %v188, %v55
  %v221 = vmul.f32 %v189, %v55
  %v222 = vmul.f32 %v190, %v55
  %v223 = vadd.f32 %v191, %v93
  %v224 = vadd.f32 %v192, %v93
  %v225 = vadd.f32 %v193, %v93
  %v226 = vadd.f32 %v194, %v93
  %v227 = vadd.f32 %v195, %v93
  %v228 = vadd.f32 %v196, %v93
  %v229 = vadd.f32 %v197, %v93
  %v230 = vadd.f32 %v198, %v93
  %v231 = vadd.f32 %v199, %v93
  %v232 = vadd.f32 %v200, %v93
  %v233 = vadd.f32 %v201, %v93
  %v234 = vadd.f32 %v202, %v93
  %v235 = vadd.f32 %v203, %v93
  %v236 = vadd.f32 %v204, %v93
  %v237 = vadd.f32 %v205, %v93
  %v238 = vadd.f32 %v206, %v93
  %v239 = vadd.f32 %v207, %v93
  %v240 = vadd.f32 %v208, %v93
  %v241 = vadd.f32 %v209, %v93
  %v242 = vadd.f32 %v210, %v93
  %v243 = vadd.f32 %v211, %v93
  %v244 = vadd.f32 %v212, %v93
  %v245 = vadd.f32 %v213, %v93
  %v246 = vadd.f32 %v214, %v93
  %v247 = vadd.f32 %v215, %v93
  %v248 = vadd.f32 %v216, %v93
  %v249 = vadd.f32 %v217, %v93
  %v250 = vadd.f32 %v218, %v93
  %v251 = vadd.f32 %v219, %v93
  %v252 = vadd.f32 %v220, %v93
  %v253 = vadd.f32 %v221, %v93
  %v254 = vadd.f32 %v222, %v93
  %v255 = vmax.f32 %v223, 0.0
  %v256 = vmax.f32 %v224, 0.0
  %v257 = vmax.f32 %v225, 0.0
  %v258 = vmax.f32 %v226, 0.0
  %v259 = vmax.f32 %v227, 0.0
  %v260 = vmax.f32 %v228, 0.0
  %v261 = vmax.f32 %v229, 0.0
  %v262 = vmax.f32 %v230, 0.0
  %v263 = vmax.f32 %v231, 0.0
  %v264 = vmax.f32 %v232, 0.0
  %v265 = vmax.f32 %v233, 0.0
  %v266 = vmax.f32 %v234, 0.0
  %v267 = vmax.f32 %v235, 0.0
  %v268 = vmax.f32 %v236, 0.0
  %v269 = vmax.f32 %v237, 0.0
  %v270 = vmax.f32 %v238, 0.0
  %v271 = vmax.f32 %v239, 0.0
  %v272 = vmax.f32 %v240, 0.0
  %v273 = vmax.f32 %v241, 0.0
  %v274 = vmax.f32 %v242, 0.0
  %v275 = vmax.f32 %v243, 0.0
  %v276 = vmax.f32 %v244, 0.0
  %v277 = vmax.f32 %v245, 0.0
  %v278 = vmax.f32 %v246, 0.0
  %v279 = vmax.f32 %v247, 0.0
  %v280 = vmax.f32 %v248, 0.0
  %v281 = vmax.f32 %v249, 0.0
  %v282 = vmax.f32 %v250, 0.0
  %v283 = vmax.f32 %v251, 0.0
  %v284 = vmax.f32 %v252, 0.0
  %v285 = vmax.f32 %v253, 0.0
  %v286 = vmax.f32 %v254, 0.0
  %v287 = vmax.f32 %v127, %v128
  %v288 = vmax.f32 %v129, %v130
  %v289 = vmax.f32 %v131, %v132
  %v290 = vmax.f32 %v133, %v134
  %v291 = vmax.f32 %v135, %v136
  %v292 = vmax.f32 %v137, %v138
  %v293 = vmax.f32 %v139, %v140
  %v294 = vmax.f32 %v141, %v142
  %v295 = vmax.f32 %v143, %v144
  %v296 = vmax.f32 %v145, %v146
  %v297 = vmax.f32 %v147, %v148
  %v298 = vmax.f32 %v149, %v150
  %v299 = vmax.f32 %v151, %v152
  %v300 = vmax.f32 %v153, %v154
  %v301 = vmax.f32 %v155, %v156
  %v302 = vmax.f32 %v157, %v158
  %v303 = vmax.f32 %v255, %v256
  %v304 = vmax.f32 %v257, %v258
  %v305 = vmax.f32 %v259, %v260
  %v306 = vmax.f32 %v261, %v262
  %v307 = vmax.f32 %v263, %v264
  %v308 = vmax.f32 %v265, %v266
  %v309 = vmax.f32 %v267, %v268
  %v310 = vmax.f32 %v269, %v270
  %v311 = vmax.f32 %v271, %v272
  %v312 = vmax.f32 %v273, %v274
  %v313 = vmax.f32 %v275, %v276
  %v314 = vmax.f32 %v277, %v278
  %v315 = vmax.f32 %v279, %v280
  %v316 = vmax.f32 %v281, %v282
  %v317 = vmax.f32 %v283, %v284
  %v318 = vmax.f32 %v285, %v286
  %v319 = vmax.f32 %v287, %v303
  %v320 = vmax.f32 %v288, %v304
  %v321 = vmax.f32 %v289, %v305
  %v322 = vmax.f32 %v290, %v306
  %v323 = vmax.f32 %v291, %v307
  %v324 = vmax.f32 %v292, %v308
  %v325 = vmax.f32 %v293, %v309
  %v326 = vmax.f32 %v294, %v310
  %v327 = vmax.f32 %v295, %v311
  %v328 = vmax.f32 %v296, %v312
  %v329 = vmax.f32 %v297, %v313
  %v330 = vmax.f32 %v298, %v314
  %v331 = vmax.f32 %v299, %v315
  %v332 = vmax.f32 %v300, %v316
  %v333 = vmax.f32 %v301, %v317
  %v334 = vmax.f32 %v302, %v318
  %vm335 = vcmask 64512
  %336 = vst.msk [vmem:[%s4] sm:$0xff] %vm335, %v319
  %337 = vst.msk [vmem:[%s4 + $0x8] sm:$0xff] %vm335, %v320
  %338 = vst.msk [vmem:[%s4 + $0x10] sm:$0xff] %vm335, %v321
  %339 = vst.msk [vmem:[%s4 + $0x18] sm:$0xff] %vm335, %v322
  %340 = vst.msk [vmem:[%s4 + $0x20] sm:$0xff] %vm335, %v323
  %341 = vst.msk [vmem:[%s4 + $0x28] sm:$0xff] %vm335, %v324
  %342 = vst.msk [vmem:[%s4 + $0x30] sm:$0xff] %vm335, %v325
  %343 = vst.msk [vmem:[%s4 + $0x38] sm:$0xff] %vm335, %v326
  %344 = vst.msk [vmem:[%s4 + $0x40] sm:$0xff] %vm335, %v327
  %345 = vst.msk [vmem:[%s4 + $0x48] sm:$0xff] %vm335, %v328
  %346 = vst.msk [vmem:[%s4 + $0x50] sm:$0xff] %vm335, %v329
  %347 = vst.msk [vmem:[%s4 + $0x58] sm:$0xff] %vm335, %v330
  %348 = vst.msk [vmem:[%s4 + $0x60] sm:$0xff] %vm335, %v331
  %349 = vst.msk [vmem:[%s4 + $0x68] sm:$0xff] %vm335, %v332
  %350 = vst.msk [vmem:[%s4 + $0x70] sm:$0xff] %vm335, %v333
  %351 = vst.msk [vmem:[%s4 + $0x78] sm:$0xff] %vm335, %v334
  // Predicated region
  $region18: #{downblock_forward.5} parent=0 // pred_check
    _
  $region19: #{downblock_forward.5} parent=0 // pred_check_branch
    %353 = sbr.rel (0) target = $region21
  $region20: #{downblock_forward.5} parent=0 // pred_region
    _
  $region21: #{downblock_forward.5} parent=0 // pred_fallthru
    _
  // Predicated region
  $region22: #{downblock_forward.5} parent=0 // pred_check
    _
  $region23: #{downblock_forward.5} parent=0 // pred_check_branch
    %355 = sbr.rel (0) target = $region25
  $region24: #{downblock_forward.5} parent=0 // pred_region
    _
  $region25: #{downblock_forward.5} parent=0 // pred_fallthru
    _

// kernel: downblock_forward.3
$region0: #{downblock_forward.3}
  #allocation0 [shape = 'u32[]', space=smem, size = 0x4, offset = 0x4, fixed_abs, tag = 'smem constant byte address 0x4 - core index']
  #allocation1 [shape = 'u32[144,128]{1,0:T(1,128)}', space=vmem, size = 0x12000, scoped, tag = 'internal scratch']
  %s0 = inlined_call_operand.vmem [shape: f32[9,4,8], index: 0, kind: input, shape index: {}]
  %s1 = inlined_call_operand.vmem [shape: f32[1,8], index: 1, kind: input, shape index: {}]
  %s2 = inlined_call_operand.vmem [shape: f32[288,1], index: 2, kind: input, shape index: {}]
  %s3 = inlined_call_operand.vmem [shape: f32[656,4], index: 3, kind: input, shape index: {}]
  %s4 = inlined_call_operand.vmem [shape: f32[576,8], index: 4, kind: output, shape index: {0}]
  %s5 = inlined_call_operand.vmem [shape: f32[2,2,8], index: 5, kind: output, shape index: {1}]
  %6 = xla_tuple %s4, %s5
  %s7 = sld [smem:[#allocation0]]
  $region57: #{downblock_forward.3} parent=0
    _
  %s9 = ssub.s32 1, %s7
  %s10 = scalar_select 0, %s9, %s7
  loop: start=0, step=1, limit=4
  $region2: #{downblock_forward.3} parent=0 // loop_pre_header
    _
  $region3: #{downblock_forward.3} parent=0 // loop_header
    %s12 = sphi 0, %s16
    %p13 = scmp.ge.s32.totalorder %s12, 4
    %s20 = sphi 0, %s20
    %s22 = sphi 0, %s20
    %s23 = sphi 0, %s22
    %s37 = sphi 0, %s23
    %s41 = sphi 0, %s41
    %s43 = sphi 0, %s41
    %s44 = sphi 0, %s43
    %s58 = sphi 0, %s44
    %s62 = sphi 0, %s62
    %s64 = sphi 0, %s62
    %s65 = sphi 0, %s64
    %s79 = sphi 0, %s65
    %s85 = sphi 0, %s87
    %s88 = sphi 0, %s85
    %s89 = sphi 0, %s88
    %s105 = sphi 0, %s89
    %s111 = sphi 0, %s113
    %s114 = sphi 0, %s111
    %s115 = sphi 0, %s114
    %s131 = sphi 0, %s115
    %s137 = sphi 0, %s139
    %s140 = sphi 0, %s137
    %s141 = sphi 0, %s140
    %s157 = sphi 0, %s141
  $region4: #{downblock_forward.3} parent=0 // loop_header_branch
    %15 = sbr.rel (%p13) target = $region8
  $region5: #{downblock_forward.3} parent=0 // loop_body
    %s17 = ssub.s32 %s12, 1
    %s18 = ssub.s32 %s12, 2
    %s19 = sadd.s32 %s12, 1
    %s21 = sadd.s32 %s20, 1
    %p24 = scmp.eq.s32.totalorder %s12, 1
    %p25 = scmp.ne.s32.totalorder %s20, %s22
    %p26 = scmp.eq.s32.totalorder %s12, 0
    %p27 = por %p25, %p26
    %p28 = scmp.ne.s32.totalorder %s20, %s22
    %p29 = scmp.eq.s32.totalorder %s17, 1
    %p30 = por %p28, %p29
    %p31 = scmp.ne.s32.totalorder %s22, %s23
    %p32 = scmp.eq.s32.totalorder %s17, 0
    %p33 = por %p31, %p32
    %p34 = scmp.ne.s32.totalorder %s22, %s23
    %p35 = scmp.eq.s32.totalorder %s18, 1
    %p36 = por %p34, %p35
    %p38 = scmp.ne.s32.totalorder %s23, %s37
    %p39 = scmp.eq.s32.totalorder %s18, 0
    %p40 = por %p38, %p39
    %s42 = sadd.s32 %s41, 1
    %p45 = scmp.eq.s32.totalorder %s12, 1
    %p46 = scmp.ne.s32.totalorder %s41, %s43
    %p47 = scmp.eq.s32.totalorder %s12, 0
    %p48 = por %p46, %p47
    %p49 = scmp.ne.s32.totalorder %s41, %s43
    %p50 = scmp.eq.s32.totalorder %s17, 1
    %p51 = por %p49, %p50
    %p52 = scmp.ne.s32.totalorder %s43, %s44
    %p53 = scmp.eq.s32.totalorder %s17, 0
    %p54 = por %p52, %p53
    %p55 = scmp.ne.s32.totalorder %s43, %s44
    %p56 = scmp.eq.s32.totalorder %s18, 1
    %p57 = por %p55, %p56
    %p59 = scmp.ne.s32.totalorder %s44, %s58
    %p60 = scmp.eq.s32.totalorder %s18, 0
    %p61 = por %p59, %p60
    %s63 = sadd.s32 %s62, 1
    %p66 = scmp.eq.s32.totalorder %s12, 1
    %p67 = scmp.ne.s32.totalorder %s62, %s64
    %p68 = scmp.eq.s32.totalorder %s12, 0
    %p69 = por %p67, %p68
    %p70 = scmp.ne.s32.totalorder %s62, %s64
    %p71 = scmp.eq.s32.totalorder %s17, 1
    %p72 = por %p70, %p71
    %p73 = scmp.ne.s32.totalorder %s64, %s65
    %p74 = scmp.eq.s32.totalorder %s17, 0
    %p75 = por %p73, %p74
    %p76 = scmp.ne.s32.totalorder %s64, %s65
    %p77 = scmp.eq.s32.totalorder %s18, 1
    %p78 = por %p76, %p77
    %p80 = scmp.ne.s32.totalorder %s65, %s79
    %p81 = scmp.eq.s32.totalorder %s18, 0
    %p82 = por %p80, %p81
    %s83 = ssub.s32 %s12, %s19
    %p84 = scmp.eq.s32.totalorder %s83, 0
    %s86 = sadd.s32 %s85, 1
    %s87 = scalar_select %p84, %s85, %s86
    %p90 = pneg %p84
    %p91 = scmp.eq.s32.totalorder %s12, 1
    %p92 = por %p90, %p91
    %p93 = scmp.ne.s32.totalorder %s85, %s88
    %p94 = scmp.eq.s32.totalorder %s12, 0
    %p95 = por %p93, %p94
    %p96 = scmp.ne.s32.totalorder %s85, %s88
    %p97 = scmp.eq.s32.totalorder %s17, 1
    %p98 = por %p96, %p97
    %p99 = scmp.ne.s32.totalorder %s88, %s89
    %p100 = scmp.eq.s32.totalorder %s17, 0
    %p101 = por %p99, %p100
    %p102 = scmp.ne.s32.totalorder %s88, %s89
    %p103 = scmp.eq.s32.totalorder %s18, 1
    %p104 = por %p102, %p103
    %p106 = scmp.ne.s32.totalorder %s89, %s105
    %p107 = scmp.eq.s32.totalorder %s18, 0
    %p108 = por %p106, %p107
    %s109 = ssub.s32 %s12, %s19
    %p110 = scmp.eq.s32.totalorder %s109, 0
    %s112 = sadd.s32 %s111, 1
    %s113 = scalar_select %p110, %s111, %s112
    %p116 = pneg %p110
    %p117 = scmp.eq.s32.totalorder %s12, 1
    %p118 = por %p116, %p117
    %p119 = scmp.ne.s32.totalorder %s111, %s114
    %p120 = scmp.eq.s32.totalorder %s12, 0
    %p121 = por %p119, %p120
    %p122 = scmp.ne.s32.totalorder %s111, %s114
    %p123 = scmp.eq.s32.totalorder %s17, 1
    %p124 = por %p122, %p123
    %p125 = scmp.ne.s32.totalorder %s114, %s115
    %p126 = scmp.eq.s32.totalorder %s17, 0
    %p127 = por %p125, %p126
    %p128 = scmp.ne.s32.totalorder %s114, %s115
    %p129 = scmp.eq.s32.totalorder %s18, 1
    %p130 = por %p128, %p129
    %p132 = scmp.ne.s32.totalorder %s115, %s131
    %p133 = scmp.eq.s32.totalorder %s18, 0
    %p134 = por %p132, %p133
    %s135 = ssub.s32 %s12, %s19
    %p136 = scmp.eq.s32.totalorder %s135, 0
    %s138 = sadd.s32 %s137, 1
    %s139 = scalar_select %p136, %s137, %s138
    %p142 = pneg %p136
    %p143 = scmp.eq.s32.totalorder %s12, 1
    %p144 = por %p142, %p143
    %p145 = scmp.ne.s32.totalorder %s137, %s140
    %p146 = scmp.eq.s32.totalorder %s12, 0
    %p147 = por %p145, %p146
    %p148 = scmp.ne.s32.totalorder %s137, %s140
    %p149 = scmp.eq.s32.totalorder %s17, 1
    %p150 = por %p148, %p149
    %p151 = scmp.ne.s32.totalorder %s140, %s141
    %p152 = scmp.eq.s32.totalorder %s17, 0
    %p153 = por %p151, %p152
    %p154 = scmp.ne.s32.totalorder %s140, %s141
    %p155 = scmp.eq.s32.totalorder %s18, 1
    %p156 = por %p154, %p155
    %p158 = scmp.ne.s32.totalorder %s141, %s157
    %p159 = scmp.eq.s32.totalorder %s18, 0
    %p160 = por %p158, %p159
    %p161 = scmp.le.s32.totalorder 1, %s12
    %p162 = scmp.lt.s32.totalorder %s12, 3
    %p163 = pnand %p161, %p162
    %p164 = pneg %p163
    // Predicated region
    $region9: #{downblock_forward.3} parent=5 // pred_check
      _
    $region10: #{downblock_forward.3} parent=5 // pred_check_branch
      %166 = sbr.rel (%p163) target = $region12
    $region11: #{downblock_forward.3} parent=5 // pred_region
      %s167 = ssub.s32 %s12, 1
      // Predicated region
      $region13: #{downblock_forward.3} parent=11 // pred_check
        %p168 = pneg %p33
      $region14: #{downblock_forward.3} parent=11 // pred_check_branch
        %170 = sbr.rel (%p168) target = $region16
      $region15: #{downblock_forward.3} parent=11 // pred_region
        _
      $region16: #{downblock_forward.3} parent=11 // pred_fallthru
        _
      // Predicated region
      $region17: #{downblock_forward.3} parent=11 // pred_check
        %p171 = pneg %p54
      $region18: #{downblock_forward.3} parent=11 // pred_check_branch
        %173 = sbr.rel (%p171) target = $region20
      $region19: #{downblock_forward.3} parent=11 // pred_region
        _
      $region20: #{downblock_forward.3} parent=11 // pred_fallthru
        _
      // Predicated region
      $region21: #{downblock_forward.3} parent=11 // pred_check
        %p174 = pneg %p75
      $region22: #{downblock_forward.3} parent=11 // pred_check_branch
        %176 = sbr.rel (%p174) target = $region24
      $region23: #{downblock_forward.3} parent=11 // pred_region
        _
      $region24: #{downblock_forward.3} parent=11 // pred_fallthru
        _
    $region12: #{downblock_forward.3} parent=5 // pred_fallthru
      _
    %p177 = scmp.lt.s32.totalorder %s12, 2
    // Predicated region
    $region25: #{downblock_forward.3} parent=5 // pred_check
      %p178 = pneg %p177
    $region26: #{downblock_forward.3} parent=5 // pred_check_branch
      %180 = sbr.rel (%p178) target = $region28
    $region27: #{downblock_forward.3} parent=5 // pred_region
      // Predicated region
      $region29: #{downblock_forward.3} parent=27 // pred_check
        %p181 = pneg %p95
      $region30: #{downblock_forward.3} parent=27 // pred_check_branch
        %183 = sbr.rel (%p181) target = $region32
      $region31: #{downblock_forward.3} parent=27 // pred_region
        %s184 = smul.u32 41, %s12
        %p185 = scmp.lt.s32.totalorder %s184, 81
        %s186 = scalar_select %p185, %s184, 81
        %s187 = smul.addr %s186, 8
        %s188 = scalar_lea.vmem %s3, %s187
        %s189 = smul.u32 41, %s12
      $region32: #{downblock_forward.3} parent=27 // pred_fallthru
        _
    $region28: #{downblock_forward.3} parent=5 // pred_fallthru
      _
    %p190 = scmp.le.s32.totalorder 1, %s12
    %p191 = scmp.lt.s32.totalorder %s12, 3
    %p192 = pnand %p190, %p191
    %p193 = pneg %p192
    // Predicated region
    $region33: #{downblock_forward.3} parent=5 // pred_check
      _
    $region34: #{downblock_forward.3} parent=5 // pred_check_branch
      %195 = sbr.rel (%p192) target = $region36
    $region35: #{downblock_forward.3} parent=5 // pred_region
      %s196 = ssub.s32 %s12, 1
      %p197 = pneg %p33
      %p198 = pneg %p30
      %p199 = pneg %p54
      %p200 = pneg %p51
      %p201 = pneg %p75
      %p202 = pneg %p72
      %s203 = smul.u32 41, %s17
      %p204 = scmp.lt.s32.totalorder %s203, 81
      %s205 = scalar_select %p204, %s203, 81
      %s206 = smul.addr %s205, 8
      %s207 = scalar_lea.vmem %s3, %s206
      %p208 = pneg %p101
      %p209 = pneg %p98
      %p210 = pneg %p127
      %p211 = pneg %p124
      %s212 = smul.u32 36, %s17
      %p213 = scmp.lt.s32.totalorder %s212, 71
      %s214 = scalar_select %p213, %s212, 71
      %s215 = smul.addr %s214, 8
      %s216 = scalar_lea.vmem %s4, %s215
      %p217 = pneg %p153
      %p218 = pneg %p150
      %p219 = scmp.lt.s32.totalorder %s17, 1
      %s220 = scalar_select %p219, %s17, 1
      %s221 = smul.addr %s220, 2
      %s222 = scalar_lea.vmem %s5, %s221
      %s223 = smul.u32 41, %s17
      %p224 = scmp.lt.s32.totalorder %s223, 81
      %s225 = scalar_select %p224, %s223, 81
      %s226 = smul.addr %s225, 8
      %s227 = scalar_lea.vmem %s3, %s226
      %s228 = smul.u32 41, %s17
      %s229 = smul.u32 36, %s17
      %p230 = scmp.lt.s32.totalorder %s229, 71
      %s231 = scalar_select %p230, %s229, 71
      %s232 = smul.addr %s231, 8
      %s233 = scalar_lea.vmem %s4, %s232
      %s234 = smul.u32 36, %s17
      %p235 = scmp.lt.s32.totalorder %s17, 1
      %s236 = scalar_select %p235, %s17, 1
      %s237 = smul.addr %s236, 2
      %s238 = scalar_lea.vmem %s5, %s237
      %v239 = vld [vmem:[%s227] sm:$0xff]
      %v240 = vld [vmem:[%s227 + $0x8] sm:$0xff]
      %v241 = vld [vmem:[%s227 + $0x10] sm:$0xff]
      %v242 = vld [vmem:[%s227 + $0x18] sm:$0xff]
      %v243 = vld [vmem:[%s227 + $0x20] sm:$0xff]
      %v244 = vld [vmem:[%s227 + $0x28] sm:$0xff]
      %v245 = vld [vmem:[%s227 + $0x30] sm:$0xff]
      %v246 = vld [vmem:[%s227 + $0x38] sm:$0xff]
      %v247 = vld [vmem:[%s227 + $0x40] sm:$0xff]
      %v248 = vld [vmem:[%s227 + $0x48] sm:$0xff]
      %v249 = vld [vmem:[%s227 + $0x50] sm:$0xff]
      %v250 = vld [vmem:[%s227 + $0x58] sm:$0xff]
      %v251 = vld [vmem:[%s227 + $0x60] sm:$0xff]
      %v252 = vld [vmem:[%s227 + $0x68] sm:$0xff]
      %v253 = vld [vmem:[%s227 + $0x70] sm:$0xff]
      %v254 = vld [vmem:[%s227 + $0x78] sm:$0xff]
      %v255 = vld [vmem:[%s227 + $0x80] sm:$0xff]
      %v256 = vld [vmem:[%s227 + $0x88] sm:$0xff]
      %v257 = vld [vmem:[%s227 + $0x90] sm:$0xff]
      %v258 = vld [vmem:[%s227 + $0x98] sm:$0xff]
      %v259 = vld [vmem:[%s227 + $0xa0] sm:$0xff]
      %v260 = vld [vmem:[%s227 + $0xa8] sm:$0xff]
      %v261 = vld [vmem:[%s227 + $0xb0] sm:$0xff]
      %v262 = vld [vmem:[%s227 + $0xb8] sm:$0xff]
      %v263 = vld [vmem:[%s227 + $0xc0] sm:$0xff]
      %v264 = vld [vmem:[%s227 + $0xc8] sm:$0xff]
      %v265 = vld [vmem:[%s227 + $0xd0] sm:$0xff]
      %v266 = vld [vmem:[%s227 + $0xd8] sm:$0xff]
      %v267 = vld [vmem:[%s227 + $0xe0] sm:$0xff]
      %v268 = vld [vmem:[%s227 + $0xe8] sm:$0xff]
      %v269 = vld [vmem:[%s227 + $0xf0] sm:$0xff]
      %v270 = vld [vmem:[%s227 + $0xf8] sm:$0xff]
      %v271 = vld [vmem:[%s227 + $0x100] sm:$0xff]
      %v272 = vld [vmem:[%s227 + $0x108] sm:$0xff]
      %v273 = vld [vmem:[%s227 + $0x110] sm:$0xff]
      %v274 = vld [vmem:[%s227 + $0x118] sm:$0xff]
      %v275 = vld [vmem:[%s227 + $0x120] sm:$0xff]
      %v276 = vld [vmem:[%s227 + $0x128] sm:$0xff]
      %v277 = vld [vmem:[%s227 + $0x130] sm:$0xff]
      %v278 = vld [vmem:[%s227 + $0x138] sm:$0xff]
      %v279 = vld [vmem:[%s227 + $0x140] sm:$0xff]
      %v280 = vld [vmem:[%s0] sm:$0xf]
      %s281 = scalar_lea.vmem %s0, 4
      %v282 = vld [vmem:[%s281] sm:$0xf]
      %vm320 = vcmask 1046528
      %v321 = vrot.slane %v239, 1
      %v322 = vrot.slane %v240, 1
      %v323 = vsel %vm320, %v321, %v322
      %v324 = vrot.slane %v241, 1
      %v325 = vsel %vm320, %v322, %v324
      %v326 = vrot.slane %v242, 1
      %v327 = vsel %vm320, %v324, %v326
      %v328 = vrot.slane %v243, 1
      %v329 = vsel %vm320, %v326, %v328
      %v330 = vrot.slane %v244, 1
      %v331 = vsel %vm320, %v328, %v330
      %v332 = vrot.slane %v245, 1
      %v333 = vsel %vm320, %v330, %v332
      %v334 = vrot.slane %v246, 1
      %v335 = vsel %vm320, %v332, %v334
      %v336 = vrot.slane %v247, 1
      %v337 = vsel %vm320, %v334, %v336
      %v338 = vrot.slane %v248, 1
      %v339 = vsel %vm320, %v336, %v338
      %v340 = vrot.slane %v249, 1
      %v341 = vsel %vm320, %v338, %v340
      %v342 = vrot.slane %v250, 1
      %v343 = vsel %vm320, %v340, %v342
      %v344 = vrot.slane %v251, 1
      %v345 = vsel %vm320, %v342, %v344
      %v346 = vrot.slane %v252, 1
      %v347 = vsel %vm320, %v344, %v346
      %v348 = vrot.slane %v253, 1
      %v349 = vsel %vm320, %v346, %v348
      %v350 = vrot.slane %v254, 1
      %v351 = vsel %vm320, %v348, %v350
      %v352 = vrot.slane %v255, 1
      %v353 = vsel %vm320, %v350, %v352
      %v354 = vrot.slane %v256, 1
      %v355 = vsel %vm320, %v352, %v354
      %v356 = vrot.slane %v257, 1
      %v357 = vsel %vm320, %v354, %v356
      %v358 = vrot.slane %v258, 1
      %v359 = vsel %vm320, %v356, %v358
      %v360 = vrot.slane %v259, 1
      %v361 = vsel %vm320, %v358, %v360
      %v362 = vrot.slane %v260, 1
      %v363 = vsel %vm320, %v360, %v362
      %v364 = vrot.slane %v261, 1
      %v365 = vsel %vm320, %v362, %v364
      %v366 = vrot.slane %v262, 1
      %v367 = vsel %vm320, %v364, %v366
      %v368 = vrot.slane %v263, 1
      %v369 = vsel %vm320, %v366, %v368
      %v370 = vrot.slane %v264, 1
      %v371 = vsel %vm320, %v368, %v370
      %v372 = vrot.slane %v265, 1
      %v373 = vsel %vm320, %v370, %v372
      %v374 = vrot.slane %v266, 1
      %v375 = vsel %vm320, %v372, %v374
      %v376 = vrot.slane %v267, 1
      %v377 = vsel %vm320, %v374, %v376
      %v378 = vrot.slane %v268, 1
      %v379 = vsel %vm320, %v376, %v378
      %v380 = vrot.slane %v269, 1
      %v381 = vsel %vm320, %v378, %v380
      %v382 = vrot.slane %v270, 1
      %v383 = vsel %vm320, %v380, %v382
      %v384 = vrot.slane %v271, 1
      %v385 = vsel %vm320, %v382, %v384
      %v386 = vrot.slane %v272, 1
      %v387 = vsel %vm320, %v384, %v386
      %v388 = vrot.slane %v273, 1
      %v389 = vsel %vm320, %v386, %v388
      %v390 = vrot.slane %v274, 1
      %v391 = vsel %vm320, %v388, %v390
      %v392 = vrot.slane %v275, 1
      %v393 = vsel %vm320, %v390, %v392
      %vm394 = vcmask 31744
      %v395 = vsel %vm394, %v323, 0
      %v397 = vsel %vm394, %v325, 0
      %v399 = vsel %vm394, %v327, 0
      %v401 = vsel %vm394, %v329, 0
      %v403 = vsel %vm394, %v331, 0
      %v405 = vsel %vm394, %v333, 0
      %v407 = vsel %vm394, %v335, 0
      %v409 = vsel %vm394, %v337, 0
      %v411 = vsel %vm394, %v339, 0
      %v413 = vsel %vm394, %v341, 0
      %v415 = vsel %vm394, %v343, 0
      %v417 = vsel %vm394, %v345, 0
      %v419 = vsel %vm394, %v347, 0
      %v421 = vsel %vm394, %v349, 0
      %v423 = vsel %vm394, %v351, 0
      %v425 = vsel %vm394, %v353, 0
      %v427 = vsel %vm394, %v355, 0
      %v429 = vsel %vm394, %v357, 0
      %v431 = vsel %vm394, %v359, 0
      %v433 = vsel %vm394, %v361, 0
      %v435 = vsel %vm394, %v363, 0
      %v437 = vsel %vm394, %v365, 0
      %v439 = vsel %vm394, %v367, 0
      %v441 = vsel %vm394, %v369, 0
      %v443 = vsel %vm394, %v371, 0
      %v445 = vsel %vm394, %v373, 0
      %v447 = vsel %vm394, %v375, 0
      %v449 = vsel %vm394, %v377, 0
      %v451 = vsel %vm394, %v379, 0
      %v453 = vsel %vm394, %v381, 0
      %v455 = vsel %vm394, %v383, 0
      %v457 = vsel %vm394, %v385, 0
      %v459 = vsel %vm394, %v387, 0
      %v461 = vsel %vm394, %v389, 0
      %v463 = vsel %vm394, %v391, 0
      %v465 = vsel %vm394, %v393, 0
      %vm467 = vcmask 1043456
      %v469 = vsel %vm467, %v282, 0
      %471 = vmatprep.subr.mxu0 0.0
      %472 = vmatpush1.msra.mxu0 %v469
      %473 = vmatprep.subr.mxu0 0.0
      %474 = vmatpush1.msra.mxu0 0.0
      %475 = vmatprep.subr.mxu0 0.0
      %476 = vmatpush1.msra.mxu0 0.0
      %477 = vmatprep.subr.mxu0 0.0
      %478 = vmatpush1.msra.mxu0 0.0
      %479 = vmatprep.subr.mxu0 0.0
      %480 = vmatpush1.msra.mxu0 0.0
      %481 = vmatprep.subr.mxu0 0.0
      %482 = vmatpush1.msra.mxu0 0.0
      %483 = vmatprep.subr.mxu0 0.0
      %484 = vmatpush1.msra.mxu0 0.0
      %485 = vmatprep.subr.mxu0 0.0
      %486 = vmatpush1.msra.mxu0 0.0
      %487 = vmatprep.subr.mxu0 0.0
      %488 = vmatpush1.msra.mxu0 0.0
      %489 = vmatprep.subr.mxu0 0.0
      %490 = vmatpush1.msra.mxu0 0.0
      %491 = vmatprep.subr.mxu0 0.0
      %492 = vmatpush1.msra.mxu0 0.0
      %493 = vmatprep.subr.mxu0 0.0
      %494 = vmatpush1.msra.mxu0 0.0
      %495 = vmatprep.subr.mxu0 0.0
      %496 = vmatpush1.msra.mxu0 0.0
      %497 = vmatprep.subr.mxu0 0.0
      %498 = vmatpush1.msra.mxu0 0.0
      %499 = vmatprep.subr.mxu0 0.0
      %500 = vmatpush1.msra.mxu0 0.0
      %501 = vmatprep.subr.mxu0 0.0
      %502 = vmatpush1.msra.mxu0 0.0
      %503 = vmatprep.subr.mxu0 0.0
      %504 = vmatpush1.msra.mxu0 0.0
      %505 = vmatprep.subr.mxu0 0.0
      %506 = vmatpush1.msra.mxu0 0.0
      %507 = vmatprep.subr.mxu0 0.0
      %508 = vmatpush1.msra.mxu0 0.0
      %509 = vmatprep.subr.mxu0 0.0
      %510 = vmatpush1.msra.mxu0 0.0
      %511 = vmatprep.subr.mxu0 0.0
      %512 = vmatpush1.msra.mxu0 0.0
      %513 = vmatprep.subr.mxu0 0.0
      %514 = vmatpush1.msra.mxu0 0.0
      %515 = vmatprep.subr.mxu0 0.0
      %516 = vmatpush1.msra.mxu0 0.0
      %517 = vmatprep.subr.mxu0 0.0
      %518 = vmatpush1.msra.mxu0 0.0
      %519 = vmatprep.subr.mxu0 0.0
      %520 = vmatpush1.msra.mxu0 0.0
      %521 = vmatprep.subr.mxu0 0.0
      %522 = vmatpush1.msra.mxu0 0.0
      %523 = vmatprep.subr.mxu0 0.0
      %524 = vmatpush1.msra.mxu0 0.0
      %525 = vmatprep.subr.mxu0 0.0
      %526 = vmatpush1.msra.mxu0 0.0
      %527 = vmatprep.subr.mxu0 0.0
      %528 = vmatpush1.msra.mxu0 0.0
      %529 = vmatprep.subr.mxu0 0.0
      %530 = vmatpush1.msra.mxu0 0.0
      %531 = vmatprep.subr.mxu0 0.0
      %532 = vmatpush1.msra.mxu0 0.0
      %533 = vmatprep.subr.mxu0 0.0
      %534 = vmatpush1.msra.mxu0 0.0
      %535 = vmatprep.mubr.f32.mxu0 0.0
      %536 = vmatmul.mubr.f32.gmra.mrb[0].mxu0 %v395
      %v537 = vpop.f32.mrb[0].mxu0
      %v538 = vadd.f32 0.0, %v537
      %v539 = vpop.f32.mrb[0].mxu0
      %540 = vmatprep.mubr.f32.mxu0 0.0
      %541 = vmatmul.mubr.f32.gmra.mrb[0].mxu0 %v397
      %v542 = vpop.f32.mrb[0].mxu0
      %v543 = vadd.f32 0.0, %v542
      %v544 = vpop.f32.mrb[0].mxu0
      %545 = vmatprep.mubr.f32.mxu0 0.0
      %546 = vmatmul.mubr.f32.gmra.mrb[0].mxu0 %v399
      %v547 = vpop.f32.mrb[0].mxu0
      %v548 = vadd.f32 0.0, %v547
      %v549 = vpop.f32.mrb[0].mxu0
      %550 = vmatprep.mubr.f32.mxu0 0.0
      %551 = vmatmul.mubr.f32.gmra.mrb[0].mxu0 %v401
      %v552 = vpop.f32.mrb[0].mxu0
      %v553 = vadd.f32 0.0, %v552
      %v554 = vpop.f32.mrb[0].mxu0
      %555 = vmatprep.mubr.f32.mxu0 0.0
      %556 = vmatmul.mubr.f32.gmra.mrb[0].mxu0 %v403
      %v557 = vpop.f32.mrb[0].mxu0
      %v558 = vadd.f32 0.0, %v557
      %v559 = vpop.f32.mrb[0].mxu0
      %560 = vmatprep.mubr.f32.mxu0 0.0
      %561 = vmatmul.mubr.f32.gmra.mrb[0].mxu0 %v405
      %v562 = vpop.f32.mrb[0].mxu0
      %v563 = vadd.f32 0.0, %v562
      %v564 = vpop.f32.mrb[0].mxu0
      %565 = vmatprep.mubr.f32.mxu0 0.0
      %566 = vmatmul.mubr.f32.gmra.mrb[0].mxu0 %v407
      %v567 = vpop.f32.mrb[0].mxu0
      %v568 = vadd.f32 0.0, %v567
      %v569 = vpop.f32.mrb[0].mxu0
      %570 = vmatprep.mubr.f32.mxu0 0.0
      %571 = vmatmul.mubr.f32.gmra.mrb[0].mxu0 %v409
      %v572 = vpop.f32.mrb[0].mxu0
      %v573 = vadd.f32 0.0, %v572
      %v574 = vpop.f32.mrb[0].mxu0
      %575 = vmatprep.mubr.f32.mxu0 0.0
      %576 = vmatmul.mubr.f32.gmra.mrb[0].mxu0 %v411
      %v577 = vpop.f32.mrb[0].mxu0
      %v578 = vadd.f32 0.0, %v577
      %v579 = vpop.f32.mrb[0].mxu0
      %580 = vmatprep.mubr.f32.mxu0 0.0
      %581 = vmatmul.mubr.f32.gmra.mrb[0].mxu0 %v413
      %v582 = vpop.f32.mrb[0].mxu0
      %v583 = vadd.f32 0.0, %v582
      %v584 = vpop.f32.mrb[0].mxu0
      %585 = vmatprep.mubr.f32.mxu0 0.0
      %586 = vmatmul.mubr.f32.gmra.mrb[0].mxu0 %v415
      %v587 = vpop.f32.mrb[0].mxu0
      %v588 = vadd.f32 0.0, %v587
      %v589 = vpop.f32.mrb[0].mxu0
      %590 = vmatprep.mubr.f32.mxu0 0.0
      %591 = vmatmul.mubr.f32.gmra.mrb[0].mxu0 %v417
      %v592 = vpop.f32.mrb[0].mxu0
      %v593 = vadd.f32 0.0, %v592
      %v594 = vpop.f32.mrb[0].mxu0
      %595 = vmatprep.mubr.f32.mxu0 0.0
      %596 = vmatmul.mubr.f32.gmra.mrb[0].mxu0 %v419
      %v597 = vpop.f32.mrb[0].mxu0
      %v598 = vadd.f32 0.0, %v597
      %v599 = vpop.f32.mrb[0].mxu0
      %600 = vmatprep.mubr.f32.mxu0 0.0
      %601 = vmatmul.mubr.f32.gmra.mrb[0].mxu0 %v421
      %v602 = vpop.f32.mrb[0].mxu0
      %v603 = vadd.f32 0.0, %v602
      %v604 = vpop.f32.mrb[0].mxu0
      %605 = vmatprep.mubr.f32.mxu0 0.0
      %606 = vmatmul.mubr.f32.gmra.mrb[0].mxu0 %v423
      %v607 = vpop.f32.mrb[0].mxu0
      %v608 = vadd.f32 0.0, %v607
      %v609 = vpop.f32.mrb[0].mxu0
      %610 = vmatprep.mubr.f32.mxu0 0.0
      %611 = vmatmul.mubr.f32.gmra.mrb[0].mxu0 %v425
      %v612 = vpop.f32.mrb[0].mxu0
      %v613 = vadd.f32 0.0, %v612
      %v614 = vpop.f32.mrb[0].mxu0
      %615 = vmatprep.mubr.f32.mxu0 0.0
      %616 = vmatmul.mubr.f32.gmra.mrb[0].mxu0 %v427
      %v617 = vpop.f32.mrb[0].mxu0
      %v618 = vadd.f32 0.0, %v617
      %v619 = vpop.f32.mrb[0].mxu0
      %620 = vmatprep.mubr.f32.mxu0 0.0
      %621 = vmatmul.mubr.f32.gmra.mrb[0].mxu0 %v429
      %v622 = vpop.f32.mrb[0].mxu0
      %v623 = vadd.f32 0.0, %v622
      %v624 = vpop.f32.mrb[0].mxu0
      %625 = vmatprep.mubr.f32.mxu0 0.0
      %626 = vmatmul.mubr.f32.gmra.mrb[0].mxu0 %v431
      %v627 = vpop.f32.mrb[0].mxu0
      %v628 = vadd.f32 0.0, %v627
      %v629 = vpop.f32.mrb[0].mxu0
      %630 = vmatprep.mubr.f32.mxu0 0.0
      %631 = vmatmul.mubr.f32.gmra.mrb[0].mxu0 %v433
      %v632 = vpop.f32.mrb[0].mxu0
      %v633 = vadd.f32 0.0, %v632
      %v634 = vpop.f32.mrb[0].mxu0
      %635 = vmatprep.mubr.f32.mxu0 0.0
      %636 = vmatmul.mubr.f32.gmra.mrb[0].mxu0 %v435
      %v637 = vpop.f32.mrb[0].mxu0
      %v638 = vadd.f32 0.0, %v637
      %v639 = vpop.f32.mrb[0].mxu0
      %640 = vmatprep.mubr.f32.mxu0 0.0
      %641 = vmatmul.mubr.f32.gmra.mrb[0].mxu0 %v437
      %v642 = vpop.f32.mrb[0].mxu0
      %v643 = vadd.f32 0.0, %v642
      %v644 = vpop.f32.mrb[0].mxu0
      %645 = vmatprep.mubr.f32.mxu0 0.0
      %646 = vmatmul.mubr.f32.gmra.mrb[0].mxu0 %v439
      %v647 = vpop.f32.mrb[0].mxu0
      %v648 = vadd.f32 0.0, %v647
      %v649 = vpop.f32.mrb[0].mxu0
      %650 = vmatprep.mubr.f32.mxu0 0.0
      %651 = vmatmul.mubr.f32.gmra.mrb[0].mxu0 %v441
      %v652 = vpop.f32.mrb[0].mxu0
      %v653 = vadd.f32 0.0, %v652
      %v654 = vpop.f32.mrb[0].mxu0
      %655 = vmatprep.mubr.f32.mxu0 0.0
      %656 = vmatmul.mubr.f32.gmra.mrb[0].mxu0 %v443
      %v657 = vpop.f32.mrb[0].mxu0
      %v658 = vadd.f32 0.0, %v657
      %v659 = vpop.f32.mrb[0].mxu0
      %660 = vmatprep.mubr.f32.mxu0 0.0
      %661 = vmatmul.mubr.f32.gmra.mrb[0].mxu0 %v445
      %v662 = vpop.f32.mrb[0].mxu0
      %v663 = vadd.f32 0.0, %v662
      %v664 = vpop.f32.mrb[0].mxu0
      %665 = vmatprep.mubr.f32.mxu0 0.0
      %666 = vmatmul.mubr.f32.gmra.mrb[0].mxu0 %v447
      %v667 = vpop.f32.mrb[0].mxu0
      %v668 = vadd.f32 0.0, %v667
      %v669 = vpop.f32.mrb[0].mxu0
      %670 = vmatprep.mubr.f32.mxu0 0.0
      %671 = vmatmul.mubr.f32.gmra.mrb[0].mxu0 %v449
      %v672 = vpop.f32.mrb[0].mxu0
      %v673 = vadd.f32 0.0, %v672
      %v674 = vpop.f32.mrb[0].mxu0
      %675 = vmatprep.mubr.f32.mxu0 0.0
      %676 = vmatmul.mubr.f32.gmra.mrb[0].mxu0 %v451
      %v677 = vpop.f32.mrb[0].mxu0
      %v678 = vadd.f32 0.0, %v677
      %v679 = vpop.f32.mrb[0].mxu0
      %680 = vmatprep.mubr.f32.mxu0 0.0
      %681 = vmatmul.mubr.f32.gmra.mrb[0].mxu0 %v453
      %v682 = vpop.f32.mrb[0].mxu0
      %v683 = vadd.f32 0.0, %v682
      %v684 = vpop.f32.mrb[0].mxu0
      %685 = vmatprep.mubr.f32.mxu0 0.0
      %686 = vmatmul.mubr.f32.gmra.mrb[0].mxu0 %v455
      %v687 = vpop.f32.mrb[0].mxu0
      %v688 = vadd.f32 0.0, %v687
      %v689 = vpop.f32.mrb[0].mxu0
      %690 = vmatprep.mubr.f32.mxu0 0.0
      %691 = vmatmul.mubr.f32.gmra.mrb[0].mxu0 %v457
      %v692 = vpop.f32.mrb[0].mxu0
      %v693 = vadd.f32 0.0, %v692
      %v694 = vpop.f32.mrb[0].mxu0
      %695 = vmatprep.mubr.f32.mxu0 0.0
      %696 = vmatmul.mubr.f32.gmra.mrb[0].mxu0 %v459
      %v697 = vpop.f32.mrb[0].mxu0
      %v698 = vadd.f32 0.0, %v697
      %v699 = vpop.f32.mrb[0].mxu0
      %700 = vmatprep.mubr.f32.mxu0 0.0
      %701 = vmatmul.mubr.f32.gmra.mrb[0].mxu0 %v461
      %v702 = vpop.f32.mrb[0].mxu0
      %v703 = vadd.f32 0.0, %v702
      %v704 = vpop.f32.mrb[0].mxu0
      %705 = vmatprep.mubr.f32.mxu0 0.0
      %706 = vmatmul.mubr.f32.gmra.mrb[0].mxu0 %v463
      %v707 = vpop.f32.mrb[0].mxu0
      %v708 = vadd.f32 0.0, %v707
      %v709 = vpop.f32.mrb[0].mxu0
      %710 = vmatprep.mubr.f32.mxu0 0.0
      %711 = vmatmul.mubr.f32.gmra.mrb[0].mxu0 %v465
      %v712 = vpop.f32.mrb[0].mxu0
      %v713 = vadd.f32 0.0, %v712
      %v714 = vpop.f32.mrb[0].mxu0
      %715 = vdwg.mxu0
      %v716 = vsel %vm394, %v239, 0
      %v718 = vsel %vm394, %v240, 0
      %v720 = vsel %vm394, %v241, 0
      %v722 = vsel %vm394, %v242, 0
      %v724 = vsel %vm394, %v243, 0
      %v726 = vsel %vm394, %v244, 0
      %v728 = vsel %vm394, %v245, 0
      %v730 = vsel %vm394, %v246, 0
      %v732 = vsel %vm394, %v247, 0
      %v734 = vsel %vm394, %v248, 0
      %v736 = vsel %vm394, %v249, 0
      %v738 = vsel %vm394, %v250, 0
      %v740 = vsel %vm394, %v251, 0
      %v742 = vsel %vm394, %v252, 0
      %v744 = vsel %vm394, %v253, 0
      %v746 = vsel %vm394, %v254, 0
      %v748 = vsel %vm394, %v255, 0
      %v750 = vsel %vm394, %v256, 0
      %v752 = vsel %vm394, %v257, 0
      %v754 = vsel %vm394, %v258, 0
      %v756 = vsel %vm394, %v259, 0
      %v758 = vsel %vm394, %v260, 0
      %v760 = vsel %vm394, %v261, 0
      %v762 = vsel %vm394, %v262, 0
      %v764 = vsel %vm394, %v263, 0
      %v766 = vsel %vm394, %v264, 0
      %v768 = vsel %vm394, %v265, 0
      %v770 = vsel %vm394, %v266, 0
      %v772 = vsel %vm394, %v267, 0
      %v774 = vsel %vm394, %v268, 0
      %v776 = vsel %vm394, %v269, 0
      %v778 = vsel %vm394, %v270, 0
      %v780 = vsel %vm394, %v271, 0
      %v782 = vsel %vm394, %v272, 0
      %v784 = vsel %vm394, %v273, 0
      %v786 = vsel %vm394, %v274, 0
      %v789 = vsel %vm467, %v280, 0
      %791 = vmatprep.subr.mxu0 0.0
      %792 = vmatpush1.msra.mxu0 %v789
      %793 = vmatprep.subr.mxu0 0.0
      %794 = vmatpush1.msra.mxu0 0.0
      %795 = vmatprep.subr.mxu0 0.0
      %796 = vmatpush1.msra.mxu0 0.0
      %797 = vmatprep.subr.mxu0 0.0
      %798 = vmatpush1.msra.mxu0 0.0
      %799 = vmatprep.subr.mxu0 0.0
      %800 = vmatpush1.msra.mxu0 0.0
      %801 = vmatprep.subr.mxu0 0.0
      %802 = vmatpush1.msra.mxu0 0.0
      %803 = vmatprep.subr.mxu0 0.0
      %804 = vmatpush1.msra.mxu0 0.0
      %805 = vmatprep.subr.mxu0 0.0
      %806 = vmatpush1.msra.mxu0 0.0
      %807 = vmatprep.subr.mxu0 0.0
      %808 = vmatpush1.msra.mxu0 0.0
      %809 = vmatprep.subr.mxu0 0.0
      %810 = vmatpush1.msra.mxu0 0.0
      %811 = vmatprep.subr.mxu0 0.0
      %812 = vmatpush1.msra.mxu0 0.0
      %813 = vmatprep.subr.mxu0 0.0
      %814 = vmatpush1.msra.mxu0 0.0
      %815 = vmatprep.subr.mxu0 0.0
      %816 = vmatpush1.msra.mxu0 0.0
      %817 = vmatprep.subr.mxu0 0.0
      %818 = vmatpush1.msra.mxu0 0.0
      %819 = vmatprep.subr.mxu0 0.0
      %820 = vmatpush1.msra.mxu0 0.0
      %821 = vmatprep.subr.mxu0 0.0
      %822 = vmatpush1.msra.mxu0 0.0
      %823 = vmatprep.subr.mxu0 0.0
      %824 = vmatpush1.msra.mxu0 0.0
      %825 = vmatprep.subr.mxu0 0.0
      %826 = vmatpush1.msra.mxu0 0.0
      %827 = vmatprep.subr.mxu0 0.0
      %828 = vmatpush1.msra.mxu0 0.0
      %829 = vmatprep.subr.mxu0 0.0
      %830 = vmatpush1.msra.mxu0 0.0
      %831 = vmatprep.subr.mxu0 0.0
      %832 = vmatpush1.msra.mxu0 0.0
      %833 = vmatprep.subr.mxu0 0.0
      %834 = vmatpush1.msra.mxu0 0.0
      %835 = vmatprep.subr.mxu0 0.0
      %836 = vmatpush1.msra.mxu0 0.0
      %837 = vmatprep.subr.mxu0 0.0
      %838 = vmatpush1.msra.mxu0 0.0
      %839 = vmatprep.subr.mxu0 0.0
      %840 = vmatpush1.msra.mxu0 0.0
      %841 = vmatprep.subr.mxu0 0.0
      %842 = vmatpush1.msra.mxu0 0.0
      %843 = vmatprep.subr.mxu0 0.0
      %844 = vmatpush1.msra.mxu0 0.0
      %845 = vmatprep.subr.mxu0 0.0
      %846 = vmatpush1.msra.mxu0 0.0
      %847 = vmatprep.subr.mxu0 0.0
      %848 = vmatpush1.msra.mxu0 0.0
      %849 = vmatprep.subr.mxu0 0.0
      %850 = vmatpush1.msra.mxu0 0.0
      %851 = vmatprep.subr.mxu0 0.0
      %852 = vmatpush1.msra.mxu0 0.0
      %853 = vmatprep.subr.mxu0 0.0
      %854 = vmatpush1.msra.mxu0 0.0
      %855 = vmatprep.mubr.f32.mxu0 0.0
      %856 = vmatmul.mubr.f32.gmra.mrb[0].mxu0 %v716
      %v857 = vpop.f32.mrb[0].mxu0
      %v858 = vadd.f32 %v538, %v857
      %v859 = vpop.f32.mrb[0].mxu0
      %860 = vmatprep.mubr.f32.mxu0 0.0
      %861 = vmatmul.mubr.f32.gmra.mrb[0].mxu0 %v718
      %v862 = vpop.f32.mrb[0].mxu0
      %v863 = vadd.f32 %v543, %v862
      %v864 = vpop.f32.mrb[0].mxu0
      %865 = vmatprep.mubr.f32.mxu0 0.0
      %866 = vmatmul.mubr.f32.gmra.mrb[0].mxu0 %v720
      %v867 = vpop.f32.mrb[0].mxu0
      %v868 = vadd.f32 %v548, %v867
      %v869 = vpop.f32.mrb[0].mxu0
      %870 = vmatprep.mubr.f32.mxu0 0.0
      %871 = vmatmul.mubr.f32.gmra.mrb[0].mxu0 %v722
      %v872 = vpop.f32.mrb[0].mxu0
      %v873 = vadd.f32 %v553, %v872
      %v874 = vpop.f32.mrb[0].mxu0
      %875 = vmatprep.mubr.f32.mxu0 0.0
      %876 = vmatmul.mubr.f32.gmra.mrb[0].mxu0 %v724
      %v877 = vpop.f32.mrb[0].mxu0
      %v878 = vadd.f32 %v558, %v877
      %v879 = vpop.f32.mrb[0].mxu0
      %880 = vmatprep.mubr.f32.mxu0 0.0
      %881 = vmatmul.mubr.f32.gmra.mrb[0].mxu0 %v726
      %v882 = vpop.f32.mrb[0].mxu0
      %v883 = vadd.f32 %v563, %v882
      %v884 = vpop.f32.mrb[0].mxu0
      %885 = vmatprep.mubr.f32.mxu0 0.0
      %886 = vmatmul.mubr.f32.gmra.mrb[0].mxu0 %v728
      %v887 = vpop.f32.mrb[0].mxu0
      %v888 = vadd.f32 %v568, %v887
      %v889 = vpop.f32.mrb[0].mxu0
      %890 = vmatprep.mubr.f32.mxu0 0.0
      %891 = vmatmul.mubr.f32.gmra.mrb[0].mxu0 %v730
      %v892 = vpop.f32.mrb[0].mxu0
      %v893 = vadd.f32 %v573, %v892
      %v894 = vpop.f32.mrb[0].mxu0
      %895 = vmatprep.mubr.f32.mxu0 0.0
      %896 = vmatmul.mubr.f32.gmra.mrb[0].mxu0 %v732
      %v897 = vpop.f32.mrb[0].mxu0
      %v898 = vadd.f32 %v578, %v897
      %v899 = vpop.f32.mrb[0].mxu0
      %900 = vmatprep.mubr.f32.mxu0 0.0
      %901 = vmatmul.mubr.f32.gmra.mrb[0].mxu0 %v734
      %v902 = vpop.f32.mrb[0].mxu0
      %v903 = vadd.f32 %v583, %v902
      %v904 = vpop.f32.mrb[0].mxu0
      %905 = vmatprep.mubr.f32.mxu0 0.0
      %906 = vmatmul.mubr.f32.gmra.mrb[0].mxu0 %v736
      %v907 = vpop.f32.mrb[0].mxu0
      %v908 = vadd.f32 %v588, %v907
      %v909 = vpop.f32.mrb[0].mxu0
      %910 = vmatprep.mubr.f32.mxu0 0.0
      %911 = vmatmul.mubr.f32.gmra.mrb[0].mxu0 %v738
      %v912 = vpop.f32.mrb[0].mxu0
      %v913 = vadd.f32 %v593, %v912
      %v914 = vpop.f32.mrb[0].mxu0
      %915 = vmatprep.mubr.f32.mxu0 0.0
      %916 = vmatmul.mubr.f32.gmra.mrb[0].mxu0 %v740
      %v917 = vpop.f32.mrb[0].mxu0
      %v918 = vadd.f32 %v598, %v917
      %v919 = vpop.f32.mrb[0].mxu0
      %920 = vmatprep.mubr.f32.mxu0 0.0
      %921 = vmatmul.mubr.f32.gmra.mrb[0].mxu0 %v742
      %v922 = vpop.f32.mrb[0].mxu0
      %v923 = vadd.f32 %v603, %v922
      %v924 = vpop.f32.mrb[0].mxu0
      %925 = vmatprep.mubr.f32.mxu0 0.0
      %926 = vmatmul.mubr.f32.gmra.mrb[0].mxu0 %v744
      %v927 = vpop.f32.mrb[0].mxu0
      %v928 = vadd.f32 %v608, %v927
      %v929 = vpop.f32.mrb[0].mxu0
      %930 = vmatprep.mubr.f32.mxu0 0.0
      %931 = vmatmul.mubr.f32.gmra.mrb[0].mxu0 %v746
      %v932 = vpop.f32.mrb[0].mxu0
      %v933 = vadd.f32 %v613, %v932
      %v934 = vpop.f32.mrb[0].mxu0
      %935 = vmatprep.mubr.f32.mxu0 0.0
      %936 = vmatmul.mubr.f32.gmra.mrb[0].mxu0 %v748
      %v937 = vpop.f32.mrb[0].mxu0
      %v938 = vadd.f32 %v618, %v937
      %v939 = vpop.f32.mrb[0].mxu0
      %940 = vmatprep.mubr.f32.mxu0 0.0
      %941 = vmatmul.mubr.f32.gmra.mrb[0].mxu0 %v750
      %v942 = vpop.f32.mrb[0].mxu0
      %v943 = vadd.f32 %v623, %v942
      %v944 = vpop.f32.mrb[0].mxu0
      %945 = vmatprep.mubr.f32.mxu0 0.0
      %946 = vmatmul.mubr.f32.gmra.mrb[0].mxu0 %v752
      %v947 = vpop.f32.mrb[0].mxu0
      %v948 = vadd.f32 %v628, %v947
      %v949 = vpop.f32.mrb[0].mxu0
      %950 = vmatprep.mubr.f32.mxu0 0.0
      %951 = vmatmul.mubr.f32.gmra.mrb[0].mxu0 %v754
      %v952 = vpop.f32.mrb[0].mxu0
      %v953 = vadd.f32 %v633, %v952
      %v954 = vpop.f32.mrb[0].mxu0
      %955 = vmatprep.mubr.f32.mxu0 0.0
      %956 = vmatmul.mubr.f32.gmra.mrb[0].mxu0 %v756
      %v957 = vpop.f32.mrb[0].mxu0
      %v958 = vadd.f32 %v638, %v957
      %v959 = vpop.f32.mrb[0].mxu0
      %960 = vmatprep.mubr.f32.mxu0 0.0
      %961 = vmatmul.mubr.f32.gmra.mrb[0].mxu0 %v758
      %v962 = vpop.f32.mrb[0].mxu0
      %v963 = vadd.f32 %v643, %v962
      %v964 = vpop.f32.mrb[0].mxu0
      %965 = vmatprep.mubr.f32.mxu0 0.0
      %966 = vmatmul.mubr.f32.gmra.mrb[0].mxu0 %v760
      %v967 = vpop.f32.mrb[0].mxu0
      %v968 = vadd.f32 %v648, %v967
      %v969 = vpop.f32.mrb[0].mxu0
      %970 = vmatprep.mubr.f32.mxu0 0.0
      %971 = vmatmul.mubr.f32.gmra.mrb[0].mxu0 %v762
      %v972 = vpop.f32.mrb[0].mxu0
      %v973 = vadd.f32 %v653, %v972
      %v974 = vpop.f32.mrb[0].mxu0
      %975 = vmatprep.mubr.f32.mxu0 0.0
      %976 = vmatmul.mubr.f32.gmra.mrb[0].mxu0 %v764
      %v977 = vpop.f32.mrb[0].mxu0
      %v978 = vadd.f32 %v658, %v977
      %v979 = vpop.f32.mrb[0].mxu0
      %980 = vmatprep.mubr.f32.mxu0 0.0
      %981 = vmatmul.mubr.f32.gmra.mrb[0].mxu0 %v766
      %v982 = vpop.f32.mrb[0].mxu0
      %v983 = vadd.f32 %v663, %v982
      %v984 = vpop.f32.mrb[0].mxu0
      %985 = vmatprep.mubr.f32.mxu0 0.0
      %986 = vmatmul.mubr.f32.gmra.mrb[0].mxu0 %v768
      %v987 = vpop.f32.mrb[0].mxu0
      %v988 = vadd.f32 %v668, %v987
      %v989 = vpop.f32.mrb[0].mxu0
      %990 = vmatprep.mubr.f32.mxu0 0.0
      %991 = vmatmul.mubr.f32.gmra.mrb[0].mxu0 %v770
      %v992 = vpop.f32.mrb[0].mxu0
      %v993 = vadd.f32 %v673, %v992
      %v994 = vpop.f32.mrb[0].mxu0
      %995 = vmatprep.mubr.f32.mxu0 0.0
      %996 = vmatmul.mubr.f32.gmra.mrb[0].mxu0 %v772
      %v997 = vpop.f32.mrb[0].mxu0
      %v998 = vadd.f32 %v678, %v997
      %v999 = vpop.f32.mrb[0].mxu0
      %1000 = vmatprep.mubr.f32.mxu0 0.0
      %1001 = vmatmul.mubr.f32.gmra.mrb[0].mxu0 %v774
      %v1002 = vpop.f32.mrb[0].mxu0
      %v1003 = vadd.f32 %v683, %v1002
      %v1004 = vpop.f32.mrb[0].mxu0
      %1005 = vmatprep.mubr.f32.mxu0 0.0
      %1006 = vmatmul.mubr.f32.gmra.mrb[0].mxu0 %v776
      %v1007 = vpop.f32.mrb[0].mxu0
      %v1008 = vadd.f32 %v688, %v1007
      %v1009 = vpop.f32.mrb[0].mxu0
      %1010 = vmatprep.mubr.f32.mxu0 0.0
      %1011 = vmatmul.mubr.f32.gmra.mrb[0].mxu0 %v778
      %v1012 = vpop.f32.mrb[0].mxu0
      %v1013 = vadd.f32 %v693, %v1012
      %v1014 = vpop.f32.mrb[0].mxu0
      %1015 = vmatprep.mubr.f32.mxu0 0.0
      %1016 = vmatmul.mubr.f32.gmra.mrb[0].mxu0 %v780
      %v1017 = vpop.f32.mrb[0].mxu0
      %v1018 = vadd.f32 %v698, %v1017
      %v1019 = vpop.f32.mrb[0].mxu0
      %1020 = vmatprep.mubr.f32.mxu0 0.0
      %1021 = vmatmul.mubr.f32.gmra.mrb[0].mxu0 %v782
      %v1022 = vpop.f32.mrb[0].mxu0
      %v1023 = vadd.f32 %v703, %v1022
      %v1024 = vpop.f32.mrb[0].mxu0
      %1025 = vmatprep.mubr.f32.mxu0 0.0
      %1026 = vmatmul.mubr.f32.gmra.mrb[0].mxu0 %v784
      %v1027 = vpop.f32.mrb[0].mxu0
      %v1028 = vadd.f32 %v708, %v1027
      %v1029 = vpop.f32.mrb[0].mxu0
      %1030 = vmatprep.mubr.f32.mxu0 0.0
      %1031 = vmatmul.mubr.f32.gmra.mrb[0].mxu0 %v786
      %v1032 = vpop.f32.mrb[0].mxu0
      %v1033 = vadd.f32 %v713, %v1032
      %v1034 = vpop.f32.mrb[0].mxu0
      %1035 = vdwg.mxu0
      %s1036 = scalar_lea.vmem %s0, 8
      %v1037 = vld [vmem:[%s1036] sm:$0xf]
      %vm1038 = vcmask 1045504
      %v1039 = vrot.slane %v239, 2
      %v1040 = vrot.slane %v240, 2
      %v1041 = vsel %vm1038, %v1039, %v1040
      %v1042 = vrot.slane %v241, 2
      %v1043 = vsel %vm1038, %v1040, %v1042
      %v1044 = vrot.slane %v242, 2
      %v1045 = vsel %vm1038, %v1042, %v1044
      %v1046 = vrot.slane %v243, 2
      %v1047 = vsel %vm1038, %v1044, %v1046
      %v1048 = vrot.slane %v244, 2
      %v1049 = vsel %vm1038, %v1046, %v1048
      %v1050 = vrot.slane %v245, 2
      %v1051 = vsel %vm1038, %v1048, %v1050
      %v1052 = vrot.slane %v246, 2
      %v1053 = vsel %vm1038, %v1050, %v1052
      %v1054 = vrot.slane %v247, 2
      %v1055 = vsel %vm1038, %v1052, %v1054
      %v1056 = vrot.slane %v248, 2
      %v1057 = vsel %vm1038, %v1054, %v1056
      %v1058 = vrot.slane %v249, 2
      %v1059 = vsel %vm1038, %v1056, %v1058
      %v1060 = vrot.slane %v250, 2
      %v1061 = vsel %vm1038, %v1058, %v1060
      %v1062 = vrot.slane %v251, 2
      %v1063 = vsel %vm1038, %v1060, %v1062
      %v1064 = vrot.slane %v252, 2
      %v1065 = vsel %vm1038, %v1062, %v1064
      %v1066 = vrot.slane %v253, 2
      %v1067 = vsel %vm1038, %v1064, %v1066
      %v1068 = vrot.slane %v254, 2
      %v1069 = vsel %vm1038, %v1066, %v1068
      %v1070 = vrot.slane %v255, 2
      %v1071 = vsel %vm1038, %v1068, %v1070
      %v1072 = vrot.slane %v256, 2
      %v1073 = vsel %vm1038, %v1070, %v1072
      %v1074 = vrot.slane %v257, 2
      %v1075 = vsel %vm1038, %v1072, %v1074
      %v1076 = vrot.slane %v258, 2
      %v1077 = vsel %vm1038, %v1074, %v1076
      %v1078 = vrot.slane %v259, 2
      %v1079 = vsel %vm1038, %v1076, %v1078
      %v1080 = vrot.slane %v260, 2
      %v1081 = vsel %vm1038, %v1078, %v1080
      %v1082 = vrot.slane %v261, 2
      %v1083 = vsel %vm1038, %v1080, %v1082
      %v1084 = vrot.slane %v262, 2
      %v1085 = vsel %vm1038, %v1082, %v1084
      %v1086 = vrot.slane %v263, 2
      %v1087 = vsel %vm1038, %v1084, %v1086
      %v1088 = vrot.slane %v264, 2
      %v1089 = vsel %vm1038, %v1086, %v1088
      %v1090 = vrot.slane %v265, 2
      %v1091 = vsel %vm1038, %v1088, %v1090
      %v1092 = vrot.slane %v266, 2
      %v1093 = vsel %vm1038, %v1090, %v1092
      %v1094 = vrot.slane %v267, 2
      %v1095 = vsel %vm1038, %v1092, %v1094
      %v1096 = vrot.slane %v268, 2
      %v1097 = vsel %vm1038, %v1094, %v1096
      %v1098 = vrot.slane %v269, 2
      %v1099 = vsel %vm1038, %v1096, %v1098
      %v1100 = vrot.slane %v270, 2
      %v1101 = vsel %vm1038, %v1098, %v1100
      %v1102 = vrot.slane %v271, 2
      %v1103 = vsel %vm1038, %v1100, %v1102
      %v1104 = vrot.slane %v272, 2
      %v1105 = vsel %vm1038, %v1102, %v1104
      %v1106 = vrot.slane %v273, 2
      %v1107 = vsel %vm1038, %v1104, %v1106
      %v1108 = vrot.slane %v274, 2
      %v1109 = vsel %vm1038, %v1106, %v1108
      %v1110 = vrot.slane %v275, 2
      %v1111 = vsel %vm1038, %v1108, %v1110
      %v1112 = vsel %vm394, %v1041, 0
      %v1114 = vsel %vm394, %v1043, 0
      %v1116 = vsel %vm394, %v1045, 0
      %v1118 = vsel %vm394, %v1047, 0
      %v1120 = vsel %vm394, %v1049, 0
      %v1122 = vsel %vm394, %v1051, 0
      %v1124 = vsel %vm394, %v1053, 0
      %v1126 = vsel %vm394, %v1055, 0
      %v1128 = vsel %vm394, %v1057, 0
      %v1130 = vsel %vm394, %v1059, 0
      %v1132 = vsel %vm394, %v1061, 0
      %v1134 = vsel %vm394, %v1063, 0
      %v1136 = vsel %vm394, %v1065, 0
      %v1138 = vsel %vm394, %v1067, 0
      %v1140 = vsel %vm394, %v1069, 0
      %v1142 = vsel %vm394, %v1071, 0
      %v1144 = vsel %vm394, %v1073, 0
      %v1146 = vsel %vm394, %v1075, 0
      %v1148 = vsel %vm394, %v1077, 0
      %v1150 = vsel %vm394, %v1079, 0
      %v1152 = vsel %vm394, %v1081, 0
      %v1154 = vsel %vm394, %v1083, 0
      %v1156 = vsel %vm394, %v1085, 0
      %v1158 = vsel %vm394, %v1087, 0
      %v1160 = vsel %vm394, %v1089, 0
      %v1162 = vsel %vm394, %v1091, 0
      %v1164 = vsel %vm394, %v1093, 0
      %v1166 = vsel %vm394, %v1095, 0
      %v1168 = vsel %vm394, %v1097, 0
      %v1170 = vsel %vm394, %v1099, 0
      %v1172 = vsel %vm394, %v1101, 0
      %v1174 = vsel %vm394, %v1103, 0
      %v1176 = vsel %vm394, %v1105, 0
      %v1178 = vsel %vm394, %v1107, 0
      %v1180 = vsel %vm394, %v1109, 0
      %v1182 = vsel %vm394, %v1111, 0
      %v1185 = vsel %vm467, %v1037, 0
      %1187 = vmatprep.subr.mxu0 0.0
      %1188 = vmatpush1.msra.mxu0 %v1185
      %1189 = vmatprep.subr.mxu0 0.0
      %1190 = vmatpush1.msra.mxu0 0.0
      %1191 = vmatprep.subr.mxu0 0.0
      %1192 = vmatpush1.msra.mxu0 0.0
      %1193 = vmatprep.subr.mxu0 0.0
      %1194 = vmatpush1.msra.mxu0 0.0
      %1195 = vmatprep.subr.mxu0 0.0
      %1196 = vmatpush1.msra.mxu0 0.0
      %1197 = vmatprep.subr.mxu0 0.0
      %1198 = vmatpush1.msra.mxu0 0.0
      %1199 = vmatprep.subr.mxu0 0.0
      %1200 = vmatpush1.msra.mxu0 0.0
      %1201 = vmatprep.subr.mxu0 0.0
      %1202 = vmatpush1.msra.mxu0 0.0
      %1203 = vmatprep.subr.mxu0 0.0
      %1204 = vmatpush1.msra.mxu0 0.0
      %1205 = vmatprep.subr.mxu0 0.0
      %1206 = vmatpush1.msra.mxu0 0.0
      %1207 = vmatprep.subr.mxu0 0.0
      %1208 = vmatpush1.msra.mxu0 0.0
      %1209 = vmatprep.subr.mxu0 0.0
      %1210 = vmatpush1.msra.mxu0 0.0
      %1211 = vmatprep.subr.mxu0 0.0
      %1212 = vmatpush1.msra.mxu0 0.0
      %1213 = vmatprep.subr.mxu0 0.0
      %1214 = vmatpush1.msra.mxu0 0.0
      %1215 = vmatprep.subr.mxu0 0.0
      %1216 = vmatpush1.msra.mxu0 0.0
      %1217 = vmatprep.subr.mxu0 0.0
      %1218 = vmatpush1.msra.mxu0 0.0
      %1219 = vmatprep.subr.mxu0 0.0
      %1220 = vmatpush1.msra.mxu0 0.0
      %1221 = vmatprep.subr.mxu0 0.0
      %1222 = vmatpush1.msra.mxu0 0.0
      %1223 = vmatprep.subr.mxu0 0.0
      %1224 = vmatpush1.msra.mxu0 0.0
      %1225 = vmatprep.subr.mxu0 0.0
      %1226 = vmatpush1.msra.mxu0 0.0
      %1227 = vmatprep.subr.mxu0 0.0
      %1228 = vmatpush1.msra.mxu0 0.0
      %1229 = vmatprep.subr.mxu0 0.0
      %1230 = vmatpush1.msra.mxu0 0.0
      %1231 = vmatprep.subr.mxu0 0.0
      %1232 = vmatpush1.msra.mxu0 0.0
      %1233 = vmatprep.subr.mxu0 0.0
      %1234 = vmatpush1.msra.mxu0 0.0
      %1235 = vmatprep.subr.mxu0 0.0
      %1236 = vmatpush1.msra.mxu0 0.0
      %1237 = vmatprep.subr.mxu0 0.0
      %1238 = vmatpush1.msra.mxu0 0.0
      %1239 = vmatprep.subr.mxu0 0.0
      %1240 = vmatpush1.msra.mxu0 0.0
      %1241 = vmatprep.subr.mxu0 0.0
      %1242 = vmatpush1.msra.mxu0 0.0
      %1243 = vmatprep.subr.mxu0 0.0
      %1244 = vmatpush1.msra.mxu0 0.0
      %1245 = vmatprep.subr.mxu0 0.0
      %1246 = vmatpush1.msra.mxu0 0.0
      %1247 = vmatprep.subr.mxu0 0.0
      %1248 = vmatpush1.msra.mxu0 0.0
      %1249 = vmatprep.subr.mxu0 0.0
      %1250 = vmatpush1.msra.mxu0 0.0
      %1251 = vmatprep.mubr.f32.mxu0 0.0
      %1252 = vmatmul.mubr.f32.gmra.mrb[0].mxu0 %v1112
      %v1253 = vpop.f32.mrb[0].mxu0
      %v1254 = vadd.f32 0.0, %v1253
      %v1255 = vpop.f32.mrb[0].mxu0
      %1256 = vmatprep.mubr.f32.mxu0 0.0
      %1257 = vmatmul.mubr.f32.gmra.mrb[0].mxu0 %v1114
      %v1258 = vpop.f32.mrb[0].mxu0
      %v1259 = vadd.f32 0.0, %v1258
      %v1260 = vpop.f32.mrb[0].mxu0
      %1261 = vmatprep.mubr.f32.mxu0 0.0
      %1262 = vmatmul.mubr.f32.gmra.mrb[0].mxu0 %v1116
      %v1263 = vpop.f32.mrb[0].mxu0
      %v1264 = vadd.f32 0.0, %v1263
      %v1265 = vpop.f32.mrb[0].mxu0
      %1266 = vmatprep.mubr.f32.mxu0 0.0
      %1267 = vmatmul.mubr.f32.gmra.mrb[0].mxu0 %v1118
      %v1268 = vpop.f32.mrb[0].mxu0
      %v1269 = vadd.f32 0.0, %v1268
      %v1270 = vpop.f32.mrb[0].mxu0
      %1271 = vmatprep.mubr.f32.mxu0 0.0
      %1272 = vmatmul.mubr.f32.gmra.mrb[0].mxu0 %v1120
      %v1273 = vpop.f32.mrb[0].mxu0
      %v1274 = vadd.f32 0.0, %v1273
      %v1275 = vpop.f32.mrb[0].mxu0
      %1276 = vmatprep.mubr.f32.mxu0 0.0
      %1277 = vmatmul.mubr.f32.gmra.mrb[0].mxu0 %v1122
      %v1278 = vpop.f32.mrb[0].mxu0
      %v1279 = vadd.f32 0.0, %v1278
      %v1280 = vpop.f32.mrb[0].mxu0
      %1281 = vmatprep.mubr.f32.mxu0 0.0
      %1282 = vmatmul.mubr.f32.gmra.mrb[0].mxu0 %v1124
      %v1283 = vpop.f32.mrb[0].mxu0
      %v1284 = vadd.f32 0.0, %v1283
      %v1285 = vpop.f32.mrb[0].mxu0
      %1286 = vmatprep.mubr.f32.mxu0 0.0
      %1287 = vmatmul.mubr.f32.gmra.mrb[0].mxu0 %v1126
      %v1288 = vpop.f32.mrb[0].mxu0
      %v1289 = vadd.f32 0.0, %v1288
      %v1290 = vpop.f32.mrb[0].mxu0
      %1291 = vmatprep.mubr.f32.mxu0 0.0
      %1292 = vmatmul.mubr.f32.gmra.mrb[0].mxu0 %v1128
      %v1293 = vpop.f32.mrb[0].mxu0
      %v1294 = vadd.f32 0.0, %v1293
      %v1295 = vpop.f32.mrb[0].mxu0
      %1296 = vmatprep.mubr.f32.mxu0 0.0
      %1297 = vmatmul.mubr.f32.gmra.mrb[0].mxu0 %v1130
      %v1298 = vpop.f32.mrb[0].mxu0
      %v1299 = vadd.f32 0.0, %v1298
      %v1300 = vpop.f32.mrb[0].mxu0
      %1301 = vmatprep.mubr.f32.mxu0 0.0
      %1302 = vmatmul.mubr.f32.gmra.mrb[0].mxu0 %v1132
      %v1303 = vpop.f32.mrb[0].mxu0
      %v1304 = vadd.f32 0.0, %v1303
      %v1305 = vpop.f32.mrb[0].mxu0
      %1306 = vmatprep.mubr.f32.mxu0 0.0
      %1307 = vmatmul.mubr.f32.gmra.mrb[0].mxu0 %v1134
      %v1308 = vpop.f32.mrb[0].mxu0
      %v1309 = vadd.f32 0.0, %v1308
      %v1310 = vpop.f32.mrb[0].mxu0
      %1311 = vmatprep.mubr.f32.mxu0 0.0
      %1312 = vmatmul.mubr.f32.gmra.mrb[0].mxu0 %v1136
      %v1313 = vpop.f32.mrb[0].mxu0
      %v1314 = vadd.f32 0.0, %v1313
      %v1315 = vpop.f32.mrb[0].mxu0
      %1316 = vmatprep.mubr.f32.mxu0 0.0
      %1317 = vmatmul.mubr.f32.gmra.mrb[0].mxu0 %v1138
      %v1318 = vpop.f32.mrb[0].mxu0
      %v1319 = vadd.f32 0.0, %v1318
      %v1320 = vpop.f32.mrb[0].mxu0
      %1321 = vmatprep.mubr.f32.mxu0 0.0
      %1322 = vmatmul.mubr.f32.gmra.mrb[0].mxu0 %v1140
      %v1323 = vpop.f32.mrb[0].mxu0
      %v1324 = vadd.f32 0.0, %v1323
      %v1325 = vpop.f32.mrb[0].mxu0
      %1326 = vmatprep.mubr.f32.mxu0 0.0
      %1327 = vmatmul.mubr.f32.gmra.mrb[0].mxu0 %v1142
      %v1328 = vpop.f32.mrb[0].mxu0
      %v1329 = vadd.f32 0.0, %v1328
      %v1330 = vpop.f32.mrb[0].mxu0
      %1331 = vmatprep.mubr.f32.mxu0 0.0
      %1332 = vmatmul.mubr.f32.gmra.mrb[0].mxu0 %v1144
      %v1333 = vpop.f32.mrb[0].mxu0
      %v1334 = vadd.f32 0.0, %v1333
      %v1335 = vpop.f32.mrb[0].mxu0
      %1336 = vmatprep.mubr.f32.mxu0 0.0
      %1337 = vmatmul.mubr.f32.gmra.mrb[0].mxu0 %v1146
      %v1338 = vpop.f32.mrb[0].mxu0
      %v1339 = vadd.f32 0.0, %v1338
      %v1340 = vpop.f32.mrb[0].mxu0
      %1341 = vmatprep.mubr.f32.mxu0 0.0
      %1342 = vmatmul.mubr.f32.gmra.mrb[0].mxu0 %v1148
      %v1343 = vpop.f32.mrb[0].mxu0
      %v1344 = vadd.f32 0.0, %v1343
      %v1345 = vpop.f32.mrb[0].mxu0
      %1346 = vmatprep.mubr.f32.mxu0 0.0
      %1347 = vmatmul.mubr.f32.gmra.mrb[0].mxu0 %v1150
      %v1348 = vpop.f32.mrb[0].mxu0
      %v1349 = vadd.f32 0.0, %v1348
      %v1350 = vpop.f32.mrb[0].mxu0
      %1351 = vmatprep.mubr.f32.mxu0 0.0
      %1352 = vmatmul.mubr.f32.gmra.mrb[0].mxu0 %v1152
      %v1353 = vpop.f32.mrb[0].mxu0
      %v1354 = vadd.f32 0.0, %v1353
      %v1355 = vpop.f32.mrb[0].mxu0
      %1356 = vmatprep.mubr.f32.mxu0 0.0
      %1357 = vmatmul.mubr.f32.gmra.mrb[0].mxu0 %v1154
      %v1358 = vpop.f32.mrb[0].mxu0
      %v1359 = vadd.f32 0.0, %v1358
      %v1360 = vpop.f32.mrb[0].mxu0
      %1361 = vmatprep.mubr.f32.mxu0 0.0
      %1362 = vmatmul.mubr.f32.gmra.mrb[0].mxu0 %v1156
      %v1363 = vpop.f32.mrb[0].mxu0
      %v1364 = vadd.f32 0.0, %v1363
      %v1365 = vpop.f32.mrb[0].mxu0
      %1366 = vmatprep.mubr.f32.mxu0 0.0
      %1367 = vmatmul.mubr.f32.gmra.mrb[0].mxu0 %v1158
      %v1368 = vpop.f32.mrb[0].mxu0
      %v1369 = vadd.f32 0.0, %v1368
      %v1370 = vpop.f32.mrb[0].mxu0
      %1371 = vmatprep.mubr.f32.mxu0 0.0
      %1372 = vmatmul.mubr.f32.gmra.mrb[0].mxu0 %v1160
      %v1373 = vpop.f32.mrb[0].mxu0
      %v1374 = vadd.f32 0.0, %v1373
      %v1375 = vpop.f32.mrb[0].mxu0
      %1376 = vmatprep.mubr.f32.mxu0 0.0
      %1377 = vmatmul.mubr.f32.gmra.mrb[0].mxu0 %v1162
      %v1378 = vpop.f32.mrb[0].mxu0
      %v1379 = vadd.f32 0.0, %v1378
      %v1380 = vpop.f32.mrb[0].mxu0
      %1381 = vmatprep.mubr.f32.mxu0 0.0
      %1382 = vmatmul.mubr.f32.gmra.mrb[0].mxu0 %v1164
      %v1383 = vpop.f32.mrb[0].mxu0
      %v1384 = vadd.f32 0.0, %v1383
      %v1385 = vpop.f32.mrb[0].mxu0
      %1386 = vmatprep.mubr.f32.mxu0 0.0
      %1387 = vmatmul.mubr.f32.gmra.mrb[0].mxu0 %v1166
      %v1388 = vpop.f32.mrb[0].mxu0
      %v1389 = vadd.f32 0.0, %v1388
      %v1390 = vpop.f32.mrb[0].mxu0
      %1391 = vmatprep.mubr.f32.mxu0 0.0
      %1392 = vmatmul.mubr.f32.gmra.mrb[0].mxu0 %v1168
      %v1393 = vpop.f32.mrb[0].mxu0
      %v1394 = vadd.f32 0.0, %v1393
      %v1395 = vpop.f32.mrb[0].mxu0
      %1396 = vmatprep.mubr.f32.mxu0 0.0
      %1397 = vmatmul.mubr.f32.gmra.mrb[0].mxu0 %v1170
      %v1398 = vpop.f32.mrb[0].mxu0
      %v1399 = vadd.f32 0.0, %v1398
      %v1400 = vpop.f32.mrb[0].mxu0
      %1401 = vmatprep.mubr.f32.mxu0 0.0
      %1402 = vmatmul.mubr.f32.gmra.mrb[0].mxu0 %v1172
      %v1403 = vpop.f32.mrb[0].mxu0
      %v1404 = vadd.f32 0.0, %v1403
      %v1405 = vpop.f32.mrb[0].mxu0
      %1406 = vmatprep.mubr.f32.mxu0 0.0
      %1407 = vmatmul.mubr.f32.gmra.mrb[0].mxu0 %v1174
      %v1408 = vpop.f32.mrb[0].mxu0
      %v1409 = vadd.f32 0.0, %v1408
      %v1410 = vpop.f32.mrb[0].mxu0
      %1411 = vmatprep.mubr.f32.mxu0 0.0
      %1412 = vmatmul.mubr.f32.gmra.mrb[0].mxu0 %v1176
      %v1413 = vpop.f32.mrb[0].mxu0
      %v1414 = vadd.f32 0.0, %v1413
      %v1415 = vpop.f32.mrb[0].mxu0
      %1416 = vmatprep.mubr.f32.mxu0 0.0
      %1417 = vmatmul.mubr.f32.gmra.mrb[0].mxu0 %v1178
      %v1418 = vpop.f32.mrb[0].mxu0
      %v1419 = vadd.f32 0.0, %v1418
      %v1420 = vpop.f32.mrb[0].mxu0
      %1421 = vmatprep.mubr.f32.mxu0 0.0
      %1422 = vmatmul.mubr.f32.gmra.mrb[0].mxu0 %v1180
      %v1423 = vpop.f32.mrb[0].mxu0
      %v1424 = vadd.f32 0.0, %v1423
      %v1425 = vpop.f32.mrb[0].mxu0
      %1426 = vmatprep.mubr.f32.mxu0 0.0
      %1427 = vmatmul.mubr.f32.gmra.mrb[0].mxu0 %v1182
      %v1428 = vpop.f32.mrb[0].mxu0
      %v1429 = vadd.f32 0.0, %v1428
      %v1430 = vpop.f32.mrb[0].mxu0
      %1431 = vdwg.mxu0
      %v1432 = vadd.f32 %v858, %v1254
      %v1433 = vadd.f32 %v863, %v1259
      %v1434 = vadd.f32 %v868, %v1264
      %v1435 = vadd.f32 %v873, %v1269
      %v1436 = vadd.f32 %v878, %v1274
      %v1437 = vadd.f32 %v883, %v1279
      %v1438 = vadd.f32 %v888, %v1284
      %v1439 = vadd.f32 %v893, %v1289
      %v1440 = vadd.f32 %v898, %v1294
      %v1441 = vadd.f32 %v903, %v1299
      %v1442 = vadd.f32 %v908, %v1304
      %v1443 = vadd.f32 %v913, %v1309
      %v1444 = vadd.f32 %v918, %v1314
      %v1445 = vadd.f32 %v923, %v1319
      %v1446 = vadd.f32 %v928, %v1324
      %v1447 = vadd.f32 %v933, %v1329
      %v1448 = vadd.f32 %v938, %v1334
      %v1449 = vadd.f32 %v943, %v1339
      %v1450 = vadd.f32 %v948, %v1344
      %v1451 = vadd.f32 %v953, %v1349
      %v1452 = vadd.f32 %v958, %v1354
      %v1453 = vadd.f32 %v963, %v1359
      %v1454 = vadd.f32 %v968, %v1364
      %v1455 = vadd.f32 %v973, %v1369
      %v1456 = vadd.f32 %v978, %v1374
      %v1457 = vadd.f32 %v983, %v1379
      %v1458 = vadd.f32 %v988, %v1384
      %v1459 = vadd.f32 %v993, %v1389
      %v1460 = vadd.f32 %v998, %v1394
      %v1461 = vadd.f32 %v1003, %v1399
      %v1462 = vadd.f32 %v1008, %v1404
      %v1463 = vadd.f32 %v1013, %v1409
      %v1464 = vadd.f32 %v1018, %v1414
      %v1465 = vadd.f32 %v1023, %v1419
      %v1466 = vadd.f32 %v1028, %v1424
      %v1467 = vadd.f32 %v1033, %v1429
      %s1468 = scalar_lea.vmem %s0, 12
      %v1469 = vld [vmem:[%s1468] sm:$0xf]
      %v1472 = vrot.slane %v276, 2
      %v1473 = vsel %vm1038, %v1110, %v1472
      %v1474 = vrot.slane %v277, 2
      %v1475 = vsel %vm1038, %v1472, %v1474
      %v1476 = vsel %vm394, %v1473, 0
      %v1478 = vsel %vm394, %v1475, 0
      %v1481 = vsel %vm467, %v1469, 0
      %1483 = vmatprep.subr.mxu0 0.0
      %1484 = vmatpush1.msra.mxu0 %v1481
      %1485 = vmatprep.subr.mxu0 0.0
      %1486 = vmatpush1.msra.mxu0 0.0
      %1487 = vmatprep.subr.mxu0 0.0
      %1488 = vmatpush1.msra.mxu0 0.0
      %1489 = vmatprep.subr.mxu0 0.0
      %1490 = vmatpush1.msra.mxu0 0.0
      %1491 = vmatprep.subr.mxu0 0.0
      %1492 = vmatpush1.msra.mxu0 0.0
      %1493 = vmatprep.subr.mxu0 0.0
      %1494 = vmatpush1.msra.mxu0 0.0
      %1495 = vmatprep.subr.mxu0 0.0
      %1496 = vmatpush1.msra.mxu0 0.0
      %1497 = vmatprep.subr.mxu0 0.0
      %1498 = vmatpush1.msra.mxu0 0.0
      %1499 = vmatprep.subr.mxu0 0.0
      %1500 = vmatpush1.msra.mxu0 0.0
      %1501 = vmatprep.subr.mxu0 0.0
      %1502 = vmatpush1.msra.mxu0 0.0
      %1503 = vmatprep.subr.mxu0 0.0
      %1504 = vmatpush1.msra.mxu0 0.0
      %1505 = vmatprep.subr.mxu0 0.0
      %1506 = vmatpush1.msra.mxu0 0.0
      %1507 = vmatprep.subr.mxu0 0.0
      %1508 = vmatpush1.msra.mxu0 0.0
      %1509 = vmatprep.subr.mxu0 0.0
      %1510 = vmatpush1.msra.mxu0 0.0
      %1511 = vmatprep.subr.mxu0 0.0
      %1512 = vmatpush1.msra.mxu0 0.0
      %1513 = vmatprep.subr.mxu0 0.0
      %1514 = vmatpush1.msra.mxu0 0.0
      %1515 = vmatprep.subr.mxu0 0.0
      %1516 = vmatpush1.msra.mxu0 0.0
      %1517 = vmatprep.subr.mxu0 0.0
      %1518 = vmatpush1.msra.mxu0 0.0
      %1519 = vmatprep.subr.mxu0 0.0
      %1520 = vmatpush1.msra.mxu0 0.0
      %1521 = vmatprep.subr.mxu0 0.0
      %1522 = vmatpush1.msra.mxu0 0.0
      %1523 = vmatprep.subr.mxu0 0.0
      %1524 = vmatpush1.msra.mxu0 0.0
      %1525 = vmatprep.subr.mxu0 0.0
      %1526 = vmatpush1.msra.mxu0 0.0
      %1527 = vmatprep.subr.mxu0 0.0
      %1528 = vmatpush1.msra.mxu0 0.0
      %1529 = vmatprep.subr.mxu0 0.0
      %1530 = vmatpush1.msra.mxu0 0.0
      %1531 = vmatprep.subr.mxu0 0.0
      %1532 = vmatpush1.msra.mxu0 0.0
      %1533 = vmatprep.subr.mxu0 0.0
      %1534 = vmatpush1.msra.mxu0 0.0
      %1535 = vmatprep.subr.mxu0 0.0
      %1536 = vmatpush1.msra.mxu0 0.0
      %1537 = vmatprep.subr.mxu0 0.0
      %1538 = vmatpush1.msra.mxu0 0.0
      %1539 = vmatprep.subr.mxu0 0.0
      %1540 = vmatpush1.msra.mxu0 0.0
      %1541 = vmatprep.subr.mxu0 0.0
      %1542 = vmatpush1.msra.mxu0 0.0
      %1543 = vmatprep.subr.mxu0 0.0
      %1544 = vmatpush1.msra.mxu0 0.0
      %1545 = vmatprep.subr.mxu0 0.0
      %1546 = vmatpush1.msra.mxu0 0.0
      %1547 = vmatprep.mubr.f32.mxu0 0.0
      %1548 = vmatmul.mubr.f32.gmra.mrb[0].mxu0 %v1116
      %v1549 = vpop.f32.mrb[0].mxu0
      %v1550 = vadd.f32 0.0, %v1549
      %v1551 = vpop.f32.mrb[0].mxu0
      %1552 = vmatprep.mubr.f32.mxu0 0.0
      %1553 = vmatmul.mubr.f32.gmra.mrb[0].mxu0 %v1118
      %v1554 = vpop.f32.mrb[0].mxu0
      %v1555 = vadd.f32 0.0, %v1554
      %v1556 = vpop.f32.mrb[0].mxu0
      %1557 = vmatprep.mubr.f32.mxu0 0.0
      %1558 = vmatmul.mubr.f32.gmra.mrb[0].mxu0 %v1120
      %v1559 = vpop.f32.mrb[0].mxu0
      %v1560 = vadd.f32 0.0, %v1559
      %v1561 = vpop.f32.mrb[0].mxu0
      %1562 = vmatprep.mubr.f32.mxu0 0.0
      %1563 = vmatmul.mubr.f32.gmra.mrb[0].mxu0 %v1122
      %v1564 = vpop.f32.mrb[0].mxu0
      %v1565 = vadd.f32 0.0, %v1564
      %v1566 = vpop.f32.mrb[0].mxu0
      %1567 = vmatprep.mubr.f32.mxu0 0.0
      %1568 = vmatmul.mubr.f32.gmra.mrb[0].mxu0 %v1124
      %v1569 = vpop.f32.mrb[0].mxu0
      %v1570 = vadd.f32 0.0, %v1569
      %v1571 = vpop.f32.mrb[0].mxu0
      %1572 = vmatprep.mubr.f32.mxu0 0.0
      %1573 = vmatmul.mubr.f32.gmra.mrb[0].mxu0 %v1126
      %v1574 = vpop.f32.mrb[0].mxu0
      %v1575 = vadd.f32 0.0, %v1574
      %v1576 = vpop.f32.mrb[0].mxu0
      %1577 = vmatprep.mubr.f32.mxu0 0.0
      %1578 = vmatmul.mubr.f32.gmra.mrb[0].mxu0 %v1128
      %v1579 = vpop.f32.mrb[0].mxu0
      %v1580 = vadd.f32 0.0, %v1579
      %v1581 = vpop.f32.mrb[0].mxu0
      %1582 = vmatprep.mubr.f32.mxu0 0.0
      %1583 = vmatmul.mubr.f32.gmra.mrb[0].mxu0 %v1130
      %v1584 = vpop.f32.mrb[0].mxu0
      %v1585 = vadd.f32 0.0, %v1584
      %v1586 = vpop.f32.mrb[0].mxu0
      %1587 = vmatprep.mubr.f32.mxu0 0.0
      %1588 = vmatmul.mubr.f32.gmra.mrb[0].mxu0 %v1132
      %v1589 = vpop.f32.mrb[0].mxu0
      %v1590 = vadd.f32 0.0, %v1589
      %v1591 = vpop.f32.mrb[0].mxu0
      %1592 = vmatprep.mubr.f32.mxu0 0.0
      %1593 = vmatmul.mubr.f32.gmra.mrb[0].mxu0 %v1134
      %v1594 = vpop.f32.mrb[0].mxu0
      %v1595 = vadd.f32 0.0, %v1594
      %v1596 = vpop.f32.mrb[0].mxu0
      %1597 = vmatprep.mubr.f32.mxu0 0.0
      %1598 = vmatmul.mubr.f32.gmra.mrb[0].mxu0 %v1136
      %v1599 = vpop.f32.mrb[0].mxu0
      %v1600 = vadd.f32 0.0, %v1599
      %v1601 = vpop.f32.mrb[0].mxu0
      %1602 = vmatprep.mubr.f32.mxu0 0.0
      %1603 = vmatmul.mubr.f32.gmra.mrb[0].mxu0 %v1138
      %v1604 = vpop.f32.mrb[0].mxu0
      %v1605 = vadd.f32 0.0, %v1604
      %v1606 = vpop.f32.mrb[0].mxu0
      %1607 = vmatprep.mubr.f32.mxu0 0.0
      %1608 = vmatmul.mubr.f32.gmra.mrb[0].mxu0 %v1140
      %v1609 = vpop.f32.mrb[0].mxu0
      %v1610 = vadd.f32 0.0, %v1609
      %v1611 = vpop.f32.mrb[0].mxu0
      %1612 = vmatprep.mubr.f32.mxu0 0.0
      %1613 = vmatmul.mubr.f32.gmra.mrb[0].mxu0 %v1142
      %v1614 = vpop.f32.mrb[0].mxu0
      %v1615 = vadd.f32 0.0, %v1614
      %v1616 = vpop.f32.mrb[0].mxu0
      %1617 = vmatprep.mubr.f32.mxu0 0.0
      %1618 = vmatmul.mubr.f32.gmra.mrb[0].mxu0 %v1144
      %v1619 = vpop.f32.mrb[0].mxu0
      %v1620 = vadd.f32 0.0, %v1619
      %v1621 = vpop.f32.mrb[0].mxu0
      %1622 = vmatprep.mubr.f32.mxu0 0.0
      %1623 = vmatmul.mubr.f32.gmra.mrb[0].mxu0 %v1146
      %v1624 = vpop.f32.mrb[0].mxu0
      %v1625 = vadd.f32 0.0, %v1624
      %v1626 = vpop.f32.mrb[0].mxu0
      %1627 = vmatprep.mubr.f32.mxu0 0.0
      %1628 = vmatmul.mubr.f32.gmra.mrb[0].mxu0 %v1148
      %v1629 = vpop.f32.mrb[0].mxu0
      %v1630 = vadd.f32 0.0, %v1629
      %v1631 = vpop.f32.mrb[0].mxu0
      %1632 = vmatprep.mubr.f32.mxu0 0.0
      %1633 = vmatmul.mubr.f32.gmra.mrb[0].mxu0 %v1150
      %v1634 = vpop.f32.mrb[0].mxu0
      %v1635 = vadd.f32 0.0, %v1634
      %v1636 = vpop.f32.mrb[0].mxu0
      %1637 = vmatprep.mubr.f32.mxu0 0.0
      %1638 = vmatmul.mubr.f32.gmra.mrb[0].mxu0 %v1152
      %v1639 = vpop.f32.mrb[0].mxu0
      %v1640 = vadd.f32 0.0, %v1639
      %v1641 = vpop.f32.mrb[0].mxu0
      %1642 = vmatprep.mubr.f32.mxu0 0.0
      %1643 = vmatmul.mubr.f32.gmra.mrb[0].mxu0 %v1154
      %v1644 = vpop.f32.mrb[0].mxu0
      %v1645 = vadd.f32 0.0, %v1644
      %v1646 = vpop.f32.mrb[0].mxu0
      %1647 = vmatprep.mubr.f32.mxu0 0.0
      %1648 = vmatmul.mubr.f32.gmra.mrb[0].mxu0 %v1156
      %v1649 = vpop.f32.mrb[0].mxu0
      %v1650 = vadd.f32 0.0, %v1649
      %v1651 = vpop.f32.mrb[0].mxu0
      %1652 = vmatprep.mubr.f32.mxu0 0.0
      %1653 = vmatmul.mubr.f32.gmra.mrb[0].mxu0 %v1158
      %v1654 = vpop.f32.mrb[0].mxu0
      %v1655 = vadd.f32 0.0, %v1654
      %v1656 = vpop.f32.mrb[0].mxu0
      %1657 = vmatprep.mubr.f32.mxu0 0.0
      %1658 = vmatmul.mubr.f32.gmra.mrb[0].mxu0 %v1160
      %v1659 = vpop.f32.mrb[0].mxu0
      %v1660 = vadd.f32 0.0, %v1659
      %v1661 = vpop.f32.mrb[0].mxu0
      %1662 = vmatprep.mubr.f32.mxu0 0.0
      %1663 = vmatmul.mubr.f32.gmra.mrb[0].mxu0 %v1162
      %v1664 = vpop.f32.mrb[0].mxu0
      %v1665 = vadd.f32 0.0, %v1664
      %v1666 = vpop.f32.mrb[0].mxu0
      %1667 = vmatprep.mubr.f32.mxu0 0.0
      %1668 = vmatmul.mubr.f32.gmra.mrb[0].mxu0 %v1164
      %v1669 = vpop.f32.mrb[0].mxu0
      %v1670 = vadd.f32 0.0, %v1669
      %v1671 = vpop.f32.mrb[0].mxu0
      %1672 = vmatprep.mubr.f32.mxu0 0.0
      %1673 = vmatmul.mubr.f32.gmra.mrb[0].mxu0 %v1166
      %v1674 = vpop.f32.mrb[0].mxu0
      %v1675 = vadd.f32 0.0, %v1674
      %v1676 = vpop.f32.mrb[0].mxu0
      %1677 = vmatprep.mubr.f32.mxu0 0.0
      %1678 = vmatmul.mubr.f32.gmra.mrb[0].mxu0 %v1168
      %v1679 = vpop.f32.mrb[0].mxu0
      %v1680 = vadd.f32 0.0, %v1679
      %v1681 = vpop.f32.mrb[0].mxu0
      %1682 = vmatprep.mubr.f32.mxu0 0.0
      %1683 = vmatmul.mubr.f32.gmra.mrb[0].mxu0 %v1170
      %v1684 = vpop.f32.mrb[0].mxu0
      %v1685 = vadd.f32 0.0, %v1684
      %v1686 = vpop.f32.mrb[0].mxu0
      %1687 = vmatprep.mubr.f32.mxu0 0.0
      %1688 = vmatmul.mubr.f32.gmra.mrb[0].mxu0 %v1172
      %v1689 = vpop.f32.mrb[0].mxu0
      %v1690 = vadd.f32 0.0, %v1689
      %v1691 = vpop.f32.mrb[0].mxu0
      %1692 = vmatprep.mubr.f32.mxu0 0.0
      %1693 = vmatmul.mubr.f32.gmra.mrb[0].mxu0 %v1174
      %v1694 = vpop.f32.mrb[0].mxu0
      %v1695 = vadd.f32 0.0, %v1694
      %v1696 = vpop.f32.mrb[0].mxu0
      %1697 = vmatprep.mubr.f32.mxu0 0.0
      %1698 = vmatmul.mubr.f32.gmra.mrb[0].mxu0 %v1176
      %v1699 = vpop.f32.mrb[0].mxu0
      %v1700 = vadd.f32 0.0, %v1699
      %v1701 = vpop.f32.mrb[0].mxu0
      %1702 = vmatprep.mubr.f32.mxu0 0.0
      %1703 = vmatmul.mubr.f32.gmra.mrb[0].mxu0 %v1178
      %v1704 = vpop.f32.mrb[0].mxu0
      %v1705 = vadd.f32 0.0, %v1704
      %v1706 = vpop.f32.mrb[0].mxu0
      %1707 = vmatprep.mubr.f32.mxu0 0.0
      %1708 = vmatmul.mubr.f32.gmra.mrb[0].mxu0 %v1180
      %v1709 = vpop.f32.mrb[0].mxu0
      %v1710 = vadd.f32 0.0, %v1709
      %v1711 = vpop.f32.mrb[0].mxu0
      %1712 = vmatprep.mubr.f32.mxu0 0.0
      %1713 = vmatmul.mubr.f32.gmra.mrb[0].mxu0 %v1182
      %v1714 = vpop.f32.mrb[0].mxu0
      %v1715 = vadd.f32 0.0, %v1714
      %v1716 = vpop.f32.mrb[0].mxu0
      %1717 = vmatprep.mubr.f32.mxu0 0.0
      %1718 = vmatmul.mubr.f32.gmra.mrb[0].mxu0 %v1476
      %v1719 = vpop.f32.mrb[0].mxu0
      %v1720 = vadd.f32 0.0, %v1719
      %v1721 = vpop.f32.mrb[0].mxu0
      %1722 = vmatprep.mubr.f32.mxu0 0.0
      %1723 = vmatmul.mubr.f32.gmra.mrb[0].mxu0 %v1478
      %v1724 = vpop.f32.mrb[0].mxu0
      %v1725 = vadd.f32 0.0, %v1724
      %v1726 = vpop.f32.mrb[0].mxu0
      %1727 = vdwg.mxu0
      %v1728 = vadd.f32 %v1432, %v1550
      %v1729 = vadd.f32 %v1433, %v1555
      %v1730 = vadd.f32 %v1434, %v1560
      %v1731 = vadd.f32 %v1435, %v1565
      %v1732 = vadd.f32 %v1436, %v1570
      %v1733 = vadd.f32 %v1437, %v1575
      %v1734 = vadd.f32 %v1438, %v1580
      %v1735 = vadd.f32 %v1439, %v1585
      %v1736 = vadd.f32 %v1440, %v1590
      %v1737 = vadd.f32 %v1441, %v1595
      %v1738 = vadd.f32 %v1442, %v1600
      %v1739 = vadd.f32 %v1443, %v1605
      %v1740 = vadd.f32 %v1444, %v1610
      %v1741 = vadd.f32 %v1445, %v1615
      %v1742 = vadd.f32 %v1446, %v1620
      %v1743 = vadd.f32 %v1447, %v1625
      %v1744 = vadd.f32 %v1448, %v1630
      %v1745 = vadd.f32 %v1449, %v1635
      %v1746 = vadd.f32 %v1450, %v1640
      %v1747 = vadd.f32 %v1451, %v1645
      %v1748 = vadd.f32 %v1452, %v1650
      %v1749 = vadd.f32 %v1453, %v1655
      %v1750 = vadd.f32 %v1454, %v1660
      %v1751 = vadd.f32 %v1455, %v1665
      %v1752 = vadd.f32 %v1456, %v1670
      %v1753 = vadd.f32 %v1457, %v1675
      %v1754 = vadd.f32 %v1458, %v1680
      %v1755 = vadd.f32 %v1459, %v1685
      %v1756 = vadd.f32 %v1460, %v1690
      %v1757 = vadd.f32 %v1461, %v1695
      %v1758 = vadd.f32 %v1462, %v1700
      %v1759 = vadd.f32 %v1463, %v1705
      %v1760 = vadd.f32 %v1464, %v1710
      %v1761 = vadd.f32 %v1465, %v1715
      %v1762 = vadd.f32 %v1466, %v1720
      %v1763 = vadd.f32 %v1467, %v1725
      %s1764 = scalar_lea.vmem %s0, 16
      %v1765 = vld [vmem:[%s1764] sm:$0xf]
      %vm1766 = vcmask 1044480
      %v1767 = vrot.slane %v241, 3
      %v1768 = vrot.slane %v242, 3
      %v1769 = vsel %vm1766, %v1767, %v1768
      %v1770 = vrot.slane %v243, 3
      %v1771 = vsel %vm1766, %v1768, %v1770
      %v1772 = vrot.slane %v244, 3
      %v1773 = vsel %vm1766, %v1770, %v1772
      %v1774 = vrot.slane %v245, 3
      %v1775 = vsel %vm1766, %v1772, %v1774
      %v1776 = vrot.slane %v246, 3
      %v1777 = vsel %vm1766, %v1774, %v1776
      %v1778 = vrot.slane %v247, 3
      %v1779 = vsel %vm1766, %v1776, %v1778
      %v1780 = vrot.slane %v248, 3
      %v1781 = vsel %vm1766, %v1778, %v1780
      %v1782 = vrot.slane %v249, 3
      %v1783 = vsel %vm1766, %v1780, %v1782
      %v1784 = vrot.slane %v250, 3
      %v1785 = vsel %vm1766, %v1782, %v1784
      %v1786 = vrot.slane %v251, 3
      %v1787 = vsel %vm1766, %v1784, %v1786
      %v1788 = vrot.slane %v252, 3
      %v1789 = vsel %vm1766, %v1786, %v1788
      %v1790 = vrot.slane %v253, 3
      %v1791 = vsel %vm1766, %v1788, %v1790
      %v1792 = vrot.slane %v254, 3
      %v1793 = vsel %vm1766, %v1790, %v1792
      %v1794 = vrot.slane %v255, 3
      %v1795 = vsel %vm1766, %v1792, %v1794
      %v1796 = vrot.slane %v256, 3
      %v1797 = vsel %vm1766, %v1794, %v1796
      %v1798 = vrot.slane %v257, 3
      %v1799 = vsel %vm1766, %v1796, %v1798
      %v1800 = vrot.slane %v258, 3
      %v1801 = vsel %vm1766, %v1798, %v1800
      %v1802 = vrot.slane %v259, 3
      %v1803 = vsel %vm1766, %v1800, %v1802
      %v1804 = vrot.slane %v260, 3
      %v1805 = vsel %vm1766, %v1802, %v1804
      %v1806 = vrot.slane %v261, 3
      %v1807 = vsel %vm1766, %v1804, %v1806
      %v1808 = vrot.slane %v262, 3
      %v1809 = vsel %vm1766, %v1806, %v1808
      %v1810 = vrot.slane %v263, 3
      %v1811 = vsel %vm1766, %v1808, %v1810
      %v1812 = vrot.slane %v264, 3
      %v1813 = vsel %vm1766, %v1810, %v1812
      %v1814 = vrot.slane %v265, 3
      %v1815 = vsel %vm1766, %v1812, %v1814
      %v1816 = vrot.slane %v266, 3
      %v1817 = vsel %vm1766, %v1814, %v1816
      %v1818 = vrot.slane %v267, 3
      %v1819 = vsel %vm1766, %v1816, %v1818
      %v1820 = vrot.slane %v268, 3
      %v1821 = vsel %vm1766, %v1818, %v1820
      %v1822 = vrot.slane %v269, 3
      %v1823 = vsel %vm1766, %v1820, %v1822
      %v1824 = vrot.slane %v270, 3
      %v1825 = vsel %vm1766, %v1822, %v1824
      %v1826 = vrot.slane %v271, 3
      %v1827 = vsel %vm1766, %v1824, %v1826
      %v1828 = vrot.slane %v272, 3
      %v1829 = vsel %vm1766, %v1826, %v1828
      %v1830 = vrot.slane %v273, 3
      %v1831 = vsel %vm1766, %v1828, %v1830
      %v1832 = vrot.slane %v274, 3
      %v1833 = vsel %vm1766, %v1830, %v1832
      %v1834 = vrot.slane %v275, 3
      %v1835 = vsel %vm1766, %v1832, %v1834
      %v1836 = vrot.slane %v276, 3
      %v1837 = vsel %vm1766, %v1834, %v1836
      %v1838 = vrot.slane %v277, 3
      %v1839 = vsel %vm1766, %v1836, %v1838
      %v1840 = vsel %vm394, %v1769, 0
      %v1842 = vsel %vm394, %v1771, 0
      %v1844 = vsel %vm394, %v1773, 0
      %v1846 = vsel %vm394, %v1775, 0
      %v1848 = vsel %vm394, %v1777, 0
      %v1850 = vsel %vm394, %v1779, 0
      %v1852 = vsel %vm394, %v1781, 0
      %v1854 = vsel %vm394, %v1783, 0
      %v1856 = vsel %vm394, %v1785, 0
      %v1858 = vsel %vm394, %v1787, 0
      %v1860 = vsel %vm394, %v1789, 0
      %v1862 = vsel %vm394, %v1791, 0
      %v1864 = vsel %vm394, %v1793, 0
      %v1866 = vsel %vm394, %v1795, 0
      %v1868 = vsel %vm394, %v1797, 0
      %v1870 = vsel %vm394, %v1799, 0
      %v1872 = vsel %vm394, %v1801, 0
      %v1874 = vsel %vm394, %v1803, 0
      %v1876 = vsel %vm394, %v1805, 0
      %v1878 = vsel %vm394, %v1807, 0
      %v1880 = vsel %vm394, %v1809, 0
      %v1882 = vsel %vm394, %v1811, 0
      %v1884 = vsel %vm394, %v1813, 0
      %v1886 = vsel %vm394, %v1815, 0
      %v1888 = vsel %vm394, %v1817, 0
      %v1890 = vsel %vm394, %v1819, 0
      %v1892 = vsel %vm394, %v1821, 0
      %v1894 = vsel %vm394, %v1823, 0
      %v1896 = vsel %vm394, %v1825, 0
      %v1898 = vsel %vm394, %v1827, 0
      %v1900 = vsel %vm394, %v1829, 0
      %v1902 = vsel %vm394, %v1831, 0
      %v1904 = vsel %vm394, %v1833, 0
      %v1906 = vsel %vm394, %v1835, 0
      %v1908 = vsel %vm394, %v1837, 0
      %v1910 = vsel %vm394, %v1839, 0
      %v1913 = vsel %vm467, %v1765, 0
      %1915 = vmatprep.subr.mxu0 0.0
      %1916 = vmatpush1.msra.mxu0 %v1913
      %1917 = vmatprep.subr.mxu0 0.0
      %1918 = vmatpush1.msra.mxu0 0.0
      %1919 = vmatprep.subr.mxu0 0.0
      %1920 = vmatpush1.msra.mxu0 0.0
      %1921 = vmatprep.subr.mxu0 0.0
      %1922 = vmatpush1.msra.mxu0 0.0
      %1923 = vmatprep.subr.mxu0 0.0
      %1924 = vmatpush1.msra.mxu0 0.0
      %1925 = vmatprep.subr.mxu0 0.0
      %1926 = vmatpush1.msra.mxu0 0.0
      %1927 = vmatprep.subr.mxu0 0.0
      %1928 = vmatpush1.msra.mxu0 0.0
      %1929 = vmatprep.subr.mxu0 0.0
      %1930 = vmatpush1.msra.mxu0 0.0
      %1931 = vmatprep.subr.mxu0 0.0
      %1932 = vmatpush1.msra.mxu0 0.0
      %1933 = vmatprep.subr.mxu0 0.0
      %1934 = vmatpush1.msra.mxu0 0.0
      %1935 = vmatprep.subr.mxu0 0.0
      %1936 = vmatpush1.msra.mxu0 0.0
      %1937 = vmatprep.subr.mxu0 0.0
      %1938 = vmatpush1.msra.mxu0 0.0
      %1939 = vmatprep.subr.mxu0 0.0
      %1940 = vmatpush1.msra.mxu0 0.0
      %1941 = vmatprep.subr.mxu0 0.0
      %1942 = vmatpush1.msra.mxu0 0.0
      %1943 = vmatprep.subr.mxu0 0.0
      %1944 = vmatpush1.msra.mxu0 0.0
      %1945 = vmatprep.subr.mxu0 0.0
      %1946 = vmatpush1.msra.mxu0 0.0
      %1947 = vmatprep.subr.mxu0 0.0
      %1948 = vmatpush1.msra.mxu0 0.0
      %1949 = vmatprep.subr.mxu0 0.0
      %1950 = vmatpush1.msra.mxu0 0.0
      %1951 = vmatprep.subr.mxu0 0.0
      %1952 = vmatpush1.msra.mxu0 0.0
      %1953 = vmatprep.subr.mxu0 0.0
      %1954 = vmatpush1.msra.mxu0 0.0
      %1955 = vmatprep.subr.mxu0 0.0
      %1956 = vmatpush1.msra.mxu0 0.0
      %1957 = vmatprep.subr.mxu0 0.0
      %1958 = vmatpush1.msra.mxu0 0.0
      %1959 = vmatprep.subr.mxu0 0.0
      %1960 = vmatpush1.msra.mxu0 0.0
      %1961 = vmatprep.subr.mxu0 0.0
      %1962 = vmatpush1.msra.mxu0 0.0
      %1963 = vmatprep.subr.mxu0 0.0
      %1964 = vmatpush1.msra.mxu0 0.0
      %1965 = vmatprep.subr.mxu0 0.0
      %1966 = vmatpush1.msra.mxu0 0.0
      %1967 = vmatprep.subr.mxu0 0.0
      %1968 = vmatpush1.msra.mxu0 0.0
      %1969 = vmatprep.subr.mxu0 0.0
      %1970 = vmatpush1.msra.mxu0 0.0
      %1971 = vmatprep.subr.mxu0 0.0
      %1972 = vmatpush1.msra.mxu0 0.0
      %1973 = vmatprep.subr.mxu0 0.0
      %1974 = vmatpush1.msra.mxu0 0.0
      %1975 = vmatprep.subr.mxu0 0.0
      %1976 = vmatpush1.msra.mxu0 0.0
      %1977 = vmatprep.subr.mxu0 0.0
      %1978 = vmatpush1.msra.mxu0 0.0
      %1979 = vmatprep.mubr.f32.mxu0 0.0
      %1980 = vmatmul.mubr.f32.gmra.mrb[0].mxu0 %v1840
      %v1981 = vpop.f32.mrb[0].mxu0
      %v1982 = vadd.f32 0.0, %v1981
      %v1983 = vpop.f32.mrb[0].mxu0
      %1984 = vmatprep.mubr.f32.mxu0 0.0
      %1985 = vmatmul.mubr.f32.gmra.mrb[0].mxu0 %v1842
      %v1986 = vpop.f32.mrb[0].mxu0
      %v1987 = vadd.f32 0.0, %v1986
      %v1988 = vpop.f32.mrb[0].mxu0
      %1989 = vmatprep.mubr.f32.mxu0 0.0
      %1990 = vmatmul.mubr.f32.gmra.mrb[0].mxu0 %v1844
      %v1991 = vpop.f32.mrb[0].mxu0
      %v1992 = vadd.f32 0.0, %v1991
      %v1993 = vpop.f32.mrb[0].mxu0
      %1994 = vmatprep.mubr.f32.mxu0 0.0
      %1995 = vmatmul.mubr.f32.gmra.mrb[0].mxu0 %v1846
      %v1996 = vpop.f32.mrb[0].mxu0
      %v1997 = vadd.f32 0.0, %v1996
      %v1998 = vpop.f32.mrb[0].mxu0
      %1999 = vmatprep.mubr.f32.mxu0 0.0
      %2000 = vmatmul.mubr.f32.gmra.mrb[0].mxu0 %v1848
      %v2001 = vpop.f32.mrb[0].mxu0
      %v2002 = vadd.f32 0.0, %v2001
      %v2003 = vpop.f32.mrb[0].mxu0
      %2004 = vmatprep.mubr.f32.mxu0 0.0
      %2005 = vmatmul.mubr.f32.gmra.mrb[0].mxu0 %v1850
      %v2006 = vpop.f32.mrb[0].mxu0
      %v2007 = vadd.f32 0.0, %v2006
      %v2008 = vpop.f32.mrb[0].mxu0
      %2009 = vmatprep.mubr.f32.mxu0 0.0
      %2010 = vmatmul.mubr.f32.gmra.mrb[0].mxu0 %v1852
      %v2011 = vpop.f32.mrb[0].mxu0
      %v2012 = vadd.f32 0.0, %v2011
      %v2013 = vpop.f32.mrb[0].mxu0
      %2014 = vmatprep.mubr.f32.mxu0 0.0
      %2015 = vmatmul.mubr.f32.gmra.mrb[0].mxu0 %v1854
      %v2016 = vpop.f32.mrb[0].mxu0
      %v2017 = vadd.f32 0.0, %v2016
      %v2018 = vpop.f32.mrb[0].mxu0
      %2019 = vmatprep.mubr.f32.mxu0 0.0
      %2020 = vmatmul.mubr.f32.gmra.mrb[0].mxu0 %v1856
      %v2021 = vpop.f32.mrb[0].mxu0
      %v2022 = vadd.f32 0.0, %v2021
      %v2023 = vpop.f32.mrb[0].mxu0
      %2024 = vmatprep.mubr.f32.mxu0 0.0
      %2025 = vmatmul.mubr.f32.gmra.mrb[0].mxu0 %v1858
      %v2026 = vpop.f32.mrb[0].mxu0
      %v2027 = vadd.f32 0.0, %v2026
      %v2028 = vpop.f32.mrb[0].mxu0
      %2029 = vmatprep.mubr.f32.mxu0 0.0
      %2030 = vmatmul.mubr.f32.gmra.mrb[0].mxu0 %v1860
      %v2031 = vpop.f32.mrb[0].mxu0
      %v2032 = vadd.f32 0.0, %v2031
      %v2033 = vpop.f32.mrb[0].mxu0
      %2034 = vmatprep.mubr.f32.mxu0 0.0
      %2035 = vmatmul.mubr.f32.gmra.mrb[0].mxu0 %v1862
      %v2036 = vpop.f32.mrb[0].mxu0
      %v2037 = vadd.f32 0.0, %v2036
      %v2038 = vpop.f32.mrb[0].mxu0
      %2039 = vmatprep.mubr.f32.mxu0 0.0
      %2040 = vmatmul.mubr.f32.gmra.mrb[0].mxu0 %v1864
      %v2041 = vpop.f32.mrb[0].mxu0
      %v2042 = vadd.f32 0.0, %v2041
      %v2043 = vpop.f32.mrb[0].mxu0
      %2044 = vmatprep.mubr.f32.mxu0 0.0
      %2045 = vmatmul.mubr.f32.gmra.mrb[0].mxu0 %v1866
      %v2046 = vpop.f32.mrb[0].mxu0
      %v2047 = vadd.f32 0.0, %v2046
      %v2048 = vpop.f32.mrb[0].mxu0
      %2049 = vmatprep.mubr.f32.mxu0 0.0
      %2050 = vmatmul.mubr.f32.gmra.mrb[0].mxu0 %v1868
      %v2051 = vpop.f32.mrb[0].mxu0
      %v2052 = vadd.f32 0.0, %v2051
      %v2053 = vpop.f32.mrb[0].mxu0
      %2054 = vmatprep.mubr.f32.mxu0 0.0
      %2055 = vmatmul.mubr.f32.gmra.mrb[0].mxu0 %v1870
      %v2056 = vpop.f32.mrb[0].mxu0
      %v2057 = vadd.f32 0.0, %v2056
      %v2058 = vpop.f32.mrb[0].mxu0
      %2059 = vmatprep.mubr.f32.mxu0 0.0
      %2060 = vmatmul.mubr.f32.gmra.mrb[0].mxu0 %v1872
      %v2061 = vpop.f32.mrb[0].mxu0
      %v2062 = vadd.f32 0.0, %v2061
      %v2063 = vpop.f32.mrb[0].mxu0
      %2064 = vmatprep.mubr.f32.mxu0 0.0
      %2065 = vmatmul.mubr.f32.gmra.mrb[0].mxu0 %v1874
      %v2066 = vpop.f32.mrb[0].mxu0
      %v2067 = vadd.f32 0.0, %v2066
      %v2068 = vpop.f32.mrb[0].mxu0
      %2069 = vmatprep.mubr.f32.mxu0 0.0
      %2070 = vmatmul.mubr.f32.gmra.mrb[0].mxu0 %v1876
      %v2071 = vpop.f32.mrb[0].mxu0
      %v2072 = vadd.f32 0.0, %v2071
      %v2073 = vpop.f32.mrb[0].mxu0
      %2074 = vmatprep.mubr.f32.mxu0 0.0
      %2075 = vmatmul.mubr.f32.gmra.mrb[0].mxu0 %v1878
      %v2076 = vpop.f32.mrb[0].mxu0
      %v2077 = vadd.f32 0.0, %v2076
      %v2078 = vpop.f32.mrb[0].mxu0
      %2079 = vmatprep.mubr.f32.mxu0 0.0
      %2080 = vmatmul.mubr.f32.gmra.mrb[0].mxu0 %v1880
      %v2081 = vpop.f32.mrb[0].mxu0
      %v2082 = vadd.f32 0.0, %v2081
      %v2083 = vpop.f32.mrb[0].mxu0
      %2084 = vmatprep.mubr.f32.mxu0 0.0
      %2085 = vmatmul.mubr.f32.gmra.mrb[0].mxu0 %v1882
      %v2086 = vpop.f32.mrb[0].mxu0
      %v2087 = vadd.f32 0.0, %v2086
      %v2088 = vpop.f32.mrb[0].mxu0
      %2089 = vmatprep.mubr.f32.mxu0 0.0
      %2090 = vmatmul.mubr.f32.gmra.mrb[0].mxu0 %v1884
      %v2091 = vpop.f32.mrb[0].mxu0
      %v2092 = vadd.f32 0.0, %v2091
      %v2093 = vpop.f32.mrb[0].mxu0
      %2094 = vmatprep.mubr.f32.mxu0 0.0
      %2095 = vmatmul.mubr.f32.gmra.mrb[0].mxu0 %v1886
      %v2096 = vpop.f32.mrb[0].mxu0
      %v2097 = vadd.f32 0.0, %v2096
      %v2098 = vpop.f32.mrb[0].mxu0
      %2099 = vmatprep.mubr.f32.mxu0 0.0
      %2100 = vmatmul.mubr.f32.gmra.mrb[0].mxu0 %v1888
      %v2101 = vpop.f32.mrb[0].mxu0
      %v2102 = vadd.f32 0.0, %v2101
      %v2103 = vpop.f32.mrb[0].mxu0
      %2104 = vmatprep.mubr.f32.mxu0 0.0
      %2105 = vmatmul.mubr.f32.gmra.mrb[0].mxu0 %v1890
      %v2106 = vpop.f32.mrb[0].mxu0
      %v2107 = vadd.f32 0.0, %v2106
      %v2108 = vpop.f32.mrb[0].mxu0
      %2109 = vmatprep.mubr.f32.mxu0 0.0
      %2110 = vmatmul.mubr.f32.gmra.mrb[0].mxu0 %v1892
      %v2111 = vpop.f32.mrb[0].mxu0
      %v2112 = vadd.f32 0.0, %v2111
      %v2113 = vpop.f32.mrb[0].mxu0
      %2114 = vmatprep.mubr.f32.mxu0 0.0
      %2115 = vmatmul.mubr.f32.gmra.mrb[0].mxu0 %v1894
      %v2116 = vpop.f32.mrb[0].mxu0
      %v2117 = vadd.f32 0.0, %v2116
      %v2118 = vpop.f32.mrb[0].mxu0
      %2119 = vmatprep.mubr.f32.mxu0 0.0
      %2120 = vmatmul.mubr.f32.gmra.mrb[0].mxu0 %v1896
      %v2121 = vpop.f32.mrb[0].mxu0
      %v2122 = vadd.f32 0.0, %v2121
      %v2123 = vpop.f32.mrb[0].mxu0
      %2124 = vmatprep.mubr.f32.mxu0 0.0
      %2125 = vmatmul.mubr.f32.gmra.mrb[0].mxu0 %v1898
      %v2126 = vpop.f32.mrb[0].mxu0
      %v2127 = vadd.f32 0.0, %v2126
      %v2128 = vpop.f32.mrb[0].mxu0
      %2129 = vmatprep.mubr.f32.mxu0 0.0
      %2130 = vmatmul.mubr.f32.gmra.mrb[0].mxu0 %v1900
      %v2131 = vpop.f32.mrb[0].mxu0
      %v2132 = vadd.f32 0.0, %v2131
      %v2133 = vpop.f32.mrb[0].mxu0
      %2134 = vmatprep.mubr.f32.mxu0 0.0
      %2135 = vmatmul.mubr.f32.gmra.mrb[0].mxu0 %v1902
      %v2136 = vpop.f32.mrb[0].mxu0
      %v2137 = vadd.f32 0.0, %v2136
      %v2138 = vpop.f32.mrb[0].mxu0
      %2139 = vmatprep.mubr.f32.mxu0 0.0
      %2140 = vmatmul.mubr.f32.gmra.mrb[0].mxu0 %v1904
      %v2141 = vpop.f32.mrb[0].mxu0
      %v2142 = vadd.f32 0.0, %v2141
      %v2143 = vpop.f32.mrb[0].mxu0
      %2144 = vmatprep.mubr.f32.mxu0 0.0
      %2145 = vmatmul.mubr.f32.gmra.mrb[0].mxu0 %v1906
      %v2146 = vpop.f32.mrb[0].mxu0
      %v2147 = vadd.f32 0.0, %v2146
      %v2148 = vpop.f32.mrb[0].mxu0
      %2149 = vmatprep.mubr.f32.mxu0 0.0
      %2150 = vmatmul.mubr.f32.gmra.mrb[0].mxu0 %v1908
      %v2151 = vpop.f32.mrb[0].mxu0
      %v2152 = vadd.f32 0.0, %v2151
      %v2153 = vpop.f32.mrb[0].mxu0
      %2154 = vmatprep.mubr.f32.mxu0 0.0
      %2155 = vmatmul.mubr.f32.gmra.mrb[0].mxu0 %v1910
      %v2156 = vpop.f32.mrb[0].mxu0
      %v2157 = vadd.f32 0.0, %v2156
      %v2158 = vpop.f32.mrb[0].mxu0
      %2159 = vdwg.mxu0
      %v2160 = vadd.f32 %v1728, %v1982
      %v2161 = vadd.f32 %v1729, %v1987
      %v2162 = vadd.f32 %v1730, %v1992
      %v2163 = vadd.f32 %v1731, %v1997
      %v2164 = vadd.f32 %v1732, %v2002
      %v2165 = vadd.f32 %v1733, %v2007
      %v2166 = vadd.f32 %v1734, %v2012
      %v2167 = vadd.f32 %v1735, %v2017
      %v2168 = vadd.f32 %v1736, %v2022
      %v2169 = vadd.f32 %v1737, %v2027
      %v2170 = vadd.f32 %v1738, %v2032
      %v2171 = vadd.f32 %v1739, %v2037
      %v2172 = vadd.f32 %v1740, %v2042
      %v2173 = vadd.f32 %v1741, %v2047
      %v2174 = vadd.f32 %v1742, %v2052
      %v2175 = vadd.f32 %v1743, %v2057
      %v2176 = vadd.f32 %v1744, %v2062
      %v2177 = vadd.f32 %v1745, %v2067
      %v2178 = vadd.f32 %v1746, %v2072
      %v2179 = vadd.f32 %v1747, %v2077
      %v2180 = vadd.f32 %v1748, %v2082
      %v2181 = vadd.f32 %v1749, %v2087
      %v2182 = vadd.f32 %v1750, %v2092
      %v2183 = vadd.f32 %v1751, %v2097
      %v2184 = vadd.f32 %v1752, %v2102
      %v2185 = vadd.f32 %v1753, %v2107
      %v2186 = vadd.f32 %v1754, %v2112
      %v2187 = vadd.f32 %v1755, %v2117
      %v2188 = vadd.f32 %v1756, %v2122
      %v2189 = vadd.f32 %v1757, %v2127
      %v2190 = vadd.f32 %v1758, %v2132
      %v2191 = vadd.f32 %v1759, %v2137
      %v2192 = vadd.f32 %v1760, %v2142
      %v2193 = vadd.f32 %v1761, %v2147
      %v2194 = vadd.f32 %v1762, %v2152
      %v2195 = vadd.f32 %v1763, %v2157
      %s2196 = scalar_lea.vmem %s0, 20
      %v2197 = vld [vmem:[%s2196] sm:$0xf]
      %v2198 = vrot.slane %v241, 4
      %v2199 = vrot.slane %v242, 4
      %v2200 = vsel %vm467, %v2198, %v2199
      %v2201 = vrot.slane %v243, 4
      %v2202 = vsel %vm467, %v2199, %v2201
      %v2203 = vrot.slane %v244, 4
      %v2204 = vsel %vm467, %v2201, %v2203
      %v2205 = vrot.slane %v245, 4
      %v2206 = vsel %vm467, %v2203, %v2205
      %v2207 = vrot.slane %v246, 4
      %v2208 = vsel %vm467, %v2205, %v2207
      %v2209 = vrot.slane %v247, 4
      %v2210 = vsel %vm467, %v2207, %v2209
      %v2211 = vrot.slane %v248, 4
      %v2212 = vsel %vm467, %v2209, %v2211
      %v2213 = vrot.slane %v249, 4
      %v2214 = vsel %vm467, %v2211, %v2213
      %v2215 = vrot.slane %v250, 4
      %v2216 = vsel %vm467, %v2213, %v2215
      %v2217 = vrot.slane %v251, 4
      %v2218 = vsel %vm467, %v2215, %v2217
      %v2219 = vrot.slane %v252, 4
      %v2220 = vsel %vm467, %v2217, %v2219
      %v2221 = vrot.slane %v253, 4
      %v2222 = vsel %vm467, %v2219, %v2221
      %v2223 = vrot.slane %v254, 4
      %v2224 = vsel %vm467, %v2221, %v2223
      %v2225 = vrot.slane %v255, 4
      %v2226 = vsel %vm467, %v2223, %v2225
      %v2227 = vrot.slane %v256, 4
      %v2228 = vsel %vm467, %v2225, %v2227
      %v2229 = vrot.slane %v257, 4
      %v2230 = vsel %vm467, %v2227, %v2229
      %v2231 = vrot.slane %v258, 4
      %v2232 = vsel %vm467, %v2229, %v2231
      %v2233 = vrot.slane %v259, 4
      %v2234 = vsel %vm467, %v2231, %v2233
      %v2235 = vrot.slane %v260, 4
      %v2236 = vsel %vm467, %v2233, %v2235
      %v2237 = vrot.slane %v261, 4
      %v2238 = vsel %vm467, %v2235, %v2237
      %v2239 = vrot.slane %v262, 4
      %v2240 = vsel %vm467, %v2237, %v2239
      %v2241 = vrot.slane %v263, 4
      %v2242 = vsel %vm467, %v2239, %v2241
      %v2243 = vrot.slane %v264, 4
      %v2244 = vsel %vm467, %v2241, %v2243
      %v2245 = vrot.slane %v265, 4
      %v2246 = vsel %vm467, %v2243, %v2245
      %v2247 = vrot.slane %v266, 4
      %v2248 = vsel %vm467, %v2245, %v2247
      %v2249 = vrot.slane %v267, 4
      %v2250 = vsel %vm467, %v2247, %v2249
      %v2251 = vrot.slane %v268, 4
      %v2252 = vsel %vm467, %v2249, %v2251
      %v2253 = vrot.slane %v269, 4
      %v2254 = vsel %vm467, %v2251, %v2253
      %v2255 = vrot.slane %v270, 4
      %v2256 = vsel %vm467, %v2253, %v2255
      %v2257 = vrot.slane %v271, 4
      %v2258 = vsel %vm467, %v2255, %v2257
      %v2259 = vrot.slane %v272, 4
      %v2260 = vsel %vm467, %v2257, %v2259
      %v2261 = vrot.slane %v273, 4
      %v2262 = vsel %vm467, %v2259, %v2261
      %v2263 = vrot.slane %v274, 4
      %v2264 = vsel %vm467, %v2261, %v2263
      %v2265 = vrot.slane %v275, 4
      %v2266 = vsel %vm467, %v2263, %v2265
      %v2267 = vrot.slane %v276, 4
      %v2268 = vsel %vm467, %v2265, %v2267
      %v2269 = vrot.slane %v277, 4
      %v2270 = vsel %vm467, %v2267, %v2269
      %v2271 = vsel %vm394, %v2200, 0
      %v2273 = vsel %vm394, %v2202, 0
      %v2275 = vsel %vm394, %v2204, 0
      %v2277 = vsel %vm394, %v2206, 0
      %v2279 = vsel %vm394, %v2208, 0
      %v2281 = vsel %vm394, %v2210, 0
      %v2283 = vsel %vm394, %v2212, 0
      %v2285 = vsel %vm394, %v2214, 0
      %v2287 = vsel %vm394, %v2216, 0
      %v2289 = vsel %vm394, %v2218, 0
      %v2291 = vsel %vm394, %v2220, 0
      %v2293 = vsel %vm394, %v2222, 0
      %v2295 = vsel %vm394, %v2224, 0
      %v2297 = vsel %vm394, %v2226, 0
      %v2299 = vsel %vm394, %v2228, 0
      %v2301 = vsel %vm394, %v2230, 0
      %v2303 = vsel %vm394, %v2232, 0
      %v2305 = vsel %vm394, %v2234, 0
      %v2307 = vsel %vm394, %v2236, 0
      %v2309 = vsel %vm394, %v2238, 0
      %v2311 = vsel %vm394, %v2240, 0
      %v2313 = vsel %vm394, %v2242, 0
      %v2315 = vsel %vm394, %v2244, 0
      %v2317 = vsel %vm394, %v2246, 0
      %v2319 = vsel %vm394, %v2248, 0
      %v2321 = vsel %vm394, %v2250, 0
      %v2323 = vsel %vm394, %v2252, 0
      %v2325 = vsel %vm394, %v2254, 0
      %v2327 = vsel %vm394, %v2256, 0
      %v2329 = vsel %vm394, %v2258, 0
      %v2331 = vsel %vm394, %v2260, 0
      %v2333 = vsel %vm394, %v2262, 0
      %v2335 = vsel %vm394, %v2264, 0
      %v2337 = vsel %vm394, %v2266, 0
      %v2339 = vsel %vm394, %v2268, 0
      %v2341 = vsel %vm394, %v2270, 0
      %v2344 = vsel %vm467, %v2197, 0
      %2346 = vmatprep.subr.mxu0 0.0
      %2347 = vmatpush1.msra.mxu0 %v2344
      %2348 = vmatprep.subr.mxu0 0.0
      %2349 = vmatpush1.msra.mxu0 0.0
      %2350 = vmatprep.subr.mxu0 0.0
      %2351 = vmatpush1.msra.mxu0 0.0
      %2352 = vmatprep.subr.mxu0 0.0
      %2353 = vmatpush1.msra.mxu0 0.0
      %2354 = vmatprep.subr.mxu0 0.0
      %2355 = vmatpush1.msra.mxu0 0.0
      %2356 = vmatprep.subr.mxu0 0.0
      %2357 = vmatpush1.msra.mxu0 0.0
      %2358 = vmatprep.subr.mxu0 0.0
      %2359 = vmatpush1.msra.mxu0 0.0
      %2360 = vmatprep.subr.mxu0 0.0
      %2361 = vmatpush1.msra.mxu0 0.0
      %2362 = vmatprep.subr.mxu0 0.0
      %2363 = vmatpush1.msra.mxu0 0.0
      %2364 = vmatprep.subr.mxu0 0.0
      %2365 = vmatpush1.msra.mxu0 0.0
      %2366 = vmatprep.subr.mxu0 0.0
      %2367 = vmatpush1.msra.mxu0 0.0
      %2368 = vmatprep.subr.mxu0 0.0
      %2369 = vmatpush1.msra.mxu0 0.0
      %2370 = vmatprep.subr.mxu0 0.0
      %2371 = vmatpush1.msra.mxu0 0.0
      %2372 = vmatprep.subr.mxu0 0.0
      %2373 = vmatpush1.msra.mxu0 0.0
      %2374 = vmatprep.subr.mxu0 0.0
      %2375 = vmatpush1.msra.mxu0 0.0
      %2376 = vmatprep.subr.mxu0 0.0
      %2377 = vmatpush1.msra.mxu0 0.0
      %2378 = vmatprep.subr.mxu0 0.0
      %2379 = vmatpush1.msra.mxu0 0.0
      %2380 = vmatprep.subr.mxu0 0.0
      %2381 = vmatpush1.msra.mxu0 0.0
      %2382 = vmatprep.subr.mxu0 0.0
      %2383 = vmatpush1.msra.mxu0 0.0
      %2384 = vmatprep.subr.mxu0 0.0
      %2385 = vmatpush1.msra.mxu0 0.0
      %2386 = vmatprep.subr.mxu0 0.0
      %2387 = vmatpush1.msra.mxu0 0.0
      %2388 = vmatprep.subr.mxu0 0.0
      %2389 = vmatpush1.msra.mxu0 0.0
      %2390 = vmatprep.subr.mxu0 0.0
      %2391 = vmatpush1.msra.mxu0 0.0
      %2392 = vmatprep.subr.mxu0 0.0
      %2393 = vmatpush1.msra.mxu0 0.0
      %2394 = vmatprep.subr.mxu0 0.0
      %2395 = vmatpush1.msra.mxu0 0.0
      %2396 = vmatprep.subr.mxu0 0.0
      %2397 = vmatpush1.msra.mxu0 0.0
      %2398 = vmatprep.subr.mxu0 0.0
      %2399 = vmatpush1.msra.mxu0 0.0
      %2400 = vmatprep.subr.mxu0 0.0
      %2401 = vmatpush1.msra.mxu0 0.0
      %2402 = vmatprep.subr.mxu0 0.0
      %2403 = vmatpush1.msra.mxu0 0.0
      %2404 = vmatprep.subr.mxu0 0.0
      %2405 = vmatpush1.msra.mxu0 0.0
      %2406 = vmatprep.subr.mxu0 0.0
      %2407 = vmatpush1.msra.mxu0 0.0
      %2408 = vmatprep.subr.mxu0 0.0
      %2409 = vmatpush1.msra.mxu0 0.0
      %2410 = vmatprep.mubr.f32.mxu0 0.0
      %2411 = vmatmul.mubr.f32.gmra.mrb[0].mxu0 %v2271
      %v2412 = vpop.f32.mrb[0].mxu0
      %v2413 = vadd.f32 0.0, %v2412
      %v2414 = vpop.f32.mrb[0].mxu0
      %2415 = vmatprep.mubr.f32.mxu0 0.0
      %2416 = vmatmul.mubr.f32.gmra.mrb[0].mxu0 %v2273
      %v2417 = vpop.f32.mrb[0].mxu0
      %v2418 = vadd.f32 0.0, %v2417
      %v2419 = vpop.f32.mrb[0].mxu0
      %2420 = vmatprep.mubr.f32.mxu0 0.0
      %2421 = vmatmul.mubr.f32.gmra.mrb[0].mxu0 %v2275
      %v2422 = vpop.f32.mrb[0].mxu0
      %v2423 = vadd.f32 0.0, %v2422
      %v2424 = vpop.f32.mrb[0].mxu0
      %2425 = vmatprep.mubr.f32.mxu0 0.0
      %2426 = vmatmul.mubr.f32.gmra.mrb[0].mxu0 %v2277
      %v2427 = vpop.f32.mrb[0].mxu0
      %v2428 = vadd.f32 0.0, %v2427
      %v2429 = vpop.f32.mrb[0].mxu0
      %2430 = vmatprep.mubr.f32.mxu0 0.0
      %2431 = vmatmul.mubr.f32.gmra.mrb[0].mxu0 %v2279
      %v2432 = vpop.f32.mrb[0].mxu0
      %v2433 = vadd.f32 0.0, %v2432
      %v2434 = vpop.f32.mrb[0].mxu0
      %2435 = vmatprep.mubr.f32.mxu0 0.0
      %2436 = vmatmul.mubr.f32.gmra.mrb[0].mxu0 %v2281
      %v2437 = vpop.f32.mrb[0].mxu0
      %v2438 = vadd.f32 0.0, %v2437
      %v2439 = vpop.f32.mrb[0].mxu0
      %2440 = vmatprep.mubr.f32.mxu0 0.0
      %2441 = vmatmul.mubr.f32.gmra.mrb[0].mxu0 %v2283
      %v2442 = vpop.f32.mrb[0].mxu0
      %v2443 = vadd.f32 0.0, %v2442
      %v2444 = vpop.f32.mrb[0].mxu0
      %2445 = vmatprep.mubr.f32.mxu0 0.0
      %2446 = vmatmul.mubr.f32.gmra.mrb[0].mxu0 %v2285
      %v2447 = vpop.f32.mrb[0].mxu0
      %v2448 = vadd.f32 0.0, %v2447
      %v2449 = vpop.f32.mrb[0].mxu0
      %2450 = vmatprep.mubr.f32.mxu0 0.0
      %2451 = vmatmul.mubr.f32.gmra.mrb[0].mxu0 %v2287
      %v2452 = vpop.f32.mrb[0].mxu0
      %v2453 = vadd.f32 0.0, %v2452
      %v2454 = vpop.f32.mrb[0].mxu0
      %2455 = vmatprep.mubr.f32.mxu0 0.0
      %2456 = vmatmul.mubr.f32.gmra.mrb[0].mxu0 %v2289
      %v2457 = vpop.f32.mrb[0].mxu0
      %v2458 = vadd.f32 0.0, %v2457
      %v2459 = vpop.f32.mrb[0].mxu0
      %2460 = vmatprep.mubr.f32.mxu0 0.0
      %2461 = vmatmul.mubr.f32.gmra.mrb[0].mxu0 %v2291
      %v2462 = vpop.f32.mrb[0].mxu0
      %v2463 = vadd.f32 0.0, %v2462
      %v2464 = vpop.f32.mrb[0].mxu0
      %2465 = vmatprep.mubr.f32.mxu0 0.0
      %2466 = vmatmul.mubr.f32.gmra.mrb[0].mxu0 %v2293
      %v2467 = vpop.f32.mrb[0].mxu0
      %v2468 = vadd.f32 0.0, %v2467
      %v2469 = vpop.f32.mrb[0].mxu0
      %2470 = vmatprep.mubr.f32.mxu0 0.0
      %2471 = vmatmul.mubr.f32.gmra.mrb[0].mxu0 %v2295
      %v2472 = vpop.f32.mrb[0].mxu0
      %v2473 = vadd.f32 0.0, %v2472
      %v2474 = vpop.f32.mrb[0].mxu0
      %2475 = vmatprep.mubr.f32.mxu0 0.0
      %2476 = vmatmul.mubr.f32.gmra.mrb[0].mxu0 %v2297
      %v2477 = vpop.f32.mrb[0].mxu0
      %v2478 = vadd.f32 0.0, %v2477
      %v2479 = vpop.f32.mrb[0].mxu0
      %2480 = vmatprep.mubr.f32.mxu0 0.0
      %2481 = vmatmul.mubr.f32.gmra.mrb[0].mxu0 %v2299
      %v2482 = vpop.f32.mrb[0].mxu0
      %v2483 = vadd.f32 0.0, %v2482
      %v2484 = vpop.f32.mrb[0].mxu0
      %2485 = vmatprep.mubr.f32.mxu0 0.0
      %2486 = vmatmul.mubr.f32.gmra.mrb[0].mxu0 %v2301
      %v2487 = vpop.f32.mrb[0].mxu0
      %v2488 = vadd.f32 0.0, %v2487
      %v2489 = vpop.f32.mrb[0].mxu0
      %2490 = vmatprep.mubr.f32.mxu0 0.0
      %2491 = vmatmul.mubr.f32.gmra.mrb[0].mxu0 %v2303
      %v2492 = vpop.f32.mrb[0].mxu0
      %v2493 = vadd.f32 0.0, %v2492
      %v2494 = vpop.f32.mrb[0].mxu0
      %2495 = vmatprep.mubr.f32.mxu0 0.0
      %2496 = vmatmul.mubr.f32.gmra.mrb[0].mxu0 %v2305
      %v2497 = vpop.f32.mrb[0].mxu0
      %v2498 = vadd.f32 0.0, %v2497
      %v2499 = vpop.f32.mrb[0].mxu0
      %2500 = vmatprep.mubr.f32.mxu0 0.0
      %2501 = vmatmul.mubr.f32.gmra.mrb[0].mxu0 %v2307
      %v2502 = vpop.f32.mrb[0].mxu0
      %v2503 = vadd.f32 0.0, %v2502
      %v2504 = vpop.f32.mrb[0].mxu0
      %2505 = vmatprep.mubr.f32.mxu0 0.0
      %2506 = vmatmul.mubr.f32.gmra.mrb[0].mxu0 %v2309
      %v2507 = vpop.f32.mrb[0].mxu0
      %v2508 = vadd.f32 0.0, %v2507
      %v2509 = vpop.f32.mrb[0].mxu0
      %2510 = vmatprep.mubr.f32.mxu0 0.0
      %2511 = vmatmul.mubr.f32.gmra.mrb[0].mxu0 %v2311
      %v2512 = vpop.f32.mrb[0].mxu0
      %v2513 = vadd.f32 0.0, %v2512
      %v2514 = vpop.f32.mrb[0].mxu0
      %2515 = vmatprep.mubr.f32.mxu0 0.0
      %2516 = vmatmul.mubr.f32.gmra.mrb[0].mxu0 %v2313
      %v2517 = vpop.f32.mrb[0].mxu0
      %v2518 = vadd.f32 0.0, %v2517
      %v2519 = vpop.f32.mrb[0].mxu0
      %2520 = vmatprep.mubr.f32.mxu0 0.0
      %2521 = vmatmul.mubr.f32.gmra.mrb[0].mxu0 %v2315
      %v2522 = vpop.f32.mrb[0].mxu0
      %v2523 = vadd.f32 0.0, %v2522
      %v2524 = vpop.f32.mrb[0].mxu0
      %2525 = vmatprep.mubr.f32.mxu0 0.0
      %2526 = vmatmul.mubr.f32.gmra.mrb[0].mxu0 %v2317
      %v2527 = vpop.f32.mrb[0].mxu0
      %v2528 = vadd.f32 0.0, %v2527
      %v2529 = vpop.f32.mrb[0].mxu0
      %2530 = vmatprep.mubr.f32.mxu0 0.0
      %2531 = vmatmul.mubr.f32.gmra.mrb[0].mxu0 %v2319
      %v2532 = vpop.f32.mrb[0].mxu0
      %v2533 = vadd.f32 0.0, %v2532
      %v2534 = vpop.f32.mrb[0].mxu0
      %2535 = vmatprep.mubr.f32.mxu0 0.0
      %2536 = vmatmul.mubr.f32.gmra.mrb[0].mxu0 %v2321
      %v2537 = vpop.f32.mrb[0].mxu0
      %v2538 = vadd.f32 0.0, %v2537
      %v2539 = vpop.f32.mrb[0].mxu0
      %2540 = vmatprep.mubr.f32.mxu0 0.0
      %2541 = vmatmul.mubr.f32.gmra.mrb[0].mxu0 %v2323
      %v2542 = vpop.f32.mrb[0].mxu0
      %v2543 = vadd.f32 0.0, %v2542
      %v2544 = vpop.f32.mrb[0].mxu0
      %2545 = vmatprep.mubr.f32.mxu0 0.0
      %2546 = vmatmul.mubr.f32.gmra.mrb[0].mxu0 %v2325
      %v2547 = vpop.f32.mrb[0].mxu0
      %v2548 = vadd.f32 0.0, %v2547
      %v2549 = vpop.f32.mrb[0].mxu0
      %2550 = vmatprep.mubr.f32.mxu0 0.0
      %2551 = vmatmul.mubr.f32.gmra.mrb[0].mxu0 %v2327
      %v2552 = vpop.f32.mrb[0].mxu0
      %v2553 = vadd.f32 0.0, %v2552
      %v2554 = vpop.f32.mrb[0].mxu0
      %2555 = vmatprep.mubr.f32.mxu0 0.0
      %2556 = vmatmul.mubr.f32.gmra.mrb[0].mxu0 %v2329
      %v2557 = vpop.f32.mrb[0].mxu0
      %v2558 = vadd.f32 0.0, %v2557
      %v2559 = vpop.f32.mrb[0].mxu0
      %2560 = vmatprep.mubr.f32.mxu0 0.0
      %2561 = vmatmul.mubr.f32.gmra.mrb[0].mxu0 %v2331
      %v2562 = vpop.f32.mrb[0].mxu0
      %v2563 = vadd.f32 0.0, %v2562
      %v2564 = vpop.f32.mrb[0].mxu0
      %2565 = vmatprep.mubr.f32.mxu0 0.0
      %2566 = vmatmul.mubr.f32.gmra.mrb[0].mxu0 %v2333
      %v2567 = vpop.f32.mrb[0].mxu0
      %v2568 = vadd.f32 0.0, %v2567
      %v2569 = vpop.f32.mrb[0].mxu0
      %2570 = vmatprep.mubr.f32.mxu0 0.0
      %2571 = vmatmul.mubr.f32.gmra.mrb[0].mxu0 %v2335
      %v2572 = vpop.f32.mrb[0].mxu0
      %v2573 = vadd.f32 0.0, %v2572
      %v2574 = vpop.f32.mrb[0].mxu0
      %2575 = vmatprep.mubr.f32.mxu0 0.0
      %2576 = vmatmul.mubr.f32.gmra.mrb[0].mxu0 %v2337
      %v2577 = vpop.f32.mrb[0].mxu0
      %v2578 = vadd.f32 0.0, %v2577
      %v2579 = vpop.f32.mrb[0].mxu0
      %2580 = vmatprep.mubr.f32.mxu0 0.0
      %2581 = vmatmul.mubr.f32.gmra.mrb[0].mxu0 %v2339
      %v2582 = vpop.f32.mrb[0].mxu0
      %v2583 = vadd.f32 0.0, %v2582
      %v2584 = vpop.f32.mrb[0].mxu0
      %2585 = vmatprep.mubr.f32.mxu0 0.0
      %2586 = vmatmul.mubr.f32.gmra.mrb[0].mxu0 %v2341
      %v2587 = vpop.f32.mrb[0].mxu0
      %v2588 = vadd.f32 0.0, %v2587
      %v2589 = vpop.f32.mrb[0].mxu0
      %2590 = vdwg.mxu0
      %v2591 = vadd.f32 %v2160, %v2413
      %v2592 = vadd.f32 %v2161, %v2418
      %v2593 = vadd.f32 %v2162, %v2423
      %v2594 = vadd.f32 %v2163, %v2428
      %v2595 = vadd.f32 %v2164, %v2433
      %v2596 = vadd.f32 %v2165, %v2438
      %v2597 = vadd.f32 %v2166, %v2443
      %v2598 = vadd.f32 %v2167, %v2448
      %v2599 = vadd.f32 %v2168, %v2453
      %v2600 = vadd.f32 %v2169, %v2458
      %v2601 = vadd.f32 %v2170, %v2463
      %v2602 = vadd.f32 %v2171, %v2468
      %v2603 = vadd.f32 %v2172, %v2473
      %v2604 = vadd.f32 %v2173, %v2478
      %v2605 = vadd.f32 %v2174, %v2483
      %v2606 = vadd.f32 %v2175, %v2488
      %v2607 = vadd.f32 %v2176, %v2493
      %v2608 = vadd.f32 %v2177, %v2498
      %v2609 = vadd.f32 %v2178, %v2503
      %v2610 = vadd.f32 %v2179, %v2508
      %v2611 = vadd.f32 %v2180, %v2513
      %v2612 = vadd.f32 %v2181, %v2518
      %v2613 = vadd.f32 %v2182, %v2523
      %v2614 = vadd.f32 %v2183, %v2528
      %v2615 = vadd.f32 %v2184, %v2533
      %v2616 = vadd.f32 %v2185, %v2538
      %v2617 = vadd.f32 %v2186, %v2543
      %v2618 = vadd.f32 %v2187, %v2548
      %v2619 = vadd.f32 %v2188, %v2553
      %v2620 = vadd.f32 %v2189, %v2558
      %v2621 = vadd.f32 %v2190, %v2563
      %v2622 = vadd.f32 %v2191, %v2568
      %v2623 = vadd.f32 %v2192, %v2573
      %v2624 = vadd.f32 %v2193, %v2578
      %v2625 = vadd.f32 %v2194, %v2583
      %v2626 = vadd.f32 %v2195, %v2588
      %s2627 = scalar_lea.vmem %s0, 24
      %v2628 = vld [vmem:[%s2627] sm:$0xf]
      %v2631 = vrot.slane %v278, 4
      %v2632 = vsel %vm467, %v2269, %v2631
      %v2633 = vrot.slane %v279, 4
      %v2634 = vsel %vm467, %v2631, %v2633
      %v2635 = vsel %vm394, %v2632, 0
      %v2637 = vsel %vm394, %v2634, 0
      %v2640 = vsel %vm467, %v2628, 0
      %2642 = vmatprep.subr.mxu0 0.0
      %2643 = vmatpush1.msra.mxu0 %v2640
      %2644 = vmatprep.subr.mxu0 0.0
      %2645 = vmatpush1.msra.mxu0 0.0
      %2646 = vmatprep.subr.mxu0 0.0
      %2647 = vmatpush1.msra.mxu0 0.0
      %2648 = vmatprep.subr.mxu0 0.0
      %2649 = vmatpush1.msra.mxu0 0.0
      %2650 = vmatprep.subr.mxu0 0.0
      %2651 = vmatpush1.msra.mxu0 0.0
      %2652 = vmatprep.subr.mxu0 0.0
      %2653 = vmatpush1.msra.mxu0 0.0
      %2654 = vmatprep.subr.mxu0 0.0
      %2655 = vmatpush1.msra.mxu0 0.0
      %2656 = vmatprep.subr.mxu0 0.0
      %2657 = vmatpush1.msra.mxu0 0.0
      %2658 = vmatprep.subr.mxu0 0.0
      %2659 = vmatpush1.msra.mxu0 0.0
      %2660 = vmatprep.subr.mxu0 0.0
      %2661 = vmatpush1.msra.mxu0 0.0
      %2662 = vmatprep.subr.mxu0 0.0
      %2663 = vmatpush1.msra.mxu0 0.0
      %2664 = vmatprep.subr.mxu0 0.0
      %2665 = vmatpush1.msra.mxu0 0.0
      %2666 = vmatprep.subr.mxu0 0.0
      %2667 = vmatpush1.msra.mxu0 0.0
      %2668 = vmatprep.subr.mxu0 0.0
      %2669 = vmatpush1.msra.mxu0 0.0
      %2670 = vmatprep.subr.mxu0 0.0
      %2671 = vmatpush1.msra.mxu0 0.0
      %2672 = vmatprep.subr.mxu0 0.0
      %2673 = vmatpush1.msra.mxu0 0.0
      %2674 = vmatprep.subr.mxu0 0.0
      %2675 = vmatpush1.msra.mxu0 0.0
      %2676 = vmatprep.subr.mxu0 0.0
      %2677 = vmatpush1.msra.mxu0 0.0
      %2678 = vmatprep.subr.mxu0 0.0
      %2679 = vmatpush1.msra.mxu0 0.0
      %2680 = vmatprep.subr.mxu0 0.0
      %2681 = vmatpush1.msra.mxu0 0.0
      %2682 = vmatprep.subr.mxu0 0.0
      %2683 = vmatpush1.msra.mxu0 0.0
      %2684 = vmatprep.subr.mxu0 0.0
      %2685 = vmatpush1.msra.mxu0 0.0
      %2686 = vmatprep.subr.mxu0 0.0
      %2687 = vmatpush1.msra.mxu0 0.0
      %2688 = vmatprep.subr.mxu0 0.0
      %2689 = vmatpush1.msra.mxu0 0.0
      %2690 = vmatprep.subr.mxu0 0.0
      %2691 = vmatpush1.msra.mxu0 0.0
      %2692 = vmatprep.subr.mxu0 0.0
      %2693 = vmatpush1.msra.mxu0 0.0
      %2694 = vmatprep.subr.mxu0 0.0
      %2695 = vmatpush1.msra.mxu0 0.0
      %2696 = vmatprep.subr.mxu0 0.0
      %2697 = vmatpush1.msra.mxu0 0.0
      %2698 = vmatprep.subr.mxu0 0.0
      %2699 = vmatpush1.msra.mxu0 0.0
      %2700 = vmatprep.subr.mxu0 0.0
      %2701 = vmatpush1.msra.mxu0 0.0
      %2702 = vmatprep.subr.mxu0 0.0
      %2703 = vmatpush1.msra.mxu0 0.0
      %2704 = vmatprep.subr.mxu0 0.0
      %2705 = vmatpush1.msra.mxu0 0.0
      %2706 = vmatprep.mubr.f32.mxu0 0.0
      %2707 = vmatmul.mubr.f32.gmra.mrb[0].mxu0 %v2275
      %v2708 = vpop.f32.mrb[0].mxu0
      %v2709 = vadd.f32 0.0, %v2708
      %v2710 = vpop.f32.mrb[0].mxu0
      %2711 = vmatprep.mubr.f32.mxu0 0.0
      %2712 = vmatmul.mubr.f32.gmra.mrb[0].mxu0 %v2277
      %v2713 = vpop.f32.mrb[0].mxu0
      %v2714 = vadd.f32 0.0, %v2713
      %v2715 = vpop.f32.mrb[0].mxu0
      %2716 = vmatprep.mubr.f32.mxu0 0.0
      %2717 = vmatmul.mubr.f32.gmra.mrb[0].mxu0 %v2279
      %v2718 = vpop.f32.mrb[0].mxu0
      %v2719 = vadd.f32 0.0, %v2718
      %v2720 = vpop.f32.mrb[0].mxu0
      %2721 = vmatprep.mubr.f32.mxu0 0.0
      %2722 = vmatmul.mubr.f32.gmra.mrb[0].mxu0 %v2281
      %v2723 = vpop.f32.mrb[0].mxu0
      %v2724 = vadd.f32 0.0, %v2723
      %v2725 = vpop.f32.mrb[0].mxu0
      %2726 = vmatprep.mubr.f32.mxu0 0.0
      %2727 = vmatmul.mubr.f32.gmra.mrb[0].mxu0 %v2283
      %v2728 = vpop.f32.mrb[0].mxu0
      %v2729 = vadd.f32 0.0, %v2728
      %v2730 = vpop.f32.mrb[0].mxu0
      %2731 = vmatprep.mubr.f32.mxu0 0.0
      %2732 = vmatmul.mubr.f32.gmra.mrb[0].mxu0 %v2285
      %v2733 = vpop.f32.mrb[0].mxu0
      %v2734 = vadd.f32 0.0, %v2733
      %v2735 = vpop.f32.mrb[0].mxu0
      %2736 = vmatprep.mubr.f32.mxu0 0.0
      %2737 = vmatmul.mubr.f32.gmra.mrb[0].mxu0 %v2287
      %v2738 = vpop.f32.mrb[0].mxu0
      %v2739 = vadd.f32 0.0, %v2738
      %v2740 = vpop.f32.mrb[0].mxu0
      %2741 = vmatprep.mubr.f32.mxu0 0.0
      %2742 = vmatmul.mubr.f32.gmra.mrb[0].mxu0 %v2289
      %v2743 = vpop.f32.mrb[0].mxu0
      %v2744 = vadd.f32 0.0, %v2743
      %v2745 = vpop.f32.mrb[0].mxu0
      %2746 = vmatprep.mubr.f32.mxu0 0.0
      %2747 = vmatmul.mubr.f32.gmra.mrb[0].mxu0 %v2291
      %v2748 = vpop.f32.mrb[0].mxu0
      %v2749 = vadd.f32 0.0, %v2748
      %v2750 = vpop.f32.mrb[0].mxu0
      %2751 = vmatprep.mubr.f32.mxu0 0.0
      %2752 = vmatmul.mubr.f32.gmra.mrb[0].mxu0 %v2293
      %v2753 = vpop.f32.mrb[0].mxu0
      %v2754 = vadd.f32 0.0, %v2753
      %v2755 = vpop.f32.mrb[0].mxu0
      %2756 = vmatprep.mubr.f32.mxu0 0.0
      %2757 = vmatmul.mubr.f32.gmra.mrb[0].mxu0 %v2295
      %v2758 = vpop.f32.mrb[0].mxu0
      %v2759 = vadd.f32 0.0, %v2758
      %v2760 = vpop.f32.mrb[0].mxu0
      %2761 = vmatprep.mubr.f32.mxu0 0.0
      %2762 = vmatmul.mubr.f32.gmra.mrb[0].mxu0 %v2297
      %v2763 = vpop.f32.mrb[0].mxu0
      %v2764 = vadd.f32 0.0, %v2763
      %v2765 = vpop.f32.mrb[0].mxu0
      %2766 = vmatprep.mubr.f32.mxu0 0.0
      %2767 = vmatmul.mubr.f32.gmra.mrb[0].mxu0 %v2299
      %v2768 = vpop.f32.mrb[0].mxu0
      %v2769 = vadd.f32 0.0, %v2768
      %v2770 = vpop.f32.mrb[0].mxu0
      %2771 = vmatprep.mubr.f32.mxu0 0.0
      %2772 = vmatmul.mubr.f32.gmra.mrb[0].mxu0 %v2301
      %v2773 = vpop.f32.mrb[0].mxu0
      %v2774 = vadd.f32 0.0, %v2773
      %v2775 = vpop.f32.mrb[0].mxu0
      %2776 = vmatprep.mubr.f32.mxu0 0.0
      %2777 = vmatmul.mubr.f32.gmra.mrb[0].mxu0 %v2303
      %v2778 = vpop.f32.mrb[0].mxu0
      %v2779 = vadd.f32 0.0, %v2778
      %v2780 = vpop.f32.mrb[0].mxu0
      %2781 = vmatprep.mubr.f32.mxu0 0.0
      %2782 = vmatmul.mubr.f32.gmra.mrb[0].mxu0 %v2305
      %v2783 = vpop.f32.mrb[0].mxu0
      %v2784 = vadd.f32 0.0, %v2783
      %v2785 = vpop.f32.mrb[0].mxu0
      %2786 = vmatprep.mubr.f32.mxu0 0.0
      %2787 = vmatmul.mubr.f32.gmra.mrb[0].mxu0 %v2307
      %v2788 = vpop.f32.mrb[0].mxu0
      %v2789 = vadd.f32 0.0, %v2788
      %v2790 = vpop.f32.mrb[0].mxu0
      %2791 = vmatprep.mubr.f32.mxu0 0.0
      %2792 = vmatmul.mubr.f32.gmra.mrb[0].mxu0 %v2309
      %v2793 = vpop.f32.mrb[0].mxu0
      %v2794 = vadd.f32 0.0, %v2793
      %v2795 = vpop.f32.mrb[0].mxu0
      %2796 = vmatprep.mubr.f32.mxu0 0.0
      %2797 = vmatmul.mubr.f32.gmra.mrb[0].mxu0 %v2311
      %v2798 = vpop.f32.mrb[0].mxu0
      %v2799 = vadd.f32 0.0, %v2798
      %v2800 = vpop.f32.mrb[0].mxu0
      %2801 = vmatprep.mubr.f32.mxu0 0.0
      %2802 = vmatmul.mubr.f32.gmra.mrb[0].mxu0 %v2313
      %v2803 = vpop.f32.mrb[0].mxu0
      %v2804 = vadd.f32 0.0, %v2803
      %v2805 = vpop.f32.mrb[0].mxu0
      %2806 = vmatprep.mubr.f32.mxu0 0.0
      %2807 = vmatmul.mubr.f32.gmra.mrb[0].mxu0 %v2315
      %v2808 = vpop.f32.mrb[0].mxu0
      %v2809 = vadd.f32 0.0, %v2808
      %v2810 = vpop.f32.mrb[0].mxu0
      %2811 = vmatprep.mubr.f32.mxu0 0.0
      %2812 = vmatmul.mubr.f32.gmra.mrb[0].mxu0 %v2317
      %v2813 = vpop.f32.mrb[0].mxu0
      %v2814 = vadd.f32 0.0, %v2813
      %v2815 = vpop.f32.mrb[0].mxu0
      %2816 = vmatprep.mubr.f32.mxu0 0.0
      %2817 = vmatmul.mubr.f32.gmra.mrb[0].mxu0 %v2319
      %v2818 = vpop.f32.mrb[0].mxu0
      %v2819 = vadd.f32 0.0, %v2818
      %v2820 = vpop.f32.mrb[0].mxu0
      %2821 = vmatprep.mubr.f32.mxu0 0.0
      %2822 = vmatmul.mubr.f32.gmra.mrb[0].mxu0 %v2321
      %v2823 = vpop.f32.mrb[0].mxu0
      %v2824 = vadd.f32 0.0, %v2823
      %v2825 = vpop.f32.mrb[0].mxu0
      %2826 = vmatprep.mubr.f32.mxu0 0.0
      %2827 = vmatmul.mubr.f32.gmra.mrb[0].mxu0 %v2323
      %v2828 = vpop.f32.mrb[0].mxu0
      %v2829 = vadd.f32 0.0, %v2828
      %v2830 = vpop.f32.mrb[0].mxu0
      %2831 = vmatprep.mubr.f32.mxu0 0.0
      %2832 = vmatmul.mubr.f32.gmra.mrb[0].mxu0 %v2325
      %v2833 = vpop.f32.mrb[0].mxu0
      %v2834 = vadd.f32 0.0, %v2833
      %v2835 = vpop.f32.mrb[0].mxu0
      %2836 = vmatprep.mubr.f32.mxu0 0.0
      %2837 = vmatmul.mubr.f32.gmra.mrb[0].mxu0 %v2327
      %v2838 = vpop.f32.mrb[0].mxu0
      %v2839 = vadd.f32 0.0, %v2838
      %v2840 = vpop.f32.mrb[0].mxu0
      %2841 = vmatprep.mubr.f32.mxu0 0.0
      %2842 = vmatmul.mubr.f32.gmra.mrb[0].mxu0 %v2329
      %v2843 = vpop.f32.mrb[0].mxu0
      %v2844 = vadd.f32 0.0, %v2843
      %v2845 = vpop.f32.mrb[0].mxu0
      %2846 = vmatprep.mubr.f32.mxu0 0.0
      %2847 = vmatmul.mubr.f32.gmra.mrb[0].mxu0 %v2331
      %v2848 = vpop.f32.mrb[0].mxu0
      %v2849 = vadd.f32 0.0, %v2848
      %v2850 = vpop.f32.mrb[0].mxu0
      %2851 = vmatprep.mubr.f32.mxu0 0.0
      %2852 = vmatmul.mubr.f32.gmra.mrb[0].mxu0 %v2333
      %v2853 = vpop.f32.mrb[0].mxu0
      %v2854 = vadd.f32 0.0, %v2853
      %v2855 = vpop.f32.mrb[0].mxu0
      %2856 = vmatprep.mubr.f32.mxu0 0.0
      %2857 = vmatmul.mubr.f32.gmra.mrb[0].mxu0 %v2335
      %v2858 = vpop.f32.mrb[0].mxu0
      %v2859 = vadd.f32 0.0, %v2858
      %v2860 = vpop.f32.mrb[0].mxu0
      %2861 = vmatprep.mubr.f32.mxu0 0.0
      %2862 = vmatmul.mubr.f32.gmra.mrb[0].mxu0 %v2337
      %v2863 = vpop.f32.mrb[0].mxu0
      %v2864 = vadd.f32 0.0, %v2863
      %v2865 = vpop.f32.mrb[0].mxu0
      %2866 = vmatprep.mubr.f32.mxu0 0.0
      %2867 = vmatmul.mubr.f32.gmra.mrb[0].mxu0 %v2339
      %v2868 = vpop.f32.mrb[0].mxu0
      %v2869 = vadd.f32 0.0, %v2868
      %v2870 = vpop.f32.mrb[0].mxu0
      %2871 = vmatprep.mubr.f32.mxu0 0.0
      %2872 = vmatmul.mubr.f32.gmra.mrb[0].mxu0 %v2341
      %v2873 = vpop.f32.mrb[0].mxu0
      %v2874 = vadd.f32 0.0, %v2873
      %v2875 = vpop.f32.mrb[0].mxu0
      %2876 = vmatprep.mubr.f32.mxu0 0.0
      %2877 = vmatmul.mubr.f32.gmra.mrb[0].mxu0 %v2635
      %v2878 = vpop.f32.mrb[0].mxu0
      %v2879 = vadd.f32 0.0, %v2878
      %v2880 = vpop.f32.mrb[0].mxu0
      %2881 = vmatprep.mubr.f32.mxu0 0.0
      %2882 = vmatmul.mubr.f32.gmra.mrb[0].mxu0 %v2637
      %v2883 = vpop.f32.mrb[0].mxu0
      %v2884 = vadd.f32 0.0, %v2883
      %v2885 = vpop.f32.mrb[0].mxu0
      %2886 = vdwg.mxu0
      %v2887 = vadd.f32 %v2591, %v2709
      %v2888 = vadd.f32 %v2592, %v2714
      %v2889 = vadd.f32 %v2593, %v2719
      %v2890 = vadd.f32 %v2594, %v2724
      %v2891 = vadd.f32 %v2595, %v2729
      %v2892 = vadd.f32 %v2596, %v2734
      %v2893 = vadd.f32 %v2597, %v2739
      %v2894 = vadd.f32 %v2598, %v2744
      %v2895 = vadd.f32 %v2599, %v2749
      %v2896 = vadd.f32 %v2600, %v2754
      %v2897 = vadd.f32 %v2601, %v2759
      %v2898 = vadd.f32 %v2602, %v2764
      %v2899 = vadd.f32 %v2603, %v2769
      %v2900 = vadd.f32 %v2604, %v2774
      %v2901 = vadd.f32 %v2605, %v2779
      %v2902 = vadd.f32 %v2606, %v2784
      %v2903 = vadd.f32 %v2607, %v2789
      %v2904 = vadd.f32 %v2608, %v2794
      %v2905 = vadd.f32 %v2609, %v2799
      %v2906 = vadd.f32 %v2610, %v2804
      %v2907 = vadd.f32 %v2611, %v2809
      %v2908 = vadd.f32 %v2612, %v2814
      %v2909 = vadd.f32 %v2613, %v2819
      %v2910 = vadd.f32 %v2614, %v2824
      %v2911 = vadd.f32 %v2615, %v2829
      %v2912 = vadd.f32 %v2616, %v2834
      %v2913 = vadd.f32 %v2617, %v2839
      %v2914 = vadd.f32 %v2618, %v2844
      %v2915 = vadd.f32 %v2619, %v2849
      %v2916 = vadd.f32 %v2620, %v2854
      %v2917 = vadd.f32 %v2621, %v2859
      %v2918 = vadd.f32 %v2622, %v2864
      %v2919 = vadd.f32 %v2623, %v2869
      %v2920 = vadd.f32 %v2624, %v2874
      %v2921 = vadd.f32 %v2625, %v2879
      %v2922 = vadd.f32 %v2626, %v2884
      %s2923 = scalar_lea.vmem %s0, 28
      %v2924 = vld [vmem:[%s2923] sm:$0xf]
      %vm2925 = vcmask 1042432
      %v2926 = vrot.slane %v243, 5
      %v2927 = vrot.slane %v244, 5
      %v2928 = vsel %vm2925, %v2926, %v2927
      %v2929 = vrot.slane %v245, 5
      %v2930 = vsel %vm2925, %v2927, %v2929
      %v2931 = vrot.slane %v246, 5
      %v2932 = vsel %vm2925, %v2929, %v2931
      %v2933 = vrot.slane %v247, 5
      %v2934 = vsel %vm2925, %v2931, %v2933
      %v2935 = vrot.slane %v248, 5
      %v2936 = vsel %vm2925, %v2933, %v2935
      %v2937 = vrot.slane %v249, 5
      %v2938 = vsel %vm2925, %v2935, %v2937
      %v2939 = vrot.slane %v250, 5
      %v2940 = vsel %vm2925, %v2937, %v2939
      %v2941 = vrot.slane %v251, 5
      %v2942 = vsel %vm2925, %v2939, %v2941
      %v2943 = vrot.slane %v252, 5
      %v2944 = vsel %vm2925, %v2941, %v2943
      %v2945 = vrot.slane %v253, 5
      %v2946 = vsel %vm2925, %v2943, %v2945
      %v2947 = vrot.slane %v254, 5
      %v2948 = vsel %vm2925, %v2945, %v2947
      %v2949 = vrot.slane %v255, 5
      %v2950 = vsel %vm2925, %v2947, %v2949
      %v2951 = vrot.slane %v256, 5
      %v2952 = vsel %vm2925, %v2949, %v2951
      %v2953 = vrot.slane %v257, 5
      %v2954 = vsel %vm2925, %v2951, %v2953
      %v2955 = vrot.slane %v258, 5
      %v2956 = vsel %vm2925, %v2953, %v2955
      %v2957 = vrot.slane %v259, 5
      %v2958 = vsel %vm2925, %v2955, %v2957
      %v2959 = vrot.slane %v260, 5
      %v2960 = vsel %vm2925, %v2957, %v2959
      %v2961 = vrot.slane %v261, 5
      %v2962 = vsel %vm2925, %v2959, %v2961
      %v2963 = vrot.slane %v262, 5
      %v2964 = vsel %vm2925, %v2961, %v2963
      %v2965 = vrot.slane %v263, 5
      %v2966 = vsel %vm2925, %v2963, %v2965
      %v2967 = vrot.slane %v264, 5
      %v2968 = vsel %vm2925, %v2965, %v2967
      %v2969 = vrot.slane %v265, 5
      %v2970 = vsel %vm2925, %v2967, %v2969
      %v2971 = vrot.slane %v266, 5
      %v2972 = vsel %vm2925, %v2969, %v2971
      %v2973 = vrot.slane %v267, 5
      %v2974 = vsel %vm2925, %v2971, %v2973
      %v2975 = vrot.slane %v268, 5
      %v2976 = vsel %vm2925, %v2973, %v2975
      %v2977 = vrot.slane %v269, 5
      %v2978 = vsel %vm2925, %v2975, %v2977
      %v2979 = vrot.slane %v270, 5
      %v2980 = vsel %vm2925, %v2977, %v2979
      %v2981 = vrot.slane %v271, 5
      %v2982 = vsel %vm2925, %v2979, %v2981
      %v2983 = vrot.slane %v272, 5
      %v2984 = vsel %vm2925, %v2981, %v2983
      %v2985 = vrot.slane %v273, 5
      %v2986 = vsel %vm2925, %v2983, %v2985
      %v2987 = vrot.slane %v274, 5
      %v2988 = vsel %vm2925, %v2985, %v2987
      %v2989 = vrot.slane %v275, 5
      %v2990 = vsel %vm2925, %v2987, %v2989
      %v2991 = vrot.slane %v276, 5
      %v2992 = vsel %vm2925, %v2989, %v2991
      %v2993 = vrot.slane %v277, 5
      %v2994 = vsel %vm2925, %v2991, %v2993
      %v2995 = vrot.slane %v278, 5
      %v2996 = vsel %vm2925, %v2993, %v2995
      %v2997 = vrot.slane %v279, 5
      %v2998 = vsel %vm2925, %v2995, %v2997
      %v2999 = vsel %vm394, %v2928, 0
      %v3001 = vsel %vm394, %v2930, 0
      %v3003 = vsel %vm394, %v2932, 0
      %v3005 = vsel %vm394, %v2934, 0
      %v3007 = vsel %vm394, %v2936, 0
      %v3009 = vsel %vm394, %v2938, 0
      %v3011 = vsel %vm394, %v2940, 0
      %v3013 = vsel %vm394, %v2942, 0
      %v3015 = vsel %vm394, %v2944, 0
      %v3017 = vsel %vm394, %v2946, 0
      %v3019 = vsel %vm394, %v2948, 0
      %v3021 = vsel %vm394, %v2950, 0
      %v3023 = vsel %vm394, %v2952, 0
      %v3025 = vsel %vm394, %v2954, 0
      %v3027 = vsel %vm394, %v2956, 0
      %v3029 = vsel %vm394, %v2958, 0
      %v3031 = vsel %vm394, %v2960, 0
      %v3033 = vsel %vm394, %v2962, 0
      %v3035 = vsel %vm394, %v2964, 0
      %v3037 = vsel %vm394, %v2966, 0
      %v3039 = vsel %vm394, %v2968, 0
      %v3041 = vsel %vm394, %v2970, 0
      %v3043 = vsel %vm394, %v2972, 0
      %v3045 = vsel %vm394, %v2974, 0
      %v3047 = vsel %vm394, %v2976, 0
      %v3049 = vsel %vm394, %v2978, 0
      %v3051 = vsel %vm394, %v2980, 0
      %v3053 = vsel %vm394, %v2982, 0
      %v3055 = vsel %vm394, %v2984, 0
      %v3057 = vsel %vm394, %v2986, 0
      %v3059 = vsel %vm394, %v2988, 0
      %v3061 = vsel %vm394, %v2990, 0
      %v3063 = vsel %vm394, %v2992, 0
      %v3065 = vsel %vm394, %v2994, 0
      %v3067 = vsel %vm394, %v2996, 0
      %v3069 = vsel %vm394, %v2998, 0
      %v3072 = vsel %vm467, %v2924, 0
      %3074 = vmatprep.subr.mxu0 0.0
      %3075 = vmatpush1.msra.mxu0 %v3072
      %3076 = vmatprep.subr.mxu0 0.0
      %3077 = vmatpush1.msra.mxu0 0.0
      %3078 = vmatprep.subr.mxu0 0.0
      %3079 = vmatpush1.msra.mxu0 0.0
      %3080 = vmatprep.subr.mxu0 0.0
      %3081 = vmatpush1.msra.mxu0 0.0
      %3082 = vmatprep.subr.mxu0 0.0
      %3083 = vmatpush1.msra.mxu0 0.0
      %3084 = vmatprep.subr.mxu0 0.0
      %3085 = vmatpush1.msra.mxu0 0.0
      %3086 = vmatprep.subr.mxu0 0.0
      %3087 = vmatpush1.msra.mxu0 0.0
      %3088 = vmatprep.subr.mxu0 0.0
      %3089 = vmatpush1.msra.mxu0 0.0
      %3090 = vmatprep.subr.mxu0 0.0
      %3091 = vmatpush1.msra.mxu0 0.0
      %3092 = vmatprep.subr.mxu0 0.0
      %3093 = vmatpush1.msra.mxu0 0.0
      %3094 = vmatprep.subr.mxu0 0.0
      %3095 = vmatpush1.msra.mxu0 0.0
      %3096 = vmatprep.subr.mxu0 0.0
      %3097 = vmatpush1.msra.mxu0 0.0
      %3098 = vmatprep.subr.mxu0 0.0
      %3099 = vmatpush1.msra.mxu0 0.0
      %3100 = vmatprep.subr.mxu0 0.0
      %3101 = vmatpush1.msra.mxu0 0.0
      %3102 = vmatprep.subr.mxu0 0.0
      %3103 = vmatpush1.msra.mxu0 0.0
      %3104 = vmatprep.subr.mxu0 0.0
      %3105 = vmatpush1.msra.mxu0 0.0
      %3106 = vmatprep.subr.mxu0 0.0
      %3107 = vmatpush1.msra.mxu0 0.0
      %3108 = vmatprep.subr.mxu0 0.0
      %3109 = vmatpush1.msra.mxu0 0.0
      %3110 = vmatprep.subr.mxu0 0.0
      %3111 = vmatpush1.msra.mxu0 0.0
      %3112 = vmatprep.subr.mxu0 0.0
      %3113 = vmatpush1.msra.mxu0 0.0
      %3114 = vmatprep.subr.mxu0 0.0
      %3115 = vmatpush1.msra.mxu0 0.0
      %3116 = vmatprep.subr.mxu0 0.0
      %3117 = vmatpush1.msra.mxu0 0.0
      %3118 = vmatprep.subr.mxu0 0.0
      %3119 = vmatpush1.msra.mxu0 0.0
      %3120 = vmatprep.subr.mxu0 0.0
      %3121 = vmatpush1.msra.mxu0 0.0
      %3122 = vmatprep.subr.mxu0 0.0
      %3123 = vmatpush1.msra.mxu0 0.0
      %3124 = vmatprep.subr.mxu0 0.0
      %3125 = vmatpush1.msra.mxu0 0.0
      %3126 = vmatprep.subr.mxu0 0.0
      %3127 = vmatpush1.msra.mxu0 0.0
      %3128 = vmatprep.subr.mxu0 0.0
      %3129 = vmatpush1.msra.mxu0 0.0
      %3130 = vmatprep.subr.mxu0 0.0
      %3131 = vmatpush1.msra.mxu0 0.0
      %3132 = vmatprep.subr.mxu0 0.0
      %3133 = vmatpush1.msra.mxu0 0.0
      %3134 = vmatprep.subr.mxu0 0.0
      %3135 = vmatpush1.msra.mxu0 0.0
      %3136 = vmatprep.subr.mxu0 0.0
      %3137 = vmatpush1.msra.mxu0 0.0
      %3138 = vmatprep.mubr.f32.mxu0 0.0
      %3139 = vmatmul.mubr.f32.gmra.mrb[0].mxu0 %v2999
      %v3140 = vpop.f32.mrb[0].mxu0
      %v3141 = vadd.f32 0.0, %v3140
      %v3142 = vpop.f32.mrb[0].mxu0
      %3143 = vmatprep.mubr.f32.mxu0 0.0
      %3144 = vmatmul.mubr.f32.gmra.mrb[0].mxu0 %v3001
      %v3145 = vpop.f32.mrb[0].mxu0
      %v3146 = vadd.f32 0.0, %v3145
      %v3147 = vpop.f32.mrb[0].mxu0
      %3148 = vmatprep.mubr.f32.mxu0 0.0
      %3149 = vmatmul.mubr.f32.gmra.mrb[0].mxu0 %v3003
      %v3150 = vpop.f32.mrb[0].mxu0
      %v3151 = vadd.f32 0.0, %v3150
      %v3152 = vpop.f32.mrb[0].mxu0
      %3153 = vmatprep.mubr.f32.mxu0 0.0
      %3154 = vmatmul.mubr.f32.gmra.mrb[0].mxu0 %v3005
      %v3155 = vpop.f32.mrb[0].mxu0
      %v3156 = vadd.f32 0.0, %v3155
      %v3157 = vpop.f32.mrb[0].mxu0
      %3158 = vmatprep.mubr.f32.mxu0 0.0
      %3159 = vmatmul.mubr.f32.gmra.mrb[0].mxu0 %v3007
      %v3160 = vpop.f32.mrb[0].mxu0
      %v3161 = vadd.f32 0.0, %v3160
      %v3162 = vpop.f32.mrb[0].mxu0
      %3163 = vmatprep.mubr.f32.mxu0 0.0
      %3164 = vmatmul.mubr.f32.gmra.mrb[0].mxu0 %v3009
      %v3165 = vpop.f32.mrb[0].mxu0
      %v3166 = vadd.f32 0.0, %v3165
      %v3167 = vpop.f32.mrb[0].mxu0
      %3168 = vmatprep.mubr.f32.mxu0 0.0
      %3169 = vmatmul.mubr.f32.gmra.mrb[0].mxu0 %v3011
      %v3170 = vpop.f32.mrb[0].mxu0
      %v3171 = vadd.f32 0.0, %v3170
      %v3172 = vpop.f32.mrb[0].mxu0
      %3173 = vmatprep.mubr.f32.mxu0 0.0
      %3174 = vmatmul.mubr.f32.gmra.mrb[0].mxu0 %v3013
      %v3175 = vpop.f32.mrb[0].mxu0
      %v3176 = vadd.f32 0.0, %v3175
      %v3177 = vpop.f32.mrb[0].mxu0
      %3178 = vmatprep.mubr.f32.mxu0 0.0
      %3179 = vmatmul.mubr.f32.gmra.mrb[0].mxu0 %v3015
      %v3180 = vpop.f32.mrb[0].mxu0
      %v3181 = vadd.f32 0.0, %v3180
      %v3182 = vpop.f32.mrb[0].mxu0
      %3183 = vmatprep.mubr.f32.mxu0 0.0
      %3184 = vmatmul.mubr.f32.gmra.mrb[0].mxu0 %v3017
      %v3185 = vpop.f32.mrb[0].mxu0
      %v3186 = vadd.f32 0.0, %v3185
      %v3187 = vpop.f32.mrb[0].mxu0
      %3188 = vmatprep.mubr.f32.mxu0 0.0
      %3189 = vmatmul.mubr.f32.gmra.mrb[0].mxu0 %v3019
      %v3190 = vpop.f32.mrb[0].mxu0
      %v3191 = vadd.f32 0.0, %v3190
      %v3192 = vpop.f32.mrb[0].mxu0
      %3193 = vmatprep.mubr.f32.mxu0 0.0
      %3194 = vmatmul.mubr.f32.gmra.mrb[0].mxu0 %v3021
      %v3195 = vpop.f32.mrb[0].mxu0
      %v3196 = vadd.f32 0.0, %v3195
      %v3197 = vpop.f32.mrb[0].mxu0
      %3198 = vmatprep.mubr.f32.mxu0 0.0
      %3199 = vmatmul.mubr.f32.gmra.mrb[0].mxu0 %v3023
      %v3200 = vpop.f32.mrb[0].mxu0
      %v3201 = vadd.f32 0.0, %v3200
      %v3202 = vpop.f32.mrb[0].mxu0
      %3203 = vmatprep.mubr.f32.mxu0 0.0
      %3204 = vmatmul.mubr.f32.gmra.mrb[0].mxu0 %v3025
      %v3205 = vpop.f32.mrb[0].mxu0
      %v3206 = vadd.f32 0.0, %v3205
      %v3207 = vpop.f32.mrb[0].mxu0
      %3208 = vmatprep.mubr.f32.mxu0 0.0
      %3209 = vmatmul.mubr.f32.gmra.mrb[0].mxu0 %v3027
      %v3210 = vpop.f32.mrb[0].mxu0
      %v3211 = vadd.f32 0.0, %v3210
      %v3212 = vpop.f32.mrb[0].mxu0
      %3213 = vmatprep.mubr.f32.mxu0 0.0
      %3214 = vmatmul.mubr.f32.gmra.mrb[0].mxu0 %v3029
      %v3215 = vpop.f32.mrb[0].mxu0
      %v3216 = vadd.f32 0.0, %v3215
      %v3217 = vpop.f32.mrb[0].mxu0
      %3218 = vmatprep.mubr.f32.mxu0 0.0
      %3219 = vmatmul.mubr.f32.gmra.mrb[0].mxu0 %v3031
      %v3220 = vpop.f32.mrb[0].mxu0
      %v3221 = vadd.f32 0.0, %v3220
      %v3222 = vpop.f32.mrb[0].mxu0
      %3223 = vmatprep.mubr.f32.mxu0 0.0
      %3224 = vmatmul.mubr.f32.gmra.mrb[0].mxu0 %v3033
      %v3225 = vpop.f32.mrb[0].mxu0
      %v3226 = vadd.f32 0.0, %v3225
      %v3227 = vpop.f32.mrb[0].mxu0
      %3228 = vmatprep.mubr.f32.mxu0 0.0
      %3229 = vmatmul.mubr.f32.gmra.mrb[0].mxu0 %v3035
      %v3230 = vpop.f32.mrb[0].mxu0
      %v3231 = vadd.f32 0.0, %v3230
      %v3232 = vpop.f32.mrb[0].mxu0
      %3233 = vmatprep.mubr.f32.mxu0 0.0
      %3234 = vmatmul.mubr.f32.gmra.mrb[0].mxu0 %v3037
      %v3235 = vpop.f32.mrb[0].mxu0
      %v3236 = vadd.f32 0.0, %v3235
      %v3237 = vpop.f32.mrb[0].mxu0
      %3238 = vmatprep.mubr.f32.mxu0 0.0
      %3239 = vmatmul.mubr.f32.gmra.mrb[0].mxu0 %v3039
      %v3240 = vpop.f32.mrb[0].mxu0
      %v3241 = vadd.f32 0.0, %v3240
      %v3242 = vpop.f32.mrb[0].mxu0
      %3243 = vmatprep.mubr.f32.mxu0 0.0
      %3244 = vmatmul.mubr.f32.gmra.mrb[0].mxu0 %v3041
      %v3245 = vpop.f32.mrb[0].mxu0
      %v3246 = vadd.f32 0.0, %v3245
      %v3247 = vpop.f32.mrb[0].mxu0
      %3248 = vmatprep.mubr.f32.mxu0 0.0
      %3249 = vmatmul.mubr.f32.gmra.mrb[0].mxu0 %v3043
      %v3250 = vpop.f32.mrb[0].mxu0
      %v3251 = vadd.f32 0.0, %v3250
      %v3252 = vpop.f32.mrb[0].mxu0
      %3253 = vmatprep.mubr.f32.mxu0 0.0
      %3254 = vmatmul.mubr.f32.gmra.mrb[0].mxu0 %v3045
      %v3255 = vpop.f32.mrb[0].mxu0
      %v3256 = vadd.f32 0.0, %v3255
      %v3257 = vpop.f32.mrb[0].mxu0
      %3258 = vmatprep.mubr.f32.mxu0 0.0
      %3259 = vmatmul.mubr.f32.gmra.mrb[0].mxu0 %v3047
      %v3260 = vpop.f32.mrb[0].mxu0
      %v3261 = vadd.f32 0.0, %v3260
      %v3262 = vpop.f32.mrb[0].mxu0
      %3263 = vmatprep.mubr.f32.mxu0 0.0
      %3264 = vmatmul.mubr.f32.gmra.mrb[0].mxu0 %v3049
      %v3265 = vpop.f32.mrb[0].mxu0
      %v3266 = vadd.f32 0.0, %v3265
      %v3267 = vpop.f32.mrb[0].mxu0
      %3268 = vmatprep.mubr.f32.mxu0 0.0
      %3269 = vmatmul.mubr.f32.gmra.mrb[0].mxu0 %v3051
      %v3270 = vpop.f32.mrb[0].mxu0
      %v3271 = vadd.f32 0.0, %v3270
      %v3272 = vpop.f32.mrb[0].mxu0
      %3273 = vmatprep.mubr.f32.mxu0 0.0
      %3274 = vmatmul.mubr.f32.gmra.mrb[0].mxu0 %v3053
      %v3275 = vpop.f32.mrb[0].mxu0
      %v3276 = vadd.f32 0.0, %v3275
      %v3277 = vpop.f32.mrb[0].mxu0
      %3278 = vmatprep.mubr.f32.mxu0 0.0
      %3279 = vmatmul.mubr.f32.gmra.mrb[0].mxu0 %v3055
      %v3280 = vpop.f32.mrb[0].mxu0
      %v3281 = vadd.f32 0.0, %v3280
      %v3282 = vpop.f32.mrb[0].mxu0
      %3283 = vmatprep.mubr.f32.mxu0 0.0
      %3284 = vmatmul.mubr.f32.gmra.mrb[0].mxu0 %v3057
      %v3285 = vpop.f32.mrb[0].mxu0
      %v3286 = vadd.f32 0.0, %v3285
      %v3287 = vpop.f32.mrb[0].mxu0
      %3288 = vmatprep.mubr.f32.mxu0 0.0
      %3289 = vmatmul.mubr.f32.gmra.mrb[0].mxu0 %v3059
      %v3290 = vpop.f32.mrb[0].mxu0
      %v3291 = vadd.f32 0.0, %v3290
      %v3292 = vpop.f32.mrb[0].mxu0
      %3293 = vmatprep.mubr.f32.mxu0 0.0
      %3294 = vmatmul.mubr.f32.gmra.mrb[0].mxu0 %v3061
      %v3295 = vpop.f32.mrb[0].mxu0
      %v3296 = vadd.f32 0.0, %v3295
      %v3297 = vpop.f32.mrb[0].mxu0
      %3298 = vmatprep.mubr.f32.mxu0 0.0
      %3299 = vmatmul.mubr.f32.gmra.mrb[0].mxu0 %v3063
      %v3300 = vpop.f32.mrb[0].mxu0
      %v3301 = vadd.f32 0.0, %v3300
      %v3302 = vpop.f32.mrb[0].mxu0
      %3303 = vmatprep.mubr.f32.mxu0 0.0
      %3304 = vmatmul.mubr.f32.gmra.mrb[0].mxu0 %v3065
      %v3305 = vpop.f32.mrb[0].mxu0
      %v3306 = vadd.f32 0.0, %v3305
      %v3307 = vpop.f32.mrb[0].mxu0
      %3308 = vmatprep.mubr.f32.mxu0 0.0
      %3309 = vmatmul.mubr.f32.gmra.mrb[0].mxu0 %v3067
      %v3310 = vpop.f32.mrb[0].mxu0
      %v3311 = vadd.f32 0.0, %v3310
      %v3312 = vpop.f32.mrb[0].mxu0
      %3313 = vmatprep.mubr.f32.mxu0 0.0
      %3314 = vmatmul.mubr.f32.gmra.mrb[0].mxu0 %v3069
      %v3315 = vpop.f32.mrb[0].mxu0
      %v3316 = vadd.f32 0.0, %v3315
      %v3317 = vpop.f32.mrb[0].mxu0
      %3318 = vdwg.mxu0
      %v3319 = vadd.f32 %v2887, %v3141
      %v3320 = vadd.f32 %v2888, %v3146
      %v3321 = vadd.f32 %v2889, %v3151
      %v3322 = vadd.f32 %v2890, %v3156
      %v3323 = vadd.f32 %v2891, %v3161
      %v3324 = vadd.f32 %v2892, %v3166
      %v3325 = vadd.f32 %v2893, %v3171
      %v3326 = vadd.f32 %v2894, %v3176
      %v3327 = vadd.f32 %v2895, %v3181
      %v3328 = vadd.f32 %v2896, %v3186
      %v3329 = vadd.f32 %v2897, %v3191
      %v3330 = vadd.f32 %v2898, %v3196
      %v3331 = vadd.f32 %v2899, %v3201
      %v3332 = vadd.f32 %v2900, %v3206
      %v3333 = vadd.f32 %v2901, %v3211
      %v3334 = vadd.f32 %v2902, %v3216
      %v3335 = vadd.f32 %v2903, %v3221
      %v3336 = vadd.f32 %v2904, %v3226
      %v3337 = vadd.f32 %v2905, %v3231
      %v3338 = vadd.f32 %v2906, %v3236
      %v3339 = vadd.f32 %v2907, %v3241
      %v3340 = vadd.f32 %v2908, %v3246
      %v3341 = vadd.f32 %v2909, %v3251
      %v3342 = vadd.f32 %v2910, %v3256
      %v3343 = vadd.f32 %v2911, %v3261
      %v3344 = vadd.f32 %v2912, %v3266
      %v3345 = vadd.f32 %v2913, %v3271
      %v3346 = vadd.f32 %v2914, %v3276
      %v3347 = vadd.f32 %v2915, %v3281
      %v3348 = vadd.f32 %v2916, %v3286
      %v3349 = vadd.f32 %v2917, %v3291
      %v3350 = vadd.f32 %v2918, %v3296
      %v3351 = vadd.f32 %v2919, %v3301
      %v3352 = vadd.f32 %v2920, %v3306
      %v3353 = vadd.f32 %v2921, %v3311
      %v3354 = vadd.f32 %v2922, %v3316
      %s3355 = scalar_lea.vmem %s0, 32
      %v3356 = vld [vmem:[%s3355] sm:$0xf]
      %vm3357 = vcmask 1041408
      %v3358 = vrot.slane %v243, 6
      %v3359 = vrot.slane %v244, 6
      %v3360 = vsel %vm3357, %v3358, %v3359
      %v3361 = vrot.slane %v245, 6
      %v3362 = vsel %vm3357, %v3359, %v3361
      %v3363 = vrot.slane %v246, 6
      %v3364 = vsel %vm3357, %v3361, %v3363
      %v3365 = vrot.slane %v247, 6
      %v3366 = vsel %vm3357, %v3363, %v3365
      %v3367 = vrot.slane %v248, 6
      %v3368 = vsel %vm3357, %v3365, %v3367
      %v3369 = vrot.slane %v249, 6
      %v3370 = vsel %vm3357, %v3367, %v3369
      %v3371 = vrot.slane %v250, 6
      %v3372 = vsel %vm3357, %v3369, %v3371
      %v3373 = vrot.slane %v251, 6
      %v3374 = vsel %vm3357, %v3371, %v3373
      %v3375 = vrot.slane %v252, 6
      %v3376 = vsel %vm3357, %v3373, %v3375
      %v3377 = vrot.slane %v253, 6
      %v3378 = vsel %vm3357, %v3375, %v3377
      %v3379 = vrot.slane %v254, 6
      %v3380 = vsel %vm3357, %v3377, %v3379
      %v3381 = vrot.slane %v255, 6
      %v3382 = vsel %vm3357, %v3379, %v3381
      %v3383 = vrot.slane %v256, 6
      %v3384 = vsel %vm3357, %v3381, %v3383
      %v3385 = vrot.slane %v257, 6
      %v3386 = vsel %vm3357, %v3383, %v3385
      %v3387 = vrot.slane %v258, 6
      %v3388 = vsel %vm3357, %v3385, %v3387
      %v3389 = vrot.slane %v259, 6
      %v3390 = vsel %vm3357, %v3387, %v3389
      %v3391 = vrot.slane %v260, 6
      %v3392 = vsel %vm3357, %v3389, %v3391
      %v3393 = vrot.slane %v261, 6
      %v3394 = vsel %vm3357, %v3391, %v3393
      %v3395 = vrot.slane %v262, 6
      %v3396 = vsel %vm3357, %v3393, %v3395
      %v3397 = vrot.slane %v263, 6
      %v3398 = vsel %vm3357, %v3395, %v3397
      %v3399 = vrot.slane %v264, 6
      %v3400 = vsel %vm3357, %v3397, %v3399
      %v3401 = vrot.slane %v265, 6
      %v3402 = vsel %vm3357, %v3399, %v3401
      %v3403 = vrot.slane %v266, 6
      %v3404 = vsel %vm3357, %v3401, %v3403
      %v3405 = vrot.slane %v267, 6
      %v3406 = vsel %vm3357, %v3403, %v3405
      %v3407 = vrot.slane %v268, 6
      %v3408 = vsel %vm3357, %v3405, %v3407
      %v3409 = vrot.slane %v269, 6
      %v3410 = vsel %vm3357, %v3407, %v3409
      %v3411 = vrot.slane %v270, 6
      %v3412 = vsel %vm3357, %v3409, %v3411
      %v3413 = vrot.slane %v271, 6
      %v3414 = vsel %vm3357, %v3411, %v3413
      %v3415 = vrot.slane %v272, 6
      %v3416 = vsel %vm3357, %v3413, %v3415
      %v3417 = vrot.slane %v273, 6
      %v3418 = vsel %vm3357, %v3415, %v3417
      %v3419 = vrot.slane %v274, 6
      %v3420 = vsel %vm3357, %v3417, %v3419
      %v3421 = vrot.slane %v275, 6
      %v3422 = vsel %vm3357, %v3419, %v3421
      %v3423 = vrot.slane %v276, 6
      %v3424 = vsel %vm3357, %v3421, %v3423
      %v3425 = vrot.slane %v277, 6
      %v3426 = vsel %vm3357, %v3423, %v3425
      %v3427 = vrot.slane %v278, 6
      %v3428 = vsel %vm3357, %v3425, %v3427
      %v3429 = vrot.slane %v279, 6
      %v3430 = vsel %vm3357, %v3427, %v3429
      %v3431 = vsel %vm394, %v3360, 0
      %v3433 = vsel %vm394, %v3362, 0
      %v3435 = vsel %vm394, %v3364, 0
      %v3437 = vsel %vm394, %v3366, 0
      %v3439 = vsel %vm394, %v3368, 0
      %v3441 = vsel %vm394, %v3370, 0
      %v3443 = vsel %vm394, %v3372, 0
      %v3445 = vsel %vm394, %v3374, 0
      %v3447 = vsel %vm394, %v3376, 0
      %v3449 = vsel %vm394, %v3378, 0
      %v3451 = vsel %vm394, %v3380, 0
      %v3453 = vsel %vm394, %v3382, 0
      %v3455 = vsel %vm394, %v3384, 0
      %v3457 = vsel %vm394, %v3386, 0
      %v3459 = vsel %vm394, %v3388, 0
      %v3461 = vsel %vm394, %v3390, 0
      %v3463 = vsel %vm394, %v3392, 0
      %v3465 = vsel %vm394, %v3394, 0
      %v3467 = vsel %vm394, %v3396, 0
      %v3469 = vsel %vm394, %v3398, 0
      %v3471 = vsel %vm394, %v3400, 0
      %v3473 = vsel %vm394, %v3402, 0
      %v3475 = vsel %vm394, %v3404, 0
      %v3477 = vsel %vm394, %v3406, 0
      %v3479 = vsel %vm394, %v3408, 0
      %v3481 = vsel %vm394, %v3410, 0
      %v3483 = vsel %vm394, %v3412, 0
      %v3485 = vsel %vm394, %v3414, 0
      %v3487 = vsel %vm394, %v3416, 0
      %v3489 = vsel %vm394, %v3418, 0
      %v3491 = vsel %vm394, %v3420, 0
      %v3493 = vsel %vm394, %v3422, 0
      %v3495 = vsel %vm394, %v3424, 0
      %v3497 = vsel %vm394, %v3426, 0
      %v3499 = vsel %vm394, %v3428, 0
      %v3501 = vsel %vm394, %v3430, 0
      %v3504 = vsel %vm467, %v3356, 0
      %3506 = vmatprep.subr.mxu0 0.0
      %3507 = vmatpush1.msra.mxu0 %v3504
      %3508 = vmatprep.subr.mxu0 0.0
      %3509 = vmatpush1.msra.mxu0 0.0
      %3510 = vmatprep.subr.mxu0 0.0
      %3511 = vmatpush1.msra.mxu0 0.0
      %3512 = vmatprep.subr.mxu0 0.0
      %3513 = vmatpush1.msra.mxu0 0.0
      %3514 = vmatprep.subr.mxu0 0.0
      %3515 = vmatpush1.msra.mxu0 0.0
      %3516 = vmatprep.subr.mxu0 0.0
      %3517 = vmatpush1.msra.mxu0 0.0
      %3518 = vmatprep.subr.mxu0 0.0
      %3519 = vmatpush1.msra.mxu0 0.0
      %3520 = vmatprep.subr.mxu0 0.0
      %3521 = vmatpush1.msra.mxu0 0.0
      %3522 = vmatprep.subr.mxu0 0.0
      %3523 = vmatpush1.msra.mxu0 0.0
      %3524 = vmatprep.subr.mxu0 0.0
      %3525 = vmatpush1.msra.mxu0 0.0
      %3526 = vmatprep.subr.mxu0 0.0
      %3527 = vmatpush1.msra.mxu0 0.0
      %3528 = vmatprep.subr.mxu0 0.0
      %3529 = vmatpush1.msra.mxu0 0.0
      %3530 = vmatprep.subr.mxu0 0.0
      %3531 = vmatpush1.msra.mxu0 0.0
      %3532 = vmatprep.subr.mxu0 0.0
      %3533 = vmatpush1.msra.mxu0 0.0
      %3534 = vmatprep.subr.mxu0 0.0
      %3535 = vmatpush1.msra.mxu0 0.0
      %3536 = vmatprep.subr.mxu0 0.0
      %3537 = vmatpush1.msra.mxu0 0.0
      %3538 = vmatprep.subr.mxu0 0.0
      %3539 = vmatpush1.msra.mxu0 0.0
      %3540 = vmatprep.subr.mxu0 0.0
      %3541 = vmatpush1.msra.mxu0 0.0
      %3542 = vmatprep.subr.mxu0 0.0
      %3543 = vmatpush1.msra.mxu0 0.0
      %3544 = vmatprep.subr.mxu0 0.0
      %3545 = vmatpush1.msra.mxu0 0.0
      %3546 = vmatprep.subr.mxu0 0.0
      %3547 = vmatpush1.msra.mxu0 0.0
      %3548 = vmatprep.subr.mxu0 0.0
      %3549 = vmatpush1.msra.mxu0 0.0
      %3550 = vmatprep.subr.mxu0 0.0
      %3551 = vmatpush1.msra.mxu0 0.0
      %3552 = vmatprep.subr.mxu0 0.0
      %3553 = vmatpush1.msra.mxu0 0.0
      %3554 = vmatprep.subr.mxu0 0.0
      %3555 = vmatpush1.msra.mxu0 0.0
      %3556 = vmatprep.subr.mxu0 0.0
      %3557 = vmatpush1.msra.mxu0 0.0
      %3558 = vmatprep.subr.mxu0 0.0
      %3559 = vmatpush1.msra.mxu0 0.0
      %3560 = vmatprep.subr.mxu0 0.0
      %3561 = vmatpush1.msra.mxu0 0.0
      %3562 = vmatprep.subr.mxu0 0.0
      %3563 = vmatpush1.msra.mxu0 0.0
      %3564 = vmatprep.subr.mxu0 0.0
      %3565 = vmatpush1.msra.mxu0 0.0
      %3566 = vmatprep.subr.mxu0 0.0
      %3567 = vmatpush1.msra.mxu0 0.0
      %3568 = vmatprep.subr.mxu0 0.0
      %3569 = vmatpush1.msra.mxu0 0.0
      %3570 = vmatprep.mubr.f32.mxu0 0.0
      %3571 = vmatmul.mubr.f32.gmra.mrb[0].mxu0 %v3431
      %v3572 = vpop.f32.mrb[0].mxu0
      %v3573 = vadd.f32 0.0, %v3572
      %v3574 = vpop.f32.mrb[0].mxu0
      %3575 = vmatprep.mubr.f32.mxu0 0.0
      %3576 = vmatmul.mubr.f32.gmra.mrb[0].mxu0 %v3433
      %v3577 = vpop.f32.mrb[0].mxu0
      %v3578 = vadd.f32 0.0, %v3577
      %v3579 = vpop.f32.mrb[0].mxu0
      %3580 = vmatprep.mubr.f32.mxu0 0.0
      %3581 = vmatmul.mubr.f32.gmra.mrb[0].mxu0 %v3435
      %v3582 = vpop.f32.mrb[0].mxu0
      %v3583 = vadd.f32 0.0, %v3582
      %v3584 = vpop.f32.mrb[0].mxu0
      %3585 = vmatprep.mubr.f32.mxu0 0.0
      %3586 = vmatmul.mubr.f32.gmra.mrb[0].mxu0 %v3437
      %v3587 = vpop.f32.mrb[0].mxu0
      %v3588 = vadd.f32 0.0, %v3587
      %v3589 = vpop.f32.mrb[0].mxu0
      %3590 = vmatprep.mubr.f32.mxu0 0.0
      %3591 = vmatmul.mubr.f32.gmra.mrb[0].mxu0 %v3439
      %v3592 = vpop.f32.mrb[0].mxu0
      %v3593 = vadd.f32 0.0, %v3592
      %v3594 = vpop.f32.mrb[0].mxu0
      %3595 = vmatprep.mubr.f32.mxu0 0.0
      %3596 = vmatmul.mubr.f32.gmra.mrb[0].mxu0 %v3441
      %v3597 = vpop.f32.mrb[0].mxu0
      %v3598 = vadd.f32 0.0, %v3597
      %v3599 = vpop.f32.mrb[0].mxu0
      %3600 = vmatprep.mubr.f32.mxu0 0.0
      %3601 = vmatmul.mubr.f32.gmra.mrb[0].mxu0 %v3443
      %v3602 = vpop.f32.mrb[0].mxu0
      %v3603 = vadd.f32 0.0, %v3602
      %v3604 = vpop.f32.mrb[0].mxu0
      %3605 = vmatprep.mubr.f32.mxu0 0.0
      %3606 = vmatmul.mubr.f32.gmra.mrb[0].mxu0 %v3445
      %v3607 = vpop.f32.mrb[0].mxu0
      %v3608 = vadd.f32 0.0, %v3607
      %v3609 = vpop.f32.mrb[0].mxu0
      %3610 = vmatprep.mubr.f32.mxu0 0.0
      %3611 = vmatmul.mubr.f32.gmra.mrb[0].mxu0 %v3447
      %v3612 = vpop.f32.mrb[0].mxu0
      %v3613 = vadd.f32 0.0, %v3612
      %v3614 = vpop.f32.mrb[0].mxu0
      %3615 = vmatprep.mubr.f32.mxu0 0.0
      %3616 = vmatmul.mubr.f32.gmra.mrb[0].mxu0 %v3449
      %v3617 = vpop.f32.mrb[0].mxu0
      %v3618 = vadd.f32 0.0, %v3617
      %v3619 = vpop.f32.mrb[0].mxu0
      %3620 = vmatprep.mubr.f32.mxu0 0.0
      %3621 = vmatmul.mubr.f32.gmra.mrb[0].mxu0 %v3451
      %v3622 = vpop.f32.mrb[0].mxu0
      %v3623 = vadd.f32 0.0, %v3622
      %v3624 = vpop.f32.mrb[0].mxu0
      %3625 = vmatprep.mubr.f32.mxu0 0.0
      %3626 = vmatmul.mubr.f32.gmra.mrb[0].mxu0 %v3453
      %v3627 = vpop.f32.mrb[0].mxu0
      %v3628 = vadd.f32 0.0, %v3627
      %v3629 = vpop.f32.mrb[0].mxu0
      %3630 = vmatprep.mubr.f32.mxu0 0.0
      %3631 = vmatmul.mubr.f32.gmra.mrb[0].mxu0 %v3455
      %v3632 = vpop.f32.mrb[0].mxu0
      %v3633 = vadd.f32 0.0, %v3632
      %v3634 = vpop.f32.mrb[0].mxu0
      %3635 = vmatprep.mubr.f32.mxu0 0.0
      %3636 = vmatmul.mubr.f32.gmra.mrb[0].mxu0 %v3457
      %v3637 = vpop.f32.mrb[0].mxu0
      %v3638 = vadd.f32 0.0, %v3637
      %v3639 = vpop.f32.mrb[0].mxu0
      %3640 = vmatprep.mubr.f32.mxu0 0.0
      %3641 = vmatmul.mubr.f32.gmra.mrb[0].mxu0 %v3459
      %v3642 = vpop.f32.mrb[0].mxu0
      %v3643 = vadd.f32 0.0, %v3642
      %v3644 = vpop.f32.mrb[0].mxu0
      %3645 = vmatprep.mubr.f32.mxu0 0.0
      %3646 = vmatmul.mubr.f32.gmra.mrb[0].mxu0 %v3461
      %v3647 = vpop.f32.mrb[0].mxu0
      %v3648 = vadd.f32 0.0, %v3647
      %v3649 = vpop.f32.mrb[0].mxu0
      %3650 = vmatprep.mubr.f32.mxu0 0.0
      %3651 = vmatmul.mubr.f32.gmra.mrb[0].mxu0 %v3463
      %v3652 = vpop.f32.mrb[0].mxu0
      %v3653 = vadd.f32 0.0, %v3652
      %v3654 = vpop.f32.mrb[0].mxu0
      %3655 = vmatprep.mubr.f32.mxu0 0.0
      %3656 = vmatmul.mubr.f32.gmra.mrb[0].mxu0 %v3465
      %v3657 = vpop.f32.mrb[0].mxu0
      %v3658 = vadd.f32 0.0, %v3657
      %v3659 = vpop.f32.mrb[0].mxu0
      %3660 = vmatprep.mubr.f32.mxu0 0.0
      %3661 = vmatmul.mubr.f32.gmra.mrb[0].mxu0 %v3467
      %v3662 = vpop.f32.mrb[0].mxu0
      %v3663 = vadd.f32 0.0, %v3662
      %v3664 = vpop.f32.mrb[0].mxu0
      %3665 = vmatprep.mubr.f32.mxu0 0.0
      %3666 = vmatmul.mubr.f32.gmra.mrb[0].mxu0 %v3469
      %v3667 = vpop.f32.mrb[0].mxu0
      %v3668 = vadd.f32 0.0, %v3667
      %v3669 = vpop.f32.mrb[0].mxu0
      %3670 = vmatprep.mubr.f32.mxu0 0.0
      %3671 = vmatmul.mubr.f32.gmra.mrb[0].mxu0 %v3471
      %v3672 = vpop.f32.mrb[0].mxu0
      %v3673 = vadd.f32 0.0, %v3672
      %v3674 = vpop.f32.mrb[0].mxu0
      %3675 = vmatprep.mubr.f32.mxu0 0.0
      %3676 = vmatmul.mubr.f32.gmra.mrb[0].mxu0 %v3473
      %v3677 = vpop.f32.mrb[0].mxu0
      %v3678 = vadd.f32 0.0, %v3677
      %v3679 = vpop.f32.mrb[0].mxu0
      %3680 = vmatprep.mubr.f32.mxu0 0.0
      %3681 = vmatmul.mubr.f32.gmra.mrb[0].mxu0 %v3475
      %v3682 = vpop.f32.mrb[0].mxu0
      %v3683 = vadd.f32 0.0, %v3682
      %v3684 = vpop.f32.mrb[0].mxu0
      %3685 = vmatprep.mubr.f32.mxu0 0.0
      %3686 = vmatmul.mubr.f32.gmra.mrb[0].mxu0 %v3477
      %v3687 = vpop.f32.mrb[0].mxu0
      %v3688 = vadd.f32 0.0, %v3687
      %v3689 = vpop.f32.mrb[0].mxu0
      %3690 = vmatprep.mubr.f32.mxu0 0.0
      %3691 = vmatmul.mubr.f32.gmra.mrb[0].mxu0 %v3479
      %v3692 = vpop.f32.mrb[0].mxu0
      %v3693 = vadd.f32 0.0, %v3692
      %v3694 = vpop.f32.mrb[0].mxu0
      %3695 = vmatprep.mubr.f32.mxu0 0.0
      %3696 = vmatmul.mubr.f32.gmra.mrb[0].mxu0 %v3481
      %v3697 = vpop.f32.mrb[0].mxu0
      %v3698 = vadd.f32 0.0, %v3697
      %v3699 = vpop.f32.mrb[0].mxu0
      %3700 = vmatprep.mubr.f32.mxu0 0.0
      %3701 = vmatmul.mubr.f32.gmra.mrb[0].mxu0 %v3483
      %v3702 = vpop.f32.mrb[0].mxu0
      %v3703 = vadd.f32 0.0, %v3702
      %v3704 = vpop.f32.mrb[0].mxu0
      %3705 = vmatprep.mubr.f32.mxu0 0.0
      %3706 = vmatmul.mubr.f32.gmra.mrb[0].mxu0 %v3485
      %v3707 = vpop.f32.mrb[0].mxu0
      %v3708 = vadd.f32 0.0, %v3707
      %v3709 = vpop.f32.mrb[0].mxu0
      %3710 = vmatprep.mubr.f32.mxu0 0.0
      %3711 = vmatmul.mubr.f32.gmra.mrb[0].mxu0 %v3487
      %v3712 = vpop.f32.mrb[0].mxu0
      %v3713 = vadd.f32 0.0, %v3712
      %v3714 = vpop.f32.mrb[0].mxu0
      %3715 = vmatprep.mubr.f32.mxu0 0.0
      %3716 = vmatmul.mubr.f32.gmra.mrb[0].mxu0 %v3489
      %v3717 = vpop.f32.mrb[0].mxu0
      %v3718 = vadd.f32 0.0, %v3717
      %v3719 = vpop.f32.mrb[0].mxu0
      %3720 = vmatprep.mubr.f32.mxu0 0.0
      %3721 = vmatmul.mubr.f32.gmra.mrb[0].mxu0 %v3491
      %v3722 = vpop.f32.mrb[0].mxu0
      %v3723 = vadd.f32 0.0, %v3722
      %v3724 = vpop.f32.mrb[0].mxu0
      %3725 = vmatprep.mubr.f32.mxu0 0.0
      %3726 = vmatmul.mubr.f32.gmra.mrb[0].mxu0 %v3493
      %v3727 = vpop.f32.mrb[0].mxu0
      %v3728 = vadd.f32 0.0, %v3727
      %v3729 = vpop.f32.mrb[0].mxu0
      %3730 = vmatprep.mubr.f32.mxu0 0.0
      %3731 = vmatmul.mubr.f32.gmra.mrb[0].mxu0 %v3495
      %v3732 = vpop.f32.mrb[0].mxu0
      %v3733 = vadd.f32 0.0, %v3732
      %v3734 = vpop.f32.mrb[0].mxu0
      %3735 = vmatprep.mubr.f32.mxu0 0.0
      %3736 = vmatmul.mubr.f32.gmra.mrb[0].mxu0 %v3497
      %v3737 = vpop.f32.mrb[0].mxu0
      %v3738 = vadd.f32 0.0, %v3737
      %v3739 = vpop.f32.mrb[0].mxu0
      %3740 = vmatprep.mubr.f32.mxu0 0.0
      %3741 = vmatmul.mubr.f32.gmra.mrb[0].mxu0 %v3499
      %v3742 = vpop.f32.mrb[0].mxu0
      %v3743 = vadd.f32 0.0, %v3742
      %v3744 = vpop.f32.mrb[0].mxu0
      %3745 = vmatprep.mubr.f32.mxu0 0.0
      %3746 = vmatmul.mubr.f32.gmra.mrb[0].mxu0 %v3501
      %v3747 = vpop.f32.mrb[0].mxu0
      %v3748 = vadd.f32 0.0, %v3747
      %v3749 = vpop.f32.mrb[0].mxu0
      %3750 = vdwg.mxu0
      %v3751 = vadd.f32 %v3319, %v3573
      %v3752 = vadd.f32 %v3320, %v3578
      %v3753 = vadd.f32 %v3321, %v3583
      %v3754 = vadd.f32 %v3322, %v3588
      %v3755 = vadd.f32 %v3323, %v3593
      %v3756 = vadd.f32 %v3324, %v3598
      %v3757 = vadd.f32 %v3325, %v3603
      %v3758 = vadd.f32 %v3326, %v3608
      %v3759 = vadd.f32 %v3327, %v3613
      %v3760 = vadd.f32 %v3328, %v3618
      %v3761 = vadd.f32 %v3329, %v3623
      %v3762 = vadd.f32 %v3330, %v3628
      %v3763 = vadd.f32 %v3331, %v3633
      %v3764 = vadd.f32 %v3332, %v3638
      %v3765 = vadd.f32 %v3333, %v3643
      %v3766 = vadd.f32 %v3334, %v3648
      %v3767 = vadd.f32 %v3335, %v3653
      %v3768 = vadd.f32 %v3336, %v3658
      %v3769 = vadd.f32 %v3337, %v3663
      %v3770 = vadd.f32 %v3338, %v3668
      %v3771 = vadd.f32 %v3339, %v3673
      %v3772 = vadd.f32 %v3340, %v3678
      %v3773 = vadd.f32 %v3341, %v3683
      %v3774 = vadd.f32 %v3342, %v3688
      %v3775 = vadd.f32 %v3343, %v3693
      %v3776 = vadd.f32 %v3344, %v3698
      %v3777 = vadd.f32 %v3345, %v3703
      %v3778 = vadd.f32 %v3346, %v3708
      %v3779 = vadd.f32 %v3347, %v3713
      %v3780 = vadd.f32 %v3348, %v3718
      %v3781 = vadd.f32 %v3349, %v3723
      %v3782 = vadd.f32 %v3350, %v3728
      %v3783 = vadd.f32 %v3351, %v3733
      %v3784 = vadd.f32 %v3352, %v3738
      %v3785 = vadd.f32 %v3353, %v3743
      %v3786 = vadd.f32 %v3354, %v3748
      %v3787 = vld [vmem:[%s1] sm:$0x1]
      %v3789 = vlaneseq
      %v3790 = vshrl.u32 %v3789, 7
      %v3791 = vsub.s32 0, %v3790
      %v3792 = vrot.slane %v3787, %v3791
      %v3794 = vadd.f32 %v3751, %v3792
      %v3795 = vadd.f32 %v3752, %v3792
      %v3796 = vadd.f32 %v3753, %v3792
      %v3797 = vadd.f32 %v3754, %v3792
      %v3798 = vadd.f32 %v3755, %v3792
      %v3799 = vadd.f32 %v3756, %v3792
      %v3800 = vadd.f32 %v3757, %v3792
      %v3801 = vadd.f32 %v3758, %v3792
      %v3802 = vadd.f32 %v3759, %v3792
      %v3803 = vadd.f32 %v3760, %v3792
      %v3804 = vadd.f32 %v3761, %v3792
      %v3805 = vadd.f32 %v3762, %v3792
      %v3806 = vadd.f32 %v3763, %v3792
      %v3807 = vadd.f32 %v3764, %v3792
      %v3808 = vadd.f32 %v3765, %v3792
      %v3809 = vadd.f32 %v3766, %v3792
      %v3810 = vadd.f32 %v3767, %v3792
      %v3811 = vadd.f32 %v3768, %v3792
      %v3812 = vadd.f32 %v3769, %v3792
      %v3813 = vadd.f32 %v3770, %v3792
      %v3814 = vadd.f32 %v3771, %v3792
      %v3815 = vadd.f32 %v3772, %v3792
      %v3816 = vadd.f32 %v3773, %v3792
      %v3817 = vadd.f32 %v3774, %v3792
      %v3818 = vadd.f32 %v3775, %v3792
      %v3819 = vadd.f32 %v3776, %v3792
      %v3820 = vadd.f32 %v3777, %v3792
      %v3821 = vadd.f32 %v3778, %v3792
      %v3822 = vadd.f32 %v3779, %v3792
      %v3823 = vadd.f32 %v3780, %v3792
      %v3824 = vadd.f32 %v3781, %v3792
      %v3825 = vadd.f32 %v3782, %v3792
      %v3826 = vadd.f32 %v3783, %v3792
      %v3827 = vadd.f32 %v3784, %v3792
      %v3828 = vadd.f32 %v3785, %v3792
      %v3829 = vadd.f32 %v3786, %v3792
      %vm3830 = vcmask 64512
      %3831 = vst.msk [vmem:[%s233] sm:$0xff] %vm3830, %v3794
      %3832 = vst.msk [vmem:[%s233 + $0x8] sm:$0xff] %vm3830, %v3795
      %3833 = vst.msk [vmem:[%s233 + $0x10] sm:$0xff] %vm3830, %v3796
      %3834 = vst.msk [vmem:[%s233 + $0x18] sm:$0xff] %vm3830, %v3797
      %3835 = vst.msk [vmem:[%s233 + $0x20] sm:$0xff] %vm3830, %v3798
      %3836 = vst.msk [vmem:[%s233 + $0x28] sm:$0xff] %vm3830, %v3799
      %3837 = vst.msk [vmem:[%s233 + $0x30] sm:$0xff] %vm3830, %v3800
      %3838 = vst.msk [vmem:[%s233 + $0x38] sm:$0xff] %vm3830, %v3801
      %3839 = vst.msk [vmem:[%s233 + $0x40] sm:$0xff] %vm3830, %v3802
      %3840 = vst.msk [vmem:[%s233 + $0x48] sm:$0xff] %vm3830, %v3803
      %3841 = vst.msk [vmem:[%s233 + $0x50] sm:$0xff] %vm3830, %v3804
      %3842 = vst.msk [vmem:[%s233 + $0x58] sm:$0xff] %vm3830, %v3805
      %3843 = vst.msk [vmem:[%s233 + $0x60] sm:$0xff] %vm3830, %v3806
      %3844 = vst.msk [vmem:[%s233 + $0x68] sm:$0xff] %vm3830, %v3807
      %3845 = vst.msk [vmem:[%s233 + $0x70] sm:$0xff] %vm3830, %v3808
      %3846 = vst.msk [vmem:[%s233 + $0x78] sm:$0xff] %vm3830, %v3809
      %3847 = vst.msk [vmem:[%s233 + $0x80] sm:$0xff] %vm3830, %v3810
      %3848 = vst.msk [vmem:[%s233 + $0x88] sm:$0xff] %vm3830, %v3811
      %3849 = vst.msk [vmem:[%s233 + $0x90] sm:$0xff] %vm3830, %v3812
      %3850 = vst.msk [vmem:[%s233 + $0x98] sm:$0xff] %vm3830, %v3813
      %3851 = vst.msk [vmem:[%s233 + $0xa0] sm:$0xff] %vm3830, %v3814
      %3852 = vst.msk [vmem:[%s233 + $0xa8] sm:$0xff] %vm3830, %v3815
      %3853 = vst.msk [vmem:[%s233 + $0xb0] sm:$0xff] %vm3830, %v3816
      %3854 = vst.msk [vmem:[%s233 + $0xb8] sm:$0xff] %vm3830, %v3817
      %3855 = vst.msk [vmem:[%s233 + $0xc0] sm:$0xff] %vm3830, %v3818
      %3856 = vst.msk [vmem:[%s233 + $0xc8] sm:$0xff] %vm3830, %v3819
      %3857 = vst.msk [vmem:[%s233 + $0xd0] sm:$0xff] %vm3830, %v3820
      %3858 = vst.msk [vmem:[%s233 + $0xd8] sm:$0xff] %vm3830, %v3821
      %3859 = vst.msk [vmem:[%s233 + $0xe0] sm:$0xff] %vm3830, %v3822
      %3860 = vst.msk [vmem:[%s233 + $0xe8] sm:$0xff] %vm3830, %v3823
      %3861 = vst.msk [vmem:[%s233 + $0xf0] sm:$0xff] %vm3830, %v3824
      %3862 = vst.msk [vmem:[%s233 + $0xf8] sm:$0xff] %vm3830, %v3825
      %3863 = vst.msk [vmem:[%s233 + $0x100] sm:$0xff] %vm3830, %v3826
      %3864 = vst.msk [vmem:[%s233 + $0x108] sm:$0xff] %vm3830, %v3827
      %3865 = vst.msk [vmem:[%s233 + $0x110] sm:$0xff] %vm3830, %v3828
      %3866 = vst.msk [vmem:[%s233 + $0x118] sm:$0xff] %vm3830, %v3829
      %v3867 = vld [vmem:[%s2] sm:$0xff]
      %v3868 = vld [vmem:[%s2 + $0x8] sm:$0xff]
      %v3869 = vld [vmem:[%s2 + $0x10] sm:$0xff]
      %v3870 = vld [vmem:[%s2 + $0x18] sm:$0xff]
      %v3871 = vld [vmem:[%s2 + $0x20] sm:$0xff]
      %v3872 = vld [vmem:[%s2 + $0x28] sm:$0xff]
      %v3873 = vld [vmem:[%s2 + $0x30] sm:$0xff]
      %v3874 = vld [vmem:[%s2 + $0x38] sm:$0xff]
      %v3875 = vld [vmem:[%s2 + $0x40] sm:$0xff]
      %v3876 = vld [vmem:[%s2 + $0x48] sm:$0xff]
      %v3877 = vld [vmem:[%s2 + $0x50] sm:$0xff]
      %v3878 = vld [vmem:[%s2 + $0x58] sm:$0xff]
      %v3879 = vld [vmem:[%s2 + $0x60] sm:$0xff]
      %v3880 = vld [vmem:[%s2 + $0x68] sm:$0xff]
      %v3881 = vld [vmem:[%s2 + $0x70] sm:$0xff]
      %v3882 = vld [vmem:[%s2 + $0x78] sm:$0xff]
      %v3883 = vld [vmem:[%s2 + $0x80] sm:$0xff]
      %v3884 = vld [vmem:[%s2 + $0x88] sm:$0xff]
      %v3885 = vld [vmem:[%s2 + $0x90] sm:$0xff]
      %v3886 = vld [vmem:[%s2 + $0x98] sm:$0xff]
      %v3887 = vld [vmem:[%s2 + $0xa0] sm:$0xff]
      %v3888 = vld [vmem:[%s2 + $0xa8] sm:$0xff]
      %v3889 = vld [vmem:[%s2 + $0xb0] sm:$0xff]
      %v3890 = vld [vmem:[%s2 + $0xb8] sm:$0xff]
      %v3891 = vld [vmem:[%s2 + $0xc0] sm:$0xff]
      %v3892 = vld [vmem:[%s2 + $0xc8] sm:$0xff]
      %v3893 = vld [vmem:[%s2 + $0xd0] sm:$0xff]
      %v3894 = vld [vmem:[%s2 + $0xd8] sm:$0xff]
      %v3895 = vld [vmem:[%s2 + $0xe0] sm:$0xff]
      %v3896 = vld [vmem:[%s2 + $0xe8] sm:$0xff]
      %v3897 = vld [vmem:[%s2 + $0xf0] sm:$0xff]
      %v3898 = vld [vmem:[%s2 + $0xf8] sm:$0xff]
      %v3899 = vld [vmem:[%s2 + $0x100] sm:$0xff]
      %v3900 = vld [vmem:[%s2 + $0x108] sm:$0xff]
      %v3901 = vld [vmem:[%s2 + $0x110] sm:$0xff]
      %v3902 = vld [vmem:[%s2 + $0x118] sm:$0xff]
      %3904 = vset.pattern.permute.xlu0 0
      %3905 = vperm.xlu0 %3904, %v3867
      %v3906 = vpop.permute.xlu0 %3905
      %3909 = vset.pattern.permute.xlu0 0
      %3910 = vperm.xlu0 %3909, %v3868
      %v3911 = vpop.permute.xlu0 %3910
      %3914 = vset.pattern.permute.xlu0 0
      %3915 = vperm.xlu0 %3914, %v3869
      %v3916 = vpop.permute.xlu0 %3915
      %3919 = vset.pattern.permute.xlu0 0
      %3920 = vperm.xlu0 %3919, %v3870
      %v3921 = vpop.permute.xlu0 %3920
      %3924 = vset.pattern.permute.xlu0 0
      %3925 = vperm.xlu0 %3924, %v3871
      %v3926 = vpop.permute.xlu0 %3925
      %3929 = vset.pattern.permute.xlu0 0
      %3930 = vperm.xlu0 %3929, %v3872
      %v3931 = vpop.permute.xlu0 %3930
      %3934 = vset.pattern.permute.xlu0 0
      %3935 = vperm.xlu0 %3934, %v3873
      %v3936 = vpop.permute.xlu0 %3935
      %3939 = vset.pattern.permute.xlu0 0
      %3940 = vperm.xlu0 %3939, %v3874
      %v3941 = vpop.permute.xlu0 %3940
      %3944 = vset.pattern.permute.xlu0 0
      %3945 = vperm.xlu0 %3944, %v3875
      %v3946 = vpop.permute.xlu0 %3945
      %3949 = vset.pattern.permute.xlu0 0
      %3950 = vperm.xlu0 %3949, %v3876
      %v3951 = vpop.permute.xlu0 %3950
      %3954 = vset.pattern.permute.xlu0 0
      %3955 = vperm.xlu0 %3954, %v3877
      %v3956 = vpop.permute.xlu0 %3955
      %3959 = vset.pattern.permute.xlu0 0
      %3960 = vperm.xlu0 %3959, %v3878
      %v3961 = vpop.permute.xlu0 %3960
      %3964 = vset.pattern.permute.xlu0 0
      %3965 = vperm.xlu0 %3964, %v3879
      %v3966 = vpop.permute.xlu0 %3965
      %3969 = vset.pattern.permute.xlu0 0
      %3970 = vperm.xlu0 %3969, %v3880
      %v3971 = vpop.permute.xlu0 %3970
      %3974 = vset.pattern.permute.xlu0 0
      %3975 = vperm.xlu0 %3974, %v3881
      %v3976 = vpop.permute.xlu0 %3975
      %3979 = vset.pattern.permute.xlu0 0
      %3980 = vperm.xlu0 %3979, %v3882
      %v3981 = vpop.permute.xlu0 %3980
      %3984 = vset.pattern.permute.xlu0 0
      %3985 = vperm.xlu0 %3984, %v3883
      %v3986 = vpop.permute.xlu0 %3985
      %3989 = vset.pattern.permute.xlu0 0
      %3990 = vperm.xlu0 %3989, %v3884
      %v3991 = vpop.permute.xlu0 %3990
      %3994 = vset.pattern.permute.xlu0 0
      %3995 = vperm.xlu0 %3994, %v3885
      %v3996 = vpop.permute.xlu0 %3995
      %3999 = vset.pattern.permute.xlu0 0
      %4000 = vperm.xlu0 %3999, %v3886
      %v4001 = vpop.permute.xlu0 %4000
      %4004 = vset.pattern.permute.xlu0 0
      %4005 = vperm.xlu0 %4004, %v3887
      %v4006 = vpop.permute.xlu0 %4005
      %4009 = vset.pattern.permute.xlu0 0
      %4010 = vperm.xlu0 %4009, %v3888
      %v4011 = vpop.permute.xlu0 %4010
      %4014 = vset.pattern.permute.xlu0 0
      %4015 = vperm.xlu0 %4014, %v3889
      %v4016 = vpop.permute.xlu0 %4015
      %4019 = vset.pattern.permute.xlu0 0
      %4020 = vperm.xlu0 %4019, %v3890
      %v4021 = vpop.permute.xlu0 %4020
      %4024 = vset.pattern.permute.xlu0 0
      %4025 = vperm.xlu0 %4024, %v3891
      %v4026 = vpop.permute.xlu0 %4025
      %4029 = vset.pattern.permute.xlu0 0
      %4030 = vperm.xlu0 %4029, %v3892
      %v4031 = vpop.permute.xlu0 %4030
      %4034 = vset.pattern.permute.xlu0 0
      %4035 = vperm.xlu0 %4034, %v3893
      %v4036 = vpop.permute.xlu0 %4035
      %4039 = vset.pattern.permute.xlu0 0
      %4040 = vperm.xlu0 %4039, %v3894
      %v4041 = vpop.permute.xlu0 %4040
      %4044 = vset.pattern.permute.xlu0 0
      %4045 = vperm.xlu0 %4044, %v3895
      %v4046 = vpop.permute.xlu0 %4045
      %4049 = vset.pattern.permute.xlu0 0
      %4050 = vperm.xlu0 %4049, %v3896
      %v4051 = vpop.permute.xlu0 %4050
      %4054 = vset.pattern.permute.xlu0 0
      %4055 = vperm.xlu0 %4054, %v3897
      %v4056 = vpop.permute.xlu0 %4055
      %4059 = vset.pattern.permute.xlu0 0
      %4060 = vperm.xlu0 %4059, %v3898
      %v4061 = vpop.permute.xlu0 %4060
      %4064 = vset.pattern.permute.xlu0 0
      %4065 = vperm.xlu0 %4064, %v3899
      %v4066 = vpop.permute.xlu0 %4065
      %4069 = vset.pattern.permute.xlu0 0
      %4070 = vperm.xlu0 %4069, %v3900
      %v4071 = vpop.permute.xlu0 %4070
      %4074 = vset.pattern.permute.xlu0 0
      %4075 = vperm.xlu0 %4074, %v3901
      %v4076 = vpop.permute.xlu0 %4075
      %4079 = vset.pattern.permute.xlu0 0
      %4080 = vperm.xlu0 %4079, %v3902
      %v4081 = vpop.permute.xlu0 %4080
      %v4083 = vmul.f32 %v3794, %v3906
      %v4084 = vmul.f32 %v3795, %v3911
      %v4085 = vmul.f32 %v3796, %v3916
      %v4086 = vmul.f32 %v3797, %v3921
      %v4087 = vmul.f32 %v3798, %v3926
      %v4088 = vmul.f32 %v3799, %v3931
      %v4089 = vmul.f32 %v3800, %v3936
      %v4090 = vmul.f32 %v3801, %v3941
      %v4091 = vmul.f32 %v3802, %v3946
      %v4092 = vmul.f32 %v3803, %v3951
      %v4093 = vmul.f32 %v3804, %v3956
      %v4094 = vmul.f32 %v3805, %v3961
      %v4095 = vmul.f32 %v3806, %v3966
      %v4096 = vmul.f32 %v3807, %v3971
      %v4097 = vmul.f32 %v3808, %v3976
      %v4098 = vmul.f32 %v3809, %v3981
      %v4099 = vmul.f32 %v3810, %v3986
      %v4100 = vmul.f32 %v3811, %v3991
      %v4101 = vmul.f32 %v3812, %v3996
      %v4102 = vmul.f32 %v3813, %v4001
      %v4103 = vmul.f32 %v3814, %v4006
      %v4104 = vmul.f32 %v3815, %v4011
      %v4105 = vmul.f32 %v3816, %v4016
      %v4106 = vmul.f32 %v3817, %v4021
      %v4107 = vmul.f32 %v3818, %v4026
      %v4108 = vmul.f32 %v3819, %v4031
      %v4109 = vmul.f32 %v3820, %v4036
      %v4110 = vmul.f32 %v3821, %v4041
      %v4111 = vmul.f32 %v3822, %v4046
      %v4112 = vmul.f32 %v3823, %v4051
      %v4113 = vmul.f32 %v3824, %v4056
      %v4114 = vmul.f32 %v3825, %v4061
      %v4115 = vmul.f32 %v3826, %v4066
      %v4116 = vmul.f32 %v3827, %v4071
      %v4117 = vmul.f32 %v3828, %v4076
      %v4118 = vmul.f32 %v3829, %v4081
      %v4119 = vsel %vm3830, %v4083, 0.0
      %v4120 = vsel %vm3830, %v4084, 0.0
      %v4121 = vadd.f32 %v4119, %v4120
      %v4122 = vsel %vm3830, %v4085, 0.0
      %v4123 = vadd.f32 %v4121, %v4122
      %v4124 = vsel %vm3830, %v4086, 0.0
      %v4125 = vadd.f32 %v4123, %v4124
      %v4126 = vsel %vm3830, %v4087, 0.0
      %v4127 = vadd.f32 %v4125, %v4126
      %v4128 = vsel %vm3830, %v4088, 0.0
      %v4129 = vadd.f32 %v4127, %v4128
      %v4130 = vsel %vm3830, %v4089, 0.0
      %v4131 = vadd.f32 %v4129, %v4130
      %v4132 = vsel %vm3830, %v4090, 0.0
      %v4133 = vadd.f32 %v4131, %v4132
      %v4134 = vsel %vm3830, %v4091, 0.0
      %v4135 = vadd.f32 %v4133, %v4134
      %v4136 = vsel %vm3830, %v4092, 0.0
      %v4137 = vadd.f32 %v4135, %v4136
      %v4138 = vsel %vm3830, %v4093, 0.0
      %v4139 = vadd.f32 %v4137, %v4138
      %v4140 = vsel %vm3830, %v4094, 0.0
      %v4141 = vadd.f32 %v4139, %v4140
      %v4142 = vsel %vm3830, %v4095, 0.0
      %v4143 = vadd.f32 %v4141, %v4142
      %v4144 = vsel %vm3830, %v4096, 0.0
      %v4145 = vadd.f32 %v4143, %v4144
      %v4146 = vsel %vm3830, %v4097, 0.0
      %v4147 = vadd.f32 %v4145, %v4146
      %v4148 = vsel %vm3830, %v4098, 0.0
      %v4149 = vadd.f32 %v4147, %v4148
      %v4150 = vsel %vm3830, %v4099, 0.0
      %v4151 = vadd.f32 %v4149, %v4150
      %v4152 = vsel %vm3830, %v4100, 0.0
      %v4153 = vadd.f32 %v4151, %v4152
      %v4154 = vsel %vm3830, %v4101, 0.0
      %v4155 = vadd.f32 %v4153, %v4154
      %v4156 = vsel %vm3830, %v4102, 0.0
      %v4157 = vadd.f32 %v4155, %v4156
      %v4158 = vsel %vm3830, %v4103, 0.0
      %v4159 = vadd.f32 %v4157, %v4158
      %v4160 = vsel %vm3830, %v4104, 0.0
      %v4161 = vadd.f32 %v4159, %v4160
      %v4162 = vsel %vm3830, %v4105, 0.0
      %v4163 = vadd.f32 %v4161, %v4162
      %v4164 = vsel %vm3830, %v4106, 0.0
      %v4165 = vadd.f32 %v4163, %v4164
      %v4166 = vsel %vm3830, %v4107, 0.0
      %v4167 = vadd.f32 %v4165, %v4166
      %v4168 = vsel %vm3830, %v4108, 0.0
      %v4169 = vadd.f32 %v4167, %v4168
      %v4170 = vsel %vm3830, %v4109, 0.0
      %v4171 = vadd.f32 %v4169, %v4170
      %v4172 = vsel %vm3830, %v4110, 0.0
      %v4173 = vadd.f32 %v4171, %v4172
      %v4174 = vsel %vm3830, %v4111, 0.0
      %v4175 = vadd.f32 %v4173, %v4174
      %v4176 = vsel %vm3830, %v4112, 0.0
      %v4177 = vadd.f32 %v4175, %v4176
      %v4178 = vsel %vm3830, %v4113, 0.0
      %v4179 = vadd.f32 %v4177, %v4178
      %v4180 = vsel %vm3830, %v4114, 0.0
      %v4181 = vadd.f32 %v4179, %v4180
      %v4182 = vsel %vm3830, %v4115, 0.0
      %v4183 = vadd.f32 %v4181, %v4182
      %v4184 = vsel %vm3830, %v4116, 0.0
      %v4185 = vadd.f32 %v4183, %v4184
      %v4186 = vsel %vm3830, %v4117, 0.0
      %v4187 = vadd.f32 %v4185, %v4186
      %v4188 = vsel %vm3830, %v4118, 0.0
      %v4189 = vadd.f32 %v4187, %v4188
      %v4190 = vrot.slane %v4189, 4
      %v4191 = vadd.f32 %v4189, %v4190
      %v4192 = vrot.slane %v4191, 2
      %v4193 = vadd.f32 %v4191, %v4192
      %v4194 = vrot.slane %v4193, 1
      %v4195 = vadd.f32 %v4193, %v4194
      %vm4196 = vcmask 57344
      %4197 = vst.msk [vmem:[%s238] sm:$0x1] %vm4196, %v4195
      %v4198 = vmul.f32 %v3794, %v3794
      %v4199 = vmul.f32 %v3795, %v3795
      %v4200 = vmul.f32 %v3796, %v3796
      %v4201 = vmul.f32 %v3797, %v3797
      %v4202 = vmul.f32 %v3798, %v3798
      %v4203 = vmul.f32 %v3799, %v3799
      %v4204 = vmul.f32 %v3800, %v3800
      %v4205 = vmul.f32 %v3801, %v3801
      %v4206 = vmul.f32 %v3802, %v3802
      %v4207 = vmul.f32 %v3803, %v3803
      %v4208 = vmul.f32 %v3804, %v3804
      %v4209 = vmul.f32 %v3805, %v3805
      %v4210 = vmul.f32 %v3806, %v3806
      %v4211 = vmul.f32 %v3807, %v3807
      %v4212 = vmul.f32 %v3808, %v3808
      %v4213 = vmul.f32 %v3809, %v3809
      %v4214 = vmul.f32 %v3810, %v3810
      %v4215 = vmul.f32 %v3811, %v3811
      %v4216 = vmul.f32 %v3812, %v3812
      %v4217 = vmul.f32 %v3813, %v3813
      %v4218 = vmul.f32 %v3814, %v3814
      %v4219 = vmul.f32 %v3815, %v3815
      %v4220 = vmul.f32 %v3816, %v3816
      %v4221 = vmul.f32 %v3817, %v3817
      %v4222 = vmul.f32 %v3818, %v3818
      %v4223 = vmul.f32 %v3819, %v3819
      %v4224 = vmul.f32 %v3820, %v3820
      %v4225 = vmul.f32 %v3821, %v3821
      %v4226 = vmul.f32 %v3822, %v3822
      %v4227 = vmul.f32 %v3823, %v3823
      %v4228 = vmul.f32 %v3824, %v3824
      %v4229 = vmul.f32 %v3825, %v3825
      %v4230 = vmul.f32 %v3826, %v3826
      %v4231 = vmul.f32 %v3827, %v3827
      %v4232 = vmul.f32 %v3828, %v3828
      %v4233 = vmul.f32 %v3829, %v3829
      %v4234 = vmul.f32 %v4198, %v3906
      %v4235 = vmul.f32 %v4199, %v3911
      %v4236 = vmul.f32 %v4200, %v3916
      %v4237 = vmul.f32 %v4201, %v3921
      %v4238 = vmul.f32 %v4202, %v3926
      %v4239 = vmul.f32 %v4203, %v3931
      %v4240 = vmul.f32 %v4204, %v3936
      %v4241 = vmul.f32 %v4205, %v3941
      %v4242 = vmul.f32 %v4206, %v3946
      %v4243 = vmul.f32 %v4207, %v3951
      %v4244 = vmul.f32 %v4208, %v3956
      %v4245 = vmul.f32 %v4209, %v3961
      %v4246 = vmul.f32 %v4210, %v3966
      %v4247 = vmul.f32 %v4211, %v3971
      %v4248 = vmul.f32 %v4212, %v3976
      %v4249 = vmul.f32 %v4213, %v3981
      %v4250 = vmul.f32 %v4214, %v3986
      %v4251 = vmul.f32 %v4215, %v3991
      %v4252 = vmul.f32 %v4216, %v3996
      %v4253 = vmul.f32 %v4217, %v4001
      %v4254 = vmul.f32 %v4218, %v4006
      %v4255 = vmul.f32 %v4219, %v4011
      %v4256 = vmul.f32 %v4220, %v4016
      %v4257 = vmul.f32 %v4221, %v4021
      %v4258 = vmul.f32 %v4222, %v4026
      %v4259 = vmul.f32 %v4223, %v4031
      %v4260 = vmul.f32 %v4224, %v4036
      %v4261 = vmul.f32 %v4225, %v4041
      %v4262 = vmul.f32 %v4226, %v4046
      %v4263 = vmul.f32 %v4227, %v4051
      %v4264 = vmul.f32 %v4228, %v4056
      %v4265 = vmul.f32 %v4229, %v4061
      %v4266 = vmul.f32 %v4230, %v4066
      %v4267 = vmul.f32 %v4231, %v4071
      %v4268 = vmul.f32 %v4232, %v4076
      %v4269 = vmul.f32 %v4233, %v4081
      %v4270 = vsel %vm3830, %v4234, 0.0
      %v4271 = vsel %vm3830, %v4235, 0.0
      %v4272 = vadd.f32 %v4270, %v4271
      %v4273 = vsel %vm3830, %v4236, 0.0
      %v4274 = vadd.f32 %v4272, %v4273
      %v4275 = vsel %vm3830, %v4237, 0.0
      %v4276 = vadd.f32 %v4274, %v4275
      %v4277 = vsel %vm3830, %v4238, 0.0
      %v4278 = vadd.f32 %v4276, %v4277
      %v4279 = vsel %vm3830, %v4239, 0.0
      %v4280 = vadd.f32 %v4278, %v4279
      %v4281 = vsel %vm3830, %v4240, 0.0
      %v4282 = vadd.f32 %v4280, %v4281
      %v4283 = vsel %vm3830, %v4241, 0.0
      %v4284 = vadd.f32 %v4282, %v4283
      %v4285 = vsel %vm3830, %v4242, 0.0
      %v4286 = vadd.f32 %v4284, %v4285
      %v4287 = vsel %vm3830, %v4243, 0.0
      %v4288 = vadd.f32 %v4286, %v4287
      %v4289 = vsel %vm3830, %v4244, 0.0
      %v4290 = vadd.f32 %v4288, %v4289
      %v4291 = vsel %vm3830, %v4245, 0.0
      %v4292 = vadd.f32 %v4290, %v4291
      %v4293 = vsel %vm3830, %v4246, 0.0
      %v4294 = vadd.f32 %v4292, %v4293
      %v4295 = vsel %vm3830, %v4247, 0.0
      %v4296 = vadd.f32 %v4294, %v4295
      %v4297 = vsel %vm3830, %v4248, 0.0
      %v4298 = vadd.f32 %v4296, %v4297
      %v4299 = vsel %vm3830, %v4249, 0.0
      %v4300 = vadd.f32 %v4298, %v4299
      %v4301 = vsel %vm3830, %v4250, 0.0
      %v4302 = vadd.f32 %v4300, %v4301
      %v4303 = vsel %vm3830, %v4251, 0.0
      %v4304 = vadd.f32 %v4302, %v4303
      %v4305 = vsel %vm3830, %v4252, 0.0
      %v4306 = vadd.f32 %v4304, %v4305
      %v4307 = vsel %vm3830, %v4253, 0.0
      %v4308 = vadd.f32 %v4306, %v4307
      %v4309 = vsel %vm3830, %v4254, 0.0
      %v4310 = vadd.f32 %v4308, %v4309
      %v4311 = vsel %vm3830, %v4255, 0.0
      %v4312 = vadd.f32 %v4310, %v4311
      %v4313 = vsel %vm3830, %v4256, 0.0
      %v4314 = vadd.f32 %v4312, %v4313
      %v4315 = vsel %vm3830, %v4257, 0.0
      %v4316 = vadd.f32 %v4314, %v4315
      %v4317 = vsel %vm3830, %v4258, 0.0
      %v4318 = vadd.f32 %v4316, %v4317
      %v4319 = vsel %vm3830, %v4259, 0.0
      %v4320 = vadd.f32 %v4318, %v4319
      %v4321 = vsel %vm3830, %v4260, 0.0
      %v4322 = vadd.f32 %v4320, %v4321
      %v4323 = vsel %vm3830, %v4261, 0.0
      %v4324 = vadd.f32 %v4322, %v4323
      %v4325 = vsel %vm3830, %v4262, 0.0
      %v4326 = vadd.f32 %v4324, %v4325
      %v4327 = vsel %vm3830, %v4263, 0.0
      %v4328 = vadd.f32 %v4326, %v4327
      %v4329 = vsel %vm3830, %v4264, 0.0
      %v4330 = vadd.f32 %v4328, %v4329
      %v4331 = vsel %vm3830, %v4265, 0.0
      %v4332 = vadd.f32 %v4330, %v4331
      %v4333 = vsel %vm3830, %v4266, 0.0
      %v4334 = vadd.f32 %v4332, %v4333
      %v4335 = vsel %vm3830, %v4267, 0.0
      %v4336 = vadd.f32 %v4334, %v4335
      %v4337 = vsel %vm3830, %v4268, 0.0
      %v4338 = vadd.f32 %v4336, %v4337
      %v4339 = vsel %vm3830, %v4269, 0.0
      %v4340 = vadd.f32 %v4338, %v4339
      %v4341 = vrot.slane %v4340, 4
      %v4342 = vadd.f32 %v4340, %v4341
      %v4343 = vrot.slane %v4342, 2
      %v4344 = vadd.f32 %v4342, %v4343
      %v4345 = vrot.slane %v4344, 1
      %v4346 = vadd.f32 %v4344, %v4345
      %4347 = vst.msk [vmem:[%s238 + $0x1] sm:$0x1] %vm4196, %v4346
      %s4348 = smul.u32 36, %s17
      %p4349 = scmp.lt.s32.totalorder %s4348, 71
      %s4350 = scalar_select %p4349, %s4348, 71
      %s4351 = smul.addr %s4350, 8
      %s4352 = scalar_lea.vmem %s4, %s4351
      %p4353 = scmp.lt.s32.totalorder %s17, 1
      %s4354 = scalar_select %p4353, %s17, 1
      %s4355 = smul.addr %s4354, 2
      %s4356 = scalar_lea.vmem %s5, %s4355
      // Predicated region
      $region37: #{downblock_forward.3} parent=35 // pred_check
        %p4357 = pneg %p124
      $region38: #{downblock_forward.3} parent=35 // pred_check_branch
        %4359 = sbr.rel (%p4357) target = $region40
      $region39: #{downblock_forward.3} parent=35 // pred_region
        %s4360 = smul.u32 36, %s17
      $region40: #{downblock_forward.3} parent=35 // pred_fallthru
        _
      // Predicated region
      $region41: #{downblock_forward.3} parent=35 // pred_check
        %p4361 = pneg %p150
      $region42: #{downblock_forward.3} parent=35 // pred_check_branch
        %4363 = sbr.rel (%p4361) target = $region44
      $region43: #{downblock_forward.3} parent=35 // pred_region
        _
      $region44: #{downblock_forward.3} parent=35 // pred_fallthru
        _
    $region36: #{downblock_forward.3} parent=5 // pred_fallthru
      _
    %p4364 = scmp.le.s32.totalorder 2, %s12
    // Predicated region
    $region45: #{downblock_forward.3} parent=5 // pred_check
      %p4365 = pneg %p4364
    $region46: #{downblock_forward.3} parent=5 // pred_check_branch
      %4367 = sbr.rel (%p4365) target = $region48
    $region47: #{downblock_forward.3} parent=5 // pred_region
      %s4368 = ssub.s32 %s12, 2
      // Predicated region
      $region49: #{downblock_forward.3} parent=47 // pred_check
        %p4369 = pneg %p130
      $region50: #{downblock_forward.3} parent=47 // pred_check_branch
        %4371 = sbr.rel (%p4369) target = $region52
      $region51: #{downblock_forward.3} parent=47 // pred_region
        %s4372 = smul.u32 36, %s18
        %p4373 = scmp.lt.s32.totalorder %s4372, 71
        %s4374 = scalar_select %p4373, %s4372, 71
        %s4375 = smul.addr %s4374, 8
        %s4376 = scalar_lea.vmem %s4, %s4375
      $region52: #{downblock_forward.3} parent=47 // pred_fallthru
        _
      // Predicated region
      $region53: #{downblock_forward.3} parent=47 // pred_check
        %p4377 = pneg %p156
      $region54: #{downblock_forward.3} parent=47 // pred_check_branch
        %4379 = sbr.rel (%p4377) target = $region56
      $region55: #{downblock_forward.3} parent=47 // pred_region
        %p4380 = scmp.lt.s32.totalorder %s18, 1
        %s4381 = scalar_select %p4380, %s18, 1
        %s4382 = smul.addr %s4381, 2
        %s4383 = scalar_lea.vmem %s5, %s4382
      $region56: #{downblock_forward.3} parent=47 // pred_fallthru
        _
    $region48: #{downblock_forward.3} parent=5 // pred_fallthru
      _
  $region6: #{downblock_forward.3} parent=0 // loop_footer
    %s16 = sadd.s32 1, %s12
  $region7: #{downblock_forward.3} parent=0 // loop_footer_branch
    %11 = sbr.rel target = $region3
  $region8: #{downblock_forward.3} parent=0 // loop_exit
    _

// kernel: downblock_forward.4
$region0: #{downblock_forward.4}
  #allocation0 [shape = 'u32[]', space=smem, size = 0x4, offset = 0x4, fixed_abs, tag = 'smem constant byte address 0x4 - core index']
  #allocation1 [shape = 'u32[144,128]{1,0:T(1,128)}', space=vmem, size = 0x12000, scoped, tag = 'internal scratch']
  %s0 = inlined_call_operand.vmem [shape: f32[9,8,8], index: 0, kind: input, shape index: {}]
  %s1 = inlined_call_operand.vmem [shape: f32[1,8], index: 1, kind: input, shape index: {}]
  %s2 = inlined_call_operand.vmem [shape: f32[288,1], index: 2, kind: input, shape index: {}]
  %s3 = inlined_call_operand.vmem [shape: f32[656,8], index: 3, kind: input, shape index: {}]
  %s4 = inlined_call_operand.vmem [shape: f32[576,8], index: 4, kind: output, shape index: {0}]
  %s5 = inlined_call_operand.vmem [shape: f32[2,2,8], index: 5, kind: output, shape index: {1}]
  %6 = xla_tuple %s4, %s5
  %s7 = sld [smem:[#allocation0]]
  $region57: #{downblock_forward.4} parent=0
    _
  %s9 = ssub.s32 1, %s7
  %s10 = scalar_select 0, %s9, %s7
  loop: start=0, step=1, limit=4
  $region2: #{downblock_forward.4} parent=0 // loop_pre_header
    _
  $region3: #{downblock_forward.4} parent=0 // loop_header
    %s12 = sphi 0, %s16
    %p13 = scmp.ge.s32.totalorder %s12, 4
    %s20 = sphi 0, %s20
    %s22 = sphi 0, %s20
    %s23 = sphi 0, %s22
    %s37 = sphi 0, %s23
    %s41 = sphi 0, %s41
    %s43 = sphi 0, %s41
    %s44 = sphi 0, %s43
    %s58 = sphi 0, %s44
    %s62 = sphi 0, %s62
    %s64 = sphi 0, %s62
    %s65 = sphi 0, %s64
    %s79 = sphi 0, %s65
    %s85 = sphi 0, %s87
    %s88 = sphi 0, %s85
    %s89 = sphi 0, %s88
    %s105 = sphi 0, %s89
    %s111 = sphi 0, %s113
    %s114 = sphi 0, %s111
    %s115 = sphi 0, %s114
    %s131 = sphi 0, %s115
    %s137 = sphi 0, %s139
    %s140 = sphi 0, %s137
    %s141 = sphi 0, %s140
    %s157 = sphi 0, %s141
  $region4: #{downblock_forward.4} parent=0 // loop_header_branch
    %15 = sbr.rel (%p13) target = $region8
  $region5: #{downblock_forward.4} parent=0 // loop_body
    %s17 = ssub.s32 %s12, 1
    %s18 = ssub.s32 %s12, 2
    %s19 = sadd.s32 %s12, 1
    %s21 = sadd.s32 %s20, 1
    %p24 = scmp.eq.s32.totalorder %s12, 1
    %p25 = scmp.ne.s32.totalorder %s20, %s22
    %p26 = scmp.eq.s32.totalorder %s12, 0
    %p27 = por %p25, %p26
    %p28 = scmp.ne.s32.totalorder %s20, %s22
    %p29 = scmp.eq.s32.totalorder %s17, 1
    %p30 = por %p28, %p29
    %p31 = scmp.ne.s32.totalorder %s22, %s23
    %p32 = scmp.eq.s32.totalorder %s17, 0
    %p33 = por %p31, %p32
    %p34 = scmp.ne.s32.totalorder %s22, %s23
    %p35 = scmp.eq.s32.totalorder %s18, 1
    %p36 = por %p34, %p35
    %p38 = scmp.ne.s32.totalorder %s23, %s37
    %p39 = scmp.eq.s32.totalorder %s18, 0
    %p40 = por %p38, %p39
    %s42 = sadd.s32 %s41, 1
    %p45 = scmp.eq.s32.totalorder %s12, 1
    %p46 = scmp.ne.s32.totalorder %s41, %s43
    %p47 = scmp.eq.s32.totalorder %s12, 0
    %p48 = por %p46, %p47
    %p49 = scmp.ne.s32.totalorder %s41, %s43
    %p50 = scmp.eq.s32.totalorder %s17, 1
    %p51 = por %p49, %p50
    %p52 = scmp.ne.s32.totalorder %s43, %s44
    %p53 = scmp.eq.s32.totalorder %s17, 0
    %p54 = por %p52, %p53
    %p55 = scmp.ne.s32.totalorder %s43, %s44
    %p56 = scmp.eq.s32.totalorder %s18, 1
    %p57 = por %p55, %p56
    %p59 = scmp.ne.s32.totalorder %s44, %s58
    %p60 = scmp.eq.s32.totalorder %s18, 0
    %p61 = por %p59, %p60
    %s63 = sadd.s32 %s62, 1
    %p66 = scmp.eq.s32.totalorder %s12, 1
    %p67 = scmp.ne.s32.totalorder %s62, %s64
    %p68 = scmp.eq.s32.totalorder %s12, 0
    %p69 = por %p67, %p68
    %p70 = scmp.ne.s32.totalorder %s62, %s64
    %p71 = scmp.eq.s32.totalorder %s17, 1
    %p72 = por %p70, %p71
    %p73 = scmp.ne.s32.totalorder %s64, %s65
    %p74 = scmp.eq.s32.totalorder %s17, 0
    %p75 = por %p73, %p74
    %p76 = scmp.ne.s32.totalorder %s64, %s65
    %p77 = scmp.eq.s32.totalorder %s18, 1
    %p78 = por %p76, %p77
    %p80 = scmp.ne.s32.totalorder %s65, %s79
    %p81 = scmp.eq.s32.totalorder %s18, 0
    %p82 = por %p80, %p81
    %s83 = ssub.s32 %s12, %s19
    %p84 = scmp.eq.s32.totalorder %s83, 0
    %s86 = sadd.s32 %s85, 1
    %s87 = scalar_select %p84, %s85, %s86
    %p90 = pneg %p84
    %p91 = scmp.eq.s32.totalorder %s12, 1
    %p92 = por %p90, %p91
    %p93 = scmp.ne.s32.totalorder %s85, %s88
    %p94 = scmp.eq.s32.totalorder %s12, 0
    %p95 = por %p93, %p94
    %p96 = scmp.ne.s32.totalorder %s85, %s88
    %p97 = scmp.eq.s32.totalorder %s17, 1
    %p98 = por %p96, %p97
    %p99 = scmp.ne.s32.totalorder %s88, %s89
    %p100 = scmp.eq.s32.totalorder %s17, 0
    %p101 = por %p99, %p100
    %p102 = scmp.ne.s32.totalorder %s88, %s89
    %p103 = scmp.eq.s32.totalorder %s18, 1
    %p104 = por %p102, %p103
    %p106 = scmp.ne.s32.totalorder %s89, %s105
    %p107 = scmp.eq.s32.totalorder %s18, 0
    %p108 = por %p106, %p107
    %s109 = ssub.s32 %s12, %s19
    %p110 = scmp.eq.s32.totalorder %s109, 0
    %s112 = sadd.s32 %s111, 1
    %s113 = scalar_select %p110, %s111, %s112
    %p116 = pneg %p110
    %p117 = scmp.eq.s32.totalorder %s12, 1
    %p118 = por %p116, %p117
    %p119 = scmp.ne.s32.totalorder %s111, %s114
    %p120 = scmp.eq.s32.totalorder %s12, 0
    %p121 = por %p119, %p120
    %p122 = scmp.ne.s32.totalorder %s111, %s114
    %p123 = scmp.eq.s32.totalorder %s17, 1
    %p124 = por %p122, %p123
    %p125 = scmp.ne.s32.totalorder %s114, %s115
    %p126 = scmp.eq.s32.totalorder %s17, 0
    %p127 = por %p125, %p126
    %p128 = scmp.ne.s32.totalorder %s114, %s115
    %p129 = scmp.eq.s32.totalorder %s18, 1
    %p130 = por %p128, %p129
    %p132 = scmp.ne.s32.totalorder %s115, %s131
    %p133 = scmp.eq.s32.totalorder %s18, 0
    %p134 = por %p132, %p133
    %s135 = ssub.s32 %s12, %s19
    %p136 = scmp.eq.s32.totalorder %s135, 0
    %s138 = sadd.s32 %s137, 1
    %s139 = scalar_select %p136, %s137, %s138
    %p142 = pneg %p136
    %p143 = scmp.eq.s32.totalorder %s12, 1
    %p144 = por %p142, %p143
    %p145 = scmp.ne.s32.totalorder %s137, %s140
    %p146 = scmp.eq.s32.totalorder %s12, 0
    %p147 = por %p145, %p146
    %p148 = scmp.ne.s32.totalorder %s137, %s140
    %p149 = scmp.eq.s32.totalorder %s17, 1
    %p150 = por %p148, %p149
    %p151 = scmp.ne.s32.totalorder %s140, %s141
    %p152 = scmp.eq.s32.totalorder %s17, 0
    %p153 = por %p151, %p152
    %p154 = scmp.ne.s32.totalorder %s140, %s141
    %p155 = scmp.eq.s32.totalorder %s18, 1
    %p156 = por %p154, %p155
    %p158 = scmp.ne.s32.totalorder %s141, %s157
    %p159 = scmp.eq.s32.totalorder %s18, 0
    %p160 = por %p158, %p159
    %p161 = scmp.le.s32.totalorder 1, %s12
    %p162 = scmp.lt.s32.totalorder %s12, 3
    %p163 = pnand %p161, %p162
    %p164 = pneg %p163
    // Predicated region
    $region9: #{downblock_forward.4} parent=5 // pred_check
      _
    $region10: #{downblock_forward.4} parent=5 // pred_check_branch
      %166 = sbr.rel (%p163) target = $region12
    $region11: #{downblock_forward.4} parent=5 // pred_region
      %s167 = ssub.s32 %s12, 1
      // Predicated region
      $region13: #{downblock_forward.4} parent=11 // pred_check
        %p168 = pneg %p33
      $region14: #{downblock_forward.4} parent=11 // pred_check_branch
        %170 = sbr.rel (%p168) target = $region16
      $region15: #{downblock_forward.4} parent=11 // pred_region
        _
      $region16: #{downblock_forward.4} parent=11 // pred_fallthru
        _
      // Predicated region
      $region17: #{downblock_forward.4} parent=11 // pred_check
        %p171 = pneg %p54
      $region18: #{downblock_forward.4} parent=11 // pred_check_branch
        %173 = sbr.rel (%p171) target = $region20
      $region19: #{downblock_forward.4} parent=11 // pred_region
        _
      $region20: #{downblock_forward.4} parent=11 // pred_fallthru
        _
      // Predicated region
      $region21: #{downblock_forward.4} parent=11 // pred_check
        %p174 = pneg %p75
      $region22: #{downblock_forward.4} parent=11 // pred_check_branch
        %176 = sbr.rel (%p174) target = $region24
      $region23: #{downblock_forward.4} parent=11 // pred_region
        _
      $region24: #{downblock_forward.4} parent=11 // pred_fallthru
        _
    $region12: #{downblock_forward.4} parent=5 // pred_fallthru
      _
    %p177 = scmp.lt.s32.totalorder %s12, 2
    // Predicated region
    $region25: #{downblock_forward.4} parent=5 // pred_check
      %p178 = pneg %p177
    $region26: #{downblock_forward.4} parent=5 // pred_check_branch
      %180 = sbr.rel (%p178) target = $region28
    $region27: #{downblock_forward.4} parent=5 // pred_region
      // Predicated region
      $region29: #{downblock_forward.4} parent=27 // pred_check
        %p181 = pneg %p95
      $region30: #{downblock_forward.4} parent=27 // pred_check_branch
        %183 = sbr.rel (%p181) target = $region32
      $region31: #{downblock_forward.4} parent=27 // pred_region
        %s184 = smul.u32 41, %s12
        %p185 = scmp.lt.s32.totalorder %s184, 81
        %s186 = scalar_select %p185, %s184, 81
        %s187 = smul.addr %s186, 8
        %s188 = scalar_lea.vmem %s3, %s187
        %s189 = smul.u32 41, %s12
      $region32: #{downblock_forward.4} parent=27 // pred_fallthru
        _
    $region28: #{downblock_forward.4} parent=5 // pred_fallthru
      _
    %p190 = scmp.le.s32.totalorder 1, %s12
    %p191 = scmp.lt.s32.totalorder %s12, 3
    %p192 = pnand %p190, %p191
    %p193 = pneg %p192
    // Predicated region
    $region33: #{downblock_forward.4} parent=5 // pred_check
      _
    $region34: #{downblock_forward.4} parent=5 // pred_check_branch
      %195 = sbr.rel (%p192) target = $region36
    $region35: #{downblock_forward.4} parent=5 // pred_region
      %s196 = ssub.s32 %s12, 1
      %p197 = pneg %p33
      %p198 = pneg %p30
      %p199 = pneg %p54
      %p200 = pneg %p51
      %p201 = pneg %p75
      %p202 = pneg %p72
      %s203 = smul.u32 41, %s17
      %p204 = scmp.lt.s32.totalorder %s203, 81
      %s205 = scalar_select %p204, %s203, 81
      %s206 = smul.addr %s205, 8
      %s207 = scalar_lea.vmem %s3, %s206
      %p208 = pneg %p101
      %p209 = pneg %p98
      %p210 = pneg %p127
      %p211 = pneg %p124
      %s212 = smul.u32 36, %s17
      %p213 = scmp.lt.s32.totalorder %s212, 71
      %s214 = scalar_select %p213, %s212, 71
      %s215 = smul.addr %s214, 8
      %s216 = scalar_lea.vmem %s4, %s215
      %p217 = pneg %p153
      %p218 = pneg %p150
      %p219 = scmp.lt.s32.totalorder %s17, 1
      %s220 = scalar_select %p219, %s17, 1
      %s221 = smul.addr %s220, 2
      %s222 = scalar_lea.vmem %s5, %s221
      %s223 = smul.u32 41, %s17
      %p224 = scmp.lt.s32.totalorder %s223, 81
      %s225 = scalar_select %p224, %s223, 81
      %s226 = smul.addr %s225, 8
      %s227 = scalar_lea.vmem %s3, %s226
      %s228 = smul.u32 41, %s17
      %s229 = smul.u32 36, %s17
      %p230 = scmp.lt.s32.totalorder %s229, 71
      %s231 = scalar_select %p230, %s229, 71
      %s232 = smul.addr %s231, 8
      %s233 = scalar_lea.vmem %s4, %s232
      %s234 = smul.u32 36, %s17
      %p235 = scmp.lt.s32.totalorder %s17, 1
      %s236 = scalar_select %p235, %s17, 1
      %s237 = smul.addr %s236, 2
      %s238 = scalar_lea.vmem %s5, %s237
      %v239 = vld [vmem:[%s227] sm:$0xff]
      %v240 = vld [vmem:[%s227 + $0x8] sm:$0xff]
      %v241 = vld [vmem:[%s227 + $0x10] sm:$0xff]
      %v242 = vld [vmem:[%s227 + $0x18] sm:$0xff]
      %v243 = vld [vmem:[%s227 + $0x20] sm:$0xff]
      %v244 = vld [vmem:[%s227 + $0x28] sm:$0xff]
      %v245 = vld [vmem:[%s227 + $0x30] sm:$0xff]
      %v246 = vld [vmem:[%s227 + $0x38] sm:$0xff]
      %v247 = vld [vmem:[%s227 + $0x40] sm:$0xff]
      %v248 = vld [vmem:[%s227 + $0x48] sm:$0xff]
      %v249 = vld [vmem:[%s227 + $0x50] sm:$0xff]
      %v250 = vld [vmem:[%s227 + $0x58] sm:$0xff]
      %v251 = vld [vmem:[%s227 + $0x60] sm:$0xff]
      %v252 = vld [vmem:[%s227 + $0x68] sm:$0xff]
      %v253 = vld [vmem:[%s227 + $0x70] sm:$0xff]
      %v254 = vld [vmem:[%s227 + $0x78] sm:$0xff]
      %v255 = vld [vmem:[%s227 + $0x80] sm:$0xff]
      %v256 = vld [vmem:[%s227 + $0x88] sm:$0xff]
      %v257 = vld [vmem:[%s227 + $0x90] sm:$0xff]
      %v258 = vld [vmem:[%s227 + $0x98] sm:$0xff]
      %v259 = vld [vmem:[%s227 + $0xa0] sm:$0xff]
      %v260 = vld [vmem:[%s227 + $0xa8] sm:$0xff]
      %v261 = vld [vmem:[%s227 + $0xb0] sm:$0xff]
      %v262 = vld [vmem:[%s227 + $0xb8] sm:$0xff]
      %v263 = vld [vmem:[%s227 + $0xc0] sm:$0xff]
      %v264 = vld [vmem:[%s227 + $0xc8] sm:$0xff]
      %v265 = vld [vmem:[%s227 + $0xd0] sm:$0xff]
      %v266 = vld [vmem:[%s227 + $0xd8] sm:$0xff]
      %v267 = vld [vmem:[%s227 + $0xe0] sm:$0xff]
      %v268 = vld [vmem:[%s227 + $0xe8] sm:$0xff]
      %v269 = vld [vmem:[%s227 + $0xf0] sm:$0xff]
      %v270 = vld [vmem:[%s227 + $0xf8] sm:$0xff]
      %v271 = vld [vmem:[%s227 + $0x100] sm:$0xff]
      %v272 = vld [vmem:[%s227 + $0x108] sm:$0xff]
      %v273 = vld [vmem:[%s227 + $0x110] sm:$0xff]
      %v274 = vld [vmem:[%s227 + $0x118] sm:$0xff]
      %v275 = vld [vmem:[%s227 + $0x120] sm:$0xff]
      %v276 = vld [vmem:[%s227 + $0x128] sm:$0xff]
      %v277 = vld [vmem:[%s227 + $0x130] sm:$0xff]
      %v278 = vld [vmem:[%s227 + $0x138] sm:$0xff]
      %v279 = vld [vmem:[%s227 + $0x140] sm:$0xff]
      %v280 = vld [vmem:[%s0] sm:$0xff]
      %s281 = scalar_lea.vmem %s0, 8
      %v282 = vld [vmem:[%s281] sm:$0xff]
      %vm320 = vcmask 1046528
      %v321 = vrot.slane %v239, 1
      %v322 = vrot.slane %v240, 1
      %v323 = vsel %vm320, %v321, %v322
      %v324 = vrot.slane %v241, 1
      %v325 = vsel %vm320, %v322, %v324
      %v326 = vrot.slane %v242, 1
      %v327 = vsel %vm320, %v324, %v326
      %v328 = vrot.slane %v243, 1
      %v329 = vsel %vm320, %v326, %v328
      %v330 = vrot.slane %v244, 1
      %v331 = vsel %vm320, %v328, %v330
      %v332 = vrot.slane %v245, 1
      %v333 = vsel %vm320, %v330, %v332
      %v334 = vrot.slane %v246, 1
      %v335 = vsel %vm320, %v332, %v334
      %v336 = vrot.slane %v247, 1
      %v337 = vsel %vm320, %v334, %v336
      %v338 = vrot.slane %v248, 1
      %v339 = vsel %vm320, %v336, %v338
      %v340 = vrot.slane %v249, 1
      %v341 = vsel %vm320, %v338, %v340
      %v342 = vrot.slane %v250, 1
      %v343 = vsel %vm320, %v340, %v342
      %v344 = vrot.slane %v251, 1
      %v345 = vsel %vm320, %v342, %v344
      %v346 = vrot.slane %v252, 1
      %v347 = vsel %vm320, %v344, %v346
      %v348 = vrot.slane %v253, 1
      %v349 = vsel %vm320, %v346, %v348
      %v350 = vrot.slane %v254, 1
      %v351 = vsel %vm320, %v348, %v350
      %v352 = vrot.slane %v255, 1
      %v353 = vsel %vm320, %v350, %v352
      %v354 = vrot.slane %v256, 1
      %v355 = vsel %vm320, %v352, %v354
      %v356 = vrot.slane %v257, 1
      %v357 = vsel %vm320, %v354, %v356
      %v358 = vrot.slane %v258, 1
      %v359 = vsel %vm320, %v356, %v358
      %v360 = vrot.slane %v259, 1
      %v361 = vsel %vm320, %v358, %v360
      %v362 = vrot.slane %v260, 1
      %v363 = vsel %vm320, %v360, %v362
      %v364 = vrot.slane %v261, 1
      %v365 = vsel %vm320, %v362, %v364
      %v366 = vrot.slane %v262, 1
      %v367 = vsel %vm320, %v364, %v366
      %v368 = vrot.slane %v263, 1
      %v369 = vsel %vm320, %v366, %v368
      %v370 = vrot.slane %v264, 1
      %v371 = vsel %vm320, %v368, %v370
      %v372 = vrot.slane %v265, 1
      %v373 = vsel %vm320, %v370, %v372
      %v374 = vrot.slane %v266, 1
      %v375 = vsel %vm320, %v372, %v374
      %v376 = vrot.slane %v267, 1
      %v377 = vsel %vm320, %v374, %v376
      %v378 = vrot.slane %v268, 1
      %v379 = vsel %vm320, %v376, %v378
      %v380 = vrot.slane %v269, 1
      %v381 = vsel %vm320, %v378, %v380
      %v382 = vrot.slane %v270, 1
      %v383 = vsel %vm320, %v380, %v382
      %v384 = vrot.slane %v271, 1
      %v385 = vsel %vm320, %v382, %v384
      %v386 = vrot.slane %v272, 1
      %v387 = vsel %vm320, %v384, %v386
      %v388 = vrot.slane %v273, 1
      %v389 = vsel %vm320, %v386, %v388
      %v390 = vrot.slane %v274, 1
      %v391 = vsel %vm320, %v388, %v390
      %v392 = vrot.slane %v275, 1
      %v393 = vsel %vm320, %v390, %v392
      %vm394 = vcmask 64512
      %v395 = vsel %vm394, %v323, 0
      %v397 = vsel %vm394, %v325, 0
      %v399 = vsel %vm394, %v327, 0
      %v401 = vsel %vm394, %v329, 0
      %v403 = vsel %vm394, %v331, 0
      %v405 = vsel %vm394, %v333, 0
      %v407 = vsel %vm394, %v335, 0
      %v409 = vsel %vm394, %v337, 0
      %v411 = vsel %vm394, %v339, 0
      %v413 = vsel %vm394, %v341, 0
      %v415 = vsel %vm394, %v343, 0
      %v417 = vsel %vm394, %v345, 0
      %v419 = vsel %vm394, %v347, 0
      %v421 = vsel %vm394, %v349, 0
      %v423 = vsel %vm394, %v351, 0
      %v425 = vsel %vm394, %v353, 0
      %v427 = vsel %vm394, %v355, 0
      %v429 = vsel %vm394, %v357, 0
      %v431 = vsel %vm394, %v359, 0
      %v433 = vsel %vm394, %v361, 0
      %v435 = vsel %vm394, %v363, 0
      %v437 = vsel %vm394, %v365, 0
      %v439 = vsel %vm394, %v367, 0
      %v441 = vsel %vm394, %v369, 0
      %v443 = vsel %vm394, %v371, 0
      %v445 = vsel %vm394, %v373, 0
      %v447 = vsel %vm394, %v375, 0
      %v449 = vsel %vm394, %v377, 0
      %v451 = vsel %vm394, %v379, 0
      %v453 = vsel %vm394, %v381, 0
      %v455 = vsel %vm394, %v383, 0
      %v457 = vsel %vm394, %v385, 0
      %v459 = vsel %vm394, %v387, 0
      %v461 = vsel %vm394, %v389, 0
      %v463 = vsel %vm394, %v391, 0
      %v465 = vsel %vm394, %v393, 0
      %467 = vmatprep.subr.mxu0 0.0
      %468 = vmatpush1.msra.mxu0 %v282
      %469 = vmatprep.subr.mxu0 0.0
      %470 = vmatpush1.msra.mxu0 0.0
      %471 = vmatprep.subr.mxu0 0.0
      %472 = vmatpush1.msra.mxu0 0.0
      %473 = vmatprep.subr.mxu0 0.0
      %474 = vmatpush1.msra.mxu0 0.0
      %475 = vmatprep.subr.mxu0 0.0
      %476 = vmatpush1.msra.mxu0 0.0
      %477 = vmatprep.subr.mxu0 0.0
      %478 = vmatpush1.msra.mxu0 0.0
      %479 = vmatprep.subr.mxu0 0.0
      %480 = vmatpush1.msra.mxu0 0.0
      %481 = vmatprep.subr.mxu0 0.0
      %482 = vmatpush1.msra.mxu0 0.0
      %483 = vmatprep.subr.mxu0 0.0
      %484 = vmatpush1.msra.mxu0 0.0
      %485 = vmatprep.subr.mxu0 0.0
      %486 = vmatpush1.msra.mxu0 0.0
      %487 = vmatprep.subr.mxu0 0.0
      %488 = vmatpush1.msra.mxu0 0.0
      %489 = vmatprep.subr.mxu0 0.0
      %490 = vmatpush1.msra.mxu0 0.0
      %491 = vmatprep.subr.mxu0 0.0
      %492 = vmatpush1.msra.mxu0 0.0
      %493 = vmatprep.subr.mxu0 0.0
      %494 = vmatpush1.msra.mxu0 0.0
      %495 = vmatprep.subr.mxu0 0.0
      %496 = vmatpush1.msra.mxu0 0.0
      %497 = vmatprep.subr.mxu0 0.0
      %498 = vmatpush1.msra.mxu0 0.0
      %499 = vmatprep.subr.mxu0 0.0
      %500 = vmatpush1.msra.mxu0 0.0
      %501 = vmatprep.subr.mxu0 0.0
      %502 = vmatpush1.msra.mxu0 0.0
      %503 = vmatprep.subr.mxu0 0.0
      %504 = vmatpush1.msra.mxu0 0.0
      %505 = vmatprep.subr.mxu0 0.0
      %506 = vmatpush1.msra.mxu0 0.0
      %507 = vmatprep.subr.mxu0 0.0
      %508 = vmatpush1.msra.mxu0 0.0
      %509 = vmatprep.subr.mxu0 0.0
      %510 = vmatpush1.msra.mxu0 0.0
      %511 = vmatprep.subr.mxu0 0.0
      %512 = vmatpush1.msra.mxu0 0.0
      %513 = vmatprep.subr.mxu0 0.0
      %514 = vmatpush1.msra.mxu0 0.0
      %515 = vmatprep.subr.mxu0 0.0
      %516 = vmatpush1.msra.mxu0 0.0
      %517 = vmatprep.subr.mxu0 0.0
      %518 = vmatpush1.msra.mxu0 0.0
      %519 = vmatprep.subr.mxu0 0.0
      %520 = vmatpush1.msra.mxu0 0.0
      %521 = vmatprep.subr.mxu0 0.0
      %522 = vmatpush1.msra.mxu0 0.0
      %523 = vmatprep.subr.mxu0 0.0
      %524 = vmatpush1.msra.mxu0 0.0
      %525 = vmatprep.subr.mxu0 0.0
      %526 = vmatpush1.msra.mxu0 0.0
      %527 = vmatprep.subr.mxu0 0.0
      %528 = vmatpush1.msra.mxu0 0.0
      %529 = vmatprep.subr.mxu0 0.0
      %530 = vmatpush1.msra.mxu0 0.0
      %531 = vmatprep.mubr.f32.mxu0 0.0
      %532 = vmatmul.mubr.f32.gmra.mrb[0].mxu0 %v395
      %v533 = vpop.f32.mrb[0].mxu0
      %v534 = vadd.f32 0.0, %v533
      %v535 = vpop.f32.mrb[0].mxu0
      %536 = vmatprep.mubr.f32.mxu0 0.0
      %537 = vmatmul.mubr.f32.gmra.mrb[0].mxu0 %v397
      %v538 = vpop.f32.mrb[0].mxu0
      %v539 = vadd.f32 0.0, %v538
      %v540 = vpop.f32.mrb[0].mxu0
      %541 = vmatprep.mubr.f32.mxu0 0.0
      %542 = vmatmul.mubr.f32.gmra.mrb[0].mxu0 %v399
      %v543 = vpop.f32.mrb[0].mxu0
      %v544 = vadd.f32 0.0, %v543
      %v545 = vpop.f32.mrb[0].mxu0
      %546 = vmatprep.mubr.f32.mxu0 0.0
      %547 = vmatmul.mubr.f32.gmra.mrb[0].mxu0 %v401
      %v548 = vpop.f32.mrb[0].mxu0
      %v549 = vadd.f32 0.0, %v548
      %v550 = vpop.f32.mrb[0].mxu0
      %551 = vmatprep.mubr.f32.mxu0 0.0
      %552 = vmatmul.mubr.f32.gmra.mrb[0].mxu0 %v403
      %v553 = vpop.f32.mrb[0].mxu0
      %v554 = vadd.f32 0.0, %v553
      %v555 = vpop.f32.mrb[0].mxu0
      %556 = vmatprep.mubr.f32.mxu0 0.0
      %557 = vmatmul.mubr.f32.gmra.mrb[0].mxu0 %v405
      %v558 = vpop.f32.mrb[0].mxu0
      %v559 = vadd.f32 0.0, %v558
      %v560 = vpop.f32.mrb[0].mxu0
      %561 = vmatprep.mubr.f32.mxu0 0.0
      %562 = vmatmul.mubr.f32.gmra.mrb[0].mxu0 %v407
      %v563 = vpop.f32.mrb[0].mxu0
      %v564 = vadd.f32 0.0, %v563
      %v565 = vpop.f32.mrb[0].mxu0
      %566 = vmatprep.mubr.f32.mxu0 0.0
      %567 = vmatmul.mubr.f32.gmra.mrb[0].mxu0 %v409
      %v568 = vpop.f32.mrb[0].mxu0
      %v569 = vadd.f32 0.0, %v568
      %v570 = vpop.f32.mrb[0].mxu0
      %571 = vmatprep.mubr.f32.mxu0 0.0
      %572 = vmatmul.mubr.f32.gmra.mrb[0].mxu0 %v411
      %v573 = vpop.f32.mrb[0].mxu0
      %v574 = vadd.f32 0.0, %v573
      %v575 = vpop.f32.mrb[0].mxu0
      %576 = vmatprep.mubr.f32.mxu0 0.0
      %577 = vmatmul.mubr.f32.gmra.mrb[0].mxu0 %v413
      %v578 = vpop.f32.mrb[0].mxu0
      %v579 = vadd.f32 0.0, %v578
      %v580 = vpop.f32.mrb[0].mxu0
      %581 = vmatprep.mubr.f32.mxu0 0.0
      %582 = vmatmul.mubr.f32.gmra.mrb[0].mxu0 %v415
      %v583 = vpop.f32.mrb[0].mxu0
      %v584 = vadd.f32 0.0, %v583
      %v585 = vpop.f32.mrb[0].mxu0
      %586 = vmatprep.mubr.f32.mxu0 0.0
      %587 = vmatmul.mubr.f32.gmra.mrb[0].mxu0 %v417
      %v588 = vpop.f32.mrb[0].mxu0
      %v589 = vadd.f32 0.0, %v588
      %v590 = vpop.f32.mrb[0].mxu0
      %591 = vmatprep.mubr.f32.mxu0 0.0
      %592 = vmatmul.mubr.f32.gmra.mrb[0].mxu0 %v419
      %v593 = vpop.f32.mrb[0].mxu0
      %v594 = vadd.f32 0.0, %v593
      %v595 = vpop.f32.mrb[0].mxu0
      %596 = vmatprep.mubr.f32.mxu0 0.0
      %597 = vmatmul.mubr.f32.gmra.mrb[0].mxu0 %v421
      %v598 = vpop.f32.mrb[0].mxu0
      %v599 = vadd.f32 0.0, %v598
      %v600 = vpop.f32.mrb[0].mxu0
      %601 = vmatprep.mubr.f32.mxu0 0.0
      %602 = vmatmul.mubr.f32.gmra.mrb[0].mxu0 %v423
      %v603 = vpop.f32.mrb[0].mxu0
      %v604 = vadd.f32 0.0, %v603
      %v605 = vpop.f32.mrb[0].mxu0
      %606 = vmatprep.mubr.f32.mxu0 0.0
      %607 = vmatmul.mubr.f32.gmra.mrb[0].mxu0 %v425
      %v608 = vpop.f32.mrb[0].mxu0
      %v609 = vadd.f32 0.0, %v608
      %v610 = vpop.f32.mrb[0].mxu0
      %611 = vmatprep.mubr.f32.mxu0 0.0
      %612 = vmatmul.mubr.f32.gmra.mrb[0].mxu0 %v427
      %v613 = vpop.f32.mrb[0].mxu0
      %v614 = vadd.f32 0.0, %v613
      %v615 = vpop.f32.mrb[0].mxu0
      %616 = vmatprep.mubr.f32.mxu0 0.0
      %617 = vmatmul.mubr.f32.gmra.mrb[0].mxu0 %v429
      %v618 = vpop.f32.mrb[0].mxu0
      %v619 = vadd.f32 0.0, %v618
      %v620 = vpop.f32.mrb[0].mxu0
      %621 = vmatprep.mubr.f32.mxu0 0.0
      %622 = vmatmul.mubr.f32.gmra.mrb[0].mxu0 %v431
      %v623 = vpop.f32.mrb[0].mxu0
      %v624 = vadd.f32 0.0, %v623
      %v625 = vpop.f32.mrb[0].mxu0
      %626 = vmatprep.mubr.f32.mxu0 0.0
      %627 = vmatmul.mubr.f32.gmra.mrb[0].mxu0 %v433
      %v628 = vpop.f32.mrb[0].mxu0
      %v629 = vadd.f32 0.0, %v628
      %v630 = vpop.f32.mrb[0].mxu0
      %631 = vmatprep.mubr.f32.mxu0 0.0
      %632 = vmatmul.mubr.f32.gmra.mrb[0].mxu0 %v435
      %v633 = vpop.f32.mrb[0].mxu0
      %v634 = vadd.f32 0.0, %v633
      %v635 = vpop.f32.mrb[0].mxu0
      %636 = vmatprep.mubr.f32.mxu0 0.0
      %637 = vmatmul.mubr.f32.gmra.mrb[0].mxu0 %v437
      %v638 = vpop.f32.mrb[0].mxu0
      %v639 = vadd.f32 0.0, %v638
      %v640 = vpop.f32.mrb[0].mxu0
      %641 = vmatprep.mubr.f32.mxu0 0.0
      %642 = vmatmul.mubr.f32.gmra.mrb[0].mxu0 %v439
      %v643 = vpop.f32.mrb[0].mxu0
      %v644 = vadd.f32 0.0, %v643
      %v645 = vpop.f32.mrb[0].mxu0
      %646 = vmatprep.mubr.f32.mxu0 0.0
      %647 = vmatmul.mubr.f32.gmra.mrb[0].mxu0 %v441
      %v648 = vpop.f32.mrb[0].mxu0
      %v649 = vadd.f32 0.0, %v648
      %v650 = vpop.f32.mrb[0].mxu0
      %651 = vmatprep.mubr.f32.mxu0 0.0
      %652 = vmatmul.mubr.f32.gmra.mrb[0].mxu0 %v443
      %v653 = vpop.f32.mrb[0].mxu0
      %v654 = vadd.f32 0.0, %v653
      %v655 = vpop.f32.mrb[0].mxu0
      %656 = vmatprep.mubr.f32.mxu0 0.0
      %657 = vmatmul.mubr.f32.gmra.mrb[0].mxu0 %v445
      %v658 = vpop.f32.mrb[0].mxu0
      %v659 = vadd.f32 0.0, %v658
      %v660 = vpop.f32.mrb[0].mxu0
      %661 = vmatprep.mubr.f32.mxu0 0.0
      %662 = vmatmul.mubr.f32.gmra.mrb[0].mxu0 %v447
      %v663 = vpop.f32.mrb[0].mxu0
      %v664 = vadd.f32 0.0, %v663
      %v665 = vpop.f32.mrb[0].mxu0
      %666 = vmatprep.mubr.f32.mxu0 0.0
      %667 = vmatmul.mubr.f32.gmra.mrb[0].mxu0 %v449
      %v668 = vpop.f32.mrb[0].mxu0
      %v669 = vadd.f32 0.0, %v668
      %v670 = vpop.f32.mrb[0].mxu0
      %671 = vmatprep.mubr.f32.mxu0 0.0
      %672 = vmatmul.mubr.f32.gmra.mrb[0].mxu0 %v451
      %v673 = vpop.f32.mrb[0].mxu0
      %v674 = vadd.f32 0.0, %v673
      %v675 = vpop.f32.mrb[0].mxu0
      %676 = vmatprep.mubr.f32.mxu0 0.0
      %677 = vmatmul.mubr.f32.gmra.mrb[0].mxu0 %v453
      %v678 = vpop.f32.mrb[0].mxu0
      %v679 = vadd.f32 0.0, %v678
      %v680 = vpop.f32.mrb[0].mxu0
      %681 = vmatprep.mubr.f32.mxu0 0.0
      %682 = vmatmul.mubr.f32.gmra.mrb[0].mxu0 %v455
      %v683 = vpop.f32.mrb[0].mxu0
      %v684 = vadd.f32 0.0, %v683
      %v685 = vpop.f32.mrb[0].mxu0
      %686 = vmatprep.mubr.f32.mxu0 0.0
      %687 = vmatmul.mubr.f32.gmra.mrb[0].mxu0 %v457
      %v688 = vpop.f32.mrb[0].mxu0
      %v689 = vadd.f32 0.0, %v688
      %v690 = vpop.f32.mrb[0].mxu0
      %691 = vmatprep.mubr.f32.mxu0 0.0
      %692 = vmatmul.mubr.f32.gmra.mrb[0].mxu0 %v459
      %v693 = vpop.f32.mrb[0].mxu0
      %v694 = vadd.f32 0.0, %v693
      %v695 = vpop.f32.mrb[0].mxu0
      %696 = vmatprep.mubr.f32.mxu0 0.0
      %697 = vmatmul.mubr.f32.gmra.mrb[0].mxu0 %v461
      %v698 = vpop.f32.mrb[0].mxu0
      %v699 = vadd.f32 0.0, %v698
      %v700 = vpop.f32.mrb[0].mxu0
      %701 = vmatprep.mubr.f32.mxu0 0.0
      %702 = vmatmul.mubr.f32.gmra.mrb[0].mxu0 %v463
      %v703 = vpop.f32.mrb[0].mxu0
      %v704 = vadd.f32 0.0, %v703
      %v705 = vpop.f32.mrb[0].mxu0
      %706 = vmatprep.mubr.f32.mxu0 0.0
      %707 = vmatmul.mubr.f32.gmra.mrb[0].mxu0 %v465
      %v708 = vpop.f32.mrb[0].mxu0
      %v709 = vadd.f32 0.0, %v708
      %v710 = vpop.f32.mrb[0].mxu0
      %711 = vdwg.mxu0
      %v712 = vsel %vm394, %v239, 0
      %v714 = vsel %vm394, %v240, 0
      %v716 = vsel %vm394, %v241, 0
      %v718 = vsel %vm394, %v242, 0
      %v720 = vsel %vm394, %v243, 0
      %v722 = vsel %vm394, %v244, 0
      %v724 = vsel %vm394, %v245, 0
      %v726 = vsel %vm394, %v246, 0
      %v728 = vsel %vm394, %v247, 0
      %v730 = vsel %vm394, %v248, 0
      %v732 = vsel %vm394, %v249, 0
      %v734 = vsel %vm394, %v250, 0
      %v736 = vsel %vm394, %v251, 0
      %v738 = vsel %vm394, %v252, 0
      %v740 = vsel %vm394, %v253, 0
      %v742 = vsel %vm394, %v254, 0
      %v744 = vsel %vm394, %v255, 0
      %v746 = vsel %vm394, %v256, 0
      %v748 = vsel %vm394, %v257, 0
      %v750 = vsel %vm394, %v258, 0
      %v752 = vsel %vm394, %v259, 0
      %v754 = vsel %vm394, %v260, 0
      %v756 = vsel %vm394, %v261, 0
      %v758 = vsel %vm394, %v262, 0
      %v760 = vsel %vm394, %v263, 0
      %v762 = vsel %vm394, %v264, 0
      %v764 = vsel %vm394, %v265, 0
      %v766 = vsel %vm394, %v266, 0
      %v768 = vsel %vm394, %v267, 0
      %v770 = vsel %vm394, %v268, 0
      %v772 = vsel %vm394, %v269, 0
      %v774 = vsel %vm394, %v270, 0
      %v776 = vsel %vm394, %v271, 0
      %v778 = vsel %vm394, %v272, 0
      %v780 = vsel %vm394, %v273, 0
      %v782 = vsel %vm394, %v274, 0
      %784 = vmatprep.subr.mxu0 0.0
      %785 = vmatpush1.msra.mxu0 %v280
      %786 = vmatprep.subr.mxu0 0.0
      %787 = vmatpush1.msra.mxu0 0.0
      %788 = vmatprep.subr.mxu0 0.0
      %789 = vmatpush1.msra.mxu0 0.0
      %790 = vmatprep.subr.mxu0 0.0
      %791 = vmatpush1.msra.mxu0 0.0
      %792 = vmatprep.subr.mxu0 0.0
      %793 = vmatpush1.msra.mxu0 0.0
      %794 = vmatprep.subr.mxu0 0.0
      %795 = vmatpush1.msra.mxu0 0.0
      %796 = vmatprep.subr.mxu0 0.0
      %797 = vmatpush1.msra.mxu0 0.0
      %798 = vmatprep.subr.mxu0 0.0
      %799 = vmatpush1.msra.mxu0 0.0
      %800 = vmatprep.subr.mxu0 0.0
      %801 = vmatpush1.msra.mxu0 0.0
      %802 = vmatprep.subr.mxu0 0.0
      %803 = vmatpush1.msra.mxu0 0.0
      %804 = vmatprep.subr.mxu0 0.0
      %805 = vmatpush1.msra.mxu0 0.0
      %806 = vmatprep.subr.mxu0 0.0
      %807 = vmatpush1.msra.mxu0 0.0
      %808 = vmatprep.subr.mxu0 0.0
      %809 = vmatpush1.msra.mxu0 0.0
      %810 = vmatprep.subr.mxu0 0.0
      %811 = vmatpush1.msra.mxu0 0.0
      %812 = vmatprep.subr.mxu0 0.0
      %813 = vmatpush1.msra.mxu0 0.0
      %814 = vmatprep.subr.mxu0 0.0
      %815 = vmatpush1.msra.mxu0 0.0
      %816 = vmatprep.subr.mxu0 0.0
      %817 = vmatpush1.msra.mxu0 0.0
      %818 = vmatprep.subr.mxu0 0.0
      %819 = vmatpush1.msra.mxu0 0.0
      %820 = vmatprep.subr.mxu0 0.0
      %821 = vmatpush1.msra.mxu0 0.0
      %822 = vmatprep.subr.mxu0 0.0
      %823 = vmatpush1.msra.mxu0 0.0
      %824 = vmatprep.subr.mxu0 0.0
      %825 = vmatpush1.msra.mxu0 0.0
      %826 = vmatprep.subr.mxu0 0.0
      %827 = vmatpush1.msra.mxu0 0.0
      %828 = vmatprep.subr.mxu0 0.0
      %829 = vmatpush1.msra.mxu0 0.0
      %830 = vmatprep.subr.mxu0 0.0
      %831 = vmatpush1.msra.mxu0 0.0
      %832 = vmatprep.subr.mxu0 0.0
      %833 = vmatpush1.msra.mxu0 0.0
      %834 = vmatprep.subr.mxu0 0.0
      %835 = vmatpush1.msra.mxu0 0.0
      %836 = vmatprep.subr.mxu0 0.0
      %837 = vmatpush1.msra.mxu0 0.0
      %838 = vmatprep.subr.mxu0 0.0
      %839 = vmatpush1.msra.mxu0 0.0
      %840 = vmatprep.subr.mxu0 0.0
      %841 = vmatpush1.msra.mxu0 0.0
      %842 = vmatprep.subr.mxu0 0.0
      %843 = vmatpush1.msra.mxu0 0.0
      %844 = vmatprep.subr.mxu0 0.0
      %845 = vmatpush1.msra.mxu0 0.0
      %846 = vmatprep.subr.mxu0 0.0
      %847 = vmatpush1.msra.mxu0 0.0
      %848 = vmatprep.mubr.f32.mxu0 0.0
      %849 = vmatmul.mubr.f32.gmra.mrb[0].mxu0 %v712
      %v850 = vpop.f32.mrb[0].mxu0
      %v851 = vadd.f32 %v534, %v850
      %v852 = vpop.f32.mrb[0].mxu0
      %853 = vmatprep.mubr.f32.mxu0 0.0
      %854 = vmatmul.mubr.f32.gmra.mrb[0].mxu0 %v714
      %v855 = vpop.f32.mrb[0].mxu0
      %v856 = vadd.f32 %v539, %v855
      %v857 = vpop.f32.mrb[0].mxu0
      %858 = vmatprep.mubr.f32.mxu0 0.0
      %859 = vmatmul.mubr.f32.gmra.mrb[0].mxu0 %v716
      %v860 = vpop.f32.mrb[0].mxu0
      %v861 = vadd.f32 %v544, %v860
      %v862 = vpop.f32.mrb[0].mxu0
      %863 = vmatprep.mubr.f32.mxu0 0.0
      %864 = vmatmul.mubr.f32.gmra.mrb[0].mxu0 %v718
      %v865 = vpop.f32.mrb[0].mxu0
      %v866 = vadd.f32 %v549, %v865
      %v867 = vpop.f32.mrb[0].mxu0
      %868 = vmatprep.mubr.f32.mxu0 0.0
      %869 = vmatmul.mubr.f32.gmra.mrb[0].mxu0 %v720
      %v870 = vpop.f32.mrb[0].mxu0
      %v871 = vadd.f32 %v554, %v870
      %v872 = vpop.f32.mrb[0].mxu0
      %873 = vmatprep.mubr.f32.mxu0 0.0
      %874 = vmatmul.mubr.f32.gmra.mrb[0].mxu0 %v722
      %v875 = vpop.f32.mrb[0].mxu0
      %v876 = vadd.f32 %v559, %v875
      %v877 = vpop.f32.mrb[0].mxu0
      %878 = vmatprep.mubr.f32.mxu0 0.0
      %879 = vmatmul.mubr.f32.gmra.mrb[0].mxu0 %v724
      %v880 = vpop.f32.mrb[0].mxu0
      %v881 = vadd.f32 %v564, %v880
      %v882 = vpop.f32.mrb[0].mxu0
      %883 = vmatprep.mubr.f32.mxu0 0.0
      %884 = vmatmul.mubr.f32.gmra.mrb[0].mxu0 %v726
      %v885 = vpop.f32.mrb[0].mxu0
      %v886 = vadd.f32 %v569, %v885
      %v887 = vpop.f32.mrb[0].mxu0
      %888 = vmatprep.mubr.f32.mxu0 0.0
      %889 = vmatmul.mubr.f32.gmra.mrb[0].mxu0 %v728
      %v890 = vpop.f32.mrb[0].mxu0
      %v891 = vadd.f32 %v574, %v890
      %v892 = vpop.f32.mrb[0].mxu0
      %893 = vmatprep.mubr.f32.mxu0 0.0
      %894 = vmatmul.mubr.f32.gmra.mrb[0].mxu0 %v730
      %v895 = vpop.f32.mrb[0].mxu0
      %v896 = vadd.f32 %v579, %v895
      %v897 = vpop.f32.mrb[0].mxu0
      %898 = vmatprep.mubr.f32.mxu0 0.0
      %899 = vmatmul.mubr.f32.gmra.mrb[0].mxu0 %v732
      %v900 = vpop.f32.mrb[0].mxu0
      %v901 = vadd.f32 %v584, %v900
      %v902 = vpop.f32.mrb[0].mxu0
      %903 = vmatprep.mubr.f32.mxu0 0.0
      %904 = vmatmul.mubr.f32.gmra.mrb[0].mxu0 %v734
      %v905 = vpop.f32.mrb[0].mxu0
      %v906 = vadd.f32 %v589, %v905
      %v907 = vpop.f32.mrb[0].mxu0
      %908 = vmatprep.mubr.f32.mxu0 0.0
      %909 = vmatmul.mubr.f32.gmra.mrb[0].mxu0 %v736
      %v910 = vpop.f32.mrb[0].mxu0
      %v911 = vadd.f32 %v594, %v910
      %v912 = vpop.f32.mrb[0].mxu0
      %913 = vmatprep.mubr.f32.mxu0 0.0
      %914 = vmatmul.mubr.f32.gmra.mrb[0].mxu0 %v738
      %v915 = vpop.f32.mrb[0].mxu0
      %v916 = vadd.f32 %v599, %v915
      %v917 = vpop.f32.mrb[0].mxu0
      %918 = vmatprep.mubr.f32.mxu0 0.0
      %919 = vmatmul.mubr.f32.gmra.mrb[0].mxu0 %v740
      %v920 = vpop.f32.mrb[0].mxu0
      %v921 = vadd.f32 %v604, %v920
      %v922 = vpop.f32.mrb[0].mxu0
      %923 = vmatprep.mubr.f32.mxu0 0.0
      %924 = vmatmul.mubr.f32.gmra.mrb[0].mxu0 %v742
      %v925 = vpop.f32.mrb[0].mxu0
      %v926 = vadd.f32 %v609, %v925
      %v927 = vpop.f32.mrb[0].mxu0
      %928 = vmatprep.mubr.f32.mxu0 0.0
      %929 = vmatmul.mubr.f32.gmra.mrb[0].mxu0 %v744
      %v930 = vpop.f32.mrb[0].mxu0
      %v931 = vadd.f32 %v614, %v930
      %v932 = vpop.f32.mrb[0].mxu0
      %933 = vmatprep.mubr.f32.mxu0 0.0
      %934 = vmatmul.mubr.f32.gmra.mrb[0].mxu0 %v746
      %v935 = vpop.f32.mrb[0].mxu0
      %v936 = vadd.f32 %v619, %v935
      %v937 = vpop.f32.mrb[0].mxu0
      %938 = vmatprep.mubr.f32.mxu0 0.0
      %939 = vmatmul.mubr.f32.gmra.mrb[0].mxu0 %v748
      %v940 = vpop.f32.mrb[0].mxu0
      %v941 = vadd.f32 %v624, %v940
      %v942 = vpop.f32.mrb[0].mxu0
      %943 = vmatprep.mubr.f32.mxu0 0.0
      %944 = vmatmul.mubr.f32.gmra.mrb[0].mxu0 %v750
      %v945 = vpop.f32.mrb[0].mxu0
      %v946 = vadd.f32 %v629, %v945
      %v947 = vpop.f32.mrb[0].mxu0
      %948 = vmatprep.mubr.f32.mxu0 0.0
      %949 = vmatmul.mubr.f32.gmra.mrb[0].mxu0 %v752
      %v950 = vpop.f32.mrb[0].mxu0
      %v951 = vadd.f32 %v634, %v950
      %v952 = vpop.f32.mrb[0].mxu0
      %953 = vmatprep.mubr.f32.mxu0 0.0
      %954 = vmatmul.mubr.f32.gmra.mrb[0].mxu0 %v754
      %v955 = vpop.f32.mrb[0].mxu0
      %v956 = vadd.f32 %v639, %v955
      %v957 = vpop.f32.mrb[0].mxu0
      %958 = vmatprep.mubr.f32.mxu0 0.0
      %959 = vmatmul.mubr.f32.gmra.mrb[0].mxu0 %v756
      %v960 = vpop.f32.mrb[0].mxu0
      %v961 = vadd.f32 %v644, %v960
      %v962 = vpop.f32.mrb[0].mxu0
      %963 = vmatprep.mubr.f32.mxu0 0.0
      %964 = vmatmul.mubr.f32.gmra.mrb[0].mxu0 %v758
      %v965 = vpop.f32.mrb[0].mxu0
      %v966 = vadd.f32 %v649, %v965
      %v967 = vpop.f32.mrb[0].mxu0
      %968 = vmatprep.mubr.f32.mxu0 0.0
      %969 = vmatmul.mubr.f32.gmra.mrb[0].mxu0 %v760
      %v970 = vpop.f32.mrb[0].mxu0
      %v971 = vadd.f32 %v654, %v970
      %v972 = vpop.f32.mrb[0].mxu0
      %973 = vmatprep.mubr.f32.mxu0 0.0
      %974 = vmatmul.mubr.f32.gmra.mrb[0].mxu0 %v762
      %v975 = vpop.f32.mrb[0].mxu0
      %v976 = vadd.f32 %v659, %v975
      %v977 = vpop.f32.mrb[0].mxu0
      %978 = vmatprep.mubr.f32.mxu0 0.0
      %979 = vmatmul.mubr.f32.gmra.mrb[0].mxu0 %v764
      %v980 = vpop.f32.mrb[0].mxu0
      %v981 = vadd.f32 %v664, %v980
      %v982 = vpop.f32.mrb[0].mxu0
      %983 = vmatprep.mubr.f32.mxu0 0.0
      %984 = vmatmul.mubr.f32.gmra.mrb[0].mxu0 %v766
      %v985 = vpop.f32.mrb[0].mxu0
      %v986 = vadd.f32 %v669, %v985
      %v987 = vpop.f32.mrb[0].mxu0
      %988 = vmatprep.mubr.f32.mxu0 0.0
      %989 = vmatmul.mubr.f32.gmra.mrb[0].mxu0 %v768
      %v990 = vpop.f32.mrb[0].mxu0
      %v991 = vadd.f32 %v674, %v990
      %v992 = vpop.f32.mrb[0].mxu0
      %993 = vmatprep.mubr.f32.mxu0 0.0
      %994 = vmatmul.mubr.f32.gmra.mrb[0].mxu0 %v770
      %v995 = vpop.f32.mrb[0].mxu0
      %v996 = vadd.f32 %v679, %v995
      %v997 = vpop.f32.mrb[0].mxu0
      %998 = vmatprep.mubr.f32.mxu0 0.0
      %999 = vmatmul.mubr.f32.gmra.mrb[0].mxu0 %v772
      %v1000 = vpop.f32.mrb[0].mxu0
      %v1001 = vadd.f32 %v684, %v1000
      %v1002 = vpop.f32.mrb[0].mxu0
      %1003 = vmatprep.mubr.f32.mxu0 0.0
      %1004 = vmatmul.mubr.f32.gmra.mrb[0].mxu0 %v774
      %v1005 = vpop.f32.mrb[0].mxu0
      %v1006 = vadd.f32 %v689, %v1005
      %v1007 = vpop.f32.mrb[0].mxu0
      %1008 = vmatprep.mubr.f32.mxu0 0.0
      %1009 = vmatmul.mubr.f32.gmra.mrb[0].mxu0 %v776
      %v1010 = vpop.f32.mrb[0].mxu0
      %v1011 = vadd.f32 %v694, %v1010
      %v1012 = vpop.f32.mrb[0].mxu0
      %1013 = vmatprep.mubr.f32.mxu0 0.0
      %1014 = vmatmul.mubr.f32.gmra.mrb[0].mxu0 %v778
      %v1015 = vpop.f32.mrb[0].mxu0
      %v1016 = vadd.f32 %v699, %v1015
      %v1017 = vpop.f32.mrb[0].mxu0
      %1018 = vmatprep.mubr.f32.mxu0 0.0
      %1019 = vmatmul.mubr.f32.gmra.mrb[0].mxu0 %v780
      %v1020 = vpop.f32.mrb[0].mxu0
      %v1021 = vadd.f32 %v704, %v1020
      %v1022 = vpop.f32.mrb[0].mxu0
      %1023 = vmatprep.mubr.f32.mxu0 0.0
      %1024 = vmatmul.mubr.f32.gmra.mrb[0].mxu0 %v782
      %v1025 = vpop.f32.mrb[0].mxu0
      %v1026 = vadd.f32 %v709, %v1025
      %v1027 = vpop.f32.mrb[0].mxu0
      %1028 = vdwg.mxu0
      %s1029 = scalar_lea.vmem %s0, 16
      %v1030 = vld [vmem:[%s1029] sm:$0xff]
      %vm1031 = vcmask 1045504
      %v1032 = vrot.slane %v239, 2
      %v1033 = vrot.slane %v240, 2
      %v1034 = vsel %vm1031, %v1032, %v1033
      %v1035 = vrot.slane %v241, 2
      %v1036 = vsel %vm1031, %v1033, %v1035
      %v1037 = vrot.slane %v242, 2
      %v1038 = vsel %vm1031, %v1035, %v1037
      %v1039 = vrot.slane %v243, 2
      %v1040 = vsel %vm1031, %v1037, %v1039
      %v1041 = vrot.slane %v244, 2
      %v1042 = vsel %vm1031, %v1039, %v1041
      %v1043 = vrot.slane %v245, 2
      %v1044 = vsel %vm1031, %v1041, %v1043
      %v1045 = vrot.slane %v246, 2
      %v1046 = vsel %vm1031, %v1043, %v1045
      %v1047 = vrot.slane %v247, 2
      %v1048 = vsel %vm1031, %v1045, %v1047
      %v1049 = vrot.slane %v248, 2
      %v1050 = vsel %vm1031, %v1047, %v1049
      %v1051 = vrot.slane %v249, 2
      %v1052 = vsel %vm1031, %v1049, %v1051
      %v1053 = vrot.slane %v250, 2
      %v1054 = vsel %vm1031, %v1051, %v1053
      %v1055 = vrot.slane %v251, 2
      %v1056 = vsel %vm1031, %v1053, %v1055
      %v1057 = vrot.slane %v252, 2
      %v1058 = vsel %vm1031, %v1055, %v1057
      %v1059 = vrot.slane %v253, 2
      %v1060 = vsel %vm1031, %v1057, %v1059
      %v1061 = vrot.slane %v254, 2
      %v1062 = vsel %vm1031, %v1059, %v1061
      %v1063 = vrot.slane %v255, 2
      %v1064 = vsel %vm1031, %v1061, %v1063
      %v1065 = vrot.slane %v256, 2
      %v1066 = vsel %vm1031, %v1063, %v1065
      %v1067 = vrot.slane %v257, 2
      %v1068 = vsel %vm1031, %v1065, %v1067
      %v1069 = vrot.slane %v258, 2
      %v1070 = vsel %vm1031, %v1067, %v1069
      %v1071 = vrot.slane %v259, 2
      %v1072 = vsel %vm1031, %v1069, %v1071
      %v1073 = vrot.slane %v260, 2
      %v1074 = vsel %vm1031, %v1071, %v1073
      %v1075 = vrot.slane %v261, 2
      %v1076 = vsel %vm1031, %v1073, %v1075
      %v1077 = vrot.slane %v262, 2
      %v1078 = vsel %vm1031, %v1075, %v1077
      %v1079 = vrot.slane %v263, 2
      %v1080 = vsel %vm1031, %v1077, %v1079
      %v1081 = vrot.slane %v264, 2
      %v1082 = vsel %vm1031, %v1079, %v1081
      %v1083 = vrot.slane %v265, 2
      %v1084 = vsel %vm1031, %v1081, %v1083
      %v1085 = vrot.slane %v266, 2
      %v1086 = vsel %vm1031, %v1083, %v1085
      %v1087 = vrot.slane %v267, 2
      %v1088 = vsel %vm1031, %v1085, %v1087
      %v1089 = vrot.slane %v268, 2
      %v1090 = vsel %vm1031, %v1087, %v1089
      %v1091 = vrot.slane %v269, 2
      %v1092 = vsel %vm1031, %v1089, %v1091
      %v1093 = vrot.slane %v270, 2
      %v1094 = vsel %vm1031, %v1091, %v1093
      %v1095 = vrot.slane %v271, 2
      %v1096 = vsel %vm1031, %v1093, %v1095
      %v1097 = vrot.slane %v272, 2
      %v1098 = vsel %vm1031, %v1095, %v1097
      %v1099 = vrot.slane %v273, 2
      %v1100 = vsel %vm1031, %v1097, %v1099
      %v1101 = vrot.slane %v274, 2
      %v1102 = vsel %vm1031, %v1099, %v1101
      %v1103 = vrot.slane %v275, 2
      %v1104 = vsel %vm1031, %v1101, %v1103
      %v1105 = vsel %vm394, %v1034, 0
      %v1107 = vsel %vm394, %v1036, 0
      %v1109 = vsel %vm394, %v1038, 0
      %v1111 = vsel %vm394, %v1040, 0
      %v1113 = vsel %vm394, %v1042, 0
      %v1115 = vsel %vm394, %v1044, 0
      %v1117 = vsel %vm394, %v1046, 0
      %v1119 = vsel %vm394, %v1048, 0
      %v1121 = vsel %vm394, %v1050, 0
      %v1123 = vsel %vm394, %v1052, 0
      %v1125 = vsel %vm394, %v1054, 0
      %v1127 = vsel %vm394, %v1056, 0
      %v1129 = vsel %vm394, %v1058, 0
      %v1131 = vsel %vm394, %v1060, 0
      %v1133 = vsel %vm394, %v1062, 0
      %v1135 = vsel %vm394, %v1064, 0
      %v1137 = vsel %vm394, %v1066, 0
      %v1139 = vsel %vm394, %v1068, 0
      %v1141 = vsel %vm394, %v1070, 0
      %v1143 = vsel %vm394, %v1072, 0
      %v1145 = vsel %vm394, %v1074, 0
      %v1147 = vsel %vm394, %v1076, 0
      %v1149 = vsel %vm394, %v1078, 0
      %v1151 = vsel %vm394, %v1080, 0
      %v1153 = vsel %vm394, %v1082, 0
      %v1155 = vsel %vm394, %v1084, 0
      %v1157 = vsel %vm394, %v1086, 0
      %v1159 = vsel %vm394, %v1088, 0
      %v1161 = vsel %vm394, %v1090, 0
      %v1163 = vsel %vm394, %v1092, 0
      %v1165 = vsel %vm394, %v1094, 0
      %v1167 = vsel %vm394, %v1096, 0
      %v1169 = vsel %vm394, %v1098, 0
      %v1171 = vsel %vm394, %v1100, 0
      %v1173 = vsel %vm394, %v1102, 0
      %v1175 = vsel %vm394, %v1104, 0
      %1177 = vmatprep.subr.mxu0 0.0
      %1178 = vmatpush1.msra.mxu0 %v1030
      %1179 = vmatprep.subr.mxu0 0.0
      %1180 = vmatpush1.msra.mxu0 0.0
      %1181 = vmatprep.subr.mxu0 0.0
      %1182 = vmatpush1.msra.mxu0 0.0
      %1183 = vmatprep.subr.mxu0 0.0
      %1184 = vmatpush1.msra.mxu0 0.0
      %1185 = vmatprep.subr.mxu0 0.0
      %1186 = vmatpush1.msra.mxu0 0.0
      %1187 = vmatprep.subr.mxu0 0.0
      %1188 = vmatpush1.msra.mxu0 0.0
      %1189 = vmatprep.subr.mxu0 0.0
      %1190 = vmatpush1.msra.mxu0 0.0
      %1191 = vmatprep.subr.mxu0 0.0
      %1192 = vmatpush1.msra.mxu0 0.0
      %1193 = vmatprep.subr.mxu0 0.0
      %1194 = vmatpush1.msra.mxu0 0.0
      %1195 = vmatprep.subr.mxu0 0.0
      %1196 = vmatpush1.msra.mxu0 0.0
      %1197 = vmatprep.subr.mxu0 0.0
      %1198 = vmatpush1.msra.mxu0 0.0
      %1199 = vmatprep.subr.mxu0 0.0
      %1200 = vmatpush1.msra.mxu0 0.0
      %1201 = vmatprep.subr.mxu0 0.0
      %1202 = vmatpush1.msra.mxu0 0.0
      %1203 = vmatprep.subr.mxu0 0.0
      %1204 = vmatpush1.msra.mxu0 0.0
      %1205 = vmatprep.subr.mxu0 0.0
      %1206 = vmatpush1.msra.mxu0 0.0
      %1207 = vmatprep.subr.mxu0 0.0
      %1208 = vmatpush1.msra.mxu0 0.0
      %1209 = vmatprep.subr.mxu0 0.0
      %1210 = vmatpush1.msra.mxu0 0.0
      %1211 = vmatprep.subr.mxu0 0.0
      %1212 = vmatpush1.msra.mxu0 0.0
      %1213 = vmatprep.subr.mxu0 0.0
      %1214 = vmatpush1.msra.mxu0 0.0
      %1215 = vmatprep.subr.mxu0 0.0
      %1216 = vmatpush1.msra.mxu0 0.0
      %1217 = vmatprep.subr.mxu0 0.0
      %1218 = vmatpush1.msra.mxu0 0.0
      %1219 = vmatprep.subr.mxu0 0.0
      %1220 = vmatpush1.msra.mxu0 0.0
      %1221 = vmatprep.subr.mxu0 0.0
      %1222 = vmatpush1.msra.mxu0 0.0
      %1223 = vmatprep.subr.mxu0 0.0
      %1224 = vmatpush1.msra.mxu0 0.0
      %1225 = vmatprep.subr.mxu0 0.0
      %1226 = vmatpush1.msra.mxu0 0.0
      %1227 = vmatprep.subr.mxu0 0.0
      %1228 = vmatpush1.msra.mxu0 0.0
      %1229 = vmatprep.subr.mxu0 0.0
      %1230 = vmatpush1.msra.mxu0 0.0
      %1231 = vmatprep.subr.mxu0 0.0
      %1232 = vmatpush1.msra.mxu0 0.0
      %1233 = vmatprep.subr.mxu0 0.0
      %1234 = vmatpush1.msra.mxu0 0.0
      %1235 = vmatprep.subr.mxu0 0.0
      %1236 = vmatpush1.msra.mxu0 0.0
      %1237 = vmatprep.subr.mxu0 0.0
      %1238 = vmatpush1.msra.mxu0 0.0
      %1239 = vmatprep.subr.mxu0 0.0
      %1240 = vmatpush1.msra.mxu0 0.0
      %1241 = vmatprep.mubr.f32.mxu0 0.0
      %1242 = vmatmul.mubr.f32.gmra.mrb[0].mxu0 %v1105
      %v1243 = vpop.f32.mrb[0].mxu0
      %v1244 = vadd.f32 0.0, %v1243
      %v1245 = vpop.f32.mrb[0].mxu0
      %1246 = vmatprep.mubr.f32.mxu0 0.0
      %1247 = vmatmul.mubr.f32.gmra.mrb[0].mxu0 %v1107
      %v1248 = vpop.f32.mrb[0].mxu0
      %v1249 = vadd.f32 0.0, %v1248
      %v1250 = vpop.f32.mrb[0].mxu0
      %1251 = vmatprep.mubr.f32.mxu0 0.0
      %1252 = vmatmul.mubr.f32.gmra.mrb[0].mxu0 %v1109
      %v1253 = vpop.f32.mrb[0].mxu0
      %v1254 = vadd.f32 0.0, %v1253
      %v1255 = vpop.f32.mrb[0].mxu0
      %1256 = vmatprep.mubr.f32.mxu0 0.0
      %1257 = vmatmul.mubr.f32.gmra.mrb[0].mxu0 %v1111
      %v1258 = vpop.f32.mrb[0].mxu0
      %v1259 = vadd.f32 0.0, %v1258
      %v1260 = vpop.f32.mrb[0].mxu0
      %1261 = vmatprep.mubr.f32.mxu0 0.0
      %1262 = vmatmul.mubr.f32.gmra.mrb[0].mxu0 %v1113
      %v1263 = vpop.f32.mrb[0].mxu0
      %v1264 = vadd.f32 0.0, %v1263
      %v1265 = vpop.f32.mrb[0].mxu0
      %1266 = vmatprep.mubr.f32.mxu0 0.0
      %1267 = vmatmul.mubr.f32.gmra.mrb[0].mxu0 %v1115
      %v1268 = vpop.f32.mrb[0].mxu0
      %v1269 = vadd.f32 0.0, %v1268
      %v1270 = vpop.f32.mrb[0].mxu0
      %1271 = vmatprep.mubr.f32.mxu0 0.0
      %1272 = vmatmul.mubr.f32.gmra.mrb[0].mxu0 %v1117
      %v1273 = vpop.f32.mrb[0].mxu0
      %v1274 = vadd.f32 0.0, %v1273
      %v1275 = vpop.f32.mrb[0].mxu0
      %1276 = vmatprep.mubr.f32.mxu0 0.0
      %1277 = vmatmul.mubr.f32.gmra.mrb[0].mxu0 %v1119
      %v1278 = vpop.f32.mrb[0].mxu0
      %v1279 = vadd.f32 0.0, %v1278
      %v1280 = vpop.f32.mrb[0].mxu0
      %1281 = vmatprep.mubr.f32.mxu0 0.0
      %1282 = vmatmul.mubr.f32.gmra.mrb[0].mxu0 %v1121
      %v1283 = vpop.f32.mrb[0].mxu0
      %v1284 = vadd.f32 0.0, %v1283
      %v1285 = vpop.f32.mrb[0].mxu0
      %1286 = vmatprep.mubr.f32.mxu0 0.0
      %1287 = vmatmul.mubr.f32.gmra.mrb[0].mxu0 %v1123
      %v1288 = vpop.f32.mrb[0].mxu0
      %v1289 = vadd.f32 0.0, %v1288
      %v1290 = vpop.f32.mrb[0].mxu0
      %1291 = vmatprep.mubr.f32.mxu0 0.0
      %1292 = vmatmul.mubr.f32.gmra.mrb[0].mxu0 %v1125
      %v1293 = vpop.f32.mrb[0].mxu0
      %v1294 = vadd.f32 0.0, %v1293
      %v1295 = vpop.f32.mrb[0].mxu0
      %1296 = vmatprep.mubr.f32.mxu0 0.0
      %1297 = vmatmul.mubr.f32.gmra.mrb[0].mxu0 %v1127
      %v1298 = vpop.f32.mrb[0].mxu0
      %v1299 = vadd.f32 0.0, %v1298
      %v1300 = vpop.f32.mrb[0].mxu0
      %1301 = vmatprep.mubr.f32.mxu0 0.0
      %1302 = vmatmul.mubr.f32.gmra.mrb[0].mxu0 %v1129
      %v1303 = vpop.f32.mrb[0].mxu0
      %v1304 = vadd.f32 0.0, %v1303
      %v1305 = vpop.f32.mrb[0].mxu0
      %1306 = vmatprep.mubr.f32.mxu0 0.0
      %1307 = vmatmul.mubr.f32.gmra.mrb[0].mxu0 %v1131
      %v1308 = vpop.f32.mrb[0].mxu0
      %v1309 = vadd.f32 0.0, %v1308
      %v1310 = vpop.f32.mrb[0].mxu0
      %1311 = vmatprep.mubr.f32.mxu0 0.0
      %1312 = vmatmul.mubr.f32.gmra.mrb[0].mxu0 %v1133
      %v1313 = vpop.f32.mrb[0].mxu0
      %v1314 = vadd.f32 0.0, %v1313
      %v1315 = vpop.f32.mrb[0].mxu0
      %1316 = vmatprep.mubr.f32.mxu0 0.0
      %1317 = vmatmul.mubr.f32.gmra.mrb[0].mxu0 %v1135
      %v1318 = vpop.f32.mrb[0].mxu0
      %v1319 = vadd.f32 0.0, %v1318
      %v1320 = vpop.f32.mrb[0].mxu0
      %1321 = vmatprep.mubr.f32.mxu0 0.0
      %1322 = vmatmul.mubr.f32.gmra.mrb[0].mxu0 %v1137
      %v1323 = vpop.f32.mrb[0].mxu0
      %v1324 = vadd.f32 0.0, %v1323
      %v1325 = vpop.f32.mrb[0].mxu0
      %1326 = vmatprep.mubr.f32.mxu0 0.0
      %1327 = vmatmul.mubr.f32.gmra.mrb[0].mxu0 %v1139
      %v1328 = vpop.f32.mrb[0].mxu0
      %v1329 = vadd.f32 0.0, %v1328
      %v1330 = vpop.f32.mrb[0].mxu0
      %1331 = vmatprep.mubr.f32.mxu0 0.0
      %1332 = vmatmul.mubr.f32.gmra.mrb[0].mxu0 %v1141
      %v1333 = vpop.f32.mrb[0].mxu0
      %v1334 = vadd.f32 0.0, %v1333
      %v1335 = vpop.f32.mrb[0].mxu0
      %1336 = vmatprep.mubr.f32.mxu0 0.0
      %1337 = vmatmul.mubr.f32.gmra.mrb[0].mxu0 %v1143
      %v1338 = vpop.f32.mrb[0].mxu0
      %v1339 = vadd.f32 0.0, %v1338
      %v1340 = vpop.f32.mrb[0].mxu0
      %1341 = vmatprep.mubr.f32.mxu0 0.0
      %1342 = vmatmul.mubr.f32.gmra.mrb[0].mxu0 %v1145
      %v1343 = vpop.f32.mrb[0].mxu0
      %v1344 = vadd.f32 0.0, %v1343
      %v1345 = vpop.f32.mrb[0].mxu0
      %1346 = vmatprep.mubr.f32.mxu0 0.0
      %1347 = vmatmul.mubr.f32.gmra.mrb[0].mxu0 %v1147
      %v1348 = vpop.f32.mrb[0].mxu0
      %v1349 = vadd.f32 0.0, %v1348
      %v1350 = vpop.f32.mrb[0].mxu0
      %1351 = vmatprep.mubr.f32.mxu0 0.0
      %1352 = vmatmul.mubr.f32.gmra.mrb[0].mxu0 %v1149
      %v1353 = vpop.f32.mrb[0].mxu0
      %v1354 = vadd.f32 0.0, %v1353
      %v1355 = vpop.f32.mrb[0].mxu0
      %1356 = vmatprep.mubr.f32.mxu0 0.0
      %1357 = vmatmul.mubr.f32.gmra.mrb[0].mxu0 %v1151
      %v1358 = vpop.f32.mrb[0].mxu0
      %v1359 = vadd.f32 0.0, %v1358
      %v1360 = vpop.f32.mrb[0].mxu0
      %1361 = vmatprep.mubr.f32.mxu0 0.0
      %1362 = vmatmul.mubr.f32.gmra.mrb[0].mxu0 %v1153
      %v1363 = vpop.f32.mrb[0].mxu0
      %v1364 = vadd.f32 0.0, %v1363
      %v1365 = vpop.f32.mrb[0].mxu0
      %1366 = vmatprep.mubr.f32.mxu0 0.0
      %1367 = vmatmul.mubr.f32.gmra.mrb[0].mxu0 %v1155
      %v1368 = vpop.f32.mrb[0].mxu0
      %v1369 = vadd.f32 0.0, %v1368
      %v1370 = vpop.f32.mrb[0].mxu0
      %1371 = vmatprep.mubr.f32.mxu0 0.0
      %1372 = vmatmul.mubr.f32.gmra.mrb[0].mxu0 %v1157
      %v1373 = vpop.f32.mrb[0].mxu0
      %v1374 = vadd.f32 0.0, %v1373
      %v1375 = vpop.f32.mrb[0].mxu0
      %1376 = vmatprep.mubr.f32.mxu0 0.0
      %1377 = vmatmul.mubr.f32.gmra.mrb[0].mxu0 %v1159
      %v1378 = vpop.f32.mrb[0].mxu0
      %v1379 = vadd.f32 0.0, %v1378
      %v1380 = vpop.f32.mrb[0].mxu0
      %1381 = vmatprep.mubr.f32.mxu0 0.0
      %1382 = vmatmul.mubr.f32.gmra.mrb[0].mxu0 %v1161
      %v1383 = vpop.f32.mrb[0].mxu0
      %v1384 = vadd.f32 0.0, %v1383
      %v1385 = vpop.f32.mrb[0].mxu0
      %1386 = vmatprep.mubr.f32.mxu0 0.0
      %1387 = vmatmul.mubr.f32.gmra.mrb[0].mxu0 %v1163
      %v1388 = vpop.f32.mrb[0].mxu0
      %v1389 = vadd.f32 0.0, %v1388
      %v1390 = vpop.f32.mrb[0].mxu0
      %1391 = vmatprep.mubr.f32.mxu0 0.0
      %1392 = vmatmul.mubr.f32.gmra.mrb[0].mxu0 %v1165
      %v1393 = vpop.f32.mrb[0].mxu0
      %v1394 = vadd.f32 0.0, %v1393
      %v1395 = vpop.f32.mrb[0].mxu0
      %1396 = vmatprep.mubr.f32.mxu0 0.0
      %1397 = vmatmul.mubr.f32.gmra.mrb[0].mxu0 %v1167
      %v1398 = vpop.f32.mrb[0].mxu0
      %v1399 = vadd.f32 0.0, %v1398
      %v1400 = vpop.f32.mrb[0].mxu0
      %1401 = vmatprep.mubr.f32.mxu0 0.0
      %1402 = vmatmul.mubr.f32.gmra.mrb[0].mxu0 %v1169
      %v1403 = vpop.f32.mrb[0].mxu0
      %v1404 = vadd.f32 0.0, %v1403
      %v1405 = vpop.f32.mrb[0].mxu0
      %1406 = vmatprep.mubr.f32.mxu0 0.0
      %1407 = vmatmul.mubr.f32.gmra.mrb[0].mxu0 %v1171
      %v1408 = vpop.f32.mrb[0].mxu0
      %v1409 = vadd.f32 0.0, %v1408
      %v1410 = vpop.f32.mrb[0].mxu0
      %1411 = vmatprep.mubr.f32.mxu0 0.0
      %1412 = vmatmul.mubr.f32.gmra.mrb[0].mxu0 %v1173
      %v1413 = vpop.f32.mrb[0].mxu0
      %v1414 = vadd.f32 0.0, %v1413
      %v1415 = vpop.f32.mrb[0].mxu0
      %1416 = vmatprep.mubr.f32.mxu0 0.0
      %1417 = vmatmul.mubr.f32.gmra.mrb[0].mxu0 %v1175
      %v1418 = vpop.f32.mrb[0].mxu0
      %v1419 = vadd.f32 0.0, %v1418
      %v1420 = vpop.f32.mrb[0].mxu0
      %1421 = vdwg.mxu0
      %v1422 = vadd.f32 %v851, %v1244
      %v1423 = vadd.f32 %v856, %v1249
      %v1424 = vadd.f32 %v861, %v1254
      %v1425 = vadd.f32 %v866, %v1259
      %v1426 = vadd.f32 %v871, %v1264
      %v1427 = vadd.f32 %v876, %v1269
      %v1428 = vadd.f32 %v881, %v1274
      %v1429 = vadd.f32 %v886, %v1279
      %v1430 = vadd.f32 %v891, %v1284
      %v1431 = vadd.f32 %v896, %v1289
      %v1432 = vadd.f32 %v901, %v1294
      %v1433 = vadd.f32 %v906, %v1299
      %v1434 = vadd.f32 %v911, %v1304
      %v1435 = vadd.f32 %v916, %v1309
      %v1436 = vadd.f32 %v921, %v1314
      %v1437 = vadd.f32 %v926, %v1319
      %v1438 = vadd.f32 %v931, %v1324
      %v1439 = vadd.f32 %v936, %v1329
      %v1440 = vadd.f32 %v941, %v1334
      %v1441 = vadd.f32 %v946, %v1339
      %v1442 = vadd.f32 %v951, %v1344
      %v1443 = vadd.f32 %v956, %v1349
      %v1444 = vadd.f32 %v961, %v1354
      %v1445 = vadd.f32 %v966, %v1359
      %v1446 = vadd.f32 %v971, %v1364
      %v1447 = vadd.f32 %v976, %v1369
      %v1448 = vadd.f32 %v981, %v1374
      %v1449 = vadd.f32 %v986, %v1379
      %v1450 = vadd.f32 %v991, %v1384
      %v1451 = vadd.f32 %v996, %v1389
      %v1452 = vadd.f32 %v1001, %v1394
      %v1453 = vadd.f32 %v1006, %v1399
      %v1454 = vadd.f32 %v1011, %v1404
      %v1455 = vadd.f32 %v1016, %v1409
      %v1456 = vadd.f32 %v1021, %v1414
      %v1457 = vadd.f32 %v1026, %v1419
      %s1458 = scalar_lea.vmem %s0, 24
      %v1459 = vld [vmem:[%s1458] sm:$0xff]
      %v1462 = vrot.slane %v276, 2
      %v1463 = vsel %vm1031, %v1103, %v1462
      %v1464 = vrot.slane %v277, 2
      %v1465 = vsel %vm1031, %v1462, %v1464
      %v1466 = vsel %vm394, %v1463, 0
      %v1468 = vsel %vm394, %v1465, 0
      %1470 = vmatprep.subr.mxu0 0.0
      %1471 = vmatpush1.msra.mxu0 %v1459
      %1472 = vmatprep.subr.mxu0 0.0
      %1473 = vmatpush1.msra.mxu0 0.0
      %1474 = vmatprep.subr.mxu0 0.0
      %1475 = vmatpush1.msra.mxu0 0.0
      %1476 = vmatprep.subr.mxu0 0.0
      %1477 = vmatpush1.msra.mxu0 0.0
      %1478 = vmatprep.subr.mxu0 0.0
      %1479 = vmatpush1.msra.mxu0 0.0
      %1480 = vmatprep.subr.mxu0 0.0
      %1481 = vmatpush1.msra.mxu0 0.0
      %1482 = vmatprep.subr.mxu0 0.0
      %1483 = vmatpush1.msra.mxu0 0.0
      %1484 = vmatprep.subr.mxu0 0.0
      %1485 = vmatpush1.msra.mxu0 0.0
      %1486 = vmatprep.subr.mxu0 0.0
      %1487 = vmatpush1.msra.mxu0 0.0
      %1488 = vmatprep.subr.mxu0 0.0
      %1489 = vmatpush1.msra.mxu0 0.0
      %1490 = vmatprep.subr.mxu0 0.0
      %1491 = vmatpush1.msra.mxu0 0.0
      %1492 = vmatprep.subr.mxu0 0.0
      %1493 = vmatpush1.msra.mxu0 0.0
      %1494 = vmatprep.subr.mxu0 0.0
      %1495 = vmatpush1.msra.mxu0 0.0
      %1496 = vmatprep.subr.mxu0 0.0
      %1497 = vmatpush1.msra.mxu0 0.0
      %1498 = vmatprep.subr.mxu0 0.0
      %1499 = vmatpush1.msra.mxu0 0.0
      %1500 = vmatprep.subr.mxu0 0.0
      %1501 = vmatpush1.msra.mxu0 0.0
      %1502 = vmatprep.subr.mxu0 0.0
      %1503 = vmatpush1.msra.mxu0 0.0
      %1504 = vmatprep.subr.mxu0 0.0
      %1505 = vmatpush1.msra.mxu0 0.0
      %1506 = vmatprep.subr.mxu0 0.0
      %1507 = vmatpush1.msra.mxu0 0.0
      %1508 = vmatprep.subr.mxu0 0.0
      %1509 = vmatpush1.msra.mxu0 0.0
      %1510 = vmatprep.subr.mxu0 0.0
      %1511 = vmatpush1.msra.mxu0 0.0
      %1512 = vmatprep.subr.mxu0 0.0
      %1513 = vmatpush1.msra.mxu0 0.0
      %1514 = vmatprep.subr.mxu0 0.0
      %1515 = vmatpush1.msra.mxu0 0.0
      %1516 = vmatprep.subr.mxu0 0.0
      %1517 = vmatpush1.msra.mxu0 0.0
      %1518 = vmatprep.subr.mxu0 0.0
      %1519 = vmatpush1.msra.mxu0 0.0
      %1520 = vmatprep.subr.mxu0 0.0
      %1521 = vmatpush1.msra.mxu0 0.0
      %1522 = vmatprep.subr.mxu0 0.0
      %1523 = vmatpush1.msra.mxu0 0.0
      %1524 = vmatprep.subr.mxu0 0.0
      %1525 = vmatpush1.msra.mxu0 0.0
      %1526 = vmatprep.subr.mxu0 0.0
      %1527 = vmatpush1.msra.mxu0 0.0
      %1528 = vmatprep.subr.mxu0 0.0
      %1529 = vmatpush1.msra.mxu0 0.0
      %1530 = vmatprep.subr.mxu0 0.0
      %1531 = vmatpush1.msra.mxu0 0.0
      %1532 = vmatprep.subr.mxu0 0.0
      %1533 = vmatpush1.msra.mxu0 0.0
      %1534 = vmatprep.mubr.f32.mxu0 0.0
      %1535 = vmatmul.mubr.f32.gmra.mrb[0].mxu0 %v1109
      %v1536 = vpop.f32.mrb[0].mxu0
      %v1537 = vadd.f32 0.0, %v1536
      %v1538 = vpop.f32.mrb[0].mxu0
      %1539 = vmatprep.mubr.f32.mxu0 0.0
      %1540 = vmatmul.mubr.f32.gmra.mrb[0].mxu0 %v1111
      %v1541 = vpop.f32.mrb[0].mxu0
      %v1542 = vadd.f32 0.0, %v1541
      %v1543 = vpop.f32.mrb[0].mxu0
      %1544 = vmatprep.mubr.f32.mxu0 0.0
      %1545 = vmatmul.mubr.f32.gmra.mrb[0].mxu0 %v1113
      %v1546 = vpop.f32.mrb[0].mxu0
      %v1547 = vadd.f32 0.0, %v1546
      %v1548 = vpop.f32.mrb[0].mxu0
      %1549 = vmatprep.mubr.f32.mxu0 0.0
      %1550 = vmatmul.mubr.f32.gmra.mrb[0].mxu0 %v1115
      %v1551 = vpop.f32.mrb[0].mxu0
      %v1552 = vadd.f32 0.0, %v1551
      %v1553 = vpop.f32.mrb[0].mxu0
      %1554 = vmatprep.mubr.f32.mxu0 0.0
      %1555 = vmatmul.mubr.f32.gmra.mrb[0].mxu0 %v1117
      %v1556 = vpop.f32.mrb[0].mxu0
      %v1557 = vadd.f32 0.0, %v1556
      %v1558 = vpop.f32.mrb[0].mxu0
      %1559 = vmatprep.mubr.f32.mxu0 0.0
      %1560 = vmatmul.mubr.f32.gmra.mrb[0].mxu0 %v1119
      %v1561 = vpop.f32.mrb[0].mxu0
      %v1562 = vadd.f32 0.0, %v1561
      %v1563 = vpop.f32.mrb[0].mxu0
      %1564 = vmatprep.mubr.f32.mxu0 0.0
      %1565 = vmatmul.mubr.f32.gmra.mrb[0].mxu0 %v1121
      %v1566 = vpop.f32.mrb[0].mxu0
      %v1567 = vadd.f32 0.0, %v1566
      %v1568 = vpop.f32.mrb[0].mxu0
      %1569 = vmatprep.mubr.f32.mxu0 0.0
      %1570 = vmatmul.mubr.f32.gmra.mrb[0].mxu0 %v1123
      %v1571 = vpop.f32.mrb[0].mxu0
      %v1572 = vadd.f32 0.0, %v1571
      %v1573 = vpop.f32.mrb[0].mxu0
      %1574 = vmatprep.mubr.f32.mxu0 0.0
      %1575 = vmatmul.mubr.f32.gmra.mrb[0].mxu0 %v1125
      %v1576 = vpop.f32.mrb[0].mxu0
      %v1577 = vadd.f32 0.0, %v1576
      %v1578 = vpop.f32.mrb[0].mxu0
      %1579 = vmatprep.mubr.f32.mxu0 0.0
      %1580 = vmatmul.mubr.f32.gmra.mrb[0].mxu0 %v1127
      %v1581 = vpop.f32.mrb[0].mxu0
      %v1582 = vadd.f32 0.0, %v1581
      %v1583 = vpop.f32.mrb[0].mxu0
      %1584 = vmatprep.mubr.f32.mxu0 0.0
      %1585 = vmatmul.mubr.f32.gmra.mrb[0].mxu0 %v1129
      %v1586 = vpop.f32.mrb[0].mxu0
      %v1587 = vadd.f32 0.0, %v1586
      %v1588 = vpop.f32.mrb[0].mxu0
      %1589 = vmatprep.mubr.f32.mxu0 0.0
      %1590 = vmatmul.mubr.f32.gmra.mrb[0].mxu0 %v1131
      %v1591 = vpop.f32.mrb[0].mxu0
      %v1592 = vadd.f32 0.0, %v1591
      %v1593 = vpop.f32.mrb[0].mxu0
      %1594 = vmatprep.mubr.f32.mxu0 0.0
      %1595 = vmatmul.mubr.f32.gmra.mrb[0].mxu0 %v1133
      %v1596 = vpop.f32.mrb[0].mxu0
      %v1597 = vadd.f32 0.0, %v1596
      %v1598 = vpop.f32.mrb[0].mxu0
      %1599 = vmatprep.mubr.f32.mxu0 0.0
      %1600 = vmatmul.mubr.f32.gmra.mrb[0].mxu0 %v1135
      %v1601 = vpop.f32.mrb[0].mxu0
      %v1602 = vadd.f32 0.0, %v1601
      %v1603 = vpop.f32.mrb[0].mxu0
      %1604 = vmatprep.mubr.f32.mxu0 0.0
      %1605 = vmatmul.mubr.f32.gmra.mrb[0].mxu0 %v1137
      %v1606 = vpop.f32.mrb[0].mxu0
      %v1607 = vadd.f32 0.0, %v1606
      %v1608 = vpop.f32.mrb[0].mxu0
      %1609 = vmatprep.mubr.f32.mxu0 0.0
      %1610 = vmatmul.mubr.f32.gmra.mrb[0].mxu0 %v1139
      %v1611 = vpop.f32.mrb[0].mxu0
      %v1612 = vadd.f32 0.0, %v1611
      %v1613 = vpop.f32.mrb[0].mxu0
      %1614 = vmatprep.mubr.f32.mxu0 0.0
      %1615 = vmatmul.mubr.f32.gmra.mrb[0].mxu0 %v1141
      %v1616 = vpop.f32.mrb[0].mxu0
      %v1617 = vadd.f32 0.0, %v1616
      %v1618 = vpop.f32.mrb[0].mxu0
      %1619 = vmatprep.mubr.f32.mxu0 0.0
      %1620 = vmatmul.mubr.f32.gmra.mrb[0].mxu0 %v1143
      %v1621 = vpop.f32.mrb[0].mxu0
      %v1622 = vadd.f32 0.0, %v1621
      %v1623 = vpop.f32.mrb[0].mxu0
      %1624 = vmatprep.mubr.f32.mxu0 0.0
      %1625 = vmatmul.mubr.f32.gmra.mrb[0].mxu0 %v1145
      %v1626 = vpop.f32.mrb[0].mxu0
      %v1627 = vadd.f32 0.0, %v1626
      %v1628 = vpop.f32.mrb[0].mxu0
      %1629 = vmatprep.mubr.f32.mxu0 0.0
      %1630 = vmatmul.mubr.f32.gmra.mrb[0].mxu0 %v1147
      %v1631 = vpop.f32.mrb[0].mxu0
      %v1632 = vadd.f32 0.0, %v1631
      %v1633 = vpop.f32.mrb[0].mxu0
      %1634 = vmatprep.mubr.f32.mxu0 0.0
      %1635 = vmatmul.mubr.f32.gmra.mrb[0].mxu0 %v1149
      %v1636 = vpop.f32.mrb[0].mxu0
      %v1637 = vadd.f32 0.0, %v1636
      %v1638 = vpop.f32.mrb[0].mxu0
      %1639 = vmatprep.mubr.f32.mxu0 0.0
      %1640 = vmatmul.mubr.f32.gmra.mrb[0].mxu0 %v1151
      %v1641 = vpop.f32.mrb[0].mxu0
      %v1642 = vadd.f32 0.0, %v1641
      %v1643 = vpop.f32.mrb[0].mxu0
      %1644 = vmatprep.mubr.f32.mxu0 0.0
      %1645 = vmatmul.mubr.f32.gmra.mrb[0].mxu0 %v1153
      %v1646 = vpop.f32.mrb[0].mxu0
      %v1647 = vadd.f32 0.0, %v1646
      %v1648 = vpop.f32.mrb[0].mxu0
      %1649 = vmatprep.mubr.f32.mxu0 0.0
      %1650 = vmatmul.mubr.f32.gmra.mrb[0].mxu0 %v1155
      %v1651 = vpop.f32.mrb[0].mxu0
      %v1652 = vadd.f32 0.0, %v1651
      %v1653 = vpop.f32.mrb[0].mxu0
      %1654 = vmatprep.mubr.f32.mxu0 0.0
      %1655 = vmatmul.mubr.f32.gmra.mrb[0].mxu0 %v1157
      %v1656 = vpop.f32.mrb[0].mxu0
      %v1657 = vadd.f32 0.0, %v1656
      %v1658 = vpop.f32.mrb[0].mxu0
      %1659 = vmatprep.mubr.f32.mxu0 0.0
      %1660 = vmatmul.mubr.f32.gmra.mrb[0].mxu0 %v1159
      %v1661 = vpop.f32.mrb[0].mxu0
      %v1662 = vadd.f32 0.0, %v1661
      %v1663 = vpop.f32.mrb[0].mxu0
      %1664 = vmatprep.mubr.f32.mxu0 0.0
      %1665 = vmatmul.mubr.f32.gmra.mrb[0].mxu0 %v1161
      %v1666 = vpop.f32.mrb[0].mxu0
      %v1667 = vadd.f32 0.0, %v1666
      %v1668 = vpop.f32.mrb[0].mxu0
      %1669 = vmatprep.mubr.f32.mxu0 0.0
      %1670 = vmatmul.mubr.f32.gmra.mrb[0].mxu0 %v1163
      %v1671 = vpop.f32.mrb[0].mxu0
      %v1672 = vadd.f32 0.0, %v1671
      %v1673 = vpop.f32.mrb[0].mxu0
      %1674 = vmatprep.mubr.f32.mxu0 0.0
      %1675 = vmatmul.mubr.f32.gmra.mrb[0].mxu0 %v1165
      %v1676 = vpop.f32.mrb[0].mxu0
      %v1677 = vadd.f32 0.0, %v1676
      %v1678 = vpop.f32.mrb[0].mxu0
      %1679 = vmatprep.mubr.f32.mxu0 0.0
      %1680 = vmatmul.mubr.f32.gmra.mrb[0].mxu0 %v1167
      %v1681 = vpop.f32.mrb[0].mxu0
      %v1682 = vadd.f32 0.0, %v1681
      %v1683 = vpop.f32.mrb[0].mxu0
      %1684 = vmatprep.mubr.f32.mxu0 0.0
      %1685 = vmatmul.mubr.f32.gmra.mrb[0].mxu0 %v1169
      %v1686 = vpop.f32.mrb[0].mxu0
      %v1687 = vadd.f32 0.0, %v1686
      %v1688 = vpop.f32.mrb[0].mxu0
      %1689 = vmatprep.mubr.f32.mxu0 0.0
      %1690 = vmatmul.mubr.f32.gmra.mrb[0].mxu0 %v1171
      %v1691 = vpop.f32.mrb[0].mxu0
      %v1692 = vadd.f32 0.0, %v1691
      %v1693 = vpop.f32.mrb[0].mxu0
      %1694 = vmatprep.mubr.f32.mxu0 0.0
      %1695 = vmatmul.mubr.f32.gmra.mrb[0].mxu0 %v1173
      %v1696 = vpop.f32.mrb[0].mxu0
      %v1697 = vadd.f32 0.0, %v1696
      %v1698 = vpop.f32.mrb[0].mxu0
      %1699 = vmatprep.mubr.f32.mxu0 0.0
      %1700 = vmatmul.mubr.f32.gmra.mrb[0].mxu0 %v1175
      %v1701 = vpop.f32.mrb[0].mxu0
      %v1702 = vadd.f32 0.0, %v1701
      %v1703 = vpop.f32.mrb[0].mxu0
      %1704 = vmatprep.mubr.f32.mxu0 0.0
      %1705 = vmatmul.mubr.f32.gmra.mrb[0].mxu0 %v1466
      %v1706 = vpop.f32.mrb[0].mxu0
      %v1707 = vadd.f32 0.0, %v1706
      %v1708 = vpop.f32.mrb[0].mxu0
      %1709 = vmatprep.mubr.f32.mxu0 0.0
      %1710 = vmatmul.mubr.f32.gmra.mrb[0].mxu0 %v1468
      %v1711 = vpop.f32.mrb[0].mxu0
      %v1712 = vadd.f32 0.0, %v1711
      %v1713 = vpop.f32.mrb[0].mxu0
      %1714 = vdwg.mxu0
      %v1715 = vadd.f32 %v1422, %v1537
      %v1716 = vadd.f32 %v1423, %v1542
      %v1717 = vadd.f32 %v1424, %v1547
      %v1718 = vadd.f32 %v1425, %v1552
      %v1719 = vadd.f32 %v1426, %v1557
      %v1720 = vadd.f32 %v1427, %v1562
      %v1721 = vadd.f32 %v1428, %v1567
      %v1722 = vadd.f32 %v1429, %v1572
      %v1723 = vadd.f32 %v1430, %v1577
      %v1724 = vadd.f32 %v1431, %v1582
      %v1725 = vadd.f32 %v1432, %v1587
      %v1726 = vadd.f32 %v1433, %v1592
      %v1727 = vadd.f32 %v1434, %v1597
      %v1728 = vadd.f32 %v1435, %v1602
      %v1729 = vadd.f32 %v1436, %v1607
      %v1730 = vadd.f32 %v1437, %v1612
      %v1731 = vadd.f32 %v1438, %v1617
      %v1732 = vadd.f32 %v1439, %v1622
      %v1733 = vadd.f32 %v1440, %v1627
      %v1734 = vadd.f32 %v1441, %v1632
      %v1735 = vadd.f32 %v1442, %v1637
      %v1736 = vadd.f32 %v1443, %v1642
      %v1737 = vadd.f32 %v1444, %v1647
      %v1738 = vadd.f32 %v1445, %v1652
      %v1739 = vadd.f32 %v1446, %v1657
      %v1740 = vadd.f32 %v1447, %v1662
      %v1741 = vadd.f32 %v1448, %v1667
      %v1742 = vadd.f32 %v1449, %v1672
      %v1743 = vadd.f32 %v1450, %v1677
      %v1744 = vadd.f32 %v1451, %v1682
      %v1745 = vadd.f32 %v1452, %v1687
      %v1746 = vadd.f32 %v1453, %v1692
      %v1747 = vadd.f32 %v1454, %v1697
      %v1748 = vadd.f32 %v1455, %v1702
      %v1749 = vadd.f32 %v1456, %v1707
      %v1750 = vadd.f32 %v1457, %v1712
      %s1751 = scalar_lea.vmem %s0, 32
      %v1752 = vld [vmem:[%s1751] sm:$0xff]
      %vm1753 = vcmask 1044480
      %v1754 = vrot.slane %v241, 3
      %v1755 = vrot.slane %v242, 3
      %v1756 = vsel %vm1753, %v1754, %v1755
      %v1757 = vrot.slane %v243, 3
      %v1758 = vsel %vm1753, %v1755, %v1757
      %v1759 = vrot.slane %v244, 3
      %v1760 = vsel %vm1753, %v1757, %v1759
      %v1761 = vrot.slane %v245, 3
      %v1762 = vsel %vm1753, %v1759, %v1761
      %v1763 = vrot.slane %v246, 3
      %v1764 = vsel %vm1753, %v1761, %v1763
      %v1765 = vrot.slane %v247, 3
      %v1766 = vsel %vm1753, %v1763, %v1765
      %v1767 = vrot.slane %v248, 3
      %v1768 = vsel %vm1753, %v1765, %v1767
      %v1769 = vrot.slane %v249, 3
      %v1770 = vsel %vm1753, %v1767, %v1769
      %v1771 = vrot.slane %v250, 3
      %v1772 = vsel %vm1753, %v1769, %v1771
      %v1773 = vrot.slane %v251, 3
      %v1774 = vsel %vm1753, %v1771, %v1773
      %v1775 = vrot.slane %v252, 3
      %v1776 = vsel %vm1753, %v1773, %v1775
      %v1777 = vrot.slane %v253, 3
      %v1778 = vsel %vm1753, %v1775, %v1777
      %v1779 = vrot.slane %v254, 3
      %v1780 = vsel %vm1753, %v1777, %v1779
      %v1781 = vrot.slane %v255, 3
      %v1782 = vsel %vm1753, %v1779, %v1781
      %v1783 = vrot.slane %v256, 3
      %v1784 = vsel %vm1753, %v1781, %v1783
      %v1785 = vrot.slane %v257, 3
      %v1786 = vsel %vm1753, %v1783, %v1785
      %v1787 = vrot.slane %v258, 3
      %v1788 = vsel %vm1753, %v1785, %v1787
      %v1789 = vrot.slane %v259, 3
      %v1790 = vsel %vm1753, %v1787, %v1789
      %v1791 = vrot.slane %v260, 3
      %v1792 = vsel %vm1753, %v1789, %v1791
      %v1793 = vrot.slane %v261, 3
      %v1794 = vsel %vm1753, %v1791, %v1793
      %v1795 = vrot.slane %v262, 3
      %v1796 = vsel %vm1753, %v1793, %v1795
      %v1797 = vrot.slane %v263, 3
      %v1798 = vsel %vm1753, %v1795, %v1797
      %v1799 = vrot.slane %v264, 3
      %v1800 = vsel %vm1753, %v1797, %v1799
      %v1801 = vrot.slane %v265, 3
      %v1802 = vsel %vm1753, %v1799, %v1801
      %v1803 = vrot.slane %v266, 3
      %v1804 = vsel %vm1753, %v1801, %v1803
      %v1805 = vrot.slane %v267, 3
      %v1806 = vsel %vm1753, %v1803, %v1805
      %v1807 = vrot.slane %v268, 3
      %v1808 = vsel %vm1753, %v1805, %v1807
      %v1809 = vrot.slane %v269, 3
      %v1810 = vsel %vm1753, %v1807, %v1809
      %v1811 = vrot.slane %v270, 3
      %v1812 = vsel %vm1753, %v1809, %v1811
      %v1813 = vrot.slane %v271, 3
      %v1814 = vsel %vm1753, %v1811, %v1813
      %v1815 = vrot.slane %v272, 3
      %v1816 = vsel %vm1753, %v1813, %v1815
      %v1817 = vrot.slane %v273, 3
      %v1818 = vsel %vm1753, %v1815, %v1817
      %v1819 = vrot.slane %v274, 3
      %v1820 = vsel %vm1753, %v1817, %v1819
      %v1821 = vrot.slane %v275, 3
      %v1822 = vsel %vm1753, %v1819, %v1821
      %v1823 = vrot.slane %v276, 3
      %v1824 = vsel %vm1753, %v1821, %v1823
      %v1825 = vrot.slane %v277, 3
      %v1826 = vsel %vm1753, %v1823, %v1825
      %v1827 = vsel %vm394, %v1756, 0
      %v1829 = vsel %vm394, %v1758, 0
      %v1831 = vsel %vm394, %v1760, 0
      %v1833 = vsel %vm394, %v1762, 0
      %v1835 = vsel %vm394, %v1764, 0
      %v1837 = vsel %vm394, %v1766, 0
      %v1839 = vsel %vm394, %v1768, 0
      %v1841 = vsel %vm394, %v1770, 0
      %v1843 = vsel %vm394, %v1772, 0
      %v1845 = vsel %vm394, %v1774, 0
      %v1847 = vsel %vm394, %v1776, 0
      %v1849 = vsel %vm394, %v1778, 0
      %v1851 = vsel %vm394, %v1780, 0
      %v1853 = vsel %vm394, %v1782, 0
      %v1855 = vsel %vm394, %v1784, 0
      %v1857 = vsel %vm394, %v1786, 0
      %v1859 = vsel %vm394, %v1788, 0
      %v1861 = vsel %vm394, %v1790, 0
      %v1863 = vsel %vm394, %v1792, 0
      %v1865 = vsel %vm394, %v1794, 0
      %v1867 = vsel %vm394, %v1796, 0
      %v1869 = vsel %vm394, %v1798, 0
      %v1871 = vsel %vm394, %v1800, 0
      %v1873 = vsel %vm394, %v1802, 0
      %v1875 = vsel %vm394, %v1804, 0
      %v1877 = vsel %vm394, %v1806, 0
      %v1879 = vsel %vm394, %v1808, 0
      %v1881 = vsel %vm394, %v1810, 0
      %v1883 = vsel %vm394, %v1812, 0
      %v1885 = vsel %vm394, %v1814, 0
      %v1887 = vsel %vm394, %v1816, 0
      %v1889 = vsel %vm394, %v1818, 0
      %v1891 = vsel %vm394, %v1820, 0
      %v1893 = vsel %vm394, %v1822, 0
      %v1895 = vsel %vm394, %v1824, 0
      %v1897 = vsel %vm394, %v1826, 0
      %1899 = vmatprep.subr.mxu0 0.0
      %1900 = vmatpush1.msra.mxu0 %v1752
      %1901 = vmatprep.subr.mxu0 0.0
      %1902 = vmatpush1.msra.mxu0 0.0
      %1903 = vmatprep.subr.mxu0 0.0
      %1904 = vmatpush1.msra.mxu0 0.0
      %1905 = vmatprep.subr.mxu0 0.0
      %1906 = vmatpush1.msra.mxu0 0.0
      %1907 = vmatprep.subr.mxu0 0.0
      %1908 = vmatpush1.msra.mxu0 0.0
      %1909 = vmatprep.subr.mxu0 0.0
      %1910 = vmatpush1.msra.mxu0 0.0
      %1911 = vmatprep.subr.mxu0 0.0
      %1912 = vmatpush1.msra.mxu0 0.0
      %1913 = vmatprep.subr.mxu0 0.0
      %1914 = vmatpush1.msra.mxu0 0.0
      %1915 = vmatprep.subr.mxu0 0.0
      %1916 = vmatpush1.msra.mxu0 0.0
      %1917 = vmatprep.subr.mxu0 0.0
      %1918 = vmatpush1.msra.mxu0 0.0
      %1919 = vmatprep.subr.mxu0 0.0
      %1920 = vmatpush1.msra.mxu0 0.0
      %1921 = vmatprep.subr.mxu0 0.0
      %1922 = vmatpush1.msra.mxu0 0.0
      %1923 = vmatprep.subr.mxu0 0.0
      %1924 = vmatpush1.msra.mxu0 0.0
      %1925 = vmatprep.subr.mxu0 0.0
      %1926 = vmatpush1.msra.mxu0 0.0
      %1927 = vmatprep.subr.mxu0 0.0
      %1928 = vmatpush1.msra.mxu0 0.0
      %1929 = vmatprep.subr.mxu0 0.0
      %1930 = vmatpush1.msra.mxu0 0.0
      %1931 = vmatprep.subr.mxu0 0.0
      %1932 = vmatpush1.msra.mxu0 0.0
      %1933 = vmatprep.subr.mxu0 0.0
      %1934 = vmatpush1.msra.mxu0 0.0
      %1935 = vmatprep.subr.mxu0 0.0
      %1936 = vmatpush1.msra.mxu0 0.0
      %1937 = vmatprep.subr.mxu0 0.0
      %1938 = vmatpush1.msra.mxu0 0.0
      %1939 = vmatprep.subr.mxu0 0.0
      %1940 = vmatpush1.msra.mxu0 0.0
      %1941 = vmatprep.subr.mxu0 0.0
      %1942 = vmatpush1.msra.mxu0 0.0
      %1943 = vmatprep.subr.mxu0 0.0
      %1944 = vmatpush1.msra.mxu0 0.0
      %1945 = vmatprep.subr.mxu0 0.0
      %1946 = vmatpush1.msra.mxu0 0.0
      %1947 = vmatprep.subr.mxu0 0.0
      %1948 = vmatpush1.msra.mxu0 0.0
      %1949 = vmatprep.subr.mxu0 0.0
      %1950 = vmatpush1.msra.mxu0 0.0
      %1951 = vmatprep.subr.mxu0 0.0
      %1952 = vmatpush1.msra.mxu0 0.0
      %1953 = vmatprep.subr.mxu0 0.0
      %1954 = vmatpush1.msra.mxu0 0.0
      %1955 = vmatprep.subr.mxu0 0.0
      %1956 = vmatpush1.msra.mxu0 0.0
      %1957 = vmatprep.subr.mxu0 0.0
      %1958 = vmatpush1.msra.mxu0 0.0
      %1959 = vmatprep.subr.mxu0 0.0
      %1960 = vmatpush1.msra.mxu0 0.0
      %1961 = vmatprep.subr.mxu0 0.0
      %1962 = vmatpush1.msra.mxu0 0.0
      %1963 = vmatprep.mubr.f32.mxu0 0.0
      %1964 = vmatmul.mubr.f32.gmra.mrb[0].mxu0 %v1827
      %v1965 = vpop.f32.mrb[0].mxu0
      %v1966 = vadd.f32 0.0, %v1965
      %v1967 = vpop.f32.mrb[0].mxu0
      %1968 = vmatprep.mubr.f32.mxu0 0.0
      %1969 = vmatmul.mubr.f32.gmra.mrb[0].mxu0 %v1829
      %v1970 = vpop.f32.mrb[0].mxu0
      %v1971 = vadd.f32 0.0, %v1970
      %v1972 = vpop.f32.mrb[0].mxu0
      %1973 = vmatprep.mubr.f32.mxu0 0.0
      %1974 = vmatmul.mubr.f32.gmra.mrb[0].mxu0 %v1831
      %v1975 = vpop.f32.mrb[0].mxu0
      %v1976 = vadd.f32 0.0, %v1975
      %v1977 = vpop.f32.mrb[0].mxu0
      %1978 = vmatprep.mubr.f32.mxu0 0.0
      %1979 = vmatmul.mubr.f32.gmra.mrb[0].mxu0 %v1833
      %v1980 = vpop.f32.mrb[0].mxu0
      %v1981 = vadd.f32 0.0, %v1980
      %v1982 = vpop.f32.mrb[0].mxu0
      %1983 = vmatprep.mubr.f32.mxu0 0.0
      %1984 = vmatmul.mubr.f32.gmra.mrb[0].mxu0 %v1835
      %v1985 = vpop.f32.mrb[0].mxu0
      %v1986 = vadd.f32 0.0, %v1985
      %v1987 = vpop.f32.mrb[0].mxu0
      %1988 = vmatprep.mubr.f32.mxu0 0.0
      %1989 = vmatmul.mubr.f32.gmra.mrb[0].mxu0 %v1837
      %v1990 = vpop.f32.mrb[0].mxu0
      %v1991 = vadd.f32 0.0, %v1990
      %v1992 = vpop.f32.mrb[0].mxu0
      %1993 = vmatprep.mubr.f32.mxu0 0.0
      %1994 = vmatmul.mubr.f32.gmra.mrb[0].mxu0 %v1839
      %v1995 = vpop.f32.mrb[0].mxu0
      %v1996 = vadd.f32 0.0, %v1995
      %v1997 = vpop.f32.mrb[0].mxu0
      %1998 = vmatprep.mubr.f32.mxu0 0.0
      %1999 = vmatmul.mubr.f32.gmra.mrb[0].mxu0 %v1841
      %v2000 = vpop.f32.mrb[0].mxu0
      %v2001 = vadd.f32 0.0, %v2000
      %v2002 = vpop.f32.mrb[0].mxu0
      %2003 = vmatprep.mubr.f32.mxu0 0.0
      %2004 = vmatmul.mubr.f32.gmra.mrb[0].mxu0 %v1843
      %v2005 = vpop.f32.mrb[0].mxu0
      %v2006 = vadd.f32 0.0, %v2005
      %v2007 = vpop.f32.mrb[0].mxu0
      %2008 = vmatprep.mubr.f32.mxu0 0.0
      %2009 = vmatmul.mubr.f32.gmra.mrb[0].mxu0 %v1845
      %v2010 = vpop.f32.mrb[0].mxu0
      %v2011 = vadd.f32 0.0, %v2010
      %v2012 = vpop.f32.mrb[0].mxu0
      %2013 = vmatprep.mubr.f32.mxu0 0.0
      %2014 = vmatmul.mubr.f32.gmra.mrb[0].mxu0 %v1847
      %v2015 = vpop.f32.mrb[0].mxu0
      %v2016 = vadd.f32 0.0, %v2015
      %v2017 = vpop.f32.mrb[0].mxu0
      %2018 = vmatprep.mubr.f32.mxu0 0.0
      %2019 = vmatmul.mubr.f32.gmra.mrb[0].mxu0 %v1849
      %v2020 = vpop.f32.mrb[0].mxu0
      %v2021 = vadd.f32 0.0, %v2020
      %v2022 = vpop.f32.mrb[0].mxu0
      %2023 = vmatprep.mubr.f32.mxu0 0.0
      %2024 = vmatmul.mubr.f32.gmra.mrb[0].mxu0 %v1851
      %v2025 = vpop.f32.mrb[0].mxu0
      %v2026 = vadd.f32 0.0, %v2025
      %v2027 = vpop.f32.mrb[0].mxu0
      %2028 = vmatprep.mubr.f32.mxu0 0.0
      %2029 = vmatmul.mubr.f32.gmra.mrb[0].mxu0 %v1853
      %v2030 = vpop.f32.mrb[0].mxu0
      %v2031 = vadd.f32 0.0, %v2030
      %v2032 = vpop.f32.mrb[0].mxu0
      %2033 = vmatprep.mubr.f32.mxu0 0.0
      %2034 = vmatmul.mubr.f32.gmra.mrb[0].mxu0 %v1855
      %v2035 = vpop.f32.mrb[0].mxu0
      %v2036 = vadd.f32 0.0, %v2035
      %v2037 = vpop.f32.mrb[0].mxu0
      %2038 = vmatprep.mubr.f32.mxu0 0.0
      %2039 = vmatmul.mubr.f32.gmra.mrb[0].mxu0 %v1857
      %v2040 = vpop.f32.mrb[0].mxu0
      %v2041 = vadd.f32 0.0, %v2040
      %v2042 = vpop.f32.mrb[0].mxu0
      %2043 = vmatprep.mubr.f32.mxu0 0.0
      %2044 = vmatmul.mubr.f32.gmra.mrb[0].mxu0 %v1859
      %v2045 = vpop.f32.mrb[0].mxu0
      %v2046 = vadd.f32 0.0, %v2045
      %v2047 = vpop.f32.mrb[0].mxu0
      %2048 = vmatprep.mubr.f32.mxu0 0.0
      %2049 = vmatmul.mubr.f32.gmra.mrb[0].mxu0 %v1861
      %v2050 = vpop.f32.mrb[0].mxu0
      %v2051 = vadd.f32 0.0, %v2050
      %v2052 = vpop.f32.mrb[0].mxu0
      %2053 = vmatprep.mubr.f32.mxu0 0.0
      %2054 = vmatmul.mubr.f32.gmra.mrb[0].mxu0 %v1863
      %v2055 = vpop.f32.mrb[0].mxu0
      %v2056 = vadd.f32 0.0, %v2055
      %v2057 = vpop.f32.mrb[0].mxu0
      %2058 = vmatprep.mubr.f32.mxu0 0.0
      %2059 = vmatmul.mubr.f32.gmra.mrb[0].mxu0 %v1865
      %v2060 = vpop.f32.mrb[0].mxu0
      %v2061 = vadd.f32 0.0, %v2060
      %v2062 = vpop.f32.mrb[0].mxu0
      %2063 = vmatprep.mubr.f32.mxu0 0.0
      %2064 = vmatmul.mubr.f32.gmra.mrb[0].mxu0 %v1867
      %v2065 = vpop.f32.mrb[0].mxu0
      %v2066 = vadd.f32 0.0, %v2065
      %v2067 = vpop.f32.mrb[0].mxu0
      %2068 = vmatprep.mubr.f32.mxu0 0.0
      %2069 = vmatmul.mubr.f32.gmra.mrb[0].mxu0 %v1869
      %v2070 = vpop.f32.mrb[0].mxu0
      %v2071 = vadd.f32 0.0, %v2070
      %v2072 = vpop.f32.mrb[0].mxu0
      %2073 = vmatprep.mubr.f32.mxu0 0.0
      %2074 = vmatmul.mubr.f32.gmra.mrb[0].mxu0 %v1871
      %v2075 = vpop.f32.mrb[0].mxu0
      %v2076 = vadd.f32 0.0, %v2075
      %v2077 = vpop.f32.mrb[0].mxu0
      %2078 = vmatprep.mubr.f32.mxu0 0.0
      %2079 = vmatmul.mubr.f32.gmra.mrb[0].mxu0 %v1873
      %v2080 = vpop.f32.mrb[0].mxu0
      %v2081 = vadd.f32 0.0, %v2080
      %v2082 = vpop.f32.mrb[0].mxu0
      %2083 = vmatprep.mubr.f32.mxu0 0.0
      %2084 = vmatmul.mubr.f32.gmra.mrb[0].mxu0 %v1875
      %v2085 = vpop.f32.mrb[0].mxu0
      %v2086 = vadd.f32 0.0, %v2085
      %v2087 = vpop.f32.mrb[0].mxu0
      %2088 = vmatprep.mubr.f32.mxu0 0.0
      %2089 = vmatmul.mubr.f32.gmra.mrb[0].mxu0 %v1877
      %v2090 = vpop.f32.mrb[0].mxu0
      %v2091 = vadd.f32 0.0, %v2090
      %v2092 = vpop.f32.mrb[0].mxu0
      %2093 = vmatprep.mubr.f32.mxu0 0.0
      %2094 = vmatmul.mubr.f32.gmra.mrb[0].mxu0 %v1879
      %v2095 = vpop.f32.mrb[0].mxu0
      %v2096 = vadd.f32 0.0, %v2095
      %v2097 = vpop.f32.mrb[0].mxu0
      %2098 = vmatprep.mubr.f32.mxu0 0.0
      %2099 = vmatmul.mubr.f32.gmra.mrb[0].mxu0 %v1881
      %v2100 = vpop.f32.mrb[0].mxu0
      %v2101 = vadd.f32 0.0, %v2100
      %v2102 = vpop.f32.mrb[0].mxu0
      %2103 = vmatprep.mubr.f32.mxu0 0.0
      %2104 = vmatmul.mubr.f32.gmra.mrb[0].mxu0 %v1883
      %v2105 = vpop.f32.mrb[0].mxu0
      %v2106 = vadd.f32 0.0, %v2105
      %v2107 = vpop.f32.mrb[0].mxu0
      %2108 = vmatprep.mubr.f32.mxu0 0.0
      %2109 = vmatmul.mubr.f32.gmra.mrb[0].mxu0 %v1885
      %v2110 = vpop.f32.mrb[0].mxu0
      %v2111 = vadd.f32 0.0, %v2110
      %v2112 = vpop.f32.mrb[0].mxu0
      %2113 = vmatprep.mubr.f32.mxu0 0.0
      %2114 = vmatmul.mubr.f32.gmra.mrb[0].mxu0 %v1887
      %v2115 = vpop.f32.mrb[0].mxu0
      %v2116 = vadd.f32 0.0, %v2115
      %v2117 = vpop.f32.mrb[0].mxu0
      %2118 = vmatprep.mubr.f32.mxu0 0.0
      %2119 = vmatmul.mubr.f32.gmra.mrb[0].mxu0 %v1889
      %v2120 = vpop.f32.mrb[0].mxu0
      %v2121 = vadd.f32 0.0, %v2120
      %v2122 = vpop.f32.mrb[0].mxu0
      %2123 = vmatprep.mubr.f32.mxu0 0.0
      %2124 = vmatmul.mubr.f32.gmra.mrb[0].mxu0 %v1891
      %v2125 = vpop.f32.mrb[0].mxu0
      %v2126 = vadd.f32 0.0, %v2125
      %v2127 = vpop.f32.mrb[0].mxu0
      %2128 = vmatprep.mubr.f32.mxu0 0.0
      %2129 = vmatmul.mubr.f32.gmra.mrb[0].mxu0 %v1893
      %v2130 = vpop.f32.mrb[0].mxu0
      %v2131 = vadd.f32 0.0, %v2130
      %v2132 = vpop.f32.mrb[0].mxu0
      %2133 = vmatprep.mubr.f32.mxu0 0.0
      %2134 = vmatmul.mubr.f32.gmra.mrb[0].mxu0 %v1895
      %v2135 = vpop.f32.mrb[0].mxu0
      %v2136 = vadd.f32 0.0, %v2135
      %v2137 = vpop.f32.mrb[0].mxu0
      %2138 = vmatprep.mubr.f32.mxu0 0.0
      %2139 = vmatmul.mubr.f32.gmra.mrb[0].mxu0 %v1897
      %v2140 = vpop.f32.mrb[0].mxu0
      %v2141 = vadd.f32 0.0, %v2140
      %v2142 = vpop.f32.mrb[0].mxu0
      %2143 = vdwg.mxu0
      %v2144 = vadd.f32 %v1715, %v1966
      %v2145 = vadd.f32 %v1716, %v1971
      %v2146 = vadd.f32 %v1717, %v1976
      %v2147 = vadd.f32 %v1718, %v1981
      %v2148 = vadd.f32 %v1719, %v1986
      %v2149 = vadd.f32 %v1720, %v1991
      %v2150 = vadd.f32 %v1721, %v1996
      %v2151 = vadd.f32 %v1722, %v2001
      %v2152 = vadd.f32 %v1723, %v2006
      %v2153 = vadd.f32 %v1724, %v2011
      %v2154 = vadd.f32 %v1725, %v2016
      %v2155 = vadd.f32 %v1726, %v2021
      %v2156 = vadd.f32 %v1727, %v2026
      %v2157 = vadd.f32 %v1728, %v2031
      %v2158 = vadd.f32 %v1729, %v2036
      %v2159 = vadd.f32 %v1730, %v2041
      %v2160 = vadd.f32 %v1731, %v2046
      %v2161 = vadd.f32 %v1732, %v2051
      %v2162 = vadd.f32 %v1733, %v2056
      %v2163 = vadd.f32 %v1734, %v2061
      %v2164 = vadd.f32 %v1735, %v2066
      %v2165 = vadd.f32 %v1736, %v2071
      %v2166 = vadd.f32 %v1737, %v2076
      %v2167 = vadd.f32 %v1738, %v2081
      %v2168 = vadd.f32 %v1739, %v2086
      %v2169 = vadd.f32 %v1740, %v2091
      %v2170 = vadd.f32 %v1741, %v2096
      %v2171 = vadd.f32 %v1742, %v2101
      %v2172 = vadd.f32 %v1743, %v2106
      %v2173 = vadd.f32 %v1744, %v2111
      %v2174 = vadd.f32 %v1745, %v2116
      %v2175 = vadd.f32 %v1746, %v2121
      %v2176 = vadd.f32 %v1747, %v2126
      %v2177 = vadd.f32 %v1748, %v2131
      %v2178 = vadd.f32 %v1749, %v2136
      %v2179 = vadd.f32 %v1750, %v2141
      %s2180 = scalar_lea.vmem %s0, 40
      %v2181 = vld [vmem:[%s2180] sm:$0xff]
      %vm2182 = vcmask 1043456
      %v2183 = vrot.slane %v241, 4
      %v2184 = vrot.slane %v242, 4
      %v2185 = vsel %vm2182, %v2183, %v2184
      %v2186 = vrot.slane %v243, 4
      %v2187 = vsel %vm2182, %v2184, %v2186
      %v2188 = vrot.slane %v244, 4
      %v2189 = vsel %vm2182, %v2186, %v2188
      %v2190 = vrot.slane %v245, 4
      %v2191 = vsel %vm2182, %v2188, %v2190
      %v2192 = vrot.slane %v246, 4
      %v2193 = vsel %vm2182, %v2190, %v2192
      %v2194 = vrot.slane %v247, 4
      %v2195 = vsel %vm2182, %v2192, %v2194
      %v2196 = vrot.slane %v248, 4
      %v2197 = vsel %vm2182, %v2194, %v2196
      %v2198 = vrot.slane %v249, 4
      %v2199 = vsel %vm2182, %v2196, %v2198
      %v2200 = vrot.slane %v250, 4
      %v2201 = vsel %vm2182, %v2198, %v2200
      %v2202 = vrot.slane %v251, 4
      %v2203 = vsel %vm2182, %v2200, %v2202
      %v2204 = vrot.slane %v252, 4
      %v2205 = vsel %vm2182, %v2202, %v2204
      %v2206 = vrot.slane %v253, 4
      %v2207 = vsel %vm2182, %v2204, %v2206
      %v2208 = vrot.slane %v254, 4
      %v2209 = vsel %vm2182, %v2206, %v2208
      %v2210 = vrot.slane %v255, 4
      %v2211 = vsel %vm2182, %v2208, %v2210
      %v2212 = vrot.slane %v256, 4
      %v2213 = vsel %vm2182, %v2210, %v2212
      %v2214 = vrot.slane %v257, 4
      %v2215 = vsel %vm2182, %v2212, %v2214
      %v2216 = vrot.slane %v258, 4
      %v2217 = vsel %vm2182, %v2214, %v2216
      %v2218 = vrot.slane %v259, 4
      %v2219 = vsel %vm2182, %v2216, %v2218
      %v2220 = vrot.slane %v260, 4
      %v2221 = vsel %vm2182, %v2218, %v2220
      %v2222 = vrot.slane %v261, 4
      %v2223 = vsel %vm2182, %v2220, %v2222
      %v2224 = vrot.slane %v262, 4
      %v2225 = vsel %vm2182, %v2222, %v2224
      %v2226 = vrot.slane %v263, 4
      %v2227 = vsel %vm2182, %v2224, %v2226
      %v2228 = vrot.slane %v264, 4
      %v2229 = vsel %vm2182, %v2226, %v2228
      %v2230 = vrot.slane %v265, 4
      %v2231 = vsel %vm2182, %v2228, %v2230
      %v2232 = vrot.slane %v266, 4
      %v2233 = vsel %vm2182, %v2230, %v2232
      %v2234 = vrot.slane %v267, 4
      %v2235 = vsel %vm2182, %v2232, %v2234
      %v2236 = vrot.slane %v268, 4
      %v2237 = vsel %vm2182, %v2234, %v2236
      %v2238 = vrot.slane %v269, 4
      %v2239 = vsel %vm2182, %v2236, %v2238
      %v2240 = vrot.slane %v270, 4
      %v2241 = vsel %vm2182, %v2238, %v2240
      %v2242 = vrot.slane %v271, 4
      %v2243 = vsel %vm2182, %v2240, %v2242
      %v2244 = vrot.slane %v272, 4
      %v2245 = vsel %vm2182, %v2242, %v2244
      %v2246 = vrot.slane %v273, 4
      %v2247 = vsel %vm2182, %v2244, %v2246
      %v2248 = vrot.slane %v274, 4
      %v2249 = vsel %vm2182, %v2246, %v2248
      %v2250 = vrot.slane %v275, 4
      %v2251 = vsel %vm2182, %v2248, %v2250
      %v2252 = vrot.slane %v276, 4
      %v2253 = vsel %vm2182, %v2250, %v2252
      %v2254 = vrot.slane %v277, 4
      %v2255 = vsel %vm2182, %v2252, %v2254
      %v2256 = vsel %vm394, %v2185, 0
      %v2258 = vsel %vm394, %v2187, 0
      %v2260 = vsel %vm394, %v2189, 0
      %v2262 = vsel %vm394, %v2191, 0
      %v2264 = vsel %vm394, %v2193, 0
      %v2266 = vsel %vm394, %v2195, 0
      %v2268 = vsel %vm394, %v2197, 0
      %v2270 = vsel %vm394, %v2199, 0
      %v2272 = vsel %vm394, %v2201, 0
      %v2274 = vsel %vm394, %v2203, 0
      %v2276 = vsel %vm394, %v2205, 0
      %v2278 = vsel %vm394, %v2207, 0
      %v2280 = vsel %vm394, %v2209, 0
      %v2282 = vsel %vm394, %v2211, 0
      %v2284 = vsel %vm394, %v2213, 0
      %v2286 = vsel %vm394, %v2215, 0
      %v2288 = vsel %vm394, %v2217, 0
      %v2290 = vsel %vm394, %v2219, 0
      %v2292 = vsel %vm394, %v2221, 0
      %v2294 = vsel %vm394, %v2223, 0
      %v2296 = vsel %vm394, %v2225, 0
      %v2298 = vsel %vm394, %v2227, 0
      %v2300 = vsel %vm394, %v2229, 0
      %v2302 = vsel %vm394, %v2231, 0
      %v2304 = vsel %vm394, %v2233, 0
      %v2306 = vsel %vm394, %v2235, 0
      %v2308 = vsel %vm394, %v2237, 0
      %v2310 = vsel %vm394, %v2239, 0
      %v2312 = vsel %vm394, %v2241, 0
      %v2314 = vsel %vm394, %v2243, 0
      %v2316 = vsel %vm394, %v2245, 0
      %v2318 = vsel %vm394, %v2247, 0
      %v2320 = vsel %vm394, %v2249, 0
      %v2322 = vsel %vm394, %v2251, 0
      %v2324 = vsel %vm394, %v2253, 0
      %v2326 = vsel %vm394, %v2255, 0
      %2328 = vmatprep.subr.mxu0 0.0
      %2329 = vmatpush1.msra.mxu0 %v2181
      %2330 = vmatprep.subr.mxu0 0.0
      %2331 = vmatpush1.msra.mxu0 0.0
      %2332 = vmatprep.subr.mxu0 0.0
      %2333 = vmatpush1.msra.mxu0 0.0
      %2334 = vmatprep.subr.mxu0 0.0
      %2335 = vmatpush1.msra.mxu0 0.0
      %2336 = vmatprep.subr.mxu0 0.0
      %2337 = vmatpush1.msra.mxu0 0.0
      %2338 = vmatprep.subr.mxu0 0.0
      %2339 = vmatpush1.msra.mxu0 0.0
      %2340 = vmatprep.subr.mxu0 0.0
      %2341 = vmatpush1.msra.mxu0 0.0
      %2342 = vmatprep.subr.mxu0 0.0
      %2343 = vmatpush1.msra.mxu0 0.0
      %2344 = vmatprep.subr.mxu0 0.0
      %2345 = vmatpush1.msra.mxu0 0.0
      %2346 = vmatprep.subr.mxu0 0.0
      %2347 = vmatpush1.msra.mxu0 0.0
      %2348 = vmatprep.subr.mxu0 0.0
      %2349 = vmatpush1.msra.mxu0 0.0
      %2350 = vmatprep.subr.mxu0 0.0
      %2351 = vmatpush1.msra.mxu0 0.0
      %2352 = vmatprep.subr.mxu0 0.0
      %2353 = vmatpush1.msra.mxu0 0.0
      %2354 = vmatprep.subr.mxu0 0.0
      %2355 = vmatpush1.msra.mxu0 0.0
      %2356 = vmatprep.subr.mxu0 0.0
      %2357 = vmatpush1.msra.mxu0 0.0
      %2358 = vmatprep.subr.mxu0 0.0
      %2359 = vmatpush1.msra.mxu0 0.0
      %2360 = vmatprep.subr.mxu0 0.0
      %2361 = vmatpush1.msra.mxu0 0.0
      %2362 = vmatprep.subr.mxu0 0.0
      %2363 = vmatpush1.msra.mxu0 0.0
      %2364 = vmatprep.subr.mxu0 0.0
      %2365 = vmatpush1.msra.mxu0 0.0
      %2366 = vmatprep.subr.mxu0 0.0
      %2367 = vmatpush1.msra.mxu0 0.0
      %2368 = vmatprep.subr.mxu0 0.0
      %2369 = vmatpush1.msra.mxu0 0.0
      %2370 = vmatprep.subr.mxu0 0.0
      %2371 = vmatpush1.msra.mxu0 0.0
      %2372 = vmatprep.subr.mxu0 0.0
      %2373 = vmatpush1.msra.mxu0 0.0
      %2374 = vmatprep.subr.mxu0 0.0
      %2375 = vmatpush1.msra.mxu0 0.0
      %2376 = vmatprep.subr.mxu0 0.0
      %2377 = vmatpush1.msra.mxu0 0.0
      %2378 = vmatprep.subr.mxu0 0.0
      %2379 = vmatpush1.msra.mxu0 0.0
      %2380 = vmatprep.subr.mxu0 0.0
      %2381 = vmatpush1.msra.mxu0 0.0
      %2382 = vmatprep.subr.mxu0 0.0
      %2383 = vmatpush1.msra.mxu0 0.0
      %2384 = vmatprep.subr.mxu0 0.0
      %2385 = vmatpush1.msra.mxu0 0.0
      %2386 = vmatprep.subr.mxu0 0.0
      %2387 = vmatpush1.msra.mxu0 0.0
      %2388 = vmatprep.subr.mxu0 0.0
      %2389 = vmatpush1.msra.mxu0 0.0
      %2390 = vmatprep.subr.mxu0 0.0
      %2391 = vmatpush1.msra.mxu0 0.0
      %2392 = vmatprep.mubr.f32.mxu0 0.0
      %2393 = vmatmul.mubr.f32.gmra.mrb[0].mxu0 %v2256
      %v2394 = vpop.f32.mrb[0].mxu0
      %v2395 = vadd.f32 0.0, %v2394
      %v2396 = vpop.f32.mrb[0].mxu0
      %2397 = vmatprep.mubr.f32.mxu0 0.0
      %2398 = vmatmul.mubr.f32.gmra.mrb[0].mxu0 %v2258
      %v2399 = vpop.f32.mrb[0].mxu0
      %v2400 = vadd.f32 0.0, %v2399
      %v2401 = vpop.f32.mrb[0].mxu0
      %2402 = vmatprep.mubr.f32.mxu0 0.0
      %2403 = vmatmul.mubr.f32.gmra.mrb[0].mxu0 %v2260
      %v2404 = vpop.f32.mrb[0].mxu0
      %v2405 = vadd.f32 0.0, %v2404
      %v2406 = vpop.f32.mrb[0].mxu0
      %2407 = vmatprep.mubr.f32.mxu0 0.0
      %2408 = vmatmul.mubr.f32.gmra.mrb[0].mxu0 %v2262
      %v2409 = vpop.f32.mrb[0].mxu0
      %v2410 = vadd.f32 0.0, %v2409
      %v2411 = vpop.f32.mrb[0].mxu0
      %2412 = vmatprep.mubr.f32.mxu0 0.0
      %2413 = vmatmul.mubr.f32.gmra.mrb[0].mxu0 %v2264
      %v2414 = vpop.f32.mrb[0].mxu0
      %v2415 = vadd.f32 0.0, %v2414
      %v2416 = vpop.f32.mrb[0].mxu0
      %2417 = vmatprep.mubr.f32.mxu0 0.0
      %2418 = vmatmul.mubr.f32.gmra.mrb[0].mxu0 %v2266
      %v2419 = vpop.f32.mrb[0].mxu0
      %v2420 = vadd.f32 0.0, %v2419
      %v2421 = vpop.f32.mrb[0].mxu0
      %2422 = vmatprep.mubr.f32.mxu0 0.0
      %2423 = vmatmul.mubr.f32.gmra.mrb[0].mxu0 %v2268
      %v2424 = vpop.f32.mrb[0].mxu0
      %v2425 = vadd.f32 0.0, %v2424
      %v2426 = vpop.f32.mrb[0].mxu0
      %2427 = vmatprep.mubr.f32.mxu0 0.0
      %2428 = vmatmul.mubr.f32.gmra.mrb[0].mxu0 %v2270
      %v2429 = vpop.f32.mrb[0].mxu0
      %v2430 = vadd.f32 0.0, %v2429
      %v2431 = vpop.f32.mrb[0].mxu0
      %2432 = vmatprep.mubr.f32.mxu0 0.0
      %2433 = vmatmul.mubr.f32.gmra.mrb[0].mxu0 %v2272
      %v2434 = vpop.f32.mrb[0].mxu0
      %v2435 = vadd.f32 0.0, %v2434
      %v2436 = vpop.f32.mrb[0].mxu0
      %2437 = vmatprep.mubr.f32.mxu0 0.0
      %2438 = vmatmul.mubr.f32.gmra.mrb[0].mxu0 %v2274
      %v2439 = vpop.f32.mrb[0].mxu0
      %v2440 = vadd.f32 0.0, %v2439
      %v2441 = vpop.f32.mrb[0].mxu0
      %2442 = vmatprep.mubr.f32.mxu0 0.0
      %2443 = vmatmul.mubr.f32.gmra.mrb[0].mxu0 %v2276
      %v2444 = vpop.f32.mrb[0].mxu0
      %v2445 = vadd.f32 0.0, %v2444
      %v2446 = vpop.f32.mrb[0].mxu0
      %2447 = vmatprep.mubr.f32.mxu0 0.0
      %2448 = vmatmul.mubr.f32.gmra.mrb[0].mxu0 %v2278
      %v2449 = vpop.f32.mrb[0].mxu0
      %v2450 = vadd.f32 0.0, %v2449
      %v2451 = vpop.f32.mrb[0].mxu0
      %2452 = vmatprep.mubr.f32.mxu0 0.0
      %2453 = vmatmul.mubr.f32.gmra.mrb[0].mxu0 %v2280
      %v2454 = vpop.f32.mrb[0].mxu0
      %v2455 = vadd.f32 0.0, %v2454
      %v2456 = vpop.f32.mrb[0].mxu0
      %2457 = vmatprep.mubr.f32.mxu0 0.0
      %2458 = vmatmul.mubr.f32.gmra.mrb[0].mxu0 %v2282
      %v2459 = vpop.f32.mrb[0].mxu0
      %v2460 = vadd.f32 0.0, %v2459
      %v2461 = vpop.f32.mrb[0].mxu0
      %2462 = vmatprep.mubr.f32.mxu0 0.0
      %2463 = vmatmul.mubr.f32.gmra.mrb[0].mxu0 %v2284
      %v2464 = vpop.f32.mrb[0].mxu0
      %v2465 = vadd.f32 0.0, %v2464
      %v2466 = vpop.f32.mrb[0].mxu0
      %2467 = vmatprep.mubr.f32.mxu0 0.0
      %2468 = vmatmul.mubr.f32.gmra.mrb[0].mxu0 %v2286
      %v2469 = vpop.f32.mrb[0].mxu0
      %v2470 = vadd.f32 0.0, %v2469
      %v2471 = vpop.f32.mrb[0].mxu0
      %2472 = vmatprep.mubr.f32.mxu0 0.0
      %2473 = vmatmul.mubr.f32.gmra.mrb[0].mxu0 %v2288
      %v2474 = vpop.f32.mrb[0].mxu0
      %v2475 = vadd.f32 0.0, %v2474
      %v2476 = vpop.f32.mrb[0].mxu0
      %2477 = vmatprep.mubr.f32.mxu0 0.0
      %2478 = vmatmul.mubr.f32.gmra.mrb[0].mxu0 %v2290
      %v2479 = vpop.f32.mrb[0].mxu0
      %v2480 = vadd.f32 0.0, %v2479
      %v2481 = vpop.f32.mrb[0].mxu0
      %2482 = vmatprep.mubr.f32.mxu0 0.0
      %2483 = vmatmul.mubr.f32.gmra.mrb[0].mxu0 %v2292
      %v2484 = vpop.f32.mrb[0].mxu0
      %v2485 = vadd.f32 0.0, %v2484
      %v2486 = vpop.f32.mrb[0].mxu0
      %2487 = vmatprep.mubr.f32.mxu0 0.0
      %2488 = vmatmul.mubr.f32.gmra.mrb[0].mxu0 %v2294
      %v2489 = vpop.f32.mrb[0].mxu0
      %v2490 = vadd.f32 0.0, %v2489
      %v2491 = vpop.f32.mrb[0].mxu0
      %2492 = vmatprep.mubr.f32.mxu0 0.0
      %2493 = vmatmul.mubr.f32.gmra.mrb[0].mxu0 %v2296
      %v2494 = vpop.f32.mrb[0].mxu0
      %v2495 = vadd.f32 0.0, %v2494
      %v2496 = vpop.f32.mrb[0].mxu0
      %2497 = vmatprep.mubr.f32.mxu0 0.0
      %2498 = vmatmul.mubr.f32.gmra.mrb[0].mxu0 %v2298
      %v2499 = vpop.f32.mrb[0].mxu0
      %v2500 = vadd.f32 0.0, %v2499
      %v2501 = vpop.f32.mrb[0].mxu0
      %2502 = vmatprep.mubr.f32.mxu0 0.0
      %2503 = vmatmul.mubr.f32.gmra.mrb[0].mxu0 %v2300
      %v2504 = vpop.f32.mrb[0].mxu0
      %v2505 = vadd.f32 0.0, %v2504
      %v2506 = vpop.f32.mrb[0].mxu0
      %2507 = vmatprep.mubr.f32.mxu0 0.0
      %2508 = vmatmul.mubr.f32.gmra.mrb[0].mxu0 %v2302
      %v2509 = vpop.f32.mrb[0].mxu0
      %v2510 = vadd.f32 0.0, %v2509
      %v2511 = vpop.f32.mrb[0].mxu0
      %2512 = vmatprep.mubr.f32.mxu0 0.0
      %2513 = vmatmul.mubr.f32.gmra.mrb[0].mxu0 %v2304
      %v2514 = vpop.f32.mrb[0].mxu0
      %v2515 = vadd.f32 0.0, %v2514
      %v2516 = vpop.f32.mrb[0].mxu0
      %2517 = vmatprep.mubr.f32.mxu0 0.0
      %2518 = vmatmul.mubr.f32.gmra.mrb[0].mxu0 %v2306
      %v2519 = vpop.f32.mrb[0].mxu0
      %v2520 = vadd.f32 0.0, %v2519
      %v2521 = vpop.f32.mrb[0].mxu0
      %2522 = vmatprep.mubr.f32.mxu0 0.0
      %2523 = vmatmul.mubr.f32.gmra.mrb[0].mxu0 %v2308
      %v2524 = vpop.f32.mrb[0].mxu0
      %v2525 = vadd.f32 0.0, %v2524
      %v2526 = vpop.f32.mrb[0].mxu0
      %2527 = vmatprep.mubr.f32.mxu0 0.0
      %2528 = vmatmul.mubr.f32.gmra.mrb[0].mxu0 %v2310
      %v2529 = vpop.f32.mrb[0].mxu0
      %v2530 = vadd.f32 0.0, %v2529
      %v2531 = vpop.f32.mrb[0].mxu0
      %2532 = vmatprep.mubr.f32.mxu0 0.0
      %2533 = vmatmul.mubr.f32.gmra.mrb[0].mxu0 %v2312
      %v2534 = vpop.f32.mrb[0].mxu0
      %v2535 = vadd.f32 0.0, %v2534
      %v2536 = vpop.f32.mrb[0].mxu0
      %2537 = vmatprep.mubr.f32.mxu0 0.0
      %2538 = vmatmul.mubr.f32.gmra.mrb[0].mxu0 %v2314
      %v2539 = vpop.f32.mrb[0].mxu0
      %v2540 = vadd.f32 0.0, %v2539
      %v2541 = vpop.f32.mrb[0].mxu0
      %2542 = vmatprep.mubr.f32.mxu0 0.0
      %2543 = vmatmul.mubr.f32.gmra.mrb[0].mxu0 %v2316
      %v2544 = vpop.f32.mrb[0].mxu0
      %v2545 = vadd.f32 0.0, %v2544
      %v2546 = vpop.f32.mrb[0].mxu0
      %2547 = vmatprep.mubr.f32.mxu0 0.0
      %2548 = vmatmul.mubr.f32.gmra.mrb[0].mxu0 %v2318
      %v2549 = vpop.f32.mrb[0].mxu0
      %v2550 = vadd.f32 0.0, %v2549
      %v2551 = vpop.f32.mrb[0].mxu0
      %2552 = vmatprep.mubr.f32.mxu0 0.0
      %2553 = vmatmul.mubr.f32.gmra.mrb[0].mxu0 %v2320
      %v2554 = vpop.f32.mrb[0].mxu0
      %v2555 = vadd.f32 0.0, %v2554
      %v2556 = vpop.f32.mrb[0].mxu0
      %2557 = vmatprep.mubr.f32.mxu0 0.0
      %2558 = vmatmul.mubr.f32.gmra.mrb[0].mxu0 %v2322
      %v2559 = vpop.f32.mrb[0].mxu0
      %v2560 = vadd.f32 0.0, %v2559
      %v2561 = vpop.f32.mrb[0].mxu0
      %2562 = vmatprep.mubr.f32.mxu0 0.0
      %2563 = vmatmul.mubr.f32.gmra.mrb[0].mxu0 %v2324
      %v2564 = vpop.f32.mrb[0].mxu0
      %v2565 = vadd.f32 0.0, %v2564
      %v2566 = vpop.f32.mrb[0].mxu0
      %2567 = vmatprep.mubr.f32.mxu0 0.0
      %2568 = vmatmul.mubr.f32.gmra.mrb[0].mxu0 %v2326
      %v2569 = vpop.f32.mrb[0].mxu0
      %v2570 = vadd.f32 0.0, %v2569
      %v2571 = vpop.f32.mrb[0].mxu0
      %2572 = vdwg.mxu0
      %v2573 = vadd.f32 %v2144, %v2395
      %v2574 = vadd.f32 %v2145, %v2400
      %v2575 = vadd.f32 %v2146, %v2405
      %v2576 = vadd.f32 %v2147, %v2410
      %v2577 = vadd.f32 %v2148, %v2415
      %v2578 = vadd.f32 %v2149, %v2420
      %v2579 = vadd.f32 %v2150, %v2425
      %v2580 = vadd.f32 %v2151, %v2430
      %v2581 = vadd.f32 %v2152, %v2435
      %v2582 = vadd.f32 %v2153, %v2440
      %v2583 = vadd.f32 %v2154, %v2445
      %v2584 = vadd.f32 %v2155, %v2450
      %v2585 = vadd.f32 %v2156, %v2455
      %v2586 = vadd.f32 %v2157, %v2460
      %v2587 = vadd.f32 %v2158, %v2465
      %v2588 = vadd.f32 %v2159, %v2470
      %v2589 = vadd.f32 %v2160, %v2475
      %v2590 = vadd.f32 %v2161, %v2480
      %v2591 = vadd.f32 %v2162, %v2485
      %v2592 = vadd.f32 %v2163, %v2490
      %v2593 = vadd.f32 %v2164, %v2495
      %v2594 = vadd.f32 %v2165, %v2500
      %v2595 = vadd.f32 %v2166, %v2505
      %v2596 = vadd.f32 %v2167, %v2510
      %v2597 = vadd.f32 %v2168, %v2515
      %v2598 = vadd.f32 %v2169, %v2520
      %v2599 = vadd.f32 %v2170, %v2525
      %v2600 = vadd.f32 %v2171, %v2530
      %v2601 = vadd.f32 %v2172, %v2535
      %v2602 = vadd.f32 %v2173, %v2540
      %v2603 = vadd.f32 %v2174, %v2545
      %v2604 = vadd.f32 %v2175, %v2550
      %v2605 = vadd.f32 %v2176, %v2555
      %v2606 = vadd.f32 %v2177, %v2560
      %v2607 = vadd.f32 %v2178, %v2565
      %v2608 = vadd.f32 %v2179, %v2570
      %s2609 = scalar_lea.vmem %s0, 48
      %v2610 = vld [vmem:[%s2609] sm:$0xff]
      %v2613 = vrot.slane %v278, 4
      %v2614 = vsel %vm2182, %v2254, %v2613
      %v2615 = vrot.slane %v279, 4
      %v2616 = vsel %vm2182, %v2613, %v2615
      %v2617 = vsel %vm394, %v2614, 0
      %v2619 = vsel %vm394, %v2616, 0
      %2621 = vmatprep.subr.mxu0 0.0
      %2622 = vmatpush1.msra.mxu0 %v2610
      %2623 = vmatprep.subr.mxu0 0.0
      %2624 = vmatpush1.msra.mxu0 0.0
      %2625 = vmatprep.subr.mxu0 0.0
      %2626 = vmatpush1.msra.mxu0 0.0
      %2627 = vmatprep.subr.mxu0 0.0
      %2628 = vmatpush1.msra.mxu0 0.0
      %2629 = vmatprep.subr.mxu0 0.0
      %2630 = vmatpush1.msra.mxu0 0.0
      %2631 = vmatprep.subr.mxu0 0.0
      %2632 = vmatpush1.msra.mxu0 0.0
      %2633 = vmatprep.subr.mxu0 0.0
      %2634 = vmatpush1.msra.mxu0 0.0
      %2635 = vmatprep.subr.mxu0 0.0
      %2636 = vmatpush1.msra.mxu0 0.0
      %2637 = vmatprep.subr.mxu0 0.0
      %2638 = vmatpush1.msra.mxu0 0.0
      %2639 = vmatprep.subr.mxu0 0.0
      %2640 = vmatpush1.msra.mxu0 0.0
      %2641 = vmatprep.subr.mxu0 0.0
      %2642 = vmatpush1.msra.mxu0 0.0
      %2643 = vmatprep.subr.mxu0 0.0
      %2644 = vmatpush1.msra.mxu0 0.0
      %2645 = vmatprep.subr.mxu0 0.0
      %2646 = vmatpush1.msra.mxu0 0.0
      %2647 = vmatprep.subr.mxu0 0.0
      %2648 = vmatpush1.msra.mxu0 0.0
      %2649 = vmatprep.subr.mxu0 0.0
      %2650 = vmatpush1.msra.mxu0 0.0
      %2651 = vmatprep.subr.mxu0 0.0
      %2652 = vmatpush1.msra.mxu0 0.0
      %2653 = vmatprep.subr.mxu0 0.0
      %2654 = vmatpush1.msra.mxu0 0.0
      %2655 = vmatprep.subr.mxu0 0.0
      %2656 = vmatpush1.msra.mxu0 0.0
      %2657 = vmatprep.subr.mxu0 0.0
      %2658 = vmatpush1.msra.mxu0 0.0
      %2659 = vmatprep.subr.mxu0 0.0
      %2660 = vmatpush1.msra.mxu0 0.0
      %2661 = vmatprep.subr.mxu0 0.0
      %2662 = vmatpush1.msra.mxu0 0.0
      %2663 = vmatprep.subr.mxu0 0.0
      %2664 = vmatpush1.msra.mxu0 0.0
      %2665 = vmatprep.subr.mxu0 0.0
      %2666 = vmatpush1.msra.mxu0 0.0
      %2667 = vmatprep.subr.mxu0 0.0
      %2668 = vmatpush1.msra.mxu0 0.0
      %2669 = vmatprep.subr.mxu0 0.0
      %2670 = vmatpush1.msra.mxu0 0.0
      %2671 = vmatprep.subr.mxu0 0.0
      %2672 = vmatpush1.msra.mxu0 0.0
      %2673 = vmatprep.subr.mxu0 0.0
      %2674 = vmatpush1.msra.mxu0 0.0
      %2675 = vmatprep.subr.mxu0 0.0
      %2676 = vmatpush1.msra.mxu0 0.0
      %2677 = vmatprep.subr.mxu0 0.0
      %2678 = vmatpush1.msra.mxu0 0.0
      %2679 = vmatprep.subr.mxu0 0.0
      %2680 = vmatpush1.msra.mxu0 0.0
      %2681 = vmatprep.subr.mxu0 0.0
      %2682 = vmatpush1.msra.mxu0 0.0
      %2683 = vmatprep.subr.mxu0 0.0
      %2684 = vmatpush1.msra.mxu0 0.0
      %2685 = vmatprep.mubr.f32.mxu0 0.0
      %2686 = vmatmul.mubr.f32.gmra.mrb[0].mxu0 %v2260
      %v2687 = vpop.f32.mrb[0].mxu0
      %v2688 = vadd.f32 0.0, %v2687
      %v2689 = vpop.f32.mrb[0].mxu0
      %2690 = vmatprep.mubr.f32.mxu0 0.0
      %2691 = vmatmul.mubr.f32.gmra.mrb[0].mxu0 %v2262
      %v2692 = vpop.f32.mrb[0].mxu0
      %v2693 = vadd.f32 0.0, %v2692
      %v2694 = vpop.f32.mrb[0].mxu0
      %2695 = vmatprep.mubr.f32.mxu0 0.0
      %2696 = vmatmul.mubr.f32.gmra.mrb[0].mxu0 %v2264
      %v2697 = vpop.f32.mrb[0].mxu0
      %v2698 = vadd.f32 0.0, %v2697
      %v2699 = vpop.f32.mrb[0].mxu0
      %2700 = vmatprep.mubr.f32.mxu0 0.0
      %2701 = vmatmul.mubr.f32.gmra.mrb[0].mxu0 %v2266
      %v2702 = vpop.f32.mrb[0].mxu0
      %v2703 = vadd.f32 0.0, %v2702
      %v2704 = vpop.f32.mrb[0].mxu0
      %2705 = vmatprep.mubr.f32.mxu0 0.0
      %2706 = vmatmul.mubr.f32.gmra.mrb[0].mxu0 %v2268
      %v2707 = vpop.f32.mrb[0].mxu0
      %v2708 = vadd.f32 0.0, %v2707
      %v2709 = vpop.f32.mrb[0].mxu0
      %2710 = vmatprep.mubr.f32.mxu0 0.0
      %2711 = vmatmul.mubr.f32.gmra.mrb[0].mxu0 %v2270
      %v2712 = vpop.f32.mrb[0].mxu0
      %v2713 = vadd.f32 0.0, %v2712
      %v2714 = vpop.f32.mrb[0].mxu0
      %2715 = vmatprep.mubr.f32.mxu0 0.0
      %2716 = vmatmul.mubr.f32.gmra.mrb[0].mxu0 %v2272
      %v2717 = vpop.f32.mrb[0].mxu0
      %v2718 = vadd.f32 0.0, %v2717
      %v2719 = vpop.f32.mrb[0].mxu0
      %2720 = vmatprep.mubr.f32.mxu0 0.0
      %2721 = vmatmul.mubr.f32.gmra.mrb[0].mxu0 %v2274
      %v2722 = vpop.f32.mrb[0].mxu0
      %v2723 = vadd.f32 0.0, %v2722
      %v2724 = vpop.f32.mrb[0].mxu0
      %2725 = vmatprep.mubr.f32.mxu0 0.0
      %2726 = vmatmul.mubr.f32.gmra.mrb[0].mxu0 %v2276
      %v2727 = vpop.f32.mrb[0].mxu0
      %v2728 = vadd.f32 0.0, %v2727
      %v2729 = vpop.f32.mrb[0].mxu0
      %2730 = vmatprep.mubr.f32.mxu0 0.0
      %2731 = vmatmul.mubr.f32.gmra.mrb[0].mxu0 %v2278
      %v2732 = vpop.f32.mrb[0].mxu0
      %v2733 = vadd.f32 0.0, %v2732
      %v2734 = vpop.f32.mrb[0].mxu0
      %2735 = vmatprep.mubr.f32.mxu0 0.0
      %2736 = vmatmul.mubr.f32.gmra.mrb[0].mxu0 %v2280
      %v2737 = vpop.f32.mrb[0].mxu0
      %v2738 = vadd.f32 0.0, %v2737
      %v2739 = vpop.f32.mrb[0].mxu0
      %2740 = vmatprep.mubr.f32.mxu0 0.0
      %2741 = vmatmul.mubr.f32.gmra.mrb[0].mxu0 %v2282
      %v2742 = vpop.f32.mrb[0].mxu0
      %v2743 = vadd.f32 0.0, %v2742
      %v2744 = vpop.f32.mrb[0].mxu0
      %2745 = vmatprep.mubr.f32.mxu0 0.0
      %2746 = vmatmul.mubr.f32.gmra.mrb[0].mxu0 %v2284
      %v2747 = vpop.f32.mrb[0].mxu0
      %v2748 = vadd.f32 0.0, %v2747
      %v2749 = vpop.f32.mrb[0].mxu0
      %2750 = vmatprep.mubr.f32.mxu0 0.0
      %2751 = vmatmul.mubr.f32.gmra.mrb[0].mxu0 %v2286
      %v2752 = vpop.f32.mrb[0].mxu0
      %v2753 = vadd.f32 0.0, %v2752
      %v2754 = vpop.f32.mrb[0].mxu0
      %2755 = vmatprep.mubr.f32.mxu0 0.0
      %2756 = vmatmul.mubr.f32.gmra.mrb[0].mxu0 %v2288
      %v2757 = vpop.f32.mrb[0].mxu0
      %v2758 = vadd.f32 0.0, %v2757
      %v2759 = vpop.f32.mrb[0].mxu0
      %2760 = vmatprep.mubr.f32.mxu0 0.0
      %2761 = vmatmul.mubr.f32.gmra.mrb[0].mxu0 %v2290
      %v2762 = vpop.f32.mrb[0].mxu0
      %v2763 = vadd.f32 0.0, %v2762
      %v2764 = vpop.f32.mrb[0].mxu0
      %2765 = vmatprep.mubr.f32.mxu0 0.0
      %2766 = vmatmul.mubr.f32.gmra.mrb[0].mxu0 %v2292
      %v2767 = vpop.f32.mrb[0].mxu0
      %v2768 = vadd.f32 0.0, %v2767
      %v2769 = vpop.f32.mrb[0].mxu0
      %2770 = vmatprep.mubr.f32.mxu0 0.0
      %2771 = vmatmul.mubr.f32.gmra.mrb[0].mxu0 %v2294
      %v2772 = vpop.f32.mrb[0].mxu0
      %v2773 = vadd.f32 0.0, %v2772
      %v2774 = vpop.f32.mrb[0].mxu0
      %2775 = vmatprep.mubr.f32.mxu0 0.0
      %2776 = vmatmul.mubr.f32.gmra.mrb[0].mxu0 %v2296
      %v2777 = vpop.f32.mrb[0].mxu0
      %v2778 = vadd.f32 0.0, %v2777
      %v2779 = vpop.f32.mrb[0].mxu0
      %2780 = vmatprep.mubr.f32.mxu0 0.0
      %2781 = vmatmul.mubr.f32.gmra.mrb[0].mxu0 %v2298
      %v2782 = vpop.f32.mrb[0].mxu0
      %v2783 = vadd.f32 0.0, %v2782
      %v2784 = vpop.f32.mrb[0].mxu0
      %2785 = vmatprep.mubr.f32.mxu0 0.0
      %2786 = vmatmul.mubr.f32.gmra.mrb[0].mxu0 %v2300
      %v2787 = vpop.f32.mrb[0].mxu0
      %v2788 = vadd.f32 0.0, %v2787
      %v2789 = vpop.f32.mrb[0].mxu0
      %2790 = vmatprep.mubr.f32.mxu0 0.0
      %2791 = vmatmul.mubr.f32.gmra.mrb[0].mxu0 %v2302
      %v2792 = vpop.f32.mrb[0].mxu0
      %v2793 = vadd.f32 0.0, %v2792
      %v2794 = vpop.f32.mrb[0].mxu0
      %2795 = vmatprep.mubr.f32.mxu0 0.0
      %2796 = vmatmul.mubr.f32.gmra.mrb[0].mxu0 %v2304
      %v2797 = vpop.f32.mrb[0].mxu0
      %v2798 = vadd.f32 0.0, %v2797
      %v2799 = vpop.f32.mrb[0].mxu0
      %2800 = vmatprep.mubr.f32.mxu0 0.0
      %2801 = vmatmul.mubr.f32.gmra.mrb[0].mxu0 %v2306
      %v2802 = vpop.f32.mrb[0].mxu0
      %v2803 = vadd.f32 0.0, %v2802
      %v2804 = vpop.f32.mrb[0].mxu0
      %2805 = vmatprep.mubr.f32.mxu0 0.0
      %2806 = vmatmul.mubr.f32.gmra.mrb[0].mxu0 %v2308
      %v2807 = vpop.f32.mrb[0].mxu0
      %v2808 = vadd.f32 0.0, %v2807
      %v2809 = vpop.f32.mrb[0].mxu0
      %2810 = vmatprep.mubr.f32.mxu0 0.0
      %2811 = vmatmul.mubr.f32.gmra.mrb[0].mxu0 %v2310
      %v2812 = vpop.f32.mrb[0].mxu0
      %v2813 = vadd.f32 0.0, %v2812
      %v2814 = vpop.f32.mrb[0].mxu0
      %2815 = vmatprep.mubr.f32.mxu0 0.0
      %2816 = vmatmul.mubr.f32.gmra.mrb[0].mxu0 %v2312
      %v2817 = vpop.f32.mrb[0].mxu0
      %v2818 = vadd.f32 0.0, %v2817
      %v2819 = vpop.f32.mrb[0].mxu0
      %2820 = vmatprep.mubr.f32.mxu0 0.0
      %2821 = vmatmul.mubr.f32.gmra.mrb[0].mxu0 %v2314
      %v2822 = vpop.f32.mrb[0].mxu0
      %v2823 = vadd.f32 0.0, %v2822
      %v2824 = vpop.f32.mrb[0].mxu0
      %2825 = vmatprep.mubr.f32.mxu0 0.0
      %2826 = vmatmul.mubr.f32.gmra.mrb[0].mxu0 %v2316
      %v2827 = vpop.f32.mrb[0].mxu0
      %v2828 = vadd.f32 0.0, %v2827
      %v2829 = vpop.f32.mrb[0].mxu0
      %2830 = vmatprep.mubr.f32.mxu0 0.0
      %2831 = vmatmul.mubr.f32.gmra.mrb[0].mxu0 %v2318
      %v2832 = vpop.f32.mrb[0].mxu0
      %v2833 = vadd.f32 0.0, %v2832
      %v2834 = vpop.f32.mrb[0].mxu0
      %2835 = vmatprep.mubr.f32.mxu0 0.0
      %2836 = vmatmul.mubr.f32.gmra.mrb[0].mxu0 %v2320
      %v2837 = vpop.f32.mrb[0].mxu0
      %v2838 = vadd.f32 0.0, %v2837
      %v2839 = vpop.f32.mrb[0].mxu0
      %2840 = vmatprep.mubr.f32.mxu0 0.0
      %2841 = vmatmul.mubr.f32.gmra.mrb[0].mxu0 %v2322
      %v2842 = vpop.f32.mrb[0].mxu0
      %v2843 = vadd.f32 0.0, %v2842
      %v2844 = vpop.f32.mrb[0].mxu0
      %2845 = vmatprep.mubr.f32.mxu0 0.0
      %2846 = vmatmul.mubr.f32.gmra.mrb[0].mxu0 %v2324
      %v2847 = vpop.f32.mrb[0].mxu0
      %v2848 = vadd.f32 0.0, %v2847
      %v2849 = vpop.f32.mrb[0].mxu0
      %2850 = vmatprep.mubr.f32.mxu0 0.0
      %2851 = vmatmul.mubr.f32.gmra.mrb[0].mxu0 %v2326
      %v2852 = vpop.f32.mrb[0].mxu0
      %v2853 = vadd.f32 0.0, %v2852
      %v2854 = vpop.f32.mrb[0].mxu0
      %2855 = vmatprep.mubr.f32.mxu0 0.0
      %2856 = vmatmul.mubr.f32.gmra.mrb[0].mxu0 %v2617
      %v2857 = vpop.f32.mrb[0].mxu0
      %v2858 = vadd.f32 0.0, %v2857
      %v2859 = vpop.f32.mrb[0].mxu0
      %2860 = vmatprep.mubr.f32.mxu0 0.0
      %2861 = vmatmul.mubr.f32.gmra.mrb[0].mxu0 %v2619
      %v2862 = vpop.f32.mrb[0].mxu0
      %v2863 = vadd.f32 0.0, %v2862
      %v2864 = vpop.f32.mrb[0].mxu0
      %2865 = vdwg.mxu0
      %v2866 = vadd.f32 %v2573, %v2688
      %v2867 = vadd.f32 %v2574, %v2693
      %v2868 = vadd.f32 %v2575, %v2698
      %v2869 = vadd.f32 %v2576, %v2703
      %v2870 = vadd.f32 %v2577, %v2708
      %v2871 = vadd.f32 %v2578, %v2713
      %v2872 = vadd.f32 %v2579, %v2718
      %v2873 = vadd.f32 %v2580, %v2723
      %v2874 = vadd.f32 %v2581, %v2728
      %v2875 = vadd.f32 %v2582, %v2733
      %v2876 = vadd.f32 %v2583, %v2738
      %v2877 = vadd.f32 %v2584, %v2743
      %v2878 = vadd.f32 %v2585, %v2748
      %v2879 = vadd.f32 %v2586, %v2753
      %v2880 = vadd.f32 %v2587, %v2758
      %v2881 = vadd.f32 %v2588, %v2763
      %v2882 = vadd.f32 %v2589, %v2768
      %v2883 = vadd.f32 %v2590, %v2773
      %v2884 = vadd.f32 %v2591, %v2778
      %v2885 = vadd.f32 %v2592, %v2783
      %v2886 = vadd.f32 %v2593, %v2788
      %v2887 = vadd.f32 %v2594, %v2793
      %v2888 = vadd.f32 %v2595, %v2798
      %v2889 = vadd.f32 %v2596, %v2803
      %v2890 = vadd.f32 %v2597, %v2808
      %v2891 = vadd.f32 %v2598, %v2813
      %v2892 = vadd.f32 %v2599, %v2818
      %v2893 = vadd.f32 %v2600, %v2823
      %v2894 = vadd.f32 %v2601, %v2828
      %v2895 = vadd.f32 %v2602, %v2833
      %v2896 = vadd.f32 %v2603, %v2838
      %v2897 = vadd.f32 %v2604, %v2843
      %v2898 = vadd.f32 %v2605, %v2848
      %v2899 = vadd.f32 %v2606, %v2853
      %v2900 = vadd.f32 %v2607, %v2858
      %v2901 = vadd.f32 %v2608, %v2863
      %s2902 = scalar_lea.vmem %s0, 56
      %v2903 = vld [vmem:[%s2902] sm:$0xff]
      %vm2904 = vcmask 1042432
      %v2905 = vrot.slane %v243, 5
      %v2906 = vrot.slane %v244, 5
      %v2907 = vsel %vm2904, %v2905, %v2906
      %v2908 = vrot.slane %v245, 5
      %v2909 = vsel %vm2904, %v2906, %v2908
      %v2910 = vrot.slane %v246, 5
      %v2911 = vsel %vm2904, %v2908, %v2910
      %v2912 = vrot.slane %v247, 5
      %v2913 = vsel %vm2904, %v2910, %v2912
      %v2914 = vrot.slane %v248, 5
      %v2915 = vsel %vm2904, %v2912, %v2914
      %v2916 = vrot.slane %v249, 5
      %v2917 = vsel %vm2904, %v2914, %v2916
      %v2918 = vrot.slane %v250, 5
      %v2919 = vsel %vm2904, %v2916, %v2918
      %v2920 = vrot.slane %v251, 5
      %v2921 = vsel %vm2904, %v2918, %v2920
      %v2922 = vrot.slane %v252, 5
      %v2923 = vsel %vm2904, %v2920, %v2922
      %v2924 = vrot.slane %v253, 5
      %v2925 = vsel %vm2904, %v2922, %v2924
      %v2926 = vrot.slane %v254, 5
      %v2927 = vsel %vm2904, %v2924, %v2926
      %v2928 = vrot.slane %v255, 5
      %v2929 = vsel %vm2904, %v2926, %v2928
      %v2930 = vrot.slane %v256, 5
      %v2931 = vsel %vm2904, %v2928, %v2930
      %v2932 = vrot.slane %v257, 5
      %v2933 = vsel %vm2904, %v2930, %v2932
      %v2934 = vrot.slane %v258, 5
      %v2935 = vsel %vm2904, %v2932, %v2934
      %v2936 = vrot.slane %v259, 5
      %v2937 = vsel %vm2904, %v2934, %v2936
      %v2938 = vrot.slane %v260, 5
      %v2939 = vsel %vm2904, %v2936, %v2938
      %v2940 = vrot.slane %v261, 5
      %v2941 = vsel %vm2904, %v2938, %v2940
      %v2942 = vrot.slane %v262, 5
      %v2943 = vsel %vm2904, %v2940, %v2942
      %v2944 = vrot.slane %v263, 5
      %v2945 = vsel %vm2904, %v2942, %v2944
      %v2946 = vrot.slane %v264, 5
      %v2947 = vsel %vm2904, %v2944, %v2946
      %v2948 = vrot.slane %v265, 5
      %v2949 = vsel %vm2904, %v2946, %v2948
      %v2950 = vrot.slane %v266, 5
      %v2951 = vsel %vm2904, %v2948, %v2950
      %v2952 = vrot.slane %v267, 5
      %v2953 = vsel %vm2904, %v2950, %v2952
      %v2954 = vrot.slane %v268, 5
      %v2955 = vsel %vm2904, %v2952, %v2954
      %v2956 = vrot.slane %v269, 5
      %v2957 = vsel %vm2904, %v2954, %v2956
      %v2958 = vrot.slane %v270, 5
      %v2959 = vsel %vm2904, %v2956, %v2958
      %v2960 = vrot.slane %v271, 5
      %v2961 = vsel %vm2904, %v2958, %v2960
      %v2962 = vrot.slane %v272, 5
      %v2963 = vsel %vm2904, %v2960, %v2962
      %v2964 = vrot.slane %v273, 5
      %v2965 = vsel %vm2904, %v2962, %v2964
      %v2966 = vrot.slane %v274, 5
      %v2967 = vsel %vm2904, %v2964, %v2966
      %v2968 = vrot.slane %v275, 5
      %v2969 = vsel %vm2904, %v2966, %v2968
      %v2970 = vrot.slane %v276, 5
      %v2971 = vsel %vm2904, %v2968, %v2970
      %v2972 = vrot.slane %v277, 5
      %v2973 = vsel %vm2904, %v2970, %v2972
      %v2974 = vrot.slane %v278, 5
      %v2975 = vsel %vm2904, %v2972, %v2974
      %v2976 = vrot.slane %v279, 5
      %v2977 = vsel %vm2904, %v2974, %v2976
      %v2978 = vsel %vm394, %v2907, 0
      %v2980 = vsel %vm394, %v2909, 0
      %v2982 = vsel %vm394, %v2911, 0
      %v2984 = vsel %vm394, %v2913, 0
      %v2986 = vsel %vm394, %v2915, 0
      %v2988 = vsel %vm394, %v2917, 0
      %v2990 = vsel %vm394, %v2919, 0
      %v2992 = vsel %vm394, %v2921, 0
      %v2994 = vsel %vm394, %v2923, 0
      %v2996 = vsel %vm394, %v2925, 0
      %v2998 = vsel %vm394, %v2927, 0
      %v3000 = vsel %vm394, %v2929, 0
      %v3002 = vsel %vm394, %v2931, 0
      %v3004 = vsel %vm394, %v2933, 0
      %v3006 = vsel %vm394, %v2935, 0
      %v3008 = vsel %vm394, %v2937, 0
      %v3010 = vsel %vm394, %v2939, 0
      %v3012 = vsel %vm394, %v2941, 0
      %v3014 = vsel %vm394, %v2943, 0
      %v3016 = vsel %vm394, %v2945, 0
      %v3018 = vsel %vm394, %v2947, 0
      %v3020 = vsel %vm394, %v2949, 0
      %v3022 = vsel %vm394, %v2951, 0
      %v3024 = vsel %vm394, %v2953, 0
      %v3026 = vsel %vm394, %v2955, 0
      %v3028 = vsel %vm394, %v2957, 0
      %v3030 = vsel %vm394, %v2959, 0
      %v3032 = vsel %vm394, %v2961, 0
      %v3034 = vsel %vm394, %v2963, 0
      %v3036 = vsel %vm394, %v2965, 0
      %v3038 = vsel %vm394, %v2967, 0
      %v3040 = vsel %vm394, %v2969, 0
      %v3042 = vsel %vm394, %v2971, 0
      %v3044 = vsel %vm394, %v2973, 0
      %v3046 = vsel %vm394, %v2975, 0
      %v3048 = vsel %vm394, %v2977, 0
      %3050 = vmatprep.subr.mxu0 0.0
      %3051 = vmatpush1.msra.mxu0 %v2903
      %3052 = vmatprep.subr.mxu0 0.0
      %3053 = vmatpush1.msra.mxu0 0.0
      %3054 = vmatprep.subr.mxu0 0.0
      %3055 = vmatpush1.msra.mxu0 0.0
      %3056 = vmatprep.subr.mxu0 0.0
      %3057 = vmatpush1.msra.mxu0 0.0
      %3058 = vmatprep.subr.mxu0 0.0
      %3059 = vmatpush1.msra.mxu0 0.0
      %3060 = vmatprep.subr.mxu0 0.0
      %3061 = vmatpush1.msra.mxu0 0.0
      %3062 = vmatprep.subr.mxu0 0.0
      %3063 = vmatpush1.msra.mxu0 0.0
      %3064 = vmatprep.subr.mxu0 0.0
      %3065 = vmatpush1.msra.mxu0 0.0
      %3066 = vmatprep.subr.mxu0 0.0
      %3067 = vmatpush1.msra.mxu0 0.0
      %3068 = vmatprep.subr.mxu0 0.0
      %3069 = vmatpush1.msra.mxu0 0.0
      %3070 = vmatprep.subr.mxu0 0.0
      %3071 = vmatpush1.msra.mxu0 0.0
      %3072 = vmatprep.subr.mxu0 0.0
      %3073 = vmatpush1.msra.mxu0 0.0
      %3074 = vmatprep.subr.mxu0 0.0
      %3075 = vmatpush1.msra.mxu0 0.0
      %3076 = vmatprep.subr.mxu0 0.0
      %3077 = vmatpush1.msra.mxu0 0.0
      %3078 = vmatprep.subr.mxu0 0.0
      %3079 = vmatpush1.msra.mxu0 0.0
      %3080 = vmatprep.subr.mxu0 0.0
      %3081 = vmatpush1.msra.mxu0 0.0
      %3082 = vmatprep.subr.mxu0 0.0
      %3083 = vmatpush1.msra.mxu0 0.0
      %3084 = vmatprep.subr.mxu0 0.0
      %3085 = vmatpush1.msra.mxu0 0.0
      %3086 = vmatprep.subr.mxu0 0.0
      %3087 = vmatpush1.msra.mxu0 0.0
      %3088 = vmatprep.subr.mxu0 0.0
      %3089 = vmatpush1.msra.mxu0 0.0
      %3090 = vmatprep.subr.mxu0 0.0
      %3091 = vmatpush1.msra.mxu0 0.0
      %3092 = vmatprep.subr.mxu0 0.0
      %3093 = vmatpush1.msra.mxu0 0.0
      %3094 = vmatprep.subr.mxu0 0.0
      %3095 = vmatpush1.msra.mxu0 0.0
      %3096 = vmatprep.subr.mxu0 0.0
      %3097 = vmatpush1.msra.mxu0 0.0
      %3098 = vmatprep.subr.mxu0 0.0
      %3099 = vmatpush1.msra.mxu0 0.0
      %3100 = vmatprep.subr.mxu0 0.0
      %3101 = vmatpush1.msra.mxu0 0.0
      %3102 = vmatprep.subr.mxu0 0.0
      %3103 = vmatpush1.msra.mxu0 0.0
      %3104 = vmatprep.subr.mxu0 0.0
      %3105 = vmatpush1.msra.mxu0 0.0
      %3106 = vmatprep.subr.mxu0 0.0
      %3107 = vmatpush1.msra.mxu0 0.0
      %3108 = vmatprep.subr.mxu0 0.0
      %3109 = vmatpush1.msra.mxu0 0.0
      %3110 = vmatprep.subr.mxu0 0.0
      %3111 = vmatpush1.msra.mxu0 0.0
      %3112 = vmatprep.subr.mxu0 0.0
      %3113 = vmatpush1.msra.mxu0 0.0
      %3114 = vmatprep.mubr.f32.mxu0 0.0
      %3115 = vmatmul.mubr.f32.gmra.mrb[0].mxu0 %v2978
      %v3116 = vpop.f32.mrb[0].mxu0
      %v3117 = vadd.f32 0.0, %v3116
      %v3118 = vpop.f32.mrb[0].mxu0
      %3119 = vmatprep.mubr.f32.mxu0 0.0
      %3120 = vmatmul.mubr.f32.gmra.mrb[0].mxu0 %v2980
      %v3121 = vpop.f32.mrb[0].mxu0
      %v3122 = vadd.f32 0.0, %v3121
      %v3123 = vpop.f32.mrb[0].mxu0
      %3124 = vmatprep.mubr.f32.mxu0 0.0
      %3125 = vmatmul.mubr.f32.gmra.mrb[0].mxu0 %v2982
      %v3126 = vpop.f32.mrb[0].mxu0
      %v3127 = vadd.f32 0.0, %v3126
      %v3128 = vpop.f32.mrb[0].mxu0
      %3129 = vmatprep.mubr.f32.mxu0 0.0
      %3130 = vmatmul.mubr.f32.gmra.mrb[0].mxu0 %v2984
      %v3131 = vpop.f32.mrb[0].mxu0
      %v3132 = vadd.f32 0.0, %v3131
      %v3133 = vpop.f32.mrb[0].mxu0
      %3134 = vmatprep.mubr.f32.mxu0 0.0
      %3135 = vmatmul.mubr.f32.gmra.mrb[0].mxu0 %v2986
      %v3136 = vpop.f32.mrb[0].mxu0
      %v3137 = vadd.f32 0.0, %v3136
      %v3138 = vpop.f32.mrb[0].mxu0
      %3139 = vmatprep.mubr.f32.mxu0 0.0
      %3140 = vmatmul.mubr.f32.gmra.mrb[0].mxu0 %v2988
      %v3141 = vpop.f32.mrb[0].mxu0
      %v3142 = vadd.f32 0.0, %v3141
      %v3143 = vpop.f32.mrb[0].mxu0
      %3144 = vmatprep.mubr.f32.mxu0 0.0
      %3145 = vmatmul.mubr.f32.gmra.mrb[0].mxu0 %v2990
      %v3146 = vpop.f32.mrb[0].mxu0
      %v3147 = vadd.f32 0.0, %v3146
      %v3148 = vpop.f32.mrb[0].mxu0
      %3149 = vmatprep.mubr.f32.mxu0 0.0
      %3150 = vmatmul.mubr.f32.gmra.mrb[0].mxu0 %v2992
      %v3151 = vpop.f32.mrb[0].mxu0
      %v3152 = vadd.f32 0.0, %v3151
      %v3153 = vpop.f32.mrb[0].mxu0
      %3154 = vmatprep.mubr.f32.mxu0 0.0
      %3155 = vmatmul.mubr.f32.gmra.mrb[0].mxu0 %v2994
      %v3156 = vpop.f32.mrb[0].mxu0
      %v3157 = vadd.f32 0.0, %v3156
      %v3158 = vpop.f32.mrb[0].mxu0
      %3159 = vmatprep.mubr.f32.mxu0 0.0
      %3160 = vmatmul.mubr.f32.gmra.mrb[0].mxu0 %v2996
      %v3161 = vpop.f32.mrb[0].mxu0
      %v3162 = vadd.f32 0.0, %v3161
      %v3163 = vpop.f32.mrb[0].mxu0
      %3164 = vmatprep.mubr.f32.mxu0 0.0
      %3165 = vmatmul.mubr.f32.gmra.mrb[0].mxu0 %v2998
      %v3166 = vpop.f32.mrb[0].mxu0
      %v3167 = vadd.f32 0.0, %v3166
      %v3168 = vpop.f32.mrb[0].mxu0
      %3169 = vmatprep.mubr.f32.mxu0 0.0
      %3170 = vmatmul.mubr.f32.gmra.mrb[0].mxu0 %v3000
      %v3171 = vpop.f32.mrb[0].mxu0
      %v3172 = vadd.f32 0.0, %v3171
      %v3173 = vpop.f32.mrb[0].mxu0
      %3174 = vmatprep.mubr.f32.mxu0 0.0
      %3175 = vmatmul.mubr.f32.gmra.mrb[0].mxu0 %v3002
      %v3176 = vpop.f32.mrb[0].mxu0
      %v3177 = vadd.f32 0.0, %v3176
      %v3178 = vpop.f32.mrb[0].mxu0
      %3179 = vmatprep.mubr.f32.mxu0 0.0
      %3180 = vmatmul.mubr.f32.gmra.mrb[0].mxu0 %v3004
      %v3181 = vpop.f32.mrb[0].mxu0
      %v3182 = vadd.f32 0.0, %v3181
      %v3183 = vpop.f32.mrb[0].mxu0
      %3184 = vmatprep.mubr.f32.mxu0 0.0
      %3185 = vmatmul.mubr.f32.gmra.mrb[0].mxu0 %v3006
      %v3186 = vpop.f32.mrb[0].mxu0
      %v3187 = vadd.f32 0.0, %v3186
      %v3188 = vpop.f32.mrb[0].mxu0
      %3189 = vmatprep.mubr.f32.mxu0 0.0
      %3190 = vmatmul.mubr.f32.gmra.mrb[0].mxu0 %v3008
      %v3191 = vpop.f32.mrb[0].mxu0
      %v3192 = vadd.f32 0.0, %v3191
      %v3193 = vpop.f32.mrb[0].mxu0
      %3194 = vmatprep.mubr.f32.mxu0 0.0
      %3195 = vmatmul.mubr.f32.gmra.mrb[0].mxu0 %v3010
      %v3196 = vpop.f32.mrb[0].mxu0
      %v3197 = vadd.f32 0.0, %v3196
      %v3198 = vpop.f32.mrb[0].mxu0
      %3199 = vmatprep.mubr.f32.mxu0 0.0
      %3200 = vmatmul.mubr.f32.gmra.mrb[0].mxu0 %v3012
      %v3201 = vpop.f32.mrb[0].mxu0
      %v3202 = vadd.f32 0.0, %v3201
      %v3203 = vpop.f32.mrb[0].mxu0
      %3204 = vmatprep.mubr.f32.mxu0 0.0
      %3205 = vmatmul.mubr.f32.gmra.mrb[0].mxu0 %v3014
      %v3206 = vpop.f32.mrb[0].mxu0
      %v3207 = vadd.f32 0.0, %v3206
      %v3208 = vpop.f32.mrb[0].mxu0
      %3209 = vmatprep.mubr.f32.mxu0 0.0
      %3210 = vmatmul.mubr.f32.gmra.mrb[0].mxu0 %v3016
      %v3211 = vpop.f32.mrb[0].mxu0
      %v3212 = vadd.f32 0.0, %v3211
      %v3213 = vpop.f32.mrb[0].mxu0
      %3214 = vmatprep.mubr.f32.mxu0 0.0
      %3215 = vmatmul.mubr.f32.gmra.mrb[0].mxu0 %v3018
      %v3216 = vpop.f32.mrb[0].mxu0
      %v3217 = vadd.f32 0.0, %v3216
      %v3218 = vpop.f32.mrb[0].mxu0
      %3219 = vmatprep.mubr.f32.mxu0 0.0
      %3220 = vmatmul.mubr.f32.gmra.mrb[0].mxu0 %v3020
      %v3221 = vpop.f32.mrb[0].mxu0
      %v3222 = vadd.f32 0.0, %v3221
      %v3223 = vpop.f32.mrb[0].mxu0
      %3224 = vmatprep.mubr.f32.mxu0 0.0
      %3225 = vmatmul.mubr.f32.gmra.mrb[0].mxu0 %v3022
      %v3226 = vpop.f32.mrb[0].mxu0
      %v3227 = vadd.f32 0.0, %v3226
      %v3228 = vpop.f32.mrb[0].mxu0
      %3229 = vmatprep.mubr.f32.mxu0 0.0
      %3230 = vmatmul.mubr.f32.gmra.mrb[0].mxu0 %v3024
      %v3231 = vpop.f32.mrb[0].mxu0
      %v3232 = vadd.f32 0.0, %v3231
      %v3233 = vpop.f32.mrb[0].mxu0
      %3234 = vmatprep.mubr.f32.mxu0 0.0
      %3235 = vmatmul.mubr.f32.gmra.mrb[0].mxu0 %v3026
      %v3236 = vpop.f32.mrb[0].mxu0
      %v3237 = vadd.f32 0.0, %v3236
      %v3238 = vpop.f32.mrb[0].mxu0
      %3239 = vmatprep.mubr.f32.mxu0 0.0
      %3240 = vmatmul.mubr.f32.gmra.mrb[0].mxu0 %v3028
      %v3241 = vpop.f32.mrb[0].mxu0
      %v3242 = vadd.f32 0.0, %v3241
      %v3243 = vpop.f32.mrb[0].mxu0
      %3244 = vmatprep.mubr.f32.mxu0 0.0
      %3245 = vmatmul.mubr.f32.gmra.mrb[0].mxu0 %v3030
      %v3246 = vpop.f32.mrb[0].mxu0
      %v3247 = vadd.f32 0.0, %v3246
      %v3248 = vpop.f32.mrb[0].mxu0
      %3249 = vmatprep.mubr.f32.mxu0 0.0
      %3250 = vmatmul.mubr.f32.gmra.mrb[0].mxu0 %v3032
      %v3251 = vpop.f32.mrb[0].mxu0
      %v3252 = vadd.f32 0.0, %v3251
      %v3253 = vpop.f32.mrb[0].mxu0
      %3254 = vmatprep.mubr.f32.mxu0 0.0
      %3255 = vmatmul.mubr.f32.gmra.mrb[0].mxu0 %v3034
      %v3256 = vpop.f32.mrb[0].mxu0
      %v3257 = vadd.f32 0.0, %v3256
      %v3258 = vpop.f32.mrb[0].mxu0
      %3259 = vmatprep.mubr.f32.mxu0 0.0
      %3260 = vmatmul.mubr.f32.gmra.mrb[0].mxu0 %v3036
      %v3261 = vpop.f32.mrb[0].mxu0
      %v3262 = vadd.f32 0.0, %v3261
      %v3263 = vpop.f32.mrb[0].mxu0
      %3264 = vmatprep.mubr.f32.mxu0 0.0
      %3265 = vmatmul.mubr.f32.gmra.mrb[0].mxu0 %v3038
      %v3266 = vpop.f32.mrb[0].mxu0
      %v3267 = vadd.f32 0.0, %v3266
      %v3268 = vpop.f32.mrb[0].mxu0
      %3269 = vmatprep.mubr.f32.mxu0 0.0
      %3270 = vmatmul.mubr.f32.gmra.mrb[0].mxu0 %v3040
      %v3271 = vpop.f32.mrb[0].mxu0
      %v3272 = vadd.f32 0.0, %v3271
      %v3273 = vpop.f32.mrb[0].mxu0
      %3274 = vmatprep.mubr.f32.mxu0 0.0
      %3275 = vmatmul.mubr.f32.gmra.mrb[0].mxu0 %v3042
      %v3276 = vpop.f32.mrb[0].mxu0
      %v3277 = vadd.f32 0.0, %v3276
      %v3278 = vpop.f32.mrb[0].mxu0
      %3279 = vmatprep.mubr.f32.mxu0 0.0
      %3280 = vmatmul.mubr.f32.gmra.mrb[0].mxu0 %v3044
      %v3281 = vpop.f32.mrb[0].mxu0
      %v3282 = vadd.f32 0.0, %v3281
      %v3283 = vpop.f32.mrb[0].mxu0
      %3284 = vmatprep.mubr.f32.mxu0 0.0
      %3285 = vmatmul.mubr.f32.gmra.mrb[0].mxu0 %v3046
      %v3286 = vpop.f32.mrb[0].mxu0
      %v3287 = vadd.f32 0.0, %v3286
      %v3288 = vpop.f32.mrb[0].mxu0
      %3289 = vmatprep.mubr.f32.mxu0 0.0
      %3290 = vmatmul.mubr.f32.gmra.mrb[0].mxu0 %v3048
      %v3291 = vpop.f32.mrb[0].mxu0
      %v3292 = vadd.f32 0.0, %v3291
      %v3293 = vpop.f32.mrb[0].mxu0
      %3294 = vdwg.mxu0
      %v3295 = vadd.f32 %v2866, %v3117
      %v3296 = vadd.f32 %v2867, %v3122
      %v3297 = vadd.f32 %v2868, %v3127
      %v3298 = vadd.f32 %v2869, %v3132
      %v3299 = vadd.f32 %v2870, %v3137
      %v3300 = vadd.f32 %v2871, %v3142
      %v3301 = vadd.f32 %v2872, %v3147
      %v3302 = vadd.f32 %v2873, %v3152
      %v3303 = vadd.f32 %v2874, %v3157
      %v3304 = vadd.f32 %v2875, %v3162
      %v3305 = vadd.f32 %v2876, %v3167
      %v3306 = vadd.f32 %v2877, %v3172
      %v3307 = vadd.f32 %v2878, %v3177
      %v3308 = vadd.f32 %v2879, %v3182
      %v3309 = vadd.f32 %v2880, %v3187
      %v3310 = vadd.f32 %v2881, %v3192
      %v3311 = vadd.f32 %v2882, %v3197
      %v3312 = vadd.f32 %v2883, %v3202
      %v3313 = vadd.f32 %v2884, %v3207
      %v3314 = vadd.f32 %v2885, %v3212
      %v3315 = vadd.f32 %v2886, %v3217
      %v3316 = vadd.f32 %v2887, %v3222
      %v3317 = vadd.f32 %v2888, %v3227
      %v3318 = vadd.f32 %v2889, %v3232
      %v3319 = vadd.f32 %v2890, %v3237
      %v3320 = vadd.f32 %v2891, %v3242
      %v3321 = vadd.f32 %v2892, %v3247
      %v3322 = vadd.f32 %v2893, %v3252
      %v3323 = vadd.f32 %v2894, %v3257
      %v3324 = vadd.f32 %v2895, %v3262
      %v3325 = vadd.f32 %v2896, %v3267
      %v3326 = vadd.f32 %v2897, %v3272
      %v3327 = vadd.f32 %v2898, %v3277
      %v3328 = vadd.f32 %v2899, %v3282
      %v3329 = vadd.f32 %v2900, %v3287
      %v3330 = vadd.f32 %v2901, %v3292
      %s3331 = scalar_lea.vmem %s0, 64
      %v3332 = vld [vmem:[%s3331] sm:$0xff]
      %vm3333 = vcmask 1041408
      %v3334 = vrot.slane %v243, 6
      %v3335 = vrot.slane %v244, 6
      %v3336 = vsel %vm3333, %v3334, %v3335
      %v3337 = vrot.slane %v245, 6
      %v3338 = vsel %vm3333, %v3335, %v3337
      %v3339 = vrot.slane %v246, 6
      %v3340 = vsel %vm3333, %v3337, %v3339
      %v3341 = vrot.slane %v247, 6
      %v3342 = vsel %vm3333, %v3339, %v3341
      %v3343 = vrot.slane %v248, 6
      %v3344 = vsel %vm3333, %v3341, %v3343
      %v3345 = vrot.slane %v249, 6
      %v3346 = vsel %vm3333, %v3343, %v3345
      %v3347 = vrot.slane %v250, 6
      %v3348 = vsel %vm3333, %v3345, %v3347
      %v3349 = vrot.slane %v251, 6
      %v3350 = vsel %vm3333, %v3347, %v3349
      %v3351 = vrot.slane %v252, 6
      %v3352 = vsel %vm3333, %v3349, %v3351
      %v3353 = vrot.slane %v253, 6
      %v3354 = vsel %vm3333, %v3351, %v3353
      %v3355 = vrot.slane %v254, 6
      %v3356 = vsel %vm3333, %v3353, %v3355
      %v3357 = vrot.slane %v255, 6
      %v3358 = vsel %vm3333, %v3355, %v3357
      %v3359 = vrot.slane %v256, 6
      %v3360 = vsel %vm3333, %v3357, %v3359
      %v3361 = vrot.slane %v257, 6
      %v3362 = vsel %vm3333, %v3359, %v3361
      %v3363 = vrot.slane %v258, 6
      %v3364 = vsel %vm3333, %v3361, %v3363
      %v3365 = vrot.slane %v259, 6
      %v3366 = vsel %vm3333, %v3363, %v3365
      %v3367 = vrot.slane %v260, 6
      %v3368 = vsel %vm3333, %v3365, %v3367
      %v3369 = vrot.slane %v261, 6
      %v3370 = vsel %vm3333, %v3367, %v3369
      %v3371 = vrot.slane %v262, 6
      %v3372 = vsel %vm3333, %v3369, %v3371
      %v3373 = vrot.slane %v263, 6
      %v3374 = vsel %vm3333, %v3371, %v3373
      %v3375 = vrot.slane %v264, 6
      %v3376 = vsel %vm3333, %v3373, %v3375
      %v3377 = vrot.slane %v265, 6
      %v3378 = vsel %vm3333, %v3375, %v3377
      %v3379 = vrot.slane %v266, 6
      %v3380 = vsel %vm3333, %v3377, %v3379
      %v3381 = vrot.slane %v267, 6
      %v3382 = vsel %vm3333, %v3379, %v3381
      %v3383 = vrot.slane %v268, 6
      %v3384 = vsel %vm3333, %v3381, %v3383
      %v3385 = vrot.slane %v269, 6
      %v3386 = vsel %vm3333, %v3383, %v3385
      %v3387 = vrot.slane %v270, 6
      %v3388 = vsel %vm3333, %v3385, %v3387
      %v3389 = vrot.slane %v271, 6
      %v3390 = vsel %vm3333, %v3387, %v3389
      %v3391 = vrot.slane %v272, 6
      %v3392 = vsel %vm3333, %v3389, %v3391
      %v3393 = vrot.slane %v273, 6
      %v3394 = vsel %vm3333, %v3391, %v3393
      %v3395 = vrot.slane %v274, 6
      %v3396 = vsel %vm3333, %v3393, %v3395
      %v3397 = vrot.slane %v275, 6
      %v3398 = vsel %vm3333, %v3395, %v3397
      %v3399 = vrot.slane %v276, 6
      %v3400 = vsel %vm3333, %v3397, %v3399
      %v3401 = vrot.slane %v277, 6
      %v3402 = vsel %vm3333, %v3399, %v3401
      %v3403 = vrot.slane %v278, 6
      %v3404 = vsel %vm3333, %v3401, %v3403
      %v3405 = vrot.slane %v279, 6
      %v3406 = vsel %vm3333, %v3403, %v3405
      %v3407 = vsel %vm394, %v3336, 0
      %v3409 = vsel %vm394, %v3338, 0
      %v3411 = vsel %vm394, %v3340, 0
      %v3413 = vsel %vm394, %v3342, 0
      %v3415 = vsel %vm394, %v3344, 0
      %v3417 = vsel %vm394, %v3346, 0
      %v3419 = vsel %vm394, %v3348, 0
      %v3421 = vsel %vm394, %v3350, 0
      %v3423 = vsel %vm394, %v3352, 0
      %v3425 = vsel %vm394, %v3354, 0
      %v3427 = vsel %vm394, %v3356, 0
      %v3429 = vsel %vm394, %v3358, 0
      %v3431 = vsel %vm394, %v3360, 0
      %v3433 = vsel %vm394, %v3362, 0
      %v3435 = vsel %vm394, %v3364, 0
      %v3437 = vsel %vm394, %v3366, 0
      %v3439 = vsel %vm394, %v3368, 0
      %v3441 = vsel %vm394, %v3370, 0
      %v3443 = vsel %vm394, %v3372, 0
      %v3445 = vsel %vm394, %v3374, 0
      %v3447 = vsel %vm394, %v3376, 0
      %v3449 = vsel %vm394, %v3378, 0
      %v3451 = vsel %vm394, %v3380, 0
      %v3453 = vsel %vm394, %v3382, 0
      %v3455 = vsel %vm394, %v3384, 0
      %v3457 = vsel %vm394, %v3386, 0
      %v3459 = vsel %vm394, %v3388, 0
      %v3461 = vsel %vm394, %v3390, 0
      %v3463 = vsel %vm394, %v3392, 0
      %v3465 = vsel %vm394, %v3394, 0
      %v3467 = vsel %vm394, %v3396, 0
      %v3469 = vsel %vm394, %v3398, 0
      %v3471 = vsel %vm394, %v3400, 0
      %v3473 = vsel %vm394, %v3402, 0
      %v3475 = vsel %vm394, %v3404, 0
      %v3477 = vsel %vm394, %v3406, 0
      %3479 = vmatprep.subr.mxu0 0.0
      %3480 = vmatpush1.msra.mxu0 %v3332
      %3481 = vmatprep.subr.mxu0 0.0
      %3482 = vmatpush1.msra.mxu0 0.0
      %3483 = vmatprep.subr.mxu0 0.0
      %3484 = vmatpush1.msra.mxu0 0.0
      %3485 = vmatprep.subr.mxu0 0.0
      %3486 = vmatpush1.msra.mxu0 0.0
      %3487 = vmatprep.subr.mxu0 0.0
      %3488 = vmatpush1.msra.mxu0 0.0
      %3489 = vmatprep.subr.mxu0 0.0
      %3490 = vmatpush1.msra.mxu0 0.0
      %3491 = vmatprep.subr.mxu0 0.0
      %3492 = vmatpush1.msra.mxu0 0.0
      %3493 = vmatprep.subr.mxu0 0.0
      %3494 = vmatpush1.msra.mxu0 0.0
      %3495 = vmatprep.subr.mxu0 0.0
      %3496 = vmatpush1.msra.mxu0 0.0
      %3497 = vmatprep.subr.mxu0 0.0
      %3498 = vmatpush1.msra.mxu0 0.0
      %3499 = vmatprep.subr.mxu0 0.0
      %3500 = vmatpush1.msra.mxu0 0.0
      %3501 = vmatprep.subr.mxu0 0.0
      %3502 = vmatpush1.msra.mxu0 0.0
      %3503 = vmatprep.subr.mxu0 0.0
      %3504 = vmatpush1.msra.mxu0 0.0
      %3505 = vmatprep.subr.mxu0 0.0
      %3506 = vmatpush1.msra.mxu0 0.0
      %3507 = vmatprep.subr.mxu0 0.0
      %3508 = vmatpush1.msra.mxu0 0.0
      %3509 = vmatprep.subr.mxu0 0.0
      %3510 = vmatpush1.msra.mxu0 0.0
      %3511 = vmatprep.subr.mxu0 0.0
      %3512 = vmatpush1.msra.mxu0 0.0
      %3513 = vmatprep.subr.mxu0 0.0
      %3514 = vmatpush1.msra.mxu0 0.0
      %3515 = vmatprep.subr.mxu0 0.0
      %3516 = vmatpush1.msra.mxu0 0.0
      %3517 = vmatprep.subr.mxu0 0.0
      %3518 = vmatpush1.msra.mxu0 0.0
      %3519 = vmatprep.subr.mxu0 0.0
      %3520 = vmatpush1.msra.mxu0 0.0
      %3521 = vmatprep.subr.mxu0 0.0
      %3522 = vmatpush1.msra.mxu0 0.0
      %3523 = vmatprep.subr.mxu0 0.0
      %3524 = vmatpush1.msra.mxu0 0.0
      %3525 = vmatprep.subr.mxu0 0.0
      %3526 = vmatpush1.msra.mxu0 0.0
      %3527 = vmatprep.subr.mxu0 0.0
      %3528 = vmatpush1.msra.mxu0 0.0
      %3529 = vmatprep.subr.mxu0 0.0
      %3530 = vmatpush1.msra.mxu0 0.0
      %3531 = vmatprep.subr.mxu0 0.0
      %3532 = vmatpush1.msra.mxu0 0.0
      %3533 = vmatprep.subr.mxu0 0.0
      %3534 = vmatpush1.msra.mxu0 0.0
      %3535 = vmatprep.subr.mxu0 0.0
      %3536 = vmatpush1.msra.mxu0 0.0
      %3537 = vmatprep.subr.mxu0 0.0
      %3538 = vmatpush1.msra.mxu0 0.0
      %3539 = vmatprep.subr.mxu0 0.0
      %3540 = vmatpush1.msra.mxu0 0.0
      %3541 = vmatprep.subr.mxu0 0.0
      %3542 = vmatpush1.msra.mxu0 0.0
      %3543 = vmatprep.mubr.f32.mxu0 0.0
      %3544 = vmatmul.mubr.f32.gmra.mrb[0].mxu0 %v3407
      %v3545 = vpop.f32.mrb[0].mxu0
      %v3546 = vadd.f32 0.0, %v3545
      %v3547 = vpop.f32.mrb[0].mxu0
      %3548 = vmatprep.mubr.f32.mxu0 0.0
      %3549 = vmatmul.mubr.f32.gmra.mrb[0].mxu0 %v3409
      %v3550 = vpop.f32.mrb[0].mxu0
      %v3551 = vadd.f32 0.0, %v3550
      %v3552 = vpop.f32.mrb[0].mxu0
      %3553 = vmatprep.mubr.f32.mxu0 0.0
      %3554 = vmatmul.mubr.f32.gmra.mrb[0].mxu0 %v3411
      %v3555 = vpop.f32.mrb[0].mxu0
      %v3556 = vadd.f32 0.0, %v3555
      %v3557 = vpop.f32.mrb[0].mxu0
      %3558 = vmatprep.mubr.f32.mxu0 0.0
      %3559 = vmatmul.mubr.f32.gmra.mrb[0].mxu0 %v3413
      %v3560 = vpop.f32.mrb[0].mxu0
      %v3561 = vadd.f32 0.0, %v3560
      %v3562 = vpop.f32.mrb[0].mxu0
      %3563 = vmatprep.mubr.f32.mxu0 0.0
      %3564 = vmatmul.mubr.f32.gmra.mrb[0].mxu0 %v3415
      %v3565 = vpop.f32.mrb[0].mxu0
      %v3566 = vadd.f32 0.0, %v3565
      %v3567 = vpop.f32.mrb[0].mxu0
      %3568 = vmatprep.mubr.f32.mxu0 0.0
      %3569 = vmatmul.mubr.f32.gmra.mrb[0].mxu0 %v3417
      %v3570 = vpop.f32.mrb[0].mxu0
      %v3571 = vadd.f32 0.0, %v3570
      %v3572 = vpop.f32.mrb[0].mxu0
      %3573 = vmatprep.mubr.f32.mxu0 0.0
      %3574 = vmatmul.mubr.f32.gmra.mrb[0].mxu0 %v3419
      %v3575 = vpop.f32.mrb[0].mxu0
      %v3576 = vadd.f32 0.0, %v3575
      %v3577 = vpop.f32.mrb[0].mxu0
      %3578 = vmatprep.mubr.f32.mxu0 0.0
      %3579 = vmatmul.mubr.f32.gmra.mrb[0].mxu0 %v3421
      %v3580 = vpop.f32.mrb[0].mxu0
      %v3581 = vadd.f32 0.0, %v3580
      %v3582 = vpop.f32.mrb[0].mxu0
      %3583 = vmatprep.mubr.f32.mxu0 0.0
      %3584 = vmatmul.mubr.f32.gmra.mrb[0].mxu0 %v3423
      %v3585 = vpop.f32.mrb[0].mxu0
      %v3586 = vadd.f32 0.0, %v3585
      %v3587 = vpop.f32.mrb[0].mxu0
      %3588 = vmatprep.mubr.f32.mxu0 0.0
      %3589 = vmatmul.mubr.f32.gmra.mrb[0].mxu0 %v3425
      %v3590 = vpop.f32.mrb[0].mxu0
      %v3591 = vadd.f32 0.0, %v3590
      %v3592 = vpop.f32.mrb[0].mxu0
      %3593 = vmatprep.mubr.f32.mxu0 0.0
      %3594 = vmatmul.mubr.f32.gmra.mrb[0].mxu0 %v3427
      %v3595 = vpop.f32.mrb[0].mxu0
      %v3596 = vadd.f32 0.0, %v3595
      %v3597 = vpop.f32.mrb[0].mxu0
      %3598 = vmatprep.mubr.f32.mxu0 0.0
      %3599 = vmatmul.mubr.f32.gmra.mrb[0].mxu0 %v3429
      %v3600 = vpop.f32.mrb[0].mxu0
      %v3601 = vadd.f32 0.0, %v3600
      %v3602 = vpop.f32.mrb[0].mxu0
      %3603 = vmatprep.mubr.f32.mxu0 0.0
      %3604 = vmatmul.mubr.f32.gmra.mrb[0].mxu0 %v3431
      %v3605 = vpop.f32.mrb[0].mxu0
      %v3606 = vadd.f32 0.0, %v3605
      %v3607 = vpop.f32.mrb[0].mxu0
      %3608 = vmatprep.mubr.f32.mxu0 0.0
      %3609 = vmatmul.mubr.f32.gmra.mrb[0].mxu0 %v3433
      %v3610 = vpop.f32.mrb[0].mxu0
      %v3611 = vadd.f32 0.0, %v3610
      %v3612 = vpop.f32.mrb[0].mxu0
      %3613 = vmatprep.mubr.f32.mxu0 0.0
      %3614 = vmatmul.mubr.f32.gmra.mrb[0].mxu0 %v3435
      %v3615 = vpop.f32.mrb[0].mxu0
      %v3616 = vadd.f32 0.0, %v3615
      %v3617 = vpop.f32.mrb[0].mxu0
      %3618 = vmatprep.mubr.f32.mxu0 0.0
      %3619 = vmatmul.mubr.f32.gmra.mrb[0].mxu0 %v3437
      %v3620 = vpop.f32.mrb[0].mxu0
      %v3621 = vadd.f32 0.0, %v3620
      %v3622 = vpop.f32.mrb[0].mxu0
      %3623 = vmatprep.mubr.f32.mxu0 0.0
      %3624 = vmatmul.mubr.f32.gmra.mrb[0].mxu0 %v3439
      %v3625 = vpop.f32.mrb[0].mxu0
      %v3626 = vadd.f32 0.0, %v3625
      %v3627 = vpop.f32.mrb[0].mxu0
      %3628 = vmatprep.mubr.f32.mxu0 0.0
      %3629 = vmatmul.mubr.f32.gmra.mrb[0].mxu0 %v3441
      %v3630 = vpop.f32.mrb[0].mxu0
      %v3631 = vadd.f32 0.0, %v3630
      %v3632 = vpop.f32.mrb[0].mxu0
      %3633 = vmatprep.mubr.f32.mxu0 0.0
      %3634 = vmatmul.mubr.f32.gmra.mrb[0].mxu0 %v3443
      %v3635 = vpop.f32.mrb[0].mxu0
      %v3636 = vadd.f32 0.0, %v3635
      %v3637 = vpop.f32.mrb[0].mxu0
      %3638 = vmatprep.mubr.f32.mxu0 0.0
      %3639 = vmatmul.mubr.f32.gmra.mrb[0].mxu0 %v3445
      %v3640 = vpop.f32.mrb[0].mxu0
      %v3641 = vadd.f32 0.0, %v3640
      %v3642 = vpop.f32.mrb[0].mxu0
      %3643 = vmatprep.mubr.f32.mxu0 0.0
      %3644 = vmatmul.mubr.f32.gmra.mrb[0].mxu0 %v3447
      %v3645 = vpop.f32.mrb[0].mxu0
      %v3646 = vadd.f32 0.0, %v3645
      %v3647 = vpop.f32.mrb[0].mxu0
      %3648 = vmatprep.mubr.f32.mxu0 0.0
      %3649 = vmatmul.mubr.f32.gmra.mrb[0].mxu0 %v3449
      %v3650 = vpop.f32.mrb[0].mxu0
      %v3651 = vadd.f32 0.0, %v3650
      %v3652 = vpop.f32.mrb[0].mxu0
      %3653 = vmatprep.mubr.f32.mxu0 0.0
      %3654 = vmatmul.mubr.f32.gmra.mrb[0].mxu0 %v3451
      %v3655 = vpop.f32.mrb[0].mxu0
      %v3656 = vadd.f32 0.0, %v3655
      %v3657 = vpop.f32.mrb[0].mxu0
      %3658 = vmatprep.mubr.f32.mxu0 0.0
      %3659 = vmatmul.mubr.f32.gmra.mrb[0].mxu0 %v3453
      %v3660 = vpop.f32.mrb[0].mxu0
      %v3661 = vadd.f32 0.0, %v3660
      %v3662 = vpop.f32.mrb[0].mxu0
      %3663 = vmatprep.mubr.f32.mxu0 0.0
      %3664 = vmatmul.mubr.f32.gmra.mrb[0].mxu0 %v3455
      %v3665 = vpop.f32.mrb[0].mxu0
      %v3666 = vadd.f32 0.0, %v3665
      %v3667 = vpop.f32.mrb[0].mxu0
      %3668 = vmatprep.mubr.f32.mxu0 0.0
      %3669 = vmatmul.mubr.f32.gmra.mrb[0].mxu0 %v3457
      %v3670 = vpop.f32.mrb[0].mxu0
      %v3671 = vadd.f32 0.0, %v3670
      %v3672 = vpop.f32.mrb[0].mxu0
      %3673 = vmatprep.mubr.f32.mxu0 0.0
      %3674 = vmatmul.mubr.f32.gmra.mrb[0].mxu0 %v3459
      %v3675 = vpop.f32.mrb[0].mxu0
      %v3676 = vadd.f32 0.0, %v3675
      %v3677 = vpop.f32.mrb[0].mxu0
      %3678 = vmatprep.mubr.f32.mxu0 0.0
      %3679 = vmatmul.mubr.f32.gmra.mrb[0].mxu0 %v3461
      %v3680 = vpop.f32.mrb[0].mxu0
      %v3681 = vadd.f32 0.0, %v3680
      %v3682 = vpop.f32.mrb[0].mxu0
      %3683 = vmatprep.mubr.f32.mxu0 0.0
      %3684 = vmatmul.mubr.f32.gmra.mrb[0].mxu0 %v3463
      %v3685 = vpop.f32.mrb[0].mxu0
      %v3686 = vadd.f32 0.0, %v3685
      %v3687 = vpop.f32.mrb[0].mxu0
      %3688 = vmatprep.mubr.f32.mxu0 0.0
      %3689 = vmatmul.mubr.f32.gmra.mrb[0].mxu0 %v3465
      %v3690 = vpop.f32.mrb[0].mxu0
      %v3691 = vadd.f32 0.0, %v3690
      %v3692 = vpop.f32.mrb[0].mxu0
      %3693 = vmatprep.mubr.f32.mxu0 0.0
      %3694 = vmatmul.mubr.f32.gmra.mrb[0].mxu0 %v3467
      %v3695 = vpop.f32.mrb[0].mxu0
      %v3696 = vadd.f32 0.0, %v3695
      %v3697 = vpop.f32.mrb[0].mxu0
      %3698 = vmatprep.mubr.f32.mxu0 0.0
      %3699 = vmatmul.mubr.f32.gmra.mrb[0].mxu0 %v3469
      %v3700 = vpop.f32.mrb[0].mxu0
      %v3701 = vadd.f32 0.0, %v3700
      %v3702 = vpop.f32.mrb[0].mxu0
      %3703 = vmatprep.mubr.f32.mxu0 0.0
      %3704 = vmatmul.mubr.f32.gmra.mrb[0].mxu0 %v3471
      %v3705 = vpop.f32.mrb[0].mxu0
      %v3706 = vadd.f32 0.0, %v3705
      %v3707 = vpop.f32.mrb[0].mxu0
      %3708 = vmatprep.mubr.f32.mxu0 0.0
      %3709 = vmatmul.mubr.f32.gmra.mrb[0].mxu0 %v3473
      %v3710 = vpop.f32.mrb[0].mxu0
      %v3711 = vadd.f32 0.0, %v3710
      %v3712 = vpop.f32.mrb[0].mxu0
      %3713 = vmatprep.mubr.f32.mxu0 0.0
      %3714 = vmatmul.mubr.f32.gmra.mrb[0].mxu0 %v3475
      %v3715 = vpop.f32.mrb[0].mxu0
      %v3716 = vadd.f32 0.0, %v3715
      %v3717 = vpop.f32.mrb[0].mxu0
      %3718 = vmatprep.mubr.f32.mxu0 0.0
      %3719 = vmatmul.mubr.f32.gmra.mrb[0].mxu0 %v3477
      %v3720 = vpop.f32.mrb[0].mxu0
      %v3721 = vadd.f32 0.0, %v3720
      %v3722 = vpop.f32.mrb[0].mxu0
      %3723 = vdwg.mxu0
      %v3724 = vadd.f32 %v3295, %v3546
      %v3725 = vadd.f32 %v3296, %v3551
      %v3726 = vadd.f32 %v3297, %v3556
      %v3727 = vadd.f32 %v3298, %v3561
      %v3728 = vadd.f32 %v3299, %v3566
      %v3729 = vadd.f32 %v3300, %v3571
      %v3730 = vadd.f32 %v3301, %v3576
      %v3731 = vadd.f32 %v3302, %v3581
      %v3732 = vadd.f32 %v3303, %v3586
      %v3733 = vadd.f32 %v3304, %v3591
      %v3734 = vadd.f32 %v3305, %v3596
      %v3735 = vadd.f32 %v3306, %v3601
      %v3736 = vadd.f32 %v3307, %v3606
      %v3737 = vadd.f32 %v3308, %v3611
      %v3738 = vadd.f32 %v3309, %v3616
      %v3739 = vadd.f32 %v3310, %v3621
      %v3740 = vadd.f32 %v3311, %v3626
      %v3741 = vadd.f32 %v3312, %v3631
      %v3742 = vadd.f32 %v3313, %v3636
      %v3743 = vadd.f32 %v3314, %v3641
      %v3744 = vadd.f32 %v3315, %v3646
      %v3745 = vadd.f32 %v3316, %v3651
      %v3746 = vadd.f32 %v3317, %v3656
      %v3747 = vadd.f32 %v3318, %v3661
      %v3748 = vadd.f32 %v3319, %v3666
      %v3749 = vadd.f32 %v3320, %v3671
      %v3750 = vadd.f32 %v3321, %v3676
      %v3751 = vadd.f32 %v3322, %v3681
      %v3752 = vadd.f32 %v3323, %v3686
      %v3753 = vadd.f32 %v3324, %v3691
      %v3754 = vadd.f32 %v3325, %v3696
      %v3755 = vadd.f32 %v3326, %v3701
      %v3756 = vadd.f32 %v3327, %v3706
      %v3757 = vadd.f32 %v3328, %v3711
      %v3758 = vadd.f32 %v3329, %v3716
      %v3759 = vadd.f32 %v3330, %v3721
      %v3760 = vld [vmem:[%s1] sm:$0x1]
      %v3762 = vlaneseq
      %v3763 = vshrl.u32 %v3762, 7
      %v3764 = vsub.s32 0, %v3763
      %v3765 = vrot.slane %v3760, %v3764
      %v3767 = vadd.f32 %v3724, %v3765
      %v3768 = vadd.f32 %v3725, %v3765
      %v3769 = vadd.f32 %v3726, %v3765
      %v3770 = vadd.f32 %v3727, %v3765
      %v3771 = vadd.f32 %v3728, %v3765
      %v3772 = vadd.f32 %v3729, %v3765
      %v3773 = vadd.f32 %v3730, %v3765
      %v3774 = vadd.f32 %v3731, %v3765
      %v3775 = vadd.f32 %v3732, %v3765
      %v3776 = vadd.f32 %v3733, %v3765
      %v3777 = vadd.f32 %v3734, %v3765
      %v3778 = vadd.f32 %v3735, %v3765
      %v3779 = vadd.f32 %v3736, %v3765
      %v3780 = vadd.f32 %v3737, %v3765
      %v3781 = vadd.f32 %v3738, %v3765
      %v3782 = vadd.f32 %v3739, %v3765
      %v3783 = vadd.f32 %v3740, %v3765
      %v3784 = vadd.f32 %v3741, %v3765
      %v3785 = vadd.f32 %v3742, %v3765
      %v3786 = vadd.f32 %v3743, %v3765
      %v3787 = vadd.f32 %v3744, %v3765
      %v3788 = vadd.f32 %v3745, %v3765
      %v3789 = vadd.f32 %v3746, %v3765
      %v3790 = vadd.f32 %v3747, %v3765
      %v3791 = vadd.f32 %v3748, %v3765
      %v3792 = vadd.f32 %v3749, %v3765
      %v3793 = vadd.f32 %v3750, %v3765
      %v3794 = vadd.f32 %v3751, %v3765
      %v3795 = vadd.f32 %v3752, %v3765
      %v3796 = vadd.f32 %v3753, %v3765
      %v3797 = vadd.f32 %v3754, %v3765
      %v3798 = vadd.f32 %v3755, %v3765
      %v3799 = vadd.f32 %v3756, %v3765
      %v3800 = vadd.f32 %v3757, %v3765
      %v3801 = vadd.f32 %v3758, %v3765
      %v3802 = vadd.f32 %v3759, %v3765
      %3803 = vst.msk [vmem:[%s233] sm:$0xff] %vm394, %v3767
      %3804 = vst.msk [vmem:[%s233 + $0x8] sm:$0xff] %vm394, %v3768
      %3805 = vst.msk [vmem:[%s233 + $0x10] sm:$0xff] %vm394, %v3769
      %3806 = vst.msk [vmem:[%s233 + $0x18] sm:$0xff] %vm394, %v3770
      %3807 = vst.msk [vmem:[%s233 + $0x20] sm:$0xff] %vm394, %v3771
      %3808 = vst.msk [vmem:[%s233 + $0x28] sm:$0xff] %vm394, %v3772
      %3809 = vst.msk [vmem:[%s233 + $0x30] sm:$0xff] %vm394, %v3773
      %3810 = vst.msk [vmem:[%s233 + $0x38] sm:$0xff] %vm394, %v3774
      %3811 = vst.msk [vmem:[%s233 + $0x40] sm:$0xff] %vm394, %v3775
      %3812 = vst.msk [vmem:[%s233 + $0x48] sm:$0xff] %vm394, %v3776
      %3813 = vst.msk [vmem:[%s233 + $0x50] sm:$0xff] %vm394, %v3777
      %3814 = vst.msk [vmem:[%s233 + $0x58] sm:$0xff] %vm394, %v3778
      %3815 = vst.msk [vmem:[%s233 + $0x60] sm:$0xff] %vm394, %v3779
      %3816 = vst.msk [vmem:[%s233 + $0x68] sm:$0xff] %vm394, %v3780
      %3817 = vst.msk [vmem:[%s233 + $0x70] sm:$0xff] %vm394, %v3781
      %3818 = vst.msk [vmem:[%s233 + $0x78] sm:$0xff] %vm394, %v3782
      %3819 = vst.msk [vmem:[%s233 + $0x80] sm:$0xff] %vm394, %v3783
      %3820 = vst.msk [vmem:[%s233 + $0x88] sm:$0xff] %vm394, %v3784
      %3821 = vst.msk [vmem:[%s233 + $0x90] sm:$0xff] %vm394, %v3785
      %3822 = vst.msk [vmem:[%s233 + $0x98] sm:$0xff] %vm394, %v3786
      %3823 = vst.msk [vmem:[%s233 + $0xa0] sm:$0xff] %vm394, %v3787
      %3824 = vst.msk [vmem:[%s233 + $0xa8] sm:$0xff] %vm394, %v3788
      %3825 = vst.msk [vmem:[%s233 + $0xb0] sm:$0xff] %vm394, %v3789
      %3826 = vst.msk [vmem:[%s233 + $0xb8] sm:$0xff] %vm394, %v3790
      %3827 = vst.msk [vmem:[%s233 + $0xc0] sm:$0xff] %vm394, %v3791
      %3828 = vst.msk [vmem:[%s233 + $0xc8] sm:$0xff] %vm394, %v3792
      %3829 = vst.msk [vmem:[%s233 + $0xd0] sm:$0xff] %vm394, %v3793
      %3830 = vst.msk [vmem:[%s233 + $0xd8] sm:$0xff] %vm394, %v3794
      %3831 = vst.msk [vmem:[%s233 + $0xe0] sm:$0xff] %vm394, %v3795
      %3832 = vst.msk [vmem:[%s233 + $0xe8] sm:$0xff] %vm394, %v3796
      %3833 = vst.msk [vmem:[%s233 + $0xf0] sm:$0xff] %vm394, %v3797
      %3834 = vst.msk [vmem:[%s233 + $0xf8] sm:$0xff] %vm394, %v3798
      %3835 = vst.msk [vmem:[%s233 + $0x100] sm:$0xff] %vm394, %v3799
      %3836 = vst.msk [vmem:[%s233 + $0x108] sm:$0xff] %vm394, %v3800
      %3837 = vst.msk [vmem:[%s233 + $0x110] sm:$0xff] %vm394, %v3801
      %3838 = vst.msk [vmem:[%s233 + $0x118] sm:$0xff] %vm394, %v3802
      %v3839 = vld [vmem:[%s2] sm:$0xff]
      %v3840 = vld [vmem:[%s2 + $0x8] sm:$0xff]
      %v3841 = vld [vmem:[%s2 + $0x10] sm:$0xff]
      %v3842 = vld [vmem:[%s2 + $0x18] sm:$0xff]
      %v3843 = vld [vmem:[%s2 + $0x20] sm:$0xff]
      %v3844 = vld [vmem:[%s2 + $0x28] sm:$0xff]
      %v3845 = vld [vmem:[%s2 + $0x30] sm:$0xff]
      %v3846 = vld [vmem:[%s2 + $0x38] sm:$0xff]
      %v3847 = vld [vmem:[%s2 + $0x40] sm:$0xff]
      %v3848 = vld [vmem:[%s2 + $0x48] sm:$0xff]
      %v3849 = vld [vmem:[%s2 + $0x50] sm:$0xff]
      %v3850 = vld [vmem:[%s2 + $0x58] sm:$0xff]
      %v3851 = vld [vmem:[%s2 + $0x60] sm:$0xff]
      %v3852 = vld [vmem:[%s2 + $0x68] sm:$0xff]
      %v3853 = vld [vmem:[%s2 + $0x70] sm:$0xff]
      %v3854 = vld [vmem:[%s2 + $0x78] sm:$0xff]
      %v3855 = vld [vmem:[%s2 + $0x80] sm:$0xff]
      %v3856 = vld [vmem:[%s2 + $0x88] sm:$0xff]
      %v3857 = vld [vmem:[%s2 + $0x90] sm:$0xff]
      %v3858 = vld [vmem:[%s2 + $0x98] sm:$0xff]
      %v3859 = vld [vmem:[%s2 + $0xa0] sm:$0xff]
      %v3860 = vld [vmem:[%s2 + $0xa8] sm:$0xff]
      %v3861 = vld [vmem:[%s2 + $0xb0] sm:$0xff]
      %v3862 = vld [vmem:[%s2 + $0xb8] sm:$0xff]
      %v3863 = vld [vmem:[%s2 + $0xc0] sm:$0xff]
      %v3864 = vld [vmem:[%s2 + $0xc8] sm:$0xff]
      %v3865 = vld [vmem:[%s2 + $0xd0] sm:$0xff]
      %v3866 = vld [vmem:[%s2 + $0xd8] sm:$0xff]
      %v3867 = vld [vmem:[%s2 + $0xe0] sm:$0xff]
      %v3868 = vld [vmem:[%s2 + $0xe8] sm:$0xff]
      %v3869 = vld [vmem:[%s2 + $0xf0] sm:$0xff]
      %v3870 = vld [vmem:[%s2 + $0xf8] sm:$0xff]
      %v3871 = vld [vmem:[%s2 + $0x100] sm:$0xff]
      %v3872 = vld [vmem:[%s2 + $0x108] sm:$0xff]
      %v3873 = vld [vmem:[%s2 + $0x110] sm:$0xff]
      %v3874 = vld [vmem:[%s2 + $0x118] sm:$0xff]
      %3876 = vset.pattern.permute.xlu0 0
      %3877 = vperm.xlu0 %3876, %v3839
      %v3878 = vpop.permute.xlu0 %3877
      %3881 = vset.pattern.permute.xlu0 0
      %3882 = vperm.xlu0 %3881, %v3840
      %v3883 = vpop.permute.xlu0 %3882
      %3886 = vset.pattern.permute.xlu0 0
      %3887 = vperm.xlu0 %3886, %v3841
      %v3888 = vpop.permute.xlu0 %3887
      %3891 = vset.pattern.permute.xlu0 0
      %3892 = vperm.xlu0 %3891, %v3842
      %v3893 = vpop.permute.xlu0 %3892
      %3896 = vset.pattern.permute.xlu0 0
      %3897 = vperm.xlu0 %3896, %v3843
      %v3898 = vpop.permute.xlu0 %3897
      %3901 = vset.pattern.permute.xlu0 0
      %3902 = vperm.xlu0 %3901, %v3844
      %v3903 = vpop.permute.xlu0 %3902
      %3906 = vset.pattern.permute.xlu0 0
      %3907 = vperm.xlu0 %3906, %v3845
      %v3908 = vpop.permute.xlu0 %3907
      %3911 = vset.pattern.permute.xlu0 0
      %3912 = vperm.xlu0 %3911, %v3846
      %v3913 = vpop.permute.xlu0 %3912
      %3916 = vset.pattern.permute.xlu0 0
      %3917 = vperm.xlu0 %3916, %v3847
      %v3918 = vpop.permute.xlu0 %3917
      %3921 = vset.pattern.permute.xlu0 0
      %3922 = vperm.xlu0 %3921, %v3848
      %v3923 = vpop.permute.xlu0 %3922
      %3926 = vset.pattern.permute.xlu0 0
      %3927 = vperm.xlu0 %3926, %v3849
      %v3928 = vpop.permute.xlu0 %3927
      %3931 = vset.pattern.permute.xlu0 0
      %3932 = vperm.xlu0 %3931, %v3850
      %v3933 = vpop.permute.xlu0 %3932
      %3936 = vset.pattern.permute.xlu0 0
      %3937 = vperm.xlu0 %3936, %v3851
      %v3938 = vpop.permute.xlu0 %3937
      %3941 = vset.pattern.permute.xlu0 0
      %3942 = vperm.xlu0 %3941, %v3852
      %v3943 = vpop.permute.xlu0 %3942
      %3946 = vset.pattern.permute.xlu0 0
      %3947 = vperm.xlu0 %3946, %v3853
      %v3948 = vpop.permute.xlu0 %3947
      %3951 = vset.pattern.permute.xlu0 0
      %3952 = vperm.xlu0 %3951, %v3854
      %v3953 = vpop.permute.xlu0 %3952
      %3956 = vset.pattern.permute.xlu0 0
      %3957 = vperm.xlu0 %3956, %v3855
      %v3958 = vpop.permute.xlu0 %3957
      %3961 = vset.pattern.permute.xlu0 0
      %3962 = vperm.xlu0 %3961, %v3856
      %v3963 = vpop.permute.xlu0 %3962
      %3966 = vset.pattern.permute.xlu0 0
      %3967 = vperm.xlu0 %3966, %v3857
      %v3968 = vpop.permute.xlu0 %3967
      %3971 = vset.pattern.permute.xlu0 0
      %3972 = vperm.xlu0 %3971, %v3858
      %v3973 = vpop.permute.xlu0 %3972
      %3976 = vset.pattern.permute.xlu0 0
      %3977 = vperm.xlu0 %3976, %v3859
      %v3978 = vpop.permute.xlu0 %3977
      %3981 = vset.pattern.permute.xlu0 0
      %3982 = vperm.xlu0 %3981, %v3860
      %v3983 = vpop.permute.xlu0 %3982
      %3986 = vset.pattern.permute.xlu0 0
      %3987 = vperm.xlu0 %3986, %v3861
      %v3988 = vpop.permute.xlu0 %3987
      %3991 = vset.pattern.permute.xlu0 0
      %3992 = vperm.xlu0 %3991, %v3862
      %v3993 = vpop.permute.xlu0 %3992
      %3996 = vset.pattern.permute.xlu0 0
      %3997 = vperm.xlu0 %3996, %v3863
      %v3998 = vpop.permute.xlu0 %3997
      %4001 = vset.pattern.permute.xlu0 0
      %4002 = vperm.xlu0 %4001, %v3864
      %v4003 = vpop.permute.xlu0 %4002
      %4006 = vset.pattern.permute.xlu0 0
      %4007 = vperm.xlu0 %4006, %v3865
      %v4008 = vpop.permute.xlu0 %4007
      %4011 = vset.pattern.permute.xlu0 0
      %4012 = vperm.xlu0 %4011, %v3866
      %v4013 = vpop.permute.xlu0 %4012
      %4016 = vset.pattern.permute.xlu0 0
      %4017 = vperm.xlu0 %4016, %v3867
      %v4018 = vpop.permute.xlu0 %4017
      %4021 = vset.pattern.permute.xlu0 0
      %4022 = vperm.xlu0 %4021, %v3868
      %v4023 = vpop.permute.xlu0 %4022
      %4026 = vset.pattern.permute.xlu0 0
      %4027 = vperm.xlu0 %4026, %v3869
      %v4028 = vpop.permute.xlu0 %4027
      %4031 = vset.pattern.permute.xlu0 0
      %4032 = vperm.xlu0 %4031, %v3870
      %v4033 = vpop.permute.xlu0 %4032
      %4036 = vset.pattern.permute.xlu0 0
      %4037 = vperm.xlu0 %4036, %v3871
      %v4038 = vpop.permute.xlu0 %4037
      %4041 = vset.pattern.permute.xlu0 0
      %4042 = vperm.xlu0 %4041, %v3872
      %v4043 = vpop.permute.xlu0 %4042
      %4046 = vset.pattern.permute.xlu0 0
      %4047 = vperm.xlu0 %4046, %v3873
      %v4048 = vpop.permute.xlu0 %4047
      %4051 = vset.pattern.permute.xlu0 0
      %4052 = vperm.xlu0 %4051, %v3874
      %v4053 = vpop.permute.xlu0 %4052
      %v4055 = vmul.f32 %v3767, %v3878
      %v4056 = vmul.f32 %v3768, %v3883
      %v4057 = vmul.f32 %v3769, %v3888
      %v4058 = vmul.f32 %v3770, %v3893
      %v4059 = vmul.f32 %v3771, %v3898
      %v4060 = vmul.f32 %v3772, %v3903
      %v4061 = vmul.f32 %v3773, %v3908
      %v4062 = vmul.f32 %v3774, %v3913
      %v4063 = vmul.f32 %v3775, %v3918
      %v4064 = vmul.f32 %v3776, %v3923
      %v4065 = vmul.f32 %v3777, %v3928
      %v4066 = vmul.f32 %v3778, %v3933
      %v4067 = vmul.f32 %v3779, %v3938
      %v4068 = vmul.f32 %v3780, %v3943
      %v4069 = vmul.f32 %v3781, %v3948
      %v4070 = vmul.f32 %v3782, %v3953
      %v4071 = vmul.f32 %v3783, %v3958
      %v4072 = vmul.f32 %v3784, %v3963
      %v4073 = vmul.f32 %v3785, %v3968
      %v4074 = vmul.f32 %v3786, %v3973
      %v4075 = vmul.f32 %v3787, %v3978
      %v4076 = vmul.f32 %v3788, %v3983
      %v4077 = vmul.f32 %v3789, %v3988
      %v4078 = vmul.f32 %v3790, %v3993
      %v4079 = vmul.f32 %v3791, %v3998
      %v4080 = vmul.f32 %v3792, %v4003
      %v4081 = vmul.f32 %v3793, %v4008
      %v4082 = vmul.f32 %v3794, %v4013
      %v4083 = vmul.f32 %v3795, %v4018
      %v4084 = vmul.f32 %v3796, %v4023
      %v4085 = vmul.f32 %v3797, %v4028
      %v4086 = vmul.f32 %v3798, %v4033
      %v4087 = vmul.f32 %v3799, %v4038
      %v4088 = vmul.f32 %v3800, %v4043
      %v4089 = vmul.f32 %v3801, %v4048
      %v4090 = vmul.f32 %v3802, %v4053
      %v4091 = vsel %vm394, %v4055, 0.0
      %v4092 = vsel %vm394, %v4056, 0.0
      %v4093 = vadd.f32 %v4091, %v4092
      %v4094 = vsel %vm394, %v4057, 0.0
      %v4095 = vadd.f32 %v4093, %v4094
      %v4096 = vsel %vm394, %v4058, 0.0
      %v4097 = vadd.f32 %v4095, %v4096
      %v4098 = vsel %vm394, %v4059, 0.0
      %v4099 = vadd.f32 %v4097, %v4098
      %v4100 = vsel %vm394, %v4060, 0.0
      %v4101 = vadd.f32 %v4099, %v4100
      %v4102 = vsel %vm394, %v4061, 0.0
      %v4103 = vadd.f32 %v4101, %v4102
      %v4104 = vsel %vm394, %v4062, 0.0
      %v4105 = vadd.f32 %v4103, %v4104
      %v4106 = vsel %vm394, %v4063, 0.0
      %v4107 = vadd.f32 %v4105, %v4106
      %v4108 = vsel %vm394, %v4064, 0.0
      %v4109 = vadd.f32 %v4107, %v4108
      %v4110 = vsel %vm394, %v4065, 0.0
      %v4111 = vadd.f32 %v4109, %v4110
      %v4112 = vsel %vm394, %v4066, 0.0
      %v4113 = vadd.f32 %v4111, %v4112
      %v4114 = vsel %vm394, %v4067, 0.0
      %v4115 = vadd.f32 %v4113, %v4114
      %v4116 = vsel %vm394, %v4068, 0.0
      %v4117 = vadd.f32 %v4115, %v4116
      %v4118 = vsel %vm394, %v4069, 0.0
      %v4119 = vadd.f32 %v4117, %v4118
      %v4120 = vsel %vm394, %v4070, 0.0
      %v4121 = vadd.f32 %v4119, %v4120
      %v4122 = vsel %vm394, %v4071, 0.0
      %v4123 = vadd.f32 %v4121, %v4122
      %v4124 = vsel %vm394, %v4072, 0.0
      %v4125 = vadd.f32 %v4123, %v4124
      %v4126 = vsel %vm394, %v4073, 0.0
      %v4127 = vadd.f32 %v4125, %v4126
      %v4128 = vsel %vm394, %v4074, 0.0
      %v4129 = vadd.f32 %v4127, %v4128
      %v4130 = vsel %vm394, %v4075, 0.0
      %v4131 = vadd.f32 %v4129, %v4130
      %v4132 = vsel %vm394, %v4076, 0.0
      %v4133 = vadd.f32 %v4131, %v4132
      %v4134 = vsel %vm394, %v4077, 0.0
      %v4135 = vadd.f32 %v4133, %v4134
      %v4136 = vsel %vm394, %v4078, 0.0
      %v4137 = vadd.f32 %v4135, %v4136
      %v4138 = vsel %vm394, %v4079, 0.0
      %v4139 = vadd.f32 %v4137, %v4138
      %v4140 = vsel %vm394, %v4080, 0.0
      %v4141 = vadd.f32 %v4139, %v4140
      %v4142 = vsel %vm394, %v4081, 0.0
      %v4143 = vadd.f32 %v4141, %v4142
      %v4144 = vsel %vm394, %v4082, 0.0
      %v4145 = vadd.f32 %v4143, %v4144
      %v4146 = vsel %vm394, %v4083, 0.0
      %v4147 = vadd.f32 %v4145, %v4146
      %v4148 = vsel %vm394, %v4084, 0.0
      %v4149 = vadd.f32 %v4147, %v4148
      %v4150 = vsel %vm394, %v4085, 0.0
      %v4151 = vadd.f32 %v4149, %v4150
      %v4152 = vsel %vm394, %v4086, 0.0
      %v4153 = vadd.f32 %v4151, %v4152
      %v4154 = vsel %vm394, %v4087, 0.0
      %v4155 = vadd.f32 %v4153, %v4154
      %v4156 = vsel %vm394, %v4088, 0.0
      %v4157 = vadd.f32 %v4155, %v4156
      %v4158 = vsel %vm394, %v4089, 0.0
      %v4159 = vadd.f32 %v4157, %v4158
      %v4160 = vsel %vm394, %v4090, 0.0
      %v4161 = vadd.f32 %v4159, %v4160
      %v4162 = vrot.slane %v4161, 4
      %v4163 = vadd.f32 %v4161, %v4162
      %v4164 = vrot.slane %v4163, 2
      %v4165 = vadd.f32 %v4163, %v4164
      %v4166 = vrot.slane %v4165, 1
      %v4167 = vadd.f32 %v4165, %v4166
      %vm4168 = vcmask 57344
      %4169 = vst.msk [vmem:[%s238] sm:$0x1] %vm4168, %v4167
      %v4170 = vmul.f32 %v3767, %v3767
      %v4171 = vmul.f32 %v3768, %v3768
      %v4172 = vmul.f32 %v3769, %v3769
      %v4173 = vmul.f32 %v3770, %v3770
      %v4174 = vmul.f32 %v3771, %v3771
      %v4175 = vmul.f32 %v3772, %v3772
      %v4176 = vmul.f32 %v3773, %v3773
      %v4177 = vmul.f32 %v3774, %v3774
      %v4178 = vmul.f32 %v3775, %v3775
      %v4179 = vmul.f32 %v3776, %v3776
      %v4180 = vmul.f32 %v3777, %v3777
      %v4181 = vmul.f32 %v3778, %v3778
      %v4182 = vmul.f32 %v3779, %v3779
      %v4183 = vmul.f32 %v3780, %v3780
      %v4184 = vmul.f32 %v3781, %v3781
      %v4185 = vmul.f32 %v3782, %v3782
      %v4186 = vmul.f32 %v3783, %v3783
      %v4187 = vmul.f32 %v3784, %v3784
      %v4188 = vmul.f32 %v3785, %v3785
      %v4189 = vmul.f32 %v3786, %v3786
      %v4190 = vmul.f32 %v3787, %v3787
      %v4191 = vmul.f32 %v3788, %v3788
      %v4192 = vmul.f32 %v3789, %v3789
      %v4193 = vmul.f32 %v3790, %v3790
      %v4194 = vmul.f32 %v3791, %v3791
      %v4195 = vmul.f32 %v3792, %v3792
      %v4196 = vmul.f32 %v3793, %v3793
      %v4197 = vmul.f32 %v3794, %v3794
      %v4198 = vmul.f32 %v3795, %v3795
      %v4199 = vmul.f32 %v3796, %v3796
      %v4200 = vmul.f32 %v3797, %v3797
      %v4201 = vmul.f32 %v3798, %v3798
      %v4202 = vmul.f32 %v3799, %v3799
      %v4203 = vmul.f32 %v3800, %v3800
      %v4204 = vmul.f32 %v3801, %v3801
      %v4205 = vmul.f32 %v3802, %v3802
      %v4206 = vmul.f32 %v4170, %v3878
      %v4207 = vmul.f32 %v4171, %v3883
      %v4208 = vmul.f32 %v4172, %v3888
      %v4209 = vmul.f32 %v4173, %v3893
      %v4210 = vmul.f32 %v4174, %v3898
      %v4211 = vmul.f32 %v4175, %v3903
      %v4212 = vmul.f32 %v4176, %v3908
      %v4213 = vmul.f32 %v4177, %v3913
      %v4214 = vmul.f32 %v4178, %v3918
      %v4215 = vmul.f32 %v4179, %v3923
      %v4216 = vmul.f32 %v4180, %v3928
      %v4217 = vmul.f32 %v4181, %v3933
      %v4218 = vmul.f32 %v4182, %v3938
      %v4219 = vmul.f32 %v4183, %v3943
      %v4220 = vmul.f32 %v4184, %v3948
      %v4221 = vmul.f32 %v4185, %v3953
      %v4222 = vmul.f32 %v4186, %v3958
      %v4223 = vmul.f32 %v4187, %v3963
      %v4224 = vmul.f32 %v4188, %v3968
      %v4225 = vmul.f32 %v4189, %v3973
      %v4226 = vmul.f32 %v4190, %v3978
      %v4227 = vmul.f32 %v4191, %v3983
      %v4228 = vmul.f32 %v4192, %v3988
      %v4229 = vmul.f32 %v4193, %v3993
      %v4230 = vmul.f32 %v4194, %v3998
      %v4231 = vmul.f32 %v4195, %v4003
      %v4232 = vmul.f32 %v4196, %v4008
      %v4233 = vmul.f32 %v4197, %v4013
      %v4234 = vmul.f32 %v4198, %v4018
      %v4235 = vmul.f32 %v4199, %v4023
      %v4236 = vmul.f32 %v4200, %v4028
      %v4237 = vmul.f32 %v4201, %v4033
      %v4238 = vmul.f32 %v4202, %v4038
      %v4239 = vmul.f32 %v4203, %v4043
      %v4240 = vmul.f32 %v4204, %v4048
      %v4241 = vmul.f32 %v4205, %v4053
      %v4242 = vsel %vm394, %v4206, 0.0
      %v4243 = vsel %vm394, %v4207, 0.0
      %v4244 = vadd.f32 %v4242, %v4243
      %v4245 = vsel %vm394, %v4208, 0.0
      %v4246 = vadd.f32 %v4244, %v4245
      %v4247 = vsel %vm394, %v4209, 0.0
      %v4248 = vadd.f32 %v4246, %v4247
      %v4249 = vsel %vm394, %v4210, 0.0
      %v4250 = vadd.f32 %v4248, %v4249
      %v4251 = vsel %vm394, %v4211, 0.0
      %v4252 = vadd.f32 %v4250, %v4251
      %v4253 = vsel %vm394, %v4212, 0.0
      %v4254 = vadd.f32 %v4252, %v4253
      %v4255 = vsel %vm394, %v4213, 0.0
      %v4256 = vadd.f32 %v4254, %v4255
      %v4257 = vsel %vm394, %v4214, 0.0
      %v4258 = vadd.f32 %v4256, %v4257
      %v4259 = vsel %vm394, %v4215, 0.0
      %v4260 = vadd.f32 %v4258, %v4259
      %v4261 = vsel %vm394, %v4216, 0.0
      %v4262 = vadd.f32 %v4260, %v4261
      %v4263 = vsel %vm394, %v4217, 0.0
      %v4264 = vadd.f32 %v4262, %v4263
      %v4265 = vsel %vm394, %v4218, 0.0
      %v4266 = vadd.f32 %v4264, %v4265
      %v4267 = vsel %vm394, %v4219, 0.0
      %v4268 = vadd.f32 %v4266, %v4267
      %v4269 = vsel %vm394, %v4220, 0.0
      %v4270 = vadd.f32 %v4268, %v4269
      %v4271 = vsel %vm394, %v4221, 0.0
      %v4272 = vadd.f32 %v4270, %v4271
      %v4273 = vsel %vm394, %v4222, 0.0
      %v4274 = vadd.f32 %v4272, %v4273
      %v4275 = vsel %vm394, %v4223, 0.0
      %v4276 = vadd.f32 %v4274, %v4275
      %v4277 = vsel %vm394, %v4224, 0.0
      %v4278 = vadd.f32 %v4276, %v4277
      %v4279 = vsel %vm394, %v4225, 0.0
      %v4280 = vadd.f32 %v4278, %v4279
      %v4281 = vsel %vm394, %v4226, 0.0
      %v4282 = vadd.f32 %v4280, %v4281
      %v4283 = vsel %vm394, %v4227, 0.0
      %v4284 = vadd.f32 %v4282, %v4283
      %v4285 = vsel %vm394, %v4228, 0.0
      %v4286 = vadd.f32 %v4284, %v4285
      %v4287 = vsel %vm394, %v4229, 0.0
      %v4288 = vadd.f32 %v4286, %v4287
      %v4289 = vsel %vm394, %v4230, 0.0
      %v4290 = vadd.f32 %v4288, %v4289
      %v4291 = vsel %vm394, %v4231, 0.0
      %v4292 = vadd.f32 %v4290, %v4291
      %v4293 = vsel %vm394, %v4232, 0.0
      %v4294 = vadd.f32 %v4292, %v4293
      %v4295 = vsel %vm394, %v4233, 0.0
      %v4296 = vadd.f32 %v4294, %v4295
      %v4297 = vsel %vm394, %v4234, 0.0
      %v4298 = vadd.f32 %v4296, %v4297
      %v4299 = vsel %vm394, %v4235, 0.0
      %v4300 = vadd.f32 %v4298, %v4299
      %v4301 = vsel %vm394, %v4236, 0.0
      %v4302 = vadd.f32 %v4300, %v4301
      %v4303 = vsel %vm394, %v4237, 0.0
      %v4304 = vadd.f32 %v4302, %v4303
      %v4305 = vsel %vm394, %v4238, 0.0
      %v4306 = vadd.f32 %v4304, %v4305
      %v4307 = vsel %vm394, %v4239, 0.0
      %v4308 = vadd.f32 %v4306, %v4307
      %v4309 = vsel %vm394, %v4240, 0.0
      %v4310 = vadd.f32 %v4308, %v4309
      %v4311 = vsel %vm394, %v4241, 0.0
      %v4312 = vadd.f32 %v4310, %v4311
      %v4313 = vrot.slane %v4312, 4
      %v4314 = vadd.f32 %v4312, %v4313
      %v4315 = vrot.slane %v4314, 2
      %v4316 = vadd.f32 %v4314, %v4315
      %v4317 = vrot.slane %v4316, 1
      %v4318 = vadd.f32 %v4316, %v4317
      %4319 = vst.msk [vmem:[%s238 + $0x1] sm:$0x1] %vm4168, %v4318
      %s4320 = smul.u32 36, %s17
      %p4321 = scmp.lt.s32.totalorder %s4320, 71
      %s4322 = scalar_select %p4321, %s4320, 71
      %s4323 = smul.addr %s4322, 8
      %s4324 = scalar_lea.vmem %s4, %s4323
      %p4325 = scmp.lt.s32.totalorder %s17, 1
      %s4326 = scalar_select %p4325, %s17, 1
      %s4327 = smul.addr %s4326, 2
      %s4328 = scalar_lea.vmem %s5, %s4327
      // Predicated region
      $region37: #{downblock_forward.4} parent=35 // pred_check
        %p4329 = pneg %p124
      $region38: #{downblock_forward.4} parent=35 // pred_check_branch
        %4331 = sbr.rel (%p4329) target = $region40
      $region39: #{downblock_forward.4} parent=35 // pred_region
        %s4332 = smul.u32 36, %s17
      $region40: #{downblock_forward.4} parent=35 // pred_fallthru
        _
      // Predicated region
      $region41: #{downblock_forward.4} parent=35 // pred_check
        %p4333 = pneg %p150
      $region42: #{downblock_forward.4} parent=35 // pred_check_branch
        %4335 = sbr.rel (%p4333) target = $region44
      $region43: #{downblock_forward.4} parent=35 // pred_region
        _
      $region44: #{downblock_forward.4} parent=35 // pred_fallthru
        _
    $region36: #{downblock_forward.4} parent=5 // pred_fallthru
      _
    %p4336 = scmp.le.s32.totalorder 2, %s12
    // Predicated region
    $region45: #{downblock_forward.4} parent=5 // pred_check
      %p4337 = pneg %p4336
    $region46: #{downblock_forward.4} parent=5 // pred_check_branch
      %4339 = sbr.rel (%p4337) target = $region48
    $region47: #{downblock_forward.4} parent=5 // pred_region
      %s4340 = ssub.s32 %s12, 2
      // Predicated region
      $region49: #{downblock_forward.4} parent=47 // pred_check
        %p4341 = pneg %p130
      $region50: #{downblock_forward.4} parent=47 // pred_check_branch
        %4343 = sbr.rel (%p4341) target = $region52
      $region51: #{downblock_forward.4} parent=47 // pred_region
        %s4344 = smul.u32 36, %s18
        %p4345 = scmp.lt.s32.totalorder %s4344, 71
        %s4346 = scalar_select %p4345, %s4344, 71
        %s4347 = smul.addr %s4346, 8
        %s4348 = scalar_lea.vmem %s4, %s4347
      $region52: #{downblock_forward.4} parent=47 // pred_fallthru
        _
      // Predicated region
      $region53: #{downblock_forward.4} parent=47 // pred_check
        %p4349 = pneg %p156
      $region54: #{downblock_forward.4} parent=47 // pred_check_branch
        %4351 = sbr.rel (%p4349) target = $region56
      $region55: #{downblock_forward.4} parent=47 // pred_region
        %p4352 = scmp.lt.s32.totalorder %s18, 1
        %s4353 = scalar_select %p4352, %s18, 1
        %s4354 = smul.addr %s4353, 2
        %s4355 = scalar_lea.vmem %s5, %s4354
      $region56: #{downblock_forward.4} parent=47 // pred_fallthru
        _
    $region48: #{downblock_forward.4} parent=5 // pred_fallthru
      _
  $region6: #{downblock_forward.4} parent=0 // loop_footer
    %s16 = sadd.s32 1, %s12
  $region7: #{downblock_forward.4} parent=0 // loop_footer_branch
    %11 = sbr.rel target = $region3
  $region8: #{downblock_forward.4} parent=0 // loop_exit
    _

</llo_original>
